<compile_context>
chip_gen: v7x
topology: tpu7x:2x2x1
jax: 0.10.0
libtpu: 0.0.40
codegen_flags: <defaults>
</compile_context>

<pallas_src>
import jax
import jax.numpy as jnp
from jax.experimental import pallas as pl
from jax.experimental.pallas import tpu as pltpu

# Logical dims of the module.
D0, D1, D2, D3, D4 = 30000, 700, 500, 100, 6

# Tiling.
TM = 8            # batch tile (f32 sublane minimum)
TK = 3072         # fc1 reduction tile (multiple of 128)
K1P = 30720       # round_up(30000, TK)

_VMEM_LIMIT = 32 * 1024 * 1024


def _round_up(x, m):
    return (x + m - 1) // m * m


# --------------------------------------------------------------------------
# Fully fused forward kernel.
#   grid = (Mp // TM, K1P // TK); K is the (sequential) reduction axis.
# --------------------------------------------------------------------------
def _net_kernel(x_ref, w1_ref, b1_ref, w2_ref, b2_ref, w3_ref, b3_ref,
                w4_ref, b4_ref, o_ref, acc_ref):
    k = pl.program_id(1)

    @pl.when(k == 0)
    def _():
        acc_ref[...] = jnp.zeros_like(acc_ref)

    # Streamed, bandwidth-bound fc1 partial product.
    acc_ref[...] += jnp.dot(
        x_ref[...], w1_ref[...], preferred_element_type=jnp.float32
    )

    # Epilogue on the last K step: bias+ReLU, then the tiny fc2/fc3/fc4 tail
    # entirely in VMEM/vregs.
    @pl.when(k == pl.num_programs(1) - 1)
    def _():
        h1 = jnp.maximum(acc_ref[...] + b1_ref[...], 0.0)
        h2 = jnp.maximum(
            jnp.dot(h1, w2_ref[...], preferred_element_type=jnp.float32)
            + b2_ref[...],
            0.0,
        )
        h3 = jnp.maximum(
            jnp.dot(h2, w3_ref[...], preferred_element_type=jnp.float32)
            + b3_ref[...],
            0.0,
        )
        logits = (
            jnp.dot(h3, w4_ref[...], preferred_element_type=jnp.float32)
            + b4_ref[...]
        )
        o_ref[...] = jax.nn.sigmoid(logits).astype(o_ref.dtype)


def net_pallas(xp, w1p, b1, w2, b2, w3, b3, w4, b4):
    """Fused Net forward. xp:(Mp,K1P) zero-padded, w1p:(K1P,D1) zero-padded."""
    Mp, Kp = xp.shape
    grid = (Mp // TM, Kp // TK)
    const = lambda i, k: (0, 0)   # resident blocks (DMA'd once)
    return pl.pallas_call(
        _net_kernel,
        out_shape=jax.ShapeDtypeStruct((Mp, D4), jnp.float32),
        grid_spec=pltpu.PrefetchScalarGridSpec(
            num_scalar_prefetch=0,
            grid=grid,
            in_specs=[
                pl.BlockSpec((TM, TK), lambda i, k: (i, k)),   # x tile
                pl.BlockSpec((TK, D1), lambda i, k: (k, 0)),   # streamed fc1 W
                pl.BlockSpec((1, D1), const),                  # b1 (resident)
                pl.BlockSpec((D1, D2), const),                 # W2 (resident)
                pl.BlockSpec((1, D2), const),                  # b2
                pl.BlockSpec((D2, D3), const),                 # W3
                pl.BlockSpec((1, D3), const),                  # b3
                pl.BlockSpec((D3, D4), const),                 # W4
                pl.BlockSpec((1, D4), const),                  # b4
            ],
            out_specs=pl.BlockSpec((TM, D4), lambda i, k: (i, 0)),
            scratch_shapes=[pltpu.VMEM((TM, D1), jnp.float32)],
        ),
        compiler_params=pltpu.CompilerParams(
            dimension_semantics=("parallel", "arbitrary"),
            vmem_limit_bytes=_VMEM_LIMIT,
        ),
    )(xp, w1p, b1, w2, b2, w3, b3, w4, b4)


# --------------------------------------------------------------------------
# Parameters: PyTorch-Linear-like init; only fc1's K dim is padded, ONCE.
# --------------------------------------------------------------------------
def init_params(key):
    """U(-1/sqrt(fan_in), +1/sqrt(fan_in)), matching nn.Linear defaults."""
    dims = [D0, D1, D2, D3, D4]
    raw = []
    for i in range(4):
        key, kw, kb = jax.random.split(key, 3)
        bound = 1.0 / (dims[i] ** 0.5)
        w = jax.random.uniform(kw, (dims[i], dims[i + 1]), jnp.float32, -bound, bound)
        b = jax.random.uniform(kb, (dims[i + 1],), jnp.float32, -bound, bound)
        raw.append((w, b))
    return raw


def prepare_params(raw):
    """Pad fc1 weight rows to K1P (zeros) once; biases become (1, N)."""
    (w1, b1), (w2, b2), (w3, b3), (w4, b4) = raw
    w1p = jnp.zeros((K1P, D1), w1.dtype).at[:D0, :].set(w1)
    return dict(
        w1=w1p, b1=b1.reshape(1, D1),
        w2=w2,  b2=b2.reshape(1, D2),
        w3=w3,  b3=b3.reshape(1, D3),
        w4=w4,  b4=b4.reshape(1, D4),
    )


@jax.jit
def net_forward(x, p):
    """Net.forward: relu(fc1) -> relu(fc2) -> relu(fc3) -> sigmoid(fc4)."""
    M, K = x.shape
    Mp = _round_up(M, TM)
    xp = jnp.zeros((Mp, K1P), x.dtype).at[:M, :K].set(x)   # cheap (~1 MB) pad
    y = net_pallas(xp, p["w1"], p["b1"], p["w2"], p["b2"],
                   p["w3"], p["b3"], p["w4"], p["b4"])
    return y[:M]


def _ref_forward(x, raw):
    """Pure-JAX reference (f32, highest precision)."""
    h = x
    for i, (w, b) in enumerate(raw):
        h = jnp.dot(h, w, precision=jax.lax.Precision.HIGHEST) + b
        h = jnp.maximum(h, 0.0) if i < 3 else jax.nn.sigmoid(h)
    return h


if __name__ == "__main__":
    key = jax.random.PRNGKey(0)
    k_param, k_x = jax.random.split(key)

    raw_params = init_params(k_param)
    params = prepare_params(raw_params)   # padded once, reused every forward

    batch = 2  # input feature dim 30000 is fixed by the module
    x = jax.random.normal(k_x, (batch, D0), jnp.float32)

    y = net_forward(x, params)
    y = jax.block_until_ready(y)

    assert y.shape == (batch, D4), y.shape
    assert bool(jnp.all((y >= 0.0) & (y <= 1.0)))

    y_ref = _ref_forward(x, raw_params)
    assert bool(jnp.allclose(y, y_ref, atol=2e-3, rtol=0.0)), (
        float(jnp.max(jnp.abs(y - y_ref)))
    )

    print("KERNEL_OK")
</pallas_src>

<mosaic_0001>
module attributes {stable_mosaic.version = 11 : i64} {
  func.func @_net_kernel(%arg0: i32, %arg1: i32, %arg2: memref<8x3072xf32, #tpu.memory_space<vmem>>, %arg3: memref<3072x700xf32, #tpu.memory_space<vmem>>, %arg4: memref<1x700xf32, #tpu.memory_space<vmem>>, %arg5: memref<700x500xf32, #tpu.memory_space<vmem>>, %arg6: memref<1x500xf32, #tpu.memory_space<vmem>>, %arg7: memref<500x100xf32, #tpu.memory_space<vmem>>, %arg8: memref<1x100xf32, #tpu.memory_space<vmem>>, %arg9: memref<100x6xf32, #tpu.memory_space<vmem>>, %arg10: memref<1x6xf32, #tpu.memory_space<vmem>>, %arg11: memref<8x6xf32, #tpu.memory_space<vmem>>, %arg12: memref<8x700xf32, #tpu.memory_space<vmem>>) attributes {dimension_semantics = [#tpu.dimension_semantics<parallel>, #tpu.dimension_semantics<arbitrary>], iteration_bounds = array<i64: 1, 10>, scalar_prefetch = 0 : i64, scratch_operands = 1 : i64, tpu.core_type = #tpu.core_type<tc>, window_params = [{transform_indices = @transform_0, window_bounds = array<i64: 8, 3072>}, {transform_indices = @transform_1, window_bounds = array<i64: 3072, 700>}, {pipeline_mode = #tpu.pipeline_mode<synchronous>, transform_indices = @transform_2, window_bounds = array<i64: 1, 700>}, {pipeline_mode = #tpu.pipeline_mode<synchronous>, transform_indices = @transform_3, window_bounds = array<i64: 700, 500>}, {pipeline_mode = #tpu.pipeline_mode<synchronous>, transform_indices = @transform_4, window_bounds = array<i64: 1, 500>}, {pipeline_mode = #tpu.pipeline_mode<synchronous>, transform_indices = @transform_5, window_bounds = array<i64: 500, 100>}, {pipeline_mode = #tpu.pipeline_mode<synchronous>, transform_indices = @transform_6, window_bounds = array<i64: 1, 100>}, {pipeline_mode = #tpu.pipeline_mode<synchronous>, transform_indices = @transform_7, window_bounds = array<i64: 100, 6>}, {pipeline_mode = #tpu.pipeline_mode<synchronous>, transform_indices = @transform_8, window_bounds = array<i64: 1, 6>}, {transform_indices = @transform_9, window_bounds = array<i64: 8, 6>}]} {
    %c0_i32 = arith.constant 0 : i32
    %0 = arith.cmpi eq, %arg1, %c0_i32 : i32
    %1 = arith.extui %0 : i1 to i32
    %c0_i32_0 = arith.constant 0 : i32
    %2 = arith.cmpi ne, %1, %c0_i32_0 : i32
    scf.if %2 {
      %cst_9 = arith.constant 0.000000e+00 : f32
      %12 = vector.broadcast %cst_9 : f32 to vector<8x700xf32>
      %c0_10 = arith.constant 0 : index
      %c0_11 = arith.constant 0 : index
      %13 = vector.load %arg12[%c0_10, %c0_11] : memref<8x700xf32, #tpu.memory_space<vmem>>, vector<8x700xf32>
      tpu.vector_store %arg12[%c0_10, %c0_11], %12 {strides = array<i32>} : memref<8x700xf32, #tpu.memory_space<vmem>>, vector<8x700xf32>,
    } else {
    }
    %c0 = arith.constant 0 : index
    %c0_1 = arith.constant 0 : index
    %3 = vector.load %arg12[%c0, %c0_1] : memref<8x700xf32, #tpu.memory_space<vmem>>, vector<8x700xf32>
    %c0_2 = arith.constant 0 : index
    %c0_3 = arith.constant 0 : index
    %4 = vector.load %arg2[%c0_2, %c0_3] : memref<8x3072xf32, #tpu.memory_space<vmem>>, vector<8x3072xf32>
    %c0_4 = arith.constant 0 : index
    %c0_5 = arith.constant 0 : index
    %5 = vector.load %arg3[%c0_4, %c0_5] : memref<3072x700xf32, #tpu.memory_space<vmem>>, vector<3072x700xf32>
    %cst = arith.constant dense<0.000000e+00> : vector<8x700xf32>
    %6 = tpu.matmul %4, %5, %cst {dimension_numbers = #tpu.dot_dimension_numbers<[1], [0], [0], [1], [0, 0, 1, 1], [], []>} : vector<8x3072xf32>, vector<3072x700xf32>, vector<8x700xf32> -> vector<8x700xf32>
    %7 = arith.addf %3, %6 : vector<8x700xf32>
    %c0_6 = arith.constant 0 : index
    %c0_7 = arith.constant 0 : index
    %8 = vector.load %arg12[%c0_6, %c0_7] : memref<8x700xf32, #tpu.memory_space<vmem>>, vector<8x700xf32>
    tpu.vector_store %arg12[%c0_6, %c0_7], %7 {strides = array<i32>} : memref<8x700xf32, #tpu.memory_space<vmem>>, vector<8x700xf32>,
    %c9_i32 = arith.constant 9 : i32
    %9 = arith.cmpi eq, %arg1, %c9_i32 : i32
    %10 = arith.extui %9 : i1 to i32
    %c0_i32_8 = arith.constant 0 : i32
    %11 = arith.cmpi ne, %10, %c0_i32_8 : i32
    scf.if %11 {
      %c0_9 = arith.constant 0 : index
      %c0_10 = arith.constant 0 : index
      %12 = vector.load %arg12[%c0_9, %c0_10] : memref<8x700xf32, #tpu.memory_space<vmem>>, vector<8x700xf32>
      %c0_11 = arith.constant 0 : index
      %c0_12 = arith.constant 0 : index
      %13 = vector.load %arg4[%c0_11, %c0_12] : memref<1x700xf32, #tpu.memory_space<vmem>>, vector<1x700xf32>
      %14 = vector.broadcast %13 : vector<1x700xf32> to vector<8x700xf32>
      %15 = arith.addf %12, %14 : vector<8x700xf32>
      %cst_13 = arith.constant 0.000000e+00 : f32
      %16 = vector.broadcast %cst_13 : f32 to vector<8x700xf32>
      %17 = arith.maximumf %15, %16 : vector<8x700xf32>
      %c0_14 = arith.constant 0 : index
      %c0_15 = arith.constant 0 : index
      %18 = vector.load %arg5[%c0_14, %c0_15] : memref<700x500xf32, #tpu.memory_space<vmem>>, vector<700x500xf32>
      %cst_16 = arith.constant dense<0.000000e+00> : vector<8x500xf32>
      %19 = tpu.matmul %17, %18, %cst_16 {dimension_numbers = #tpu.dot_dimension_numbers<[1], [0], [0], [1], [0, 0, 1, 1], [], []>} : vector<8x700xf32>, vector<700x500xf32>, vector<8x500xf32> -> vector<8x500xf32>
      %c0_17 = arith.constant 0 : index
      %c0_18 = arith.constant 0 : index
      %20 = vector.load %arg6[%c0_17, %c0_18] : memref<1x500xf32, #tpu.memory_space<vmem>>, vector<1x500xf32>
      %21 = vector.broadcast %20 : vector<1x500xf32> to vector<8x500xf32>
      %22 = arith.addf %19, %21 : vector<8x500xf32>
      %cst_19 = arith.constant 0.000000e+00 : f32
      %23 = vector.broadcast %cst_19 : f32 to vector<8x500xf32>
      %24 = arith.maximumf %22, %23 : vector<8x500xf32>
      %c0_20 = arith.constant 0 : index
      %c0_21 = arith.constant 0 : index
      %25 = vector.load %arg7[%c0_20, %c0_21] : memref<500x100xf32, #tpu.memory_space<vmem>>, vector<500x100xf32>
      %cst_22 = arith.constant dense<0.000000e+00> : vector<8x100xf32>
      %26 = tpu.matmul %24, %25, %cst_22 {dimension_numbers = #tpu.dot_dimension_numbers<[1], [0], [0], [1], [0, 0, 1, 1], [], []>} : vector<8x500xf32>, vector<500x100xf32>, vector<8x100xf32> -> vector<8x100xf32>
      %c0_23 = arith.constant 0 : index
      %c0_24 = arith.constant 0 : index
      %27 = vector.load %arg8[%c0_23, %c0_24] : memref<1x100xf32, #tpu.memory_space<vmem>>, vector<1x100xf32>
      %28 = vector.broadcast %27 : vector<1x100xf32> to vector<8x100xf32>
      %29 = arith.addf %26, %28 : vector<8x100xf32>
      %cst_25 = arith.constant 0.000000e+00 : f32
      %30 = vector.broadcast %cst_25 : f32 to vector<8x100xf32>
      %31 = arith.maximumf %29, %30 : vector<8x100xf32>
      %c0_26 = arith.constant 0 : index
      %c0_27 = arith.constant 0 : index
      %32 = vector.load %arg9[%c0_26, %c0_27] : memref<100x6xf32, #tpu.memory_space<vmem>>, vector<100x6xf32>
      %cst_28 = arith.constant dense<0.000000e+00> : vector<8x6xf32>
      %33 = tpu.matmul %31, %32, %cst_28 {dimension_numbers = #tpu.dot_dimension_numbers<[1], [0], [0], [1], [0, 0, 1, 1], [], []>} : vector<8x100xf32>, vector<100x6xf32>, vector<8x6xf32> -> vector<8x6xf32>
      %c0_29 = arith.constant 0 : index
      %c0_30 = arith.constant 0 : index
      %34 = vector.load %arg10[%c0_29, %c0_30] : memref<1x6xf32, #tpu.memory_space<vmem>>, vector<1x6xf32>
      %35 = vector.broadcast %34 : vector<1x6xf32> to vector<8x6xf32>
      %36 = arith.addf %33, %35 : vector<8x6xf32>
      %37 = arith.negf %36 : vector<8x6xf32>
      %38 = math.exp %37 : vector<8x6xf32>
      %cst_31 = arith.constant 1.000000e+00 : f32
      %39 = vector.broadcast %cst_31 : f32 to vector<8x6xf32>
      %40 = arith.addf %39, %38 : vector<8x6xf32>
      %41 = arith.divf %39, %40 : vector<8x6xf32>
      %c0_32 = arith.constant 0 : index
      %c0_33 = arith.constant 0 : index
      %42 = vector.load %arg11[%c0_32, %c0_33] : memref<8x6xf32, #tpu.memory_space<vmem>>, vector<8x6xf32>
      tpu.vector_store %arg11[%c0_32, %c0_33], %41 {strides = array<i32>} : memref<8x6xf32, #tpu.memory_space<vmem>>, vector<8x6xf32>,
    } else {
    }
    return
  }
  func.func @transform_0(%arg0: i32, %arg1: i32) -> (i32, i32) {
    %c0_i32 = arith.constant 0 : i32
    return %arg0, %arg1 : i32, i32
  }
  func.func @transform_1(%arg0: i32, %arg1: i32) -> (i32, i32) {
    %c0_i32 = arith.constant 0 : i32
    %c0_i32_0 = arith.constant 0 : i32
    return %arg1, %c0_i32 : i32, i32
  }
  func.func @transform_2(%arg0: i32, %arg1: i32) -> (i32, i32) {
    %c0_i32 = arith.constant 0 : i32
    %c0_i32_0 = arith.constant 0 : i32
    %c0_i32_1 = arith.constant 0 : i32
    return %c0_i32, %c0_i32_0 : i32, i32
  }
  func.func @transform_3(%arg0: i32, %arg1: i32) -> (i32, i32) {
    %c0_i32 = arith.constant 0 : i32
    %c0_i32_0 = arith.constant 0 : i32
    %c0_i32_1 = arith.constant 0 : i32
    return %c0_i32, %c0_i32_0 : i32, i32
  }
  func.func @transform_4(%arg0: i32, %arg1: i32) -> (i32, i32) {
    %c0_i32 = arith.constant 0 : i32
    %c0_i32_0 = arith.constant 0 : i32
    %c0_i32_1 = arith.constant 0 : i32
    return %c0_i32, %c0_i32_0 : i32, i32
  }
  func.func @transform_5(%arg0: i32, %arg1: i32) -> (i32, i32) {
    %c0_i32 = arith.constant 0 : i32
    %c0_i32_0 = arith.constant 0 : i32
    %c0_i32_1 = arith.constant 0 : i32
    return %c0_i32, %c0_i32_0 : i32, i32
  }
  func.func @transform_6(%arg0: i32, %arg1: i32) -> (i32, i32) {
    %c0_i32 = arith.constant 0 : i32
    %c0_i32_0 = arith.constant 0 : i32
    %c0_i32_1 = arith.constant 0 : i32
    return %c0_i32, %c0_i32_0 : i32, i32
  }
  func.func @transform_7(%arg0: i32, %arg1: i32) -> (i32, i32) {
    %c0_i32 = arith.constant 0 : i32
    %c0_i32_0 = arith.constant 0 : i32
    %c0_i32_1 = arith.constant 0 : i32
    return %c0_i32, %c0_i32_0 : i32, i32
  }
  func.func @transform_8(%arg0: i32, %arg1: i32) -> (i32, i32) {
    %c0_i32 = arith.constant 0 : i32
    %c0_i32_0 = arith.constant 0 : i32
    %c0_i32_1 = arith.constant 0 : i32
    return %c0_i32, %c0_i32_0 : i32, i32
  }
  func.func @transform_9(%arg0: i32, %arg1: i32) -> (i32, i32) {
    %c0_i32 = arith.constant 0 : i32
    %c0_i32_0 = arith.constant 0 : i32
    return %arg0, %c0_i32 : i32, i32
  }
}

</mosaic_0001>

<llo_original>
// kernel: net_forward.1
$region0: #{net_forward.1}
  #allocation0 [shape = 'u32[]', space=smem, size = 0x4, offset = 0x4, fixed_abs, tag = 'smem constant byte address 0x4 - core index']
  #allocation1 [shape = 'u32[144,128]{1,0:T(1,128)}', space=vmem, size = 0x12000, scoped, tag = 'internal scratch']
  #allocation2 [shape = 'f32[8,700]{1,0:T(8,128)}', space=vmem, size = 0x6000, scoped, tag = 'scratch operand']
  %s0 = inlined_call_operand.vmem [shape: f32[8,30720], index: 0, kind: input, shape index: {}]
  %s1 = inlined_call_operand.hbm [shape: f32[30720,700], index: 1, kind: input, shape index: {}]
  %s2 = inlined_call_operand.vmem [shape: f32[1,700], index: 2, kind: input, shape index: {}]
  %s3 = inlined_call_operand.vmem [shape: f32[700,500], index: 3, kind: input, shape index: {}]
  %s4 = inlined_call_operand.vmem [shape: f32[1,500], index: 4, kind: input, shape index: {}]
  %s5 = inlined_call_operand.vmem [shape: f32[500,100], index: 5, kind: input, shape index: {}]
  %s6 = inlined_call_operand.vmem [shape: f32[1,100], index: 6, kind: input, shape index: {}]
  %s7 = inlined_call_operand.vmem [shape: f32[100,6], index: 7, kind: input, shape index: {}]
  %s8 = inlined_call_operand.vmem [shape: f32[1,6], index: 8, kind: input, shape index: {}]
  %s9 = inlined_call_operand.vmem [shape: f32[8,6], index: 9, kind: output, shape index: {}]
  %s10 = sld [smem:[#allocation0]]
  $region81: #{net_forward.1} parent=0
    _
  %s12 = ssub.s32 1, %s10
  %s13 = scalar_select 0, %s12, %s10
  $region1: #{net_forward.1} parent=0
    #allocation3 [shape = 'u8[18874368]{0}', space=vmem, size = 0x1200000, scoped, tag = 'input window, operand 1']
    #allocation4 [shape = 's32[2]{0}', space=sflag, size = 0x8, scoped, tag = 'scoped memory for net_forward.1']
    %14 = vsyncpa [#allocation4], 0
    %s15 = scalar_lea.sflag [#allocation4], 1
    %16 = vsyncpa %s15, 0
    loop: start=0, step=1, limit=12
    $region2: #{net_forward.1} parent=1 // loop_pre_header
      _
    $region3: #{net_forward.1} parent=1 // loop_header
      %s18 = sphi 0, %s22
      %p19 = scmp.ge.s32.totalorder %s18, 12
      %s25 = sphi 0, %s37
      %s26 = sphi 0, %s33
      %s27 = sphi 0, %s25
      %s28 = sphi 0, %s26
      %s29 = sphi 0, %s27
      %s30 = sphi 0, %s28
      %s42 = sphi 0, %s44
      %s45 = sphi 0, %s42
      %s46 = sphi 0, %s45
      %s62 = sphi 0, %s46
      %s68 = sphi 0, %s70
      %s71 = sphi 0, %s68
      %s72 = sphi 0, %s71
      %s88 = sphi 0, %s72
      %s92 = sphi 0, %s92
      %s94 = sphi 0, %s92
      %s95 = sphi 0, %s94
      %s109 = sphi 0, %s95
      %s113 = sphi 0, %s113
      %s115 = sphi 0, %s113
      %s116 = sphi 0, %s115
      %s130 = sphi 0, %s116
      %s134 = sphi 0, %s134
      %s136 = sphi 0, %s134
      %s137 = sphi 0, %s136
      %s151 = sphi 0, %s137
      %s155 = sphi 0, %s155
      %s157 = sphi 0, %s155
      %s158 = sphi 0, %s157
      %s172 = sphi 0, %s158
      %s176 = sphi 0, %s176
      %s178 = sphi 0, %s176
      %s179 = sphi 0, %s178
      %s193 = sphi 0, %s179
      %s197 = sphi 0, %s197
      %s199 = sphi 0, %s197
      %s200 = sphi 0, %s199
      %s214 = sphi 0, %s200
      %s218 = sphi 0, %s218
      %s220 = sphi 0, %s218
      %s221 = sphi 0, %s220
      %s235 = sphi 0, %s221
      %s241 = sphi 0, %s243
      %s244 = sphi 0, %s241
      %s245 = sphi 0, %s244
      %s261 = sphi 0, %s245
    $region4: #{net_forward.1} parent=1 // loop_header_branch
      %21 = sbr.rel (%p19) target = $region8
    $region5: #{net_forward.1} parent=1 // loop_body
      %s23 = ssub.s32 %s18, 1
      %s24 = ssub.s32 %s18, 2
      %s31 = sadd.s32 1, %s26
      %p32 = scmp.ge.s32.totalorder %s31, 10
      %s33 = scalar_select %p32, 0, %s31
      %s34 = sadd.s32 1, %s25
      %s35 = scalar_select %p32, %s34, %s25
      %p36 = scmp.ge.s32.totalorder %s35, 1
      %s37 = scalar_select %p36, 0, %s35
      %s38 = ssub.s32 %s25, %s37
      %s39 = ssub.s32 %s26, %s33
      %s40 = sor.u32 %s38, %s39
      %p41 = scmp.eq.s32.totalorder %s40, 0
      %s43 = sadd.s32 %s42, 1
      %s44 = scalar_select %p41, %s42, %s43
      %p47 = pneg %p41
      %p48 = scmp.eq.s32.totalorder %s18, 9
      %p49 = por %p47, %p48
      %p50 = scmp.ne.s32.totalorder %s42, %s45
      %p51 = scmp.eq.s32.totalorder %s18, 0
      %p52 = por %p50, %p51
      %p53 = scmp.ne.s32.totalorder %s42, %s45
      %p54 = scmp.eq.s32.totalorder %s23, 9
      %p55 = por %p53, %p54
      %p56 = scmp.ne.s32.totalorder %s45, %s46
      %p57 = scmp.eq.s32.totalorder %s23, 0
      %p58 = por %p56, %p57
      %p59 = scmp.ne.s32.totalorder %s45, %s46
      %p60 = scmp.eq.s32.totalorder %s24, 9
      %p61 = por %p59, %p60
      %p63 = scmp.ne.s32.totalorder %s46, %s62
      %p64 = scmp.eq.s32.totalorder %s24, 0
      %p65 = por %p63, %p64
      %s66 = ssub.s32 %s26, %s33
      %p67 = scmp.eq.s32.totalorder %s66, 0
      %s69 = sadd.s32 %s68, 1
      %s70 = scalar_select %p67, %s68, %s69
      %p73 = pneg %p67
      %p74 = scmp.eq.s32.totalorder %s18, 9
      %p75 = por %p73, %p74
      %p76 = scmp.ne.s32.totalorder %s68, %s71
      %p77 = scmp.eq.s32.totalorder %s18, 0
      %p78 = por %p76, %p77
      %p79 = scmp.ne.s32.totalorder %s68, %s71
      %p80 = scmp.eq.s32.totalorder %s23, 9
      %p81 = por %p79, %p80
      %p82 = scmp.ne.s32.totalorder %s71, %s72
      %p83 = scmp.eq.s32.totalorder %s23, 0
      %p84 = por %p82, %p83
      %p85 = scmp.ne.s32.totalorder %s71, %s72
      %p86 = scmp.eq.s32.totalorder %s24, 9
      %p87 = por %p85, %p86
      %p89 = scmp.ne.s32.totalorder %s72, %s88
      %p90 = scmp.eq.s32.totalorder %s24, 0
      %p91 = por %p89, %p90
      %s93 = sadd.s32 %s92, 1
      %p96 = scmp.eq.s32.totalorder %s18, 9
      %p97 = scmp.ne.s32.totalorder %s92, %s94
      %p98 = scmp.eq.s32.totalorder %s18, 0
      %p99 = por %p97, %p98
      %p100 = scmp.ne.s32.totalorder %s92, %s94
      %p101 = scmp.eq.s32.totalorder %s23, 9
      %p102 = por %p100, %p101
      %p103 = scmp.ne.s32.totalorder %s94, %s95
      %p104 = scmp.eq.s32.totalorder %s23, 0
      %p105 = por %p103, %p104
      %p106 = scmp.ne.s32.totalorder %s94, %s95
      %p107 = scmp.eq.s32.totalorder %s24, 9
      %p108 = por %p106, %p107
      %p110 = scmp.ne.s32.totalorder %s95, %s109
      %p111 = scmp.eq.s32.totalorder %s24, 0
      %p112 = por %p110, %p111
      %s114 = sadd.s32 %s113, 1
      %p117 = scmp.eq.s32.totalorder %s18, 9
      %p118 = scmp.ne.s32.totalorder %s113, %s115
      %p119 = scmp.eq.s32.totalorder %s18, 0
      %p120 = por %p118, %p119
      %p121 = scmp.ne.s32.totalorder %s113, %s115
      %p122 = scmp.eq.s32.totalorder %s23, 9
      %p123 = por %p121, %p122
      %p124 = scmp.ne.s32.totalorder %s115, %s116
      %p125 = scmp.eq.s32.totalorder %s23, 0
      %p126 = por %p124, %p125
      %p127 = scmp.ne.s32.totalorder %s115, %s116
      %p128 = scmp.eq.s32.totalorder %s24, 9
      %p129 = por %p127, %p128
      %p131 = scmp.ne.s32.totalorder %s116, %s130
      %p132 = scmp.eq.s32.totalorder %s24, 0
      %p133 = por %p131, %p132
      %s135 = sadd.s32 %s134, 1
      %p138 = scmp.eq.s32.totalorder %s18, 9
      %p139 = scmp.ne.s32.totalorder %s134, %s136
      %p140 = scmp.eq.s32.totalorder %s18, 0
      %p141 = por %p139, %p140
      %p142 = scmp.ne.s32.totalorder %s134, %s136
      %p143 = scmp.eq.s32.totalorder %s23, 9
      %p144 = por %p142, %p143
      %p145 = scmp.ne.s32.totalorder %s136, %s137
      %p146 = scmp.eq.s32.totalorder %s23, 0
      %p147 = por %p145, %p146
      %p148 = scmp.ne.s32.totalorder %s136, %s137
      %p149 = scmp.eq.s32.totalorder %s24, 9
      %p150 = por %p148, %p149
      %p152 = scmp.ne.s32.totalorder %s137, %s151
      %p153 = scmp.eq.s32.totalorder %s24, 0
      %p154 = por %p152, %p153
      %s156 = sadd.s32 %s155, 1
      %p159 = scmp.eq.s32.totalorder %s18, 9
      %p160 = scmp.ne.s32.totalorder %s155, %s157
      %p161 = scmp.eq.s32.totalorder %s18, 0
      %p162 = por %p160, %p161
      %p163 = scmp.ne.s32.totalorder %s155, %s157
      %p164 = scmp.eq.s32.totalorder %s23, 9
      %p165 = por %p163, %p164
      %p166 = scmp.ne.s32.totalorder %s157, %s158
      %p167 = scmp.eq.s32.totalorder %s23, 0
      %p168 = por %p166, %p167
      %p169 = scmp.ne.s32.totalorder %s157, %s158
      %p170 = scmp.eq.s32.totalorder %s24, 9
      %p171 = por %p169, %p170
      %p173 = scmp.ne.s32.totalorder %s158, %s172
      %p174 = scmp.eq.s32.totalorder %s24, 0
      %p175 = por %p173, %p174
      %s177 = sadd.s32 %s176, 1
      %p180 = scmp.eq.s32.totalorder %s18, 9
      %p181 = scmp.ne.s32.totalorder %s176, %s178
      %p182 = scmp.eq.s32.totalorder %s18, 0
      %p183 = por %p181, %p182
      %p184 = scmp.ne.s32.totalorder %s176, %s178
      %p185 = scmp.eq.s32.totalorder %s23, 9
      %p186 = por %p184, %p185
      %p187 = scmp.ne.s32.totalorder %s178, %s179
      %p188 = scmp.eq.s32.totalorder %s23, 0
      %p189 = por %p187, %p188
      %p190 = scmp.ne.s32.totalorder %s178, %s179
      %p191 = scmp.eq.s32.totalorder %s24, 9
      %p192 = por %p190, %p191
      %p194 = scmp.ne.s32.totalorder %s179, %s193
      %p195 = scmp.eq.s32.totalorder %s24, 0
      %p196 = por %p194, %p195
      %s198 = sadd.s32 %s197, 1
      %p201 = scmp.eq.s32.totalorder %s18, 9
      %p202 = scmp.ne.s32.totalorder %s197, %s199
      %p203 = scmp.eq.s32.totalorder %s18, 0
      %p204 = por %p202, %p203
      %p205 = scmp.ne.s32.totalorder %s197, %s199
      %p206 = scmp.eq.s32.totalorder %s23, 9
      %p207 = por %p205, %p206
      %p208 = scmp.ne.s32.totalorder %s199, %s200
      %p209 = scmp.eq.s32.totalorder %s23, 0
      %p210 = por %p208, %p209
      %p211 = scmp.ne.s32.totalorder %s199, %s200
      %p212 = scmp.eq.s32.totalorder %s24, 9
      %p213 = por %p211, %p212
      %p215 = scmp.ne.s32.totalorder %s200, %s214
      %p216 = scmp.eq.s32.totalorder %s24, 0
      %p217 = por %p215, %p216
      %s219 = sadd.s32 %s218, 1
      %p222 = scmp.eq.s32.totalorder %s18, 9
      %p223 = scmp.ne.s32.totalorder %s218, %s220
      %p224 = scmp.eq.s32.totalorder %s18, 0
      %p225 = por %p223, %p224
      %p226 = scmp.ne.s32.totalorder %s218, %s220
      %p227 = scmp.eq.s32.totalorder %s23, 9
      %p228 = por %p226, %p227
      %p229 = scmp.ne.s32.totalorder %s220, %s221
      %p230 = scmp.eq.s32.totalorder %s23, 0
      %p231 = por %p229, %p230
      %p232 = scmp.ne.s32.totalorder %s220, %s221
      %p233 = scmp.eq.s32.totalorder %s24, 9
      %p234 = por %p232, %p233
      %p236 = scmp.ne.s32.totalorder %s221, %s235
      %p237 = scmp.eq.s32.totalorder %s24, 0
      %p238 = por %p236, %p237
      %s239 = ssub.s32 %s25, %s37
      %p240 = scmp.eq.s32.totalorder %s239, 0
      %s242 = sadd.s32 %s241, 1
      %s243 = scalar_select %p240, %s241, %s242
      %p246 = pneg %p240
      %p247 = scmp.eq.s32.totalorder %s18, 9
      %p248 = por %p246, %p247
      %p249 = scmp.ne.s32.totalorder %s241, %s244
      %p250 = scmp.eq.s32.totalorder %s18, 0
      %p251 = por %p249, %p250
      %p252 = scmp.ne.s32.totalorder %s241, %s244
      %p253 = scmp.eq.s32.totalorder %s23, 9
      %p254 = por %p252, %p253
      %p255 = scmp.ne.s32.totalorder %s244, %s245
      %p256 = scmp.eq.s32.totalorder %s23, 0
      %p257 = por %p255, %p256
      %p258 = scmp.ne.s32.totalorder %s244, %s245
      %p259 = scmp.eq.s32.totalorder %s24, 9
      %p260 = por %p258, %p259
      %p262 = scmp.ne.s32.totalorder %s245, %s261
      %p263 = scmp.eq.s32.totalorder %s24, 0
      %p264 = por %p262, %p263
      %p265 = scmp.le.s32.totalorder 1, %s18
      %p266 = scmp.lt.s32.totalorder %s18, 11
      %p267 = pnand %p265, %p266
      %p268 = pneg %p267
      // Predicated region
      $region9: #{net_forward.1} parent=5 // pred_check
        _
      $region10: #{net_forward.1} parent=5 // pred_check_branch
        %270 = sbr.rel (%p267) target = $region12
      $region11: #{net_forward.1} parent=5 // pred_region
        %s271 = ssub.s32 %s18, 1
        // Predicated region
        $region13: #{net_forward.1} parent=11 // pred_check
          %p272 = pneg %p105
        $region14: #{net_forward.1} parent=11 // pred_check_branch
          %274 = sbr.rel (%p272) target = $region16
        $region15: #{net_forward.1} parent=11 // pred_region
          _
        $region16: #{net_forward.1} parent=11 // pred_fallthru
          _
        // Predicated region
        $region17: #{net_forward.1} parent=11 // pred_check
          %p275 = pneg %p126
        $region18: #{net_forward.1} parent=11 // pred_check_branch
          %277 = sbr.rel (%p275) target = $region20
        $region19: #{net_forward.1} parent=11 // pred_region
          _
        $region20: #{net_forward.1} parent=11 // pred_fallthru
          _
        // Predicated region
        $region21: #{net_forward.1} parent=11 // pred_check
          %p278 = pneg %p147
        $region22: #{net_forward.1} parent=11 // pred_check_branch
          %280 = sbr.rel (%p278) target = $region24
        $region23: #{net_forward.1} parent=11 // pred_region
          _
        $region24: #{net_forward.1} parent=11 // pred_fallthru
          _
        // Predicated region
        $region25: #{net_forward.1} parent=11 // pred_check
          %p281 = pneg %p168
        $region26: #{net_forward.1} parent=11 // pred_check_branch
          %283 = sbr.rel (%p281) target = $region28
        $region27: #{net_forward.1} parent=11 // pred_region
          _
        $region28: #{net_forward.1} parent=11 // pred_fallthru
          _
        // Predicated region
        $region29: #{net_forward.1} parent=11 // pred_check
          %p284 = pneg %p189
        $region30: #{net_forward.1} parent=11 // pred_check_branch
          %286 = sbr.rel (%p284) target = $region32
        $region31: #{net_forward.1} parent=11 // pred_region
          _
        $region32: #{net_forward.1} parent=11 // pred_fallthru
          _
        // Predicated region
        $region33: #{net_forward.1} parent=11 // pred_check
          %p287 = pneg %p210
        $region34: #{net_forward.1} parent=11 // pred_check_branch
          %289 = sbr.rel (%p287) target = $region36
        $region35: #{net_forward.1} parent=11 // pred_region
          _
        $region36: #{net_forward.1} parent=11 // pred_fallthru
          _
        // Predicated region
        $region37: #{net_forward.1} parent=11 // pred_check
          %p290 = pneg %p231
        $region38: #{net_forward.1} parent=11 // pred_check_branch
          %292 = sbr.rel (%p290) target = $region40
        $region39: #{net_forward.1} parent=11 // pred_region
          _
        $region40: #{net_forward.1} parent=11 // pred_fallthru
          _
      $region12: #{net_forward.1} parent=5 // pred_fallthru
        _
      %p293 = scmp.lt.s32.totalorder %s18, 10
      // Predicated region
      $region41: #{net_forward.1} parent=5 // pred_check
        %p294 = pneg %p293
      $region42: #{net_forward.1} parent=5 // pred_check_branch
        %296 = sbr.rel (%p294) target = $region44
      $region43: #{net_forward.1} parent=5 // pred_region
        // Predicated region
        $region45: #{net_forward.1} parent=43 // pred_check
          %p297 = pneg %p52
        $region46: #{net_forward.1} parent=43 // pred_check_branch
          %299 = sbr.rel (%p297) target = $region48
        $region47: #{net_forward.1} parent=43 // pred_region
          %s300 = smul.u32 24, %s26
          %p301 = scmp.lt.s32.totalorder %s25, 0
          %s302 = scalar_select %p301, %s25, 0
          %p303 = scmp.lt.s32.totalorder %s300, 239
          %s304 = scalar_select %p303, %s300, 239
          %s305 = smul.addr %s302, 240
          %s306 = sadd.s32 %s304, %s305
          %s307 = smul.addr %s306, 8
          %s308 = scalar_lea.vmem %s0, %s307
          %s309 = smul.u32 24, %s26
        $region48: #{net_forward.1} parent=43 // pred_fallthru
          _
        // Predicated region
        $region49: #{net_forward.1} parent=43 // pred_check
          %p310 = pneg %p78
        $region50: #{net_forward.1} parent=43 // pred_check_branch
          %312 = sbr.rel (%p310) target = $region52
        $region51: #{net_forward.1} parent=43 // pred_region
          %s313 = sand.u32 %s68, 1
          %s314 = scalar_lea.sflag [#allocation4], %s313
          %s315 = sand.u32 %s68, 1
          %s316 = smul.addr %s315, 18432
          %s317 = scalar_lea.vmem [#allocation3], %s316
          %s318 = smul.u32 384, %s26
          %s320 = ssub.s32 294912, 294912
          %321 = vsyncadd %s314, %s320
          %s322 = smul.addr %s318, 6
          %s323 = smul.addr %s322, 128
          %s324 = scalar_lea.hbm %s1, %s323
          %s325 = sshll.u32 %s317, 4
          %s326 = int_to_ptr.vmem [resolvable:$true] %s325
          %331 = dma.hbm_to_vmem [thread:$0]  %s324, 294912, %s326, %s314, 768, 768, 48
        $region52: #{net_forward.1} parent=43 // pred_fallthru
          _
      $region44: #{net_forward.1} parent=5 // pred_fallthru
        _
      %p332 = scmp.le.s32.totalorder 1, %s18
      %p333 = scmp.lt.s32.totalorder %s18, 11
      %p334 = pnand %p332, %p333
      %p335 = pneg %p334
      // Predicated region
      $region53: #{net_forward.1} parent=5 // pred_check
        _
      $region54: #{net_forward.1} parent=5 // pred_check_branch
        %337 = sbr.rel (%p334) target = $region56
      $region55: #{net_forward.1} parent=5 // pred_region
        %s338 = ssub.s32 %s18, 1
        %s339 = sand.u32 %s71, 1
        %s340 = scalar_lea.sflag [#allocation4], %s339
        %s341 = sand.u32 %s71, 1
        %s342 = smul.addr %s341, 18432
        %s343 = scalar_lea.vmem [#allocation3], %s342
        // Predicated region
        $region57: #{net_forward.1} parent=55 // pred_check
          %p344 = pneg %p84
        $region58: #{net_forward.1} parent=55 // pred_check_branch
          %346 = sbr.rel (%p344) target = $region60
        $region59: #{net_forward.1} parent=55 // pred_region
          %347 = dma.done %s340, 294912
        $region60: #{net_forward.1} parent=55 // pred_fallthru
          _
        %s348 = smul.u32 24, %s28
        %p349 = scmp.lt.s32.totalorder %s27, 0
        %s350 = scalar_select %p349, %s27, 0
        %p351 = scmp.lt.s32.totalorder %s348, 239
        %s352 = scalar_select %p351, %s348, 239
        %s353 = smul.addr %s350, 240
        %s354 = sadd.s32 %s352, %s353
        %s355 = smul.addr %s354, 8
        %s356 = scalar_lea.vmem %s0, %s355
        %p357 = pneg %p58
        %p358 = pneg %p55
        %s359 = sand.u32 %s71, 1
        %s360 = scalar_lea.sflag [#allocation4], %s359
        %s361 = sand.u32 %s71, 1
        %s362 = smul.addr %s361, 18432
        %s363 = scalar_lea.vmem [#allocation3], %s362
        %p364 = pneg %p84
        %p365 = pneg %p81
        %p366 = pneg %p105
        %p367 = pneg %p102
        %p368 = pneg %p126
        %p369 = pneg %p123
        %p370 = pneg %p147
        %p371 = pneg %p144
        %p372 = pneg %p168
        %p373 = pneg %p165
        %p374 = pneg %p189
        %p375 = pneg %p186
        %p376 = pneg %p210
        %p377 = pneg %p207
        %p378 = pneg %p231
        %p379 = pneg %p228
        %p380 = pneg %p257
        %p381 = pneg %p254
        %p382 = scmp.lt.s32.totalorder %s27, 0
        %s383 = scalar_select %p382, %s27, 0
        %s384 = smul.addr %s383, 8
        %s385 = scalar_lea.vmem %s9, %s384
        %s386 = smul.u32 24, %s28
        %p387 = scmp.lt.s32.totalorder %s27, 0
        %s388 = scalar_select %p387, %s27, 0
        %p389 = scmp.lt.s32.totalorder %s386, 239
        %s390 = scalar_select %p389, %s386, 239
        %s391 = smul.addr %s388, 240
        %s392 = sadd.s32 %s390, %s391
        %s393 = smul.addr %s392, 8
        %s394 = scalar_lea.vmem %s0, %s393
        %s395 = smul.u32 24, %s28
        %s396 = smul.u32 384, %s28
        %p397 = scmp.lt.s32.totalorder %s27, 0
        %s398 = scalar_select %p397, %s27, 0
        %s399 = smul.addr %s398, 8
        %s400 = scalar_lea.vmem %s9, %s399
        %p401 = scmp.eq.s32.totalorder %s28, 0
        // Predicated region
        $region61: #{net_forward.1} parent=55 // pred_check
          %p402 = pneg %p401
        $region62: #{net_forward.1} parent=55 // pred_check_branch
          %404 = sbr.rel (%p402) target = $region64
        $region63: #{net_forward.1} parent=55 // pred_region
          %405 = vst [vmem:[#allocation2] sm:$0xff] 0.0
          %406 = vst [vmem:[#allocation2 + $0x8] sm:$0xff] 0.0
          %407 = vst [vmem:[#allocation2 + $0x10] sm:$0xff] 0.0
          %408 = vst [vmem:[#allocation2 + $0x18] sm:$0xff] 0.0
          %409 = vst [vmem:[#allocation2 + $0x20] sm:$0xff] 0.0
          %vm410 = vcmask 490496
          %411 = vst.msk [vmem:[#allocation2 + $0x28] sm:$0xff] %vm410, 0.0
        $region64: #{net_forward.1} parent=55 // pred_fallthru
          _
        %v412 = vld [vmem:[#allocation2] sm:$0xff]
        %v413 = vld [vmem:[#allocation2 + $0x8] sm:$0xff]
        %v414 = vld [vmem:[#allocation2 + $0x10] sm:$0xff]
        %v415 = vld [vmem:[#allocation2 + $0x18] sm:$0xff]
        %v416 = vld [vmem:[#allocation2 + $0x20] sm:$0xff]
        %v417 = vld [vmem:[#allocation2 + $0x28] sm:$0xff]
        %v418 = vld [vmem:[%s394] sm:$0xff]
        %v419 = vld [vmem:[%s394 + $0x8] sm:$0xff]
        %v420 = vld [vmem:[%s394 + $0x10] sm:$0xff]
        %v421 = vld [vmem:[%s394 + $0x18] sm:$0xff]
        %v422 = vld [vmem:[%s394 + $0x20] sm:$0xff]
        %v423 = vld [vmem:[%s394 + $0x28] sm:$0xff]
        %v424 = vld [vmem:[%s394 + $0x30] sm:$0xff]
        %v425 = vld [vmem:[%s394 + $0x38] sm:$0xff]
        %v426 = vld [vmem:[%s394 + $0x40] sm:$0xff]
        %v427 = vld [vmem:[%s394 + $0x48] sm:$0xff]
        %v428 = vld [vmem:[%s394 + $0x50] sm:$0xff]
        %v429 = vld [vmem:[%s394 + $0x58] sm:$0xff]
        %v430 = vld [vmem:[%s394 + $0x60] sm:$0xff]
        %v431 = vld [vmem:[%s394 + $0x68] sm:$0xff]
        %v432 = vld [vmem:[%s394 + $0x70] sm:$0xff]
        %v433 = vld [vmem:[%s394 + $0x78] sm:$0xff]
        %v434 = vld [vmem:[%s394 + $0x80] sm:$0xff]
        %v435 = vld [vmem:[%s394 + $0x88] sm:$0xff]
        %v436 = vld [vmem:[%s394 + $0x90] sm:$0xff]
        %v437 = vld [vmem:[%s394 + $0x98] sm:$0xff]
        %v438 = vld [vmem:[%s394 + $0xa0] sm:$0xff]
        %v439 = vld [vmem:[%s394 + $0xa8] sm:$0xff]
        %v440 = vld [vmem:[%s394 + $0xb0] sm:$0xff]
        %v441 = vld [vmem:[%s394 + $0xb8] sm:$0xff]
        %v442 = vld [vmem:[%s343] sm:$0xff]
        %v443 = vld [vmem:[%s343 + $0x8] sm:$0xff]
        %v444 = vld [vmem:[%s343 + $0x10] sm:$0xff]
        %v445 = vld [vmem:[%s343 + $0x18] sm:$0xff]
        %v446 = vld [vmem:[%s343 + $0x20] sm:$0xff]
        %v447 = vld [vmem:[%s343 + $0x28] sm:$0xff]
        %v448 = vld [vmem:[%s343 + $0x30] sm:$0xff]
        %v449 = vld [vmem:[%s343 + $0x38] sm:$0xff]
        %v450 = vld [vmem:[%s343 + $0x40] sm:$0xff]
        %v451 = vld [vmem:[%s343 + $0x48] sm:$0xff]
        %v452 = vld [vmem:[%s343 + $0x50] sm:$0xff]
        %v453 = vld [vmem:[%s343 + $0x58] sm:$0xff]
        %v454 = vld [vmem:[%s343 + $0x60] sm:$0xff]
        %v455 = vld [vmem:[%s343 + $0x68] sm:$0xff]
        %v456 = vld [vmem:[%s343 + $0x70] sm:$0xff]
        %v457 = vld [vmem:[%s343 + $0x78] sm:$0xff]
        %v458 = vld [vmem:[%s343 + $0x80] sm:$0xff]
        %v459 = vld [vmem:[%s343 + $0x88] sm:$0xff]
        %v460 = vld [vmem:[%s343 + $0x90] sm:$0xff]
        %v461 = vld [vmem:[%s343 + $0x98] sm:$0xff]
        %v462 = vld [vmem:[%s343 + $0xa0] sm:$0xff]
        %v463 = vld [vmem:[%s343 + $0xa8] sm:$0xff]
        %v464 = vld [vmem:[%s343 + $0xb0] sm:$0xff]
        %v465 = vld [vmem:[%s343 + $0xb8] sm:$0xff]
        %v466 = vld [vmem:[%s343 + $0xc0] sm:$0xff]
        %v467 = vld [vmem:[%s343 + $0xc8] sm:$0xff]
        %v468 = vld [vmem:[%s343 + $0xd0] sm:$0xff]
        %v469 = vld [vmem:[%s343 + $0xd8] sm:$0xff]
        %v470 = vld [vmem:[%s343 + $0xe0] sm:$0xff]
        %v471 = vld [vmem:[%s343 + $0xe8] sm:$0xff]
        %v472 = vld [vmem:[%s343 + $0xf0] sm:$0xff]
        %v473 = vld [vmem:[%s343 + $0xf8] sm:$0xff]
        %v474 = vld [vmem:[%s343 + $0x100] sm:$0xff]
        %v475 = vld [vmem:[%s343 + $0x108] sm:$0xff]
        %v476 = vld [vmem:[%s343 + $0x110] sm:$0xff]
        %v477 = vld [vmem:[%s343 + $0x118] sm:$0xff]
        %v478 = vld [vmem:[%s343 + $0x120] sm:$0xff]
        %v479 = vld [vmem:[%s343 + $0x128] sm:$0xff]
        %v480 = vld [vmem:[%s343 + $0x130] sm:$0xff]
        %v481 = vld [vmem:[%s343 + $0x138] sm:$0xff]
        %v482 = vld [vmem:[%s343 + $0x140] sm:$0xff]
        %v483 = vld [vmem:[%s343 + $0x148] sm:$0xff]
        %v484 = vld [vmem:[%s343 + $0x150] sm:$0xff]
        %v485 = vld [vmem:[%s343 + $0x158] sm:$0xff]
        %v486 = vld [vmem:[%s343 + $0x160] sm:$0xff]
        %v487 = vld [vmem:[%s343 + $0x168] sm:$0xff]
        %v488 = vld [vmem:[%s343 + $0x170] sm:$0xff]
        %v489 = vld [vmem:[%s343 + $0x178] sm:$0xff]
        %v490 = vld [vmem:[%s343 + $0x180] sm:$0xff]
        %v491 = vld [vmem:[%s343 + $0x188] sm:$0xff]
        %v492 = vld [vmem:[%s343 + $0x190] sm:$0xff]
        %v493 = vld [vmem:[%s343 + $0x198] sm:$0xff]
        %v494 = vld [vmem:[%s343 + $0x1a0] sm:$0xff]
        %v495 = vld [vmem:[%s343 + $0x1a8] sm:$0xff]
        %v496 = vld [vmem:[%s343 + $0x1b0] sm:$0xff]
        %v497 = vld [vmem:[%s343 + $0x1b8] sm:$0xff]
        %v498 = vld [vmem:[%s343 + $0x1c0] sm:$0xff]
        %v499 = vld [vmem:[%s343 + $0x1c8] sm:$0xff]
        %v500 = vld [vmem:[%s343 + $0x1d0] sm:$0xff]
        %v501 = vld [vmem:[%s343 + $0x1d8] sm:$0xff]
        %v502 = vld [vmem:[%s343 + $0x1e0] sm:$0xff]
        %v503 = vld [vmem:[%s343 + $0x1e8] sm:$0xff]
        %v504 = vld [vmem:[%s343 + $0x1f0] sm:$0xff]
        %v505 = vld [vmem:[%s343 + $0x1f8] sm:$0xff]
        %v506 = vld [vmem:[%s343 + $0x200] sm:$0xff]
        %v507 = vld [vmem:[%s343 + $0x208] sm:$0xff]
        %v508 = vld [vmem:[%s343 + $0x210] sm:$0xff]
        %v509 = vld [vmem:[%s343 + $0x218] sm:$0xff]
        %v510 = vld [vmem:[%s343 + $0x220] sm:$0xff]
        %v511 = vld [vmem:[%s343 + $0x228] sm:$0xff]
        %v512 = vld [vmem:[%s343 + $0x230] sm:$0xff]
        %v513 = vld [vmem:[%s343 + $0x238] sm:$0xff]
        %v514 = vld [vmem:[%s343 + $0x240] sm:$0xff]
        %v515 = vld [vmem:[%s343 + $0x248] sm:$0xff]
        %v516 = vld [vmem:[%s343 + $0x250] sm:$0xff]
        %v517 = vld [vmem:[%s343 + $0x258] sm:$0xff]
        %v518 = vld [vmem:[%s343 + $0x260] sm:$0xff]
        %v519 = vld [vmem:[%s343 + $0x268] sm:$0xff]
        %v520 = vld [vmem:[%s343 + $0x270] sm:$0xff]
        %v521 = vld [vmem:[%s343 + $0x278] sm:$0xff]
        %v522 = vld [vmem:[%s343 + $0x280] sm:$0xff]
        %v523 = vld [vmem:[%s343 + $0x288] sm:$0xff]
        %v524 = vld [vmem:[%s343 + $0x290] sm:$0xff]
        %v525 = vld [vmem:[%s343 + $0x298] sm:$0xff]
        %v526 = vld [vmem:[%s343 + $0x2a0] sm:$0xff]
        %v527 = vld [vmem:[%s343 + $0x2a8] sm:$0xff]
        %v528 = vld [vmem:[%s343 + $0x2b0] sm:$0xff]
        %v529 = vld [vmem:[%s343 + $0x2b8] sm:$0xff]
        %v530 = vld [vmem:[%s343 + $0x2c0] sm:$0xff]
        %v531 = vld [vmem:[%s343 + $0x2c8] sm:$0xff]
        %v532 = vld [vmem:[%s343 + $0x2d0] sm:$0xff]
        %v533 = vld [vmem:[%s343 + $0x2d8] sm:$0xff]
        %v534 = vld [vmem:[%s343 + $0x2e0] sm:$0xff]
        %v535 = vld [vmem:[%s343 + $0x2e8] sm:$0xff]
        %v536 = vld [vmem:[%s343 + $0x2f0] sm:$0xff]
        %v537 = vld [vmem:[%s343 + $0x2f8] sm:$0xff]
        %v538 = vld [vmem:[%s343 + $0x300] sm:$0xff]
        %v539 = vld [vmem:[%s343 + $0x308] sm:$0xff]
        %v540 = vld [vmem:[%s343 + $0x310] sm:$0xff]
        %v541 = vld [vmem:[%s343 + $0x318] sm:$0xff]
        %v542 = vld [vmem:[%s343 + $0x320] sm:$0xff]
        %v543 = vld [vmem:[%s343 + $0x328] sm:$0xff]
        %v544 = vld [vmem:[%s343 + $0x330] sm:$0xff]
        %v545 = vld [vmem:[%s343 + $0x338] sm:$0xff]
        %v546 = vld [vmem:[%s343 + $0x340] sm:$0xff]
        %v547 = vld [vmem:[%s343 + $0x348] sm:$0xff]
        %v548 = vld [vmem:[%s343 + $0x350] sm:$0xff]
        %v549 = vld [vmem:[%s343 + $0x358] sm:$0xff]
        %v550 = vld [vmem:[%s343 + $0x360] sm:$0xff]
        %v551 = vld [vmem:[%s343 + $0x368] sm:$0xff]
        %v552 = vld [vmem:[%s343 + $0x370] sm:$0xff]
        %v553 = vld [vmem:[%s343 + $0x378] sm:$0xff]
        %v554 = vld [vmem:[%s343 + $0x380] sm:$0xff]
        %v555 = vld [vmem:[%s343 + $0x388] sm:$0xff]
        %v556 = vld [vmem:[%s343 + $0x390] sm:$0xff]
        %v557 = vld [vmem:[%s343 + $0x398] sm:$0xff]
        %v558 = vld [vmem:[%s343 + $0x3a0] sm:$0xff]
        %v559 = vld [vmem:[%s343 + $0x3a8] sm:$0xff]
        %v560 = vld [vmem:[%s343 + $0x3b0] sm:$0xff]
        %v561 = vld [vmem:[%s343 + $0x3b8] sm:$0xff]
        %v562 = vld [vmem:[%s343 + $0x3c0] sm:$0xff]
        %v563 = vld [vmem:[%s343 + $0x3c8] sm:$0xff]
        %v564 = vld [vmem:[%s343 + $0x3d0] sm:$0xff]
        %v565 = vld [vmem:[%s343 + $0x3d8] sm:$0xff]
        %v566 = vld [vmem:[%s343 + $0x3e0] sm:$0xff]
        %v567 = vld [vmem:[%s343 + $0x3e8] sm:$0xff]
        %v568 = vld [vmem:[%s343 + $0x3f0] sm:$0xff]
        %v569 = vld [vmem:[%s343 + $0x3f8] sm:$0xff]
        %v570 = vld [vmem:[%s343 + $0x400] sm:$0xff]
        %v571 = vld [vmem:[%s343 + $0x408] sm:$0xff]
        %v572 = vld [vmem:[%s343 + $0x410] sm:$0xff]
        %v573 = vld [vmem:[%s343 + $0x418] sm:$0xff]
        %v574 = vld [vmem:[%s343 + $0x420] sm:$0xff]
        %v575 = vld [vmem:[%s343 + $0x428] sm:$0xff]
        %v576 = vld [vmem:[%s343 + $0x430] sm:$0xff]
        %v577 = vld [vmem:[%s343 + $0x438] sm:$0xff]
        %v578 = vld [vmem:[%s343 + $0x440] sm:$0xff]
        %v579 = vld [vmem:[%s343 + $0x448] sm:$0xff]
        %v580 = vld [vmem:[%s343 + $0x450] sm:$0xff]
        %v581 = vld [vmem:[%s343 + $0x458] sm:$0xff]
        %v582 = vld [vmem:[%s343 + $0x460] sm:$0xff]
        %v583 = vld [vmem:[%s343 + $0x468] sm:$0xff]
        %v584 = vld [vmem:[%s343 + $0x470] sm:$0xff]
        %v585 = vld [vmem:[%s343 + $0x478] sm:$0xff]
        %v586 = vld [vmem:[%s343 + $0x480] sm:$0xff]
        %v587 = vld [vmem:[%s343 + $0x488] sm:$0xff]
        %v588 = vld [vmem:[%s343 + $0x490] sm:$0xff]
        %v589 = vld [vmem:[%s343 + $0x498] sm:$0xff]
        %v590 = vld [vmem:[%s343 + $0x4a0] sm:$0xff]
        %v591 = vld [vmem:[%s343 + $0x4a8] sm:$0xff]
        %v592 = vld [vmem:[%s343 + $0x4b0] sm:$0xff]
        %v593 = vld [vmem:[%s343 + $0x4b8] sm:$0xff]
        %v594 = vld [vmem:[%s343 + $0x4c0] sm:$0xff]
        %v595 = vld [vmem:[%s343 + $0x4c8] sm:$0xff]
        %v596 = vld [vmem:[%s343 + $0x4d0] sm:$0xff]
        %v597 = vld [vmem:[%s343 + $0x4d8] sm:$0xff]
        %v598 = vld [vmem:[%s343 + $0x4e0] sm:$0xff]
        %v599 = vld [vmem:[%s343 + $0x4e8] sm:$0xff]
        %v600 = vld [vmem:[%s343 + $0x4f0] sm:$0xff]
        %v601 = vld [vmem:[%s343 + $0x4f8] sm:$0xff]
        %v602 = vld [vmem:[%s343 + $0x500] sm:$0xff]
        %v603 = vld [vmem:[%s343 + $0x508] sm:$0xff]
        %v604 = vld [vmem:[%s343 + $0x510] sm:$0xff]
        %v605 = vld [vmem:[%s343 + $0x518] sm:$0xff]
        %v606 = vld [vmem:[%s343 + $0x520] sm:$0xff]
        %v607 = vld [vmem:[%s343 + $0x528] sm:$0xff]
        %v608 = vld [vmem:[%s343 + $0x530] sm:$0xff]
        %v609 = vld [vmem:[%s343 + $0x538] sm:$0xff]
        %v610 = vld [vmem:[%s343 + $0x540] sm:$0xff]
        %v611 = vld [vmem:[%s343 + $0x548] sm:$0xff]
        %v612 = vld [vmem:[%s343 + $0x550] sm:$0xff]
        %v613 = vld [vmem:[%s343 + $0x558] sm:$0xff]
        %v614 = vld [vmem:[%s343 + $0x560] sm:$0xff]
        %v615 = vld [vmem:[%s343 + $0x568] sm:$0xff]
        %v616 = vld [vmem:[%s343 + $0x570] sm:$0xff]
        %v617 = vld [vmem:[%s343 + $0x578] sm:$0xff]
        %v618 = vld [vmem:[%s343 + $0x580] sm:$0xff]
        %v619 = vld [vmem:[%s343 + $0x588] sm:$0xff]
        %v620 = vld [vmem:[%s343 + $0x590] sm:$0xff]
        %v621 = vld [vmem:[%s343 + $0x598] sm:$0xff]
        %v622 = vld [vmem:[%s343 + $0x5a0] sm:$0xff]
        %v623 = vld [vmem:[%s343 + $0x5a8] sm:$0xff]
        %v624 = vld [vmem:[%s343 + $0x5b0] sm:$0xff]
        %v625 = vld [vmem:[%s343 + $0x5b8] sm:$0xff]
        %v626 = vld [vmem:[%s343 + $0x5c0] sm:$0xff]
        %v627 = vld [vmem:[%s343 + $0x5c8] sm:$0xff]
        %v628 = vld [vmem:[%s343 + $0x5d0] sm:$0xff]
        %v629 = vld [vmem:[%s343 + $0x5d8] sm:$0xff]
        %v630 = vld [vmem:[%s343 + $0x5e0] sm:$0xff]
        %v631 = vld [vmem:[%s343 + $0x5e8] sm:$0xff]
        %v632 = vld [vmem:[%s343 + $0x5f0] sm:$0xff]
        %v633 = vld [vmem:[%s343 + $0x5f8] sm:$0xff]
        %v634 = vld [vmem:[%s343 + $0x600] sm:$0xff]
        %v635 = vld [vmem:[%s343 + $0x608] sm:$0xff]
        %v636 = vld [vmem:[%s343 + $0x610] sm:$0xff]
        %v637 = vld [vmem:[%s343 + $0x618] sm:$0xff]
        %v638 = vld [vmem:[%s343 + $0x620] sm:$0xff]
        %v639 = vld [vmem:[%s343 + $0x628] sm:$0xff]
        %v640 = vld [vmem:[%s343 + $0x630] sm:$0xff]
        %v641 = vld [vmem:[%s343 + $0x638] sm:$0xff]
        %v642 = vld [vmem:[%s343 + $0x640] sm:$0xff]
        %v643 = vld [vmem:[%s343 + $0x648] sm:$0xff]
        %v644 = vld [vmem:[%s343 + $0x650] sm:$0xff]
        %v645 = vld [vmem:[%s343 + $0x658] sm:$0xff]
        %v646 = vld [vmem:[%s343 + $0x660] sm:$0xff]
        %v647 = vld [vmem:[%s343 + $0x668] sm:$0xff]
        %v648 = vld [vmem:[%s343 + $0x670] sm:$0xff]
        %v649 = vld [vmem:[%s343 + $0x678] sm:$0xff]
        %v650 = vld [vmem:[%s343 + $0x680] sm:$0xff]
        %v651 = vld [vmem:[%s343 + $0x688] sm:$0xff]
        %v652 = vld [vmem:[%s343 + $0x690] sm:$0xff]
        %v653 = vld [vmem:[%s343 + $0x698] sm:$0xff]
        %v654 = vld [vmem:[%s343 + $0x6a0] sm:$0xff]
        %v655 = vld [vmem:[%s343 + $0x6a8] sm:$0xff]
        %v656 = vld [vmem:[%s343 + $0x6b0] sm:$0xff]
        %v657 = vld [vmem:[%s343 + $0x6b8] sm:$0xff]
        %v658 = vld [vmem:[%s343 + $0x6c0] sm:$0xff]
        %v659 = vld [vmem:[%s343 + $0x6c8] sm:$0xff]
        %v660 = vld [vmem:[%s343 + $0x6d0] sm:$0xff]
        %v661 = vld [vmem:[%s343 + $0x6d8] sm:$0xff]
        %v662 = vld [vmem:[%s343 + $0x6e0] sm:$0xff]
        %v663 = vld [vmem:[%s343 + $0x6e8] sm:$0xff]
        %v664 = vld [vmem:[%s343 + $0x6f0] sm:$0xff]
        %v665 = vld [vmem:[%s343 + $0x6f8] sm:$0xff]
        %v666 = vld [vmem:[%s343 + $0x700] sm:$0xff]
        %v667 = vld [vmem:[%s343 + $0x708] sm:$0xff]
        %v668 = vld [vmem:[%s343 + $0x710] sm:$0xff]
        %v669 = vld [vmem:[%s343 + $0x718] sm:$0xff]
        %v670 = vld [vmem:[%s343 + $0x720] sm:$0xff]
        %v671 = vld [vmem:[%s343 + $0x728] sm:$0xff]
        %v672 = vld [vmem:[%s343 + $0x730] sm:$0xff]
        %v673 = vld [vmem:[%s343 + $0x738] sm:$0xff]
        %v674 = vld [vmem:[%s343 + $0x740] sm:$0xff]
        %v675 = vld [vmem:[%s343 + $0x748] sm:$0xff]
        %v676 = vld [vmem:[%s343 + $0x750] sm:$0xff]
        %v677 = vld [vmem:[%s343 + $0x758] sm:$0xff]
        %v678 = vld [vmem:[%s343 + $0x760] sm:$0xff]
        %v679 = vld [vmem:[%s343 + $0x768] sm:$0xff]
        %v680 = vld [vmem:[%s343 + $0x770] sm:$0xff]
        %v681 = vld [vmem:[%s343 + $0x778] sm:$0xff]
        %v682 = vld [vmem:[%s343 + $0x780] sm:$0xff]
        %v683 = vld [vmem:[%s343 + $0x788] sm:$0xff]
        %v684 = vld [vmem:[%s343 + $0x790] sm:$0xff]
        %v685 = vld [vmem:[%s343 + $0x798] sm:$0xff]
        %v686 = vld [vmem:[%s343 + $0x7a0] sm:$0xff]
        %v687 = vld [vmem:[%s343 + $0x7a8] sm:$0xff]
        %v688 = vld [vmem:[%s343 + $0x7b0] sm:$0xff]
        %v689 = vld [vmem:[%s343 + $0x7b8] sm:$0xff]
        %v690 = vld [vmem:[%s343 + $0x7c0] sm:$0xff]
        %v691 = vld [vmem:[%s343 + $0x7c8] sm:$0xff]
        %v692 = vld [vmem:[%s343 + $0x7d0] sm:$0xff]
        %v693 = vld [vmem:[%s343 + $0x7d8] sm:$0xff]
        %v694 = vld [vmem:[%s343 + $0x7e0] sm:$0xff]
        %v695 = vld [vmem:[%s343 + $0x7e8] sm:$0xff]
        %v696 = vld [vmem:[%s343 + $0x7f0] sm:$0xff]
        %v697 = vld [vmem:[%s343 + $0x7f8] sm:$0xff]
        %v698 = vld [vmem:[%s343 + $0x800] sm:$0xff]
        %v699 = vld [vmem:[%s343 + $0x808] sm:$0xff]
        %v700 = vld [vmem:[%s343 + $0x810] sm:$0xff]
        %v701 = vld [vmem:[%s343 + $0x818] sm:$0xff]
        %v702 = vld [vmem:[%s343 + $0x820] sm:$0xff]
        %v703 = vld [vmem:[%s343 + $0x828] sm:$0xff]
        %v704 = vld [vmem:[%s343 + $0x830] sm:$0xff]
        %v705 = vld [vmem:[%s343 + $0x838] sm:$0xff]
        %v706 = vld [vmem:[%s343 + $0x840] sm:$0xff]
        %v707 = vld [vmem:[%s343 + $0x848] sm:$0xff]
        %v708 = vld [vmem:[%s343 + $0x850] sm:$0xff]
        %v709 = vld [vmem:[%s343 + $0x858] sm:$0xff]
        %v710 = vld [vmem:[%s343 + $0x860] sm:$0xff]
        %v711 = vld [vmem:[%s343 + $0x868] sm:$0xff]
        %v712 = vld [vmem:[%s343 + $0x870] sm:$0xff]
        %v713 = vld [vmem:[%s343 + $0x878] sm:$0xff]
        %v714 = vld [vmem:[%s343 + $0x880] sm:$0xff]
        %v715 = vld [vmem:[%s343 + $0x888] sm:$0xff]
        %v716 = vld [vmem:[%s343 + $0x890] sm:$0xff]
        %v717 = vld [vmem:[%s343 + $0x898] sm:$0xff]
        %v718 = vld [vmem:[%s343 + $0x8a0] sm:$0xff]
        %v719 = vld [vmem:[%s343 + $0x8a8] sm:$0xff]
        %v720 = vld [vmem:[%s343 + $0x8b0] sm:$0xff]
        %v721 = vld [vmem:[%s343 + $0x8b8] sm:$0xff]
        %v722 = vld [vmem:[%s343 + $0x8c0] sm:$0xff]
        %v723 = vld [vmem:[%s343 + $0x8c8] sm:$0xff]
        %v724 = vld [vmem:[%s343 + $0x8d0] sm:$0xff]
        %v725 = vld [vmem:[%s343 + $0x8d8] sm:$0xff]
        %v726 = vld [vmem:[%s343 + $0x8e0] sm:$0xff]
        %v727 = vld [vmem:[%s343 + $0x8e8] sm:$0xff]
        %v728 = vld [vmem:[%s343 + $0x8f0] sm:$0xff]
        %v729 = vld [vmem:[%s343 + $0x8f8] sm:$0xff]
        %v730 = vld [vmem:[%s343 + $0x900] sm:$0xff]
        %v731 = vld [vmem:[%s343 + $0x908] sm:$0xff]
        %v732 = vld [vmem:[%s343 + $0x910] sm:$0xff]
        %v733 = vld [vmem:[%s343 + $0x918] sm:$0xff]
        %v734 = vld [vmem:[%s343 + $0x920] sm:$0xff]
        %v735 = vld [vmem:[%s343 + $0x928] sm:$0xff]
        %v736 = vld [vmem:[%s343 + $0x930] sm:$0xff]
        %v737 = vld [vmem:[%s343 + $0x938] sm:$0xff]
        %v738 = vld [vmem:[%s343 + $0x940] sm:$0xff]
        %v739 = vld [vmem:[%s343 + $0x948] sm:$0xff]
        %v740 = vld [vmem:[%s343 + $0x950] sm:$0xff]
        %v741 = vld [vmem:[%s343 + $0x958] sm:$0xff]
        %v742 = vld [vmem:[%s343 + $0x960] sm:$0xff]
        %v743 = vld [vmem:[%s343 + $0x968] sm:$0xff]
        %v744 = vld [vmem:[%s343 + $0x970] sm:$0xff]
        %v745 = vld [vmem:[%s343 + $0x978] sm:$0xff]
        %v746 = vld [vmem:[%s343 + $0x980] sm:$0xff]
        %v747 = vld [vmem:[%s343 + $0x988] sm:$0xff]
        %v748 = vld [vmem:[%s343 + $0x990] sm:$0xff]
        %v749 = vld [vmem:[%s343 + $0x998] sm:$0xff]
        %v750 = vld [vmem:[%s343 + $0x9a0] sm:$0xff]
        %v751 = vld [vmem:[%s343 + $0x9a8] sm:$0xff]
        %v752 = vld [vmem:[%s343 + $0x9b0] sm:$0xff]
        %v753 = vld [vmem:[%s343 + $0x9b8] sm:$0xff]
        %v754 = vld [vmem:[%s343 + $0x9c0] sm:$0xff]
        %v755 = vld [vmem:[%s343 + $0x9c8] sm:$0xff]
        %v756 = vld [vmem:[%s343 + $0x9d0] sm:$0xff]
        %v757 = vld [vmem:[%s343 + $0x9d8] sm:$0xff]
        %v758 = vld [vmem:[%s343 + $0x9e0] sm:$0xff]
        %v759 = vld [vmem:[%s343 + $0x9e8] sm:$0xff]
        %v760 = vld [vmem:[%s343 + $0x9f0] sm:$0xff]
        %v761 = vld [vmem:[%s343 + $0x9f8] sm:$0xff]
        %v762 = vld [vmem:[%s343 + $0xa00] sm:$0xff]
        %v763 = vld [vmem:[%s343 + $0xa08] sm:$0xff]
        %v764 = vld [vmem:[%s343 + $0xa10] sm:$0xff]
        %v765 = vld [vmem:[%s343 + $0xa18] sm:$0xff]
        %v766 = vld [vmem:[%s343 + $0xa20] sm:$0xff]
        %v767 = vld [vmem:[%s343 + $0xa28] sm:$0xff]
        %v768 = vld [vmem:[%s343 + $0xa30] sm:$0xff]
        %v769 = vld [vmem:[%s343 + $0xa38] sm:$0xff]
        %v770 = vld [vmem:[%s343 + $0xa40] sm:$0xff]
        %v771 = vld [vmem:[%s343 + $0xa48] sm:$0xff]
        %v772 = vld [vmem:[%s343 + $0xa50] sm:$0xff]
        %v773 = vld [vmem:[%s343 + $0xa58] sm:$0xff]
        %v774 = vld [vmem:[%s343 + $0xa60] sm:$0xff]
        %v775 = vld [vmem:[%s343 + $0xa68] sm:$0xff]
        %v776 = vld [vmem:[%s343 + $0xa70] sm:$0xff]
        %v777 = vld [vmem:[%s343 + $0xa78] sm:$0xff]
        %v778 = vld [vmem:[%s343 + $0xa80] sm:$0xff]
        %v779 = vld [vmem:[%s343 + $0xa88] sm:$0xff]
        %v780 = vld [vmem:[%s343 + $0xa90] sm:$0xff]
        %v781 = vld [vmem:[%s343 + $0xa98] sm:$0xff]
        %v782 = vld [vmem:[%s343 + $0xaa0] sm:$0xff]
        %v783 = vld [vmem:[%s343 + $0xaa8] sm:$0xff]
        %v784 = vld [vmem:[%s343 + $0xab0] sm:$0xff]
        %v785 = vld [vmem:[%s343 + $0xab8] sm:$0xff]
        %v786 = vld [vmem:[%s343 + $0xac0] sm:$0xff]
        %v787 = vld [vmem:[%s343 + $0xac8] sm:$0xff]
        %v788 = vld [vmem:[%s343 + $0xad0] sm:$0xff]
        %v789 = vld [vmem:[%s343 + $0xad8] sm:$0xff]
        %v790 = vld [vmem:[%s343 + $0xae0] sm:$0xff]
        %v791 = vld [vmem:[%s343 + $0xae8] sm:$0xff]
        %v792 = vld [vmem:[%s343 + $0xaf0] sm:$0xff]
        %v793 = vld [vmem:[%s343 + $0xaf8] sm:$0xff]
        %v794 = vld [vmem:[%s343 + $0xb00] sm:$0xff]
        %v795 = vld [vmem:[%s343 + $0xb08] sm:$0xff]
        %v796 = vld [vmem:[%s343 + $0xb10] sm:$0xff]
        %v797 = vld [vmem:[%s343 + $0xb18] sm:$0xff]
        %v798 = vld [vmem:[%s343 + $0xb20] sm:$0xff]
        %v799 = vld [vmem:[%s343 + $0xb28] sm:$0xff]
        %v800 = vld [vmem:[%s343 + $0xb30] sm:$0xff]
        %v801 = vld [vmem:[%s343 + $0xb38] sm:$0xff]
        %v802 = vld [vmem:[%s343 + $0xb40] sm:$0xff]
        %v803 = vld [vmem:[%s343 + $0xb48] sm:$0xff]
        %v804 = vld [vmem:[%s343 + $0xb50] sm:$0xff]
        %v805 = vld [vmem:[%s343 + $0xb58] sm:$0xff]
        %v806 = vld [vmem:[%s343 + $0xb60] sm:$0xff]
        %v807 = vld [vmem:[%s343 + $0xb68] sm:$0xff]
        %v808 = vld [vmem:[%s343 + $0xb70] sm:$0xff]
        %v809 = vld [vmem:[%s343 + $0xb78] sm:$0xff]
        %v810 = vld [vmem:[%s343 + $0xb80] sm:$0xff]
        %v811 = vld [vmem:[%s343 + $0xb88] sm:$0xff]
        %v812 = vld [vmem:[%s343 + $0xb90] sm:$0xff]
        %v813 = vld [vmem:[%s343 + $0xb98] sm:$0xff]
        %v814 = vld [vmem:[%s343 + $0xba0] sm:$0xff]
        %v815 = vld [vmem:[%s343 + $0xba8] sm:$0xff]
        %v816 = vld [vmem:[%s343 + $0xbb0] sm:$0xff]
        %v817 = vld [vmem:[%s343 + $0xbb8] sm:$0xff]
        %v818 = vld [vmem:[%s343 + $0xbc0] sm:$0xff]
        %v819 = vld [vmem:[%s343 + $0xbc8] sm:$0xff]
        %v820 = vld [vmem:[%s343 + $0xbd0] sm:$0xff]
        %v821 = vld [vmem:[%s343 + $0xbd8] sm:$0xff]
        %v822 = vld [vmem:[%s343 + $0xbe0] sm:$0xff]
        %v823 = vld [vmem:[%s343 + $0xbe8] sm:$0xff]
        %v824 = vld [vmem:[%s343 + $0xbf0] sm:$0xff]
        %v825 = vld [vmem:[%s343 + $0xbf8] sm:$0xff]
        %v826 = vld [vmem:[%s343 + $0xc00] sm:$0xff]
        %v827 = vld [vmem:[%s343 + $0xc08] sm:$0xff]
        %v828 = vld [vmem:[%s343 + $0xc10] sm:$0xff]
        %v829 = vld [vmem:[%s343 + $0xc18] sm:$0xff]
        %v830 = vld [vmem:[%s343 + $0xc20] sm:$0xff]
        %v831 = vld [vmem:[%s343 + $0xc28] sm:$0xff]
        %v832 = vld [vmem:[%s343 + $0xc30] sm:$0xff]
        %v833 = vld [vmem:[%s343 + $0xc38] sm:$0xff]
        %v834 = vld [vmem:[%s343 + $0xc40] sm:$0xff]
        %v835 = vld [vmem:[%s343 + $0xc48] sm:$0xff]
        %v836 = vld [vmem:[%s343 + $0xc50] sm:$0xff]
        %v837 = vld [vmem:[%s343 + $0xc58] sm:$0xff]
        %v838 = vld [vmem:[%s343 + $0xc60] sm:$0xff]
        %v839 = vld [vmem:[%s343 + $0xc68] sm:$0xff]
        %v840 = vld [vmem:[%s343 + $0xc70] sm:$0xff]
        %v841 = vld [vmem:[%s343 + $0xc78] sm:$0xff]
        %v842 = vld [vmem:[%s343 + $0xc80] sm:$0xff]
        %v843 = vld [vmem:[%s343 + $0xc88] sm:$0xff]
        %v844 = vld [vmem:[%s343 + $0xc90] sm:$0xff]
        %v845 = vld [vmem:[%s343 + $0xc98] sm:$0xff]
        %v846 = vld [vmem:[%s343 + $0xca0] sm:$0xff]
        %v847 = vld [vmem:[%s343 + $0xca8] sm:$0xff]
        %v848 = vld [vmem:[%s343 + $0xcb0] sm:$0xff]
        %v849 = vld [vmem:[%s343 + $0xcb8] sm:$0xff]
        %v850 = vld [vmem:[%s343 + $0xcc0] sm:$0xff]
        %v851 = vld [vmem:[%s343 + $0xcc8] sm:$0xff]
        %v852 = vld [vmem:[%s343 + $0xcd0] sm:$0xff]
        %v853 = vld [vmem:[%s343 + $0xcd8] sm:$0xff]
        %v854 = vld [vmem:[%s343 + $0xce0] sm:$0xff]
        %v855 = vld [vmem:[%s343 + $0xce8] sm:$0xff]
        %v856 = vld [vmem:[%s343 + $0xcf0] sm:$0xff]
        %v857 = vld [vmem:[%s343 + $0xcf8] sm:$0xff]
        %v858 = vld [vmem:[%s343 + $0xd00] sm:$0xff]
        %v859 = vld [vmem:[%s343 + $0xd08] sm:$0xff]
        %v860 = vld [vmem:[%s343 + $0xd10] sm:$0xff]
        %v861 = vld [vmem:[%s343 + $0xd18] sm:$0xff]
        %v862 = vld [vmem:[%s343 + $0xd20] sm:$0xff]
        %v863 = vld [vmem:[%s343 + $0xd28] sm:$0xff]
        %v864 = vld [vmem:[%s343 + $0xd30] sm:$0xff]
        %v865 = vld [vmem:[%s343 + $0xd38] sm:$0xff]
        %v866 = vld [vmem:[%s343 + $0xd40] sm:$0xff]
        %v867 = vld [vmem:[%s343 + $0xd48] sm:$0xff]
        %v868 = vld [vmem:[%s343 + $0xd50] sm:$0xff]
        %v869 = vld [vmem:[%s343 + $0xd58] sm:$0xff]
        %v870 = vld [vmem:[%s343 + $0xd60] sm:$0xff]
        %v871 = vld [vmem:[%s343 + $0xd68] sm:$0xff]
        %v872 = vld [vmem:[%s343 + $0xd70] sm:$0xff]
        %v873 = vld [vmem:[%s343 + $0xd78] sm:$0xff]
        %v874 = vld [vmem:[%s343 + $0xd80] sm:$0xff]
        %v875 = vld [vmem:[%s343 + $0xd88] sm:$0xff]
        %v876 = vld [vmem:[%s343 + $0xd90] sm:$0xff]
        %v877 = vld [vmem:[%s343 + $0xd98] sm:$0xff]
        %v878 = vld [vmem:[%s343 + $0xda0] sm:$0xff]
        %v879 = vld [vmem:[%s343 + $0xda8] sm:$0xff]
        %v880 = vld [vmem:[%s343 + $0xdb0] sm:$0xff]
        %v881 = vld [vmem:[%s343 + $0xdb8] sm:$0xff]
        %v882 = vld [vmem:[%s343 + $0xdc0] sm:$0xff]
        %v883 = vld [vmem:[%s343 + $0xdc8] sm:$0xff]
        %v884 = vld [vmem:[%s343 + $0xdd0] sm:$0xff]
        %v885 = vld [vmem:[%s343 + $0xdd8] sm:$0xff]
        %v886 = vld [vmem:[%s343 + $0xde0] sm:$0xff]
        %v887 = vld [vmem:[%s343 + $0xde8] sm:$0xff]
        %v888 = vld [vmem:[%s343 + $0xdf0] sm:$0xff]
        %v889 = vld [vmem:[%s343 + $0xdf8] sm:$0xff]
        %v890 = vld [vmem:[%s343 + $0xe00] sm:$0xff]
        %v891 = vld [vmem:[%s343 + $0xe08] sm:$0xff]
        %v892 = vld [vmem:[%s343 + $0xe10] sm:$0xff]
        %v893 = vld [vmem:[%s343 + $0xe18] sm:$0xff]
        %v894 = vld [vmem:[%s343 + $0xe20] sm:$0xff]
        %v895 = vld [vmem:[%s343 + $0xe28] sm:$0xff]
        %v896 = vld [vmem:[%s343 + $0xe30] sm:$0xff]
        %v897 = vld [vmem:[%s343 + $0xe38] sm:$0xff]
        %v898 = vld [vmem:[%s343 + $0xe40] sm:$0xff]
        %v899 = vld [vmem:[%s343 + $0xe48] sm:$0xff]
        %v900 = vld [vmem:[%s343 + $0xe50] sm:$0xff]
        %v901 = vld [vmem:[%s343 + $0xe58] sm:$0xff]
        %v902 = vld [vmem:[%s343 + $0xe60] sm:$0xff]
        %v903 = vld [vmem:[%s343 + $0xe68] sm:$0xff]
        %v904 = vld [vmem:[%s343 + $0xe70] sm:$0xff]
        %v905 = vld [vmem:[%s343 + $0xe78] sm:$0xff]
        %v906 = vld [vmem:[%s343 + $0xe80] sm:$0xff]
        %v907 = vld [vmem:[%s343 + $0xe88] sm:$0xff]
        %v908 = vld [vmem:[%s343 + $0xe90] sm:$0xff]
        %v909 = vld [vmem:[%s343 + $0xe98] sm:$0xff]
        %v910 = vld [vmem:[%s343 + $0xea0] sm:$0xff]
        %v911 = vld [vmem:[%s343 + $0xea8] sm:$0xff]
        %v912 = vld [vmem:[%s343 + $0xeb0] sm:$0xff]
        %v913 = vld [vmem:[%s343 + $0xeb8] sm:$0xff]
        %v914 = vld [vmem:[%s343 + $0xec0] sm:$0xff]
        %v915 = vld [vmem:[%s343 + $0xec8] sm:$0xff]
        %v916 = vld [vmem:[%s343 + $0xed0] sm:$0xff]
        %v917 = vld [vmem:[%s343 + $0xed8] sm:$0xff]
        %v918 = vld [vmem:[%s343 + $0xee0] sm:$0xff]
        %v919 = vld [vmem:[%s343 + $0xee8] sm:$0xff]
        %v920 = vld [vmem:[%s343 + $0xef0] sm:$0xff]
        %v921 = vld [vmem:[%s343 + $0xef8] sm:$0xff]
        %v922 = vld [vmem:[%s343 + $0xf00] sm:$0xff]
        %v923 = vld [vmem:[%s343 + $0xf08] sm:$0xff]
        %v924 = vld [vmem:[%s343 + $0xf10] sm:$0xff]
        %v925 = vld [vmem:[%s343 + $0xf18] sm:$0xff]
        %v926 = vld [vmem:[%s343 + $0xf20] sm:$0xff]
        %v927 = vld [vmem:[%s343 + $0xf28] sm:$0xff]
        %v928 = vld [vmem:[%s343 + $0xf30] sm:$0xff]
        %v929 = vld [vmem:[%s343 + $0xf38] sm:$0xff]
        %v930 = vld [vmem:[%s343 + $0xf40] sm:$0xff]
        %v931 = vld [vmem:[%s343 + $0xf48] sm:$0xff]
        %v932 = vld [vmem:[%s343 + $0xf50] sm:$0xff]
        %v933 = vld [vmem:[%s343 + $0xf58] sm:$0xff]
        %v934 = vld [vmem:[%s343 + $0xf60] sm:$0xff]
        %v935 = vld [vmem:[%s343 + $0xf68] sm:$0xff]
        %v936 = vld [vmem:[%s343 + $0xf70] sm:$0xff]
        %v937 = vld [vmem:[%s343 + $0xf78] sm:$0xff]
        %v938 = vld [vmem:[%s343 + $0xf80] sm:$0xff]
        %v939 = vld [vmem:[%s343 + $0xf88] sm:$0xff]
        %v940 = vld [vmem:[%s343 + $0xf90] sm:$0xff]
        %v941 = vld [vmem:[%s343 + $0xf98] sm:$0xff]
        %v942 = vld [vmem:[%s343 + $0xfa0] sm:$0xff]
        %v943 = vld [vmem:[%s343 + $0xfa8] sm:$0xff]
        %v944 = vld [vmem:[%s343 + $0xfb0] sm:$0xff]
        %v945 = vld [vmem:[%s343 + $0xfb8] sm:$0xff]
        %v946 = vld [vmem:[%s343 + $0xfc0] sm:$0xff]
        %v947 = vld [vmem:[%s343 + $0xfc8] sm:$0xff]
        %v948 = vld [vmem:[%s343 + $0xfd0] sm:$0xff]
        %v949 = vld [vmem:[%s343 + $0xfd8] sm:$0xff]
        %v950 = vld [vmem:[%s343 + $0xfe0] sm:$0xff]
        %v951 = vld [vmem:[%s343 + $0xfe8] sm:$0xff]
        %v952 = vld [vmem:[%s343 + $0xff0] sm:$0xff]
        %v953 = vld [vmem:[%s343 + $0xff8] sm:$0xff]
        %v954 = vld [vmem:[%s343 + $0x1000] sm:$0xff]
        %v955 = vld [vmem:[%s343 + $0x1008] sm:$0xff]
        %v956 = vld [vmem:[%s343 + $0x1010] sm:$0xff]
        %v957 = vld [vmem:[%s343 + $0x1018] sm:$0xff]
        %v958 = vld [vmem:[%s343 + $0x1020] sm:$0xff]
        %v959 = vld [vmem:[%s343 + $0x1028] sm:$0xff]
        %v960 = vld [vmem:[%s343 + $0x1030] sm:$0xff]
        %v961 = vld [vmem:[%s343 + $0x1038] sm:$0xff]
        %v962 = vld [vmem:[%s343 + $0x1040] sm:$0xff]
        %v963 = vld [vmem:[%s343 + $0x1048] sm:$0xff]
        %v964 = vld [vmem:[%s343 + $0x1050] sm:$0xff]
        %v965 = vld [vmem:[%s343 + $0x1058] sm:$0xff]
        %v966 = vld [vmem:[%s343 + $0x1060] sm:$0xff]
        %v967 = vld [vmem:[%s343 + $0x1068] sm:$0xff]
        %v968 = vld [vmem:[%s343 + $0x1070] sm:$0xff]
        %v969 = vld [vmem:[%s343 + $0x1078] sm:$0xff]
        %v970 = vld [vmem:[%s343 + $0x1080] sm:$0xff]
        %v971 = vld [vmem:[%s343 + $0x1088] sm:$0xff]
        %v972 = vld [vmem:[%s343 + $0x1090] sm:$0xff]
        %v973 = vld [vmem:[%s343 + $0x1098] sm:$0xff]
        %v974 = vld [vmem:[%s343 + $0x10a0] sm:$0xff]
        %v975 = vld [vmem:[%s343 + $0x10a8] sm:$0xff]
        %v976 = vld [vmem:[%s343 + $0x10b0] sm:$0xff]
        %v977 = vld [vmem:[%s343 + $0x10b8] sm:$0xff]
        %v978 = vld [vmem:[%s343 + $0x10c0] sm:$0xff]
        %v979 = vld [vmem:[%s343 + $0x10c8] sm:$0xff]
        %v980 = vld [vmem:[%s343 + $0x10d0] sm:$0xff]
        %v981 = vld [vmem:[%s343 + $0x10d8] sm:$0xff]
        %v982 = vld [vmem:[%s343 + $0x10e0] sm:$0xff]
        %v983 = vld [vmem:[%s343 + $0x10e8] sm:$0xff]
        %v984 = vld [vmem:[%s343 + $0x10f0] sm:$0xff]
        %v985 = vld [vmem:[%s343 + $0x10f8] sm:$0xff]
        %v986 = vld [vmem:[%s343 + $0x1100] sm:$0xff]
        %v987 = vld [vmem:[%s343 + $0x1108] sm:$0xff]
        %v988 = vld [vmem:[%s343 + $0x1110] sm:$0xff]
        %v989 = vld [vmem:[%s343 + $0x1118] sm:$0xff]
        %v990 = vld [vmem:[%s343 + $0x1120] sm:$0xff]
        %v991 = vld [vmem:[%s343 + $0x1128] sm:$0xff]
        %v992 = vld [vmem:[%s343 + $0x1130] sm:$0xff]
        %v993 = vld [vmem:[%s343 + $0x1138] sm:$0xff]
        %v994 = vld [vmem:[%s343 + $0x1140] sm:$0xff]
        %v995 = vld [vmem:[%s343 + $0x1148] sm:$0xff]
        %v996 = vld [vmem:[%s343 + $0x1150] sm:$0xff]
        %v997 = vld [vmem:[%s343 + $0x1158] sm:$0xff]
        %v998 = vld [vmem:[%s343 + $0x1160] sm:$0xff]
        %v999 = vld [vmem:[%s343 + $0x1168] sm:$0xff]
        %v1000 = vld [vmem:[%s343 + $0x1170] sm:$0xff]
        %v1001 = vld [vmem:[%s343 + $0x1178] sm:$0xff]
        %v1002 = vld [vmem:[%s343 + $0x1180] sm:$0xff]
        %v1003 = vld [vmem:[%s343 + $0x1188] sm:$0xff]
        %v1004 = vld [vmem:[%s343 + $0x1190] sm:$0xff]
        %v1005 = vld [vmem:[%s343 + $0x1198] sm:$0xff]
        %v1006 = vld [vmem:[%s343 + $0x11a0] sm:$0xff]
        %v1007 = vld [vmem:[%s343 + $0x11a8] sm:$0xff]
        %v1008 = vld [vmem:[%s343 + $0x11b0] sm:$0xff]
        %v1009 = vld [vmem:[%s343 + $0x11b8] sm:$0xff]
        %v1010 = vld [vmem:[%s343 + $0x11c0] sm:$0xff]
        %v1011 = vld [vmem:[%s343 + $0x11c8] sm:$0xff]
        %v1012 = vld [vmem:[%s343 + $0x11d0] sm:$0xff]
        %v1013 = vld [vmem:[%s343 + $0x11d8] sm:$0xff]
        %v1014 = vld [vmem:[%s343 + $0x11e0] sm:$0xff]
        %v1015 = vld [vmem:[%s343 + $0x11e8] sm:$0xff]
        %v1016 = vld [vmem:[%s343 + $0x11f0] sm:$0xff]
        %v1017 = vld [vmem:[%s343 + $0x11f8] sm:$0xff]
        %v1018 = vld [vmem:[%s343 + $0x1200] sm:$0xff]
        %v1019 = vld [vmem:[%s343 + $0x1208] sm:$0xff]
        %v1020 = vld [vmem:[%s343 + $0x1210] sm:$0xff]
        %v1021 = vld [vmem:[%s343 + $0x1218] sm:$0xff]
        %v1022 = vld [vmem:[%s343 + $0x1220] sm:$0xff]
        %v1023 = vld [vmem:[%s343 + $0x1228] sm:$0xff]
        %v1024 = vld [vmem:[%s343 + $0x1230] sm:$0xff]
        %v1025 = vld [vmem:[%s343 + $0x1238] sm:$0xff]
        %v1026 = vld [vmem:[%s343 + $0x1240] sm:$0xff]
        %v1027 = vld [vmem:[%s343 + $0x1248] sm:$0xff]
        %v1028 = vld [vmem:[%s343 + $0x1250] sm:$0xff]
        %v1029 = vld [vmem:[%s343 + $0x1258] sm:$0xff]
        %v1030 = vld [vmem:[%s343 + $0x1260] sm:$0xff]
        %v1031 = vld [vmem:[%s343 + $0x1268] sm:$0xff]
        %v1032 = vld [vmem:[%s343 + $0x1270] sm:$0xff]
        %v1033 = vld [vmem:[%s343 + $0x1278] sm:$0xff]
        %v1034 = vld [vmem:[%s343 + $0x1280] sm:$0xff]
        %v1035 = vld [vmem:[%s343 + $0x1288] sm:$0xff]
        %v1036 = vld [vmem:[%s343 + $0x1290] sm:$0xff]
        %v1037 = vld [vmem:[%s343 + $0x1298] sm:$0xff]
        %v1038 = vld [vmem:[%s343 + $0x12a0] sm:$0xff]
        %v1039 = vld [vmem:[%s343 + $0x12a8] sm:$0xff]
        %v1040 = vld [vmem:[%s343 + $0x12b0] sm:$0xff]
        %v1041 = vld [vmem:[%s343 + $0x12b8] sm:$0xff]
        %v1042 = vld [vmem:[%s343 + $0x12c0] sm:$0xff]
        %v1043 = vld [vmem:[%s343 + $0x12c8] sm:$0xff]
        %v1044 = vld [vmem:[%s343 + $0x12d0] sm:$0xff]
        %v1045 = vld [vmem:[%s343 + $0x12d8] sm:$0xff]
        %v1046 = vld [vmem:[%s343 + $0x12e0] sm:$0xff]
        %v1047 = vld [vmem:[%s343 + $0x12e8] sm:$0xff]
        %v1048 = vld [vmem:[%s343 + $0x12f0] sm:$0xff]
        %v1049 = vld [vmem:[%s343 + $0x12f8] sm:$0xff]
        %v1050 = vld [vmem:[%s343 + $0x1300] sm:$0xff]
        %v1051 = vld [vmem:[%s343 + $0x1308] sm:$0xff]
        %v1052 = vld [vmem:[%s343 + $0x1310] sm:$0xff]
        %v1053 = vld [vmem:[%s343 + $0x1318] sm:$0xff]
        %v1054 = vld [vmem:[%s343 + $0x1320] sm:$0xff]
        %v1055 = vld [vmem:[%s343 + $0x1328] sm:$0xff]
        %v1056 = vld [vmem:[%s343 + $0x1330] sm:$0xff]
        %v1057 = vld [vmem:[%s343 + $0x1338] sm:$0xff]
        %v1058 = vld [vmem:[%s343 + $0x1340] sm:$0xff]
        %v1059 = vld [vmem:[%s343 + $0x1348] sm:$0xff]
        %v1060 = vld [vmem:[%s343 + $0x1350] sm:$0xff]
        %v1061 = vld [vmem:[%s343 + $0x1358] sm:$0xff]
        %v1062 = vld [vmem:[%s343 + $0x1360] sm:$0xff]
        %v1063 = vld [vmem:[%s343 + $0x1368] sm:$0xff]
        %v1064 = vld [vmem:[%s343 + $0x1370] sm:$0xff]
        %v1065 = vld [vmem:[%s343 + $0x1378] sm:$0xff]
        %v1066 = vld [vmem:[%s343 + $0x1380] sm:$0xff]
        %v1067 = vld [vmem:[%s343 + $0x1388] sm:$0xff]
        %v1068 = vld [vmem:[%s343 + $0x1390] sm:$0xff]
        %v1069 = vld [vmem:[%s343 + $0x1398] sm:$0xff]
        %v1070 = vld [vmem:[%s343 + $0x13a0] sm:$0xff]
        %v1071 = vld [vmem:[%s343 + $0x13a8] sm:$0xff]
        %v1072 = vld [vmem:[%s343 + $0x13b0] sm:$0xff]
        %v1073 = vld [vmem:[%s343 + $0x13b8] sm:$0xff]
        %v1074 = vld [vmem:[%s343 + $0x13c0] sm:$0xff]
        %v1075 = vld [vmem:[%s343 + $0x13c8] sm:$0xff]
        %v1076 = vld [vmem:[%s343 + $0x13d0] sm:$0xff]
        %v1077 = vld [vmem:[%s343 + $0x13d8] sm:$0xff]
        %v1078 = vld [vmem:[%s343 + $0x13e0] sm:$0xff]
        %v1079 = vld [vmem:[%s343 + $0x13e8] sm:$0xff]
        %v1080 = vld [vmem:[%s343 + $0x13f0] sm:$0xff]
        %v1081 = vld [vmem:[%s343 + $0x13f8] sm:$0xff]
        %v1082 = vld [vmem:[%s343 + $0x1400] sm:$0xff]
        %v1083 = vld [vmem:[%s343 + $0x1408] sm:$0xff]
        %v1084 = vld [vmem:[%s343 + $0x1410] sm:$0xff]
        %v1085 = vld [vmem:[%s343 + $0x1418] sm:$0xff]
        %v1086 = vld [vmem:[%s343 + $0x1420] sm:$0xff]
        %v1087 = vld [vmem:[%s343 + $0x1428] sm:$0xff]
        %v1088 = vld [vmem:[%s343 + $0x1430] sm:$0xff]
        %v1089 = vld [vmem:[%s343 + $0x1438] sm:$0xff]
        %v1090 = vld [vmem:[%s343 + $0x1440] sm:$0xff]
        %v1091 = vld [vmem:[%s343 + $0x1448] sm:$0xff]
        %v1092 = vld [vmem:[%s343 + $0x1450] sm:$0xff]
        %v1093 = vld [vmem:[%s343 + $0x1458] sm:$0xff]
        %v1094 = vld [vmem:[%s343 + $0x1460] sm:$0xff]
        %v1095 = vld [vmem:[%s343 + $0x1468] sm:$0xff]
        %v1096 = vld [vmem:[%s343 + $0x1470] sm:$0xff]
        %v1097 = vld [vmem:[%s343 + $0x1478] sm:$0xff]
        %v1098 = vld [vmem:[%s343 + $0x1480] sm:$0xff]
        %v1099 = vld [vmem:[%s343 + $0x1488] sm:$0xff]
        %v1100 = vld [vmem:[%s343 + $0x1490] sm:$0xff]
        %v1101 = vld [vmem:[%s343 + $0x1498] sm:$0xff]
        %v1102 = vld [vmem:[%s343 + $0x14a0] sm:$0xff]
        %v1103 = vld [vmem:[%s343 + $0x14a8] sm:$0xff]
        %v1104 = vld [vmem:[%s343 + $0x14b0] sm:$0xff]
        %v1105 = vld [vmem:[%s343 + $0x14b8] sm:$0xff]
        %v1106 = vld [vmem:[%s343 + $0x14c0] sm:$0xff]
        %v1107 = vld [vmem:[%s343 + $0x14c8] sm:$0xff]
        %v1108 = vld [vmem:[%s343 + $0x14d0] sm:$0xff]
        %v1109 = vld [vmem:[%s343 + $0x14d8] sm:$0xff]
        %v1110 = vld [vmem:[%s343 + $0x14e0] sm:$0xff]
        %v1111 = vld [vmem:[%s343 + $0x14e8] sm:$0xff]
        %v1112 = vld [vmem:[%s343 + $0x14f0] sm:$0xff]
        %v1113 = vld [vmem:[%s343 + $0x14f8] sm:$0xff]
        %v1114 = vld [vmem:[%s343 + $0x1500] sm:$0xff]
        %v1115 = vld [vmem:[%s343 + $0x1508] sm:$0xff]
        %v1116 = vld [vmem:[%s343 + $0x1510] sm:$0xff]
        %v1117 = vld [vmem:[%s343 + $0x1518] sm:$0xff]
        %v1118 = vld [vmem:[%s343 + $0x1520] sm:$0xff]
        %v1119 = vld [vmem:[%s343 + $0x1528] sm:$0xff]
        %v1120 = vld [vmem:[%s343 + $0x1530] sm:$0xff]
        %v1121 = vld [vmem:[%s343 + $0x1538] sm:$0xff]
        %v1122 = vld [vmem:[%s343 + $0x1540] sm:$0xff]
        %v1123 = vld [vmem:[%s343 + $0x1548] sm:$0xff]
        %v1124 = vld [vmem:[%s343 + $0x1550] sm:$0xff]
        %v1125 = vld [vmem:[%s343 + $0x1558] sm:$0xff]
        %v1126 = vld [vmem:[%s343 + $0x1560] sm:$0xff]
        %v1127 = vld [vmem:[%s343 + $0x1568] sm:$0xff]
        %v1128 = vld [vmem:[%s343 + $0x1570] sm:$0xff]
        %v1129 = vld [vmem:[%s343 + $0x1578] sm:$0xff]
        %v1130 = vld [vmem:[%s343 + $0x1580] sm:$0xff]
        %v1131 = vld [vmem:[%s343 + $0x1588] sm:$0xff]
        %v1132 = vld [vmem:[%s343 + $0x1590] sm:$0xff]
        %v1133 = vld [vmem:[%s343 + $0x1598] sm:$0xff]
        %v1134 = vld [vmem:[%s343 + $0x15a0] sm:$0xff]
        %v1135 = vld [vmem:[%s343 + $0x15a8] sm:$0xff]
        %v1136 = vld [vmem:[%s343 + $0x15b0] sm:$0xff]
        %v1137 = vld [vmem:[%s343 + $0x15b8] sm:$0xff]
        %v1138 = vld [vmem:[%s343 + $0x15c0] sm:$0xff]
        %v1139 = vld [vmem:[%s343 + $0x15c8] sm:$0xff]
        %v1140 = vld [vmem:[%s343 + $0x15d0] sm:$0xff]
        %v1141 = vld [vmem:[%s343 + $0x15d8] sm:$0xff]
        %v1142 = vld [vmem:[%s343 + $0x15e0] sm:$0xff]
        %v1143 = vld [vmem:[%s343 + $0x15e8] sm:$0xff]
        %v1144 = vld [vmem:[%s343 + $0x15f0] sm:$0xff]
        %v1145 = vld [vmem:[%s343 + $0x15f8] sm:$0xff]
        %v1146 = vld [vmem:[%s343 + $0x1600] sm:$0xff]
        %v1147 = vld [vmem:[%s343 + $0x1608] sm:$0xff]
        %v1148 = vld [vmem:[%s343 + $0x1610] sm:$0xff]
        %v1149 = vld [vmem:[%s343 + $0x1618] sm:$0xff]
        %v1150 = vld [vmem:[%s343 + $0x1620] sm:$0xff]
        %v1151 = vld [vmem:[%s343 + $0x1628] sm:$0xff]
        %v1152 = vld [vmem:[%s343 + $0x1630] sm:$0xff]
        %v1153 = vld [vmem:[%s343 + $0x1638] sm:$0xff]
        %v1154 = vld [vmem:[%s343 + $0x1640] sm:$0xff]
        %v1155 = vld [vmem:[%s343 + $0x1648] sm:$0xff]
        %v1156 = vld [vmem:[%s343 + $0x1650] sm:$0xff]
        %v1157 = vld [vmem:[%s343 + $0x1658] sm:$0xff]
        %v1158 = vld [vmem:[%s343 + $0x1660] sm:$0xff]
        %v1159 = vld [vmem:[%s343 + $0x1668] sm:$0xff]
        %v1160 = vld [vmem:[%s343 + $0x1670] sm:$0xff]
        %v1161 = vld [vmem:[%s343 + $0x1678] sm:$0xff]
        %v1162 = vld [vmem:[%s343 + $0x1680] sm:$0xff]
        %v1163 = vld [vmem:[%s343 + $0x1688] sm:$0xff]
        %v1164 = vld [vmem:[%s343 + $0x1690] sm:$0xff]
        %v1165 = vld [vmem:[%s343 + $0x1698] sm:$0xff]
        %v1166 = vld [vmem:[%s343 + $0x16a0] sm:$0xff]
        %v1167 = vld [vmem:[%s343 + $0x16a8] sm:$0xff]
        %v1168 = vld [vmem:[%s343 + $0x16b0] sm:$0xff]
        %v1169 = vld [vmem:[%s343 + $0x16b8] sm:$0xff]
        %v1170 = vld [vmem:[%s343 + $0x16c0] sm:$0xff]
        %v1171 = vld [vmem:[%s343 + $0x16c8] sm:$0xff]
        %v1172 = vld [vmem:[%s343 + $0x16d0] sm:$0xff]
        %v1173 = vld [vmem:[%s343 + $0x16d8] sm:$0xff]
        %v1174 = vld [vmem:[%s343 + $0x16e0] sm:$0xff]
        %v1175 = vld [vmem:[%s343 + $0x16e8] sm:$0xff]
        %v1176 = vld [vmem:[%s343 + $0x16f0] sm:$0xff]
        %v1177 = vld [vmem:[%s343 + $0x16f8] sm:$0xff]
        %v1178 = vld [vmem:[%s343 + $0x1700] sm:$0xff]
        %v1179 = vld [vmem:[%s343 + $0x1708] sm:$0xff]
        %v1180 = vld [vmem:[%s343 + $0x1710] sm:$0xff]
        %v1181 = vld [vmem:[%s343 + $0x1718] sm:$0xff]
        %v1182 = vld [vmem:[%s343 + $0x1720] sm:$0xff]
        %v1183 = vld [vmem:[%s343 + $0x1728] sm:$0xff]
        %v1184 = vld [vmem:[%s343 + $0x1730] sm:$0xff]
        %v1185 = vld [vmem:[%s343 + $0x1738] sm:$0xff]
        %v1186 = vld [vmem:[%s343 + $0x1740] sm:$0xff]
        %v1187 = vld [vmem:[%s343 + $0x1748] sm:$0xff]
        %v1188 = vld [vmem:[%s343 + $0x1750] sm:$0xff]
        %v1189 = vld [vmem:[%s343 + $0x1758] sm:$0xff]
        %v1190 = vld [vmem:[%s343 + $0x1760] sm:$0xff]
        %v1191 = vld [vmem:[%s343 + $0x1768] sm:$0xff]
        %v1192 = vld [vmem:[%s343 + $0x1770] sm:$0xff]
        %v1193 = vld [vmem:[%s343 + $0x1778] sm:$0xff]
        %v1194 = vld [vmem:[%s343 + $0x1780] sm:$0xff]
        %v1195 = vld [vmem:[%s343 + $0x1788] sm:$0xff]
        %v1196 = vld [vmem:[%s343 + $0x1790] sm:$0xff]
        %v1197 = vld [vmem:[%s343 + $0x1798] sm:$0xff]
        %v1198 = vld [vmem:[%s343 + $0x17a0] sm:$0xff]
        %v1199 = vld [vmem:[%s343 + $0x17a8] sm:$0xff]
        %v1200 = vld [vmem:[%s343 + $0x17b0] sm:$0xff]
        %v1201 = vld [vmem:[%s343 + $0x17b8] sm:$0xff]
        %v1202 = vld [vmem:[%s343 + $0x17c0] sm:$0xff]
        %v1203 = vld [vmem:[%s343 + $0x17c8] sm:$0xff]
        %v1204 = vld [vmem:[%s343 + $0x17d0] sm:$0xff]
        %v1205 = vld [vmem:[%s343 + $0x17d8] sm:$0xff]
        %v1206 = vld [vmem:[%s343 + $0x17e0] sm:$0xff]
        %v1207 = vld [vmem:[%s343 + $0x17e8] sm:$0xff]
        %v1208 = vld [vmem:[%s343 + $0x17f0] sm:$0xff]
        %v1209 = vld [vmem:[%s343 + $0x17f8] sm:$0xff]
        %v1210 = vld [vmem:[%s343 + $0x1800] sm:$0xff]
        %v1211 = vld [vmem:[%s343 + $0x1808] sm:$0xff]
        %v1212 = vld [vmem:[%s343 + $0x1810] sm:$0xff]
        %v1213 = vld [vmem:[%s343 + $0x1818] sm:$0xff]
        %v1214 = vld [vmem:[%s343 + $0x1820] sm:$0xff]
        %v1215 = vld [vmem:[%s343 + $0x1828] sm:$0xff]
        %v1216 = vld [vmem:[%s343 + $0x1830] sm:$0xff]
        %v1217 = vld [vmem:[%s343 + $0x1838] sm:$0xff]
        %v1218 = vld [vmem:[%s343 + $0x1840] sm:$0xff]
        %v1219 = vld [vmem:[%s343 + $0x1848] sm:$0xff]
        %v1220 = vld [vmem:[%s343 + $0x1850] sm:$0xff]
        %v1221 = vld [vmem:[%s343 + $0x1858] sm:$0xff]
        %v1222 = vld [vmem:[%s343 + $0x1860] sm:$0xff]
        %v1223 = vld [vmem:[%s343 + $0x1868] sm:$0xff]
        %v1224 = vld [vmem:[%s343 + $0x1870] sm:$0xff]
        %v1225 = vld [vmem:[%s343 + $0x1878] sm:$0xff]
        %v1226 = vld [vmem:[%s343 + $0x1880] sm:$0xff]
        %v1227 = vld [vmem:[%s343 + $0x1888] sm:$0xff]
        %v1228 = vld [vmem:[%s343 + $0x1890] sm:$0xff]
        %v1229 = vld [vmem:[%s343 + $0x1898] sm:$0xff]
        %v1230 = vld [vmem:[%s343 + $0x18a0] sm:$0xff]
        %v1231 = vld [vmem:[%s343 + $0x18a8] sm:$0xff]
        %v1232 = vld [vmem:[%s343 + $0x18b0] sm:$0xff]
        %v1233 = vld [vmem:[%s343 + $0x18b8] sm:$0xff]
        %v1234 = vld [vmem:[%s343 + $0x18c0] sm:$0xff]
        %v1235 = vld [vmem:[%s343 + $0x18c8] sm:$0xff]
        %v1236 = vld [vmem:[%s343 + $0x18d0] sm:$0xff]
        %v1237 = vld [vmem:[%s343 + $0x18d8] sm:$0xff]
        %v1238 = vld [vmem:[%s343 + $0x18e0] sm:$0xff]
        %v1239 = vld [vmem:[%s343 + $0x18e8] sm:$0xff]
        %v1240 = vld [vmem:[%s343 + $0x18f0] sm:$0xff]
        %v1241 = vld [vmem:[%s343 + $0x18f8] sm:$0xff]
        %v1242 = vld [vmem:[%s343 + $0x1900] sm:$0xff]
        %v1243 = vld [vmem:[%s343 + $0x1908] sm:$0xff]
        %v1244 = vld [vmem:[%s343 + $0x1910] sm:$0xff]
        %v1245 = vld [vmem:[%s343 + $0x1918] sm:$0xff]
        %v1246 = vld [vmem:[%s343 + $0x1920] sm:$0xff]
        %v1247 = vld [vmem:[%s343 + $0x1928] sm:$0xff]
        %v1248 = vld [vmem:[%s343 + $0x1930] sm:$0xff]
        %v1249 = vld [vmem:[%s343 + $0x1938] sm:$0xff]
        %v1250 = vld [vmem:[%s343 + $0x1940] sm:$0xff]
        %v1251 = vld [vmem:[%s343 + $0x1948] sm:$0xff]
        %v1252 = vld [vmem:[%s343 + $0x1950] sm:$0xff]
        %v1253 = vld [vmem:[%s343 + $0x1958] sm:$0xff]
        %v1254 = vld [vmem:[%s343 + $0x1960] sm:$0xff]
        %v1255 = vld [vmem:[%s343 + $0x1968] sm:$0xff]
        %v1256 = vld [vmem:[%s343 + $0x1970] sm:$0xff]
        %v1257 = vld [vmem:[%s343 + $0x1978] sm:$0xff]
        %v1258 = vld [vmem:[%s343 + $0x1980] sm:$0xff]
        %v1259 = vld [vmem:[%s343 + $0x1988] sm:$0xff]
        %v1260 = vld [vmem:[%s343 + $0x1990] sm:$0xff]
        %v1261 = vld [vmem:[%s343 + $0x1998] sm:$0xff]
        %v1262 = vld [vmem:[%s343 + $0x19a0] sm:$0xff]
        %v1263 = vld [vmem:[%s343 + $0x19a8] sm:$0xff]
        %v1264 = vld [vmem:[%s343 + $0x19b0] sm:$0xff]
        %v1265 = vld [vmem:[%s343 + $0x19b8] sm:$0xff]
        %v1266 = vld [vmem:[%s343 + $0x19c0] sm:$0xff]
        %v1267 = vld [vmem:[%s343 + $0x19c8] sm:$0xff]
        %v1268 = vld [vmem:[%s343 + $0x19d0] sm:$0xff]
        %v1269 = vld [vmem:[%s343 + $0x19d8] sm:$0xff]
        %v1270 = vld [vmem:[%s343 + $0x19e0] sm:$0xff]
        %v1271 = vld [vmem:[%s343 + $0x19e8] sm:$0xff]
        %v1272 = vld [vmem:[%s343 + $0x19f0] sm:$0xff]
        %v1273 = vld [vmem:[%s343 + $0x19f8] sm:$0xff]
        %v1274 = vld [vmem:[%s343 + $0x1a00] sm:$0xff]
        %v1275 = vld [vmem:[%s343 + $0x1a08] sm:$0xff]
        %v1276 = vld [vmem:[%s343 + $0x1a10] sm:$0xff]
        %v1277 = vld [vmem:[%s343 + $0x1a18] sm:$0xff]
        %v1278 = vld [vmem:[%s343 + $0x1a20] sm:$0xff]
        %v1279 = vld [vmem:[%s343 + $0x1a28] sm:$0xff]
        %v1280 = vld [vmem:[%s343 + $0x1a30] sm:$0xff]
        %v1281 = vld [vmem:[%s343 + $0x1a38] sm:$0xff]
        %v1282 = vld [vmem:[%s343 + $0x1a40] sm:$0xff]
        %v1283 = vld [vmem:[%s343 + $0x1a48] sm:$0xff]
        %v1284 = vld [vmem:[%s343 + $0x1a50] sm:$0xff]
        %v1285 = vld [vmem:[%s343 + $0x1a58] sm:$0xff]
        %v1286 = vld [vmem:[%s343 + $0x1a60] sm:$0xff]
        %v1287 = vld [vmem:[%s343 + $0x1a68] sm:$0xff]
        %v1288 = vld [vmem:[%s343 + $0x1a70] sm:$0xff]
        %v1289 = vld [vmem:[%s343 + $0x1a78] sm:$0xff]
        %v1290 = vld [vmem:[%s343 + $0x1a80] sm:$0xff]
        %v1291 = vld [vmem:[%s343 + $0x1a88] sm:$0xff]
        %v1292 = vld [vmem:[%s343 + $0x1a90] sm:$0xff]
        %v1293 = vld [vmem:[%s343 + $0x1a98] sm:$0xff]
        %v1294 = vld [vmem:[%s343 + $0x1aa0] sm:$0xff]
        %v1295 = vld [vmem:[%s343 + $0x1aa8] sm:$0xff]
        %v1296 = vld [vmem:[%s343 + $0x1ab0] sm:$0xff]
        %v1297 = vld [vmem:[%s343 + $0x1ab8] sm:$0xff]
        %v1298 = vld [vmem:[%s343 + $0x1ac0] sm:$0xff]
        %v1299 = vld [vmem:[%s343 + $0x1ac8] sm:$0xff]
        %v1300 = vld [vmem:[%s343 + $0x1ad0] sm:$0xff]
        %v1301 = vld [vmem:[%s343 + $0x1ad8] sm:$0xff]
        %v1302 = vld [vmem:[%s343 + $0x1ae0] sm:$0xff]
        %v1303 = vld [vmem:[%s343 + $0x1ae8] sm:$0xff]
        %v1304 = vld [vmem:[%s343 + $0x1af0] sm:$0xff]
        %v1305 = vld [vmem:[%s343 + $0x1af8] sm:$0xff]
        %v1306 = vld [vmem:[%s343 + $0x1b00] sm:$0xff]
        %v1307 = vld [vmem:[%s343 + $0x1b08] sm:$0xff]
        %v1308 = vld [vmem:[%s343 + $0x1b10] sm:$0xff]
        %v1309 = vld [vmem:[%s343 + $0x1b18] sm:$0xff]
        %v1310 = vld [vmem:[%s343 + $0x1b20] sm:$0xff]
        %v1311 = vld [vmem:[%s343 + $0x1b28] sm:$0xff]
        %v1312 = vld [vmem:[%s343 + $0x1b30] sm:$0xff]
        %v1313 = vld [vmem:[%s343 + $0x1b38] sm:$0xff]
        %v1314 = vld [vmem:[%s343 + $0x1b40] sm:$0xff]
        %v1315 = vld [vmem:[%s343 + $0x1b48] sm:$0xff]
        %v1316 = vld [vmem:[%s343 + $0x1b50] sm:$0xff]
        %v1317 = vld [vmem:[%s343 + $0x1b58] sm:$0xff]
        %v1318 = vld [vmem:[%s343 + $0x1b60] sm:$0xff]
        %v1319 = vld [vmem:[%s343 + $0x1b68] sm:$0xff]
        %v1320 = vld [vmem:[%s343 + $0x1b70] sm:$0xff]
        %v1321 = vld [vmem:[%s343 + $0x1b78] sm:$0xff]
        %v1322 = vld [vmem:[%s343 + $0x1b80] sm:$0xff]
        %v1323 = vld [vmem:[%s343 + $0x1b88] sm:$0xff]
        %v1324 = vld [vmem:[%s343 + $0x1b90] sm:$0xff]
        %v1325 = vld [vmem:[%s343 + $0x1b98] sm:$0xff]
        %v1326 = vld [vmem:[%s343 + $0x1ba0] sm:$0xff]
        %v1327 = vld [vmem:[%s343 + $0x1ba8] sm:$0xff]
        %v1328 = vld [vmem:[%s343 + $0x1bb0] sm:$0xff]
        %v1329 = vld [vmem:[%s343 + $0x1bb8] sm:$0xff]
        %v1330 = vld [vmem:[%s343 + $0x1bc0] sm:$0xff]
        %v1331 = vld [vmem:[%s343 + $0x1bc8] sm:$0xff]
        %v1332 = vld [vmem:[%s343 + $0x1bd0] sm:$0xff]
        %v1333 = vld [vmem:[%s343 + $0x1bd8] sm:$0xff]
        %v1334 = vld [vmem:[%s343 + $0x1be0] sm:$0xff]
        %v1335 = vld [vmem:[%s343 + $0x1be8] sm:$0xff]
        %v1336 = vld [vmem:[%s343 + $0x1bf0] sm:$0xff]
        %v1337 = vld [vmem:[%s343 + $0x1bf8] sm:$0xff]
        %v1338 = vld [vmem:[%s343 + $0x1c00] sm:$0xff]
        %v1339 = vld [vmem:[%s343 + $0x1c08] sm:$0xff]
        %v1340 = vld [vmem:[%s343 + $0x1c10] sm:$0xff]
        %v1341 = vld [vmem:[%s343 + $0x1c18] sm:$0xff]
        %v1342 = vld [vmem:[%s343 + $0x1c20] sm:$0xff]
        %v1343 = vld [vmem:[%s343 + $0x1c28] sm:$0xff]
        %v1344 = vld [vmem:[%s343 + $0x1c30] sm:$0xff]
        %v1345 = vld [vmem:[%s343 + $0x1c38] sm:$0xff]
        %v1346 = vld [vmem:[%s343 + $0x1c40] sm:$0xff]
        %v1347 = vld [vmem:[%s343 + $0x1c48] sm:$0xff]
        %v1348 = vld [vmem:[%s343 + $0x1c50] sm:$0xff]
        %v1349 = vld [vmem:[%s343 + $0x1c58] sm:$0xff]
        %v1350 = vld [vmem:[%s343 + $0x1c60] sm:$0xff]
        %v1351 = vld [vmem:[%s343 + $0x1c68] sm:$0xff]
        %v1352 = vld [vmem:[%s343 + $0x1c70] sm:$0xff]
        %v1353 = vld [vmem:[%s343 + $0x1c78] sm:$0xff]
        %v1354 = vld [vmem:[%s343 + $0x1c80] sm:$0xff]
        %v1355 = vld [vmem:[%s343 + $0x1c88] sm:$0xff]
        %v1356 = vld [vmem:[%s343 + $0x1c90] sm:$0xff]
        %v1357 = vld [vmem:[%s343 + $0x1c98] sm:$0xff]
        %v1358 = vld [vmem:[%s343 + $0x1ca0] sm:$0xff]
        %v1359 = vld [vmem:[%s343 + $0x1ca8] sm:$0xff]
        %v1360 = vld [vmem:[%s343 + $0x1cb0] sm:$0xff]
        %v1361 = vld [vmem:[%s343 + $0x1cb8] sm:$0xff]
        %v1362 = vld [vmem:[%s343 + $0x1cc0] sm:$0xff]
        %v1363 = vld [vmem:[%s343 + $0x1cc8] sm:$0xff]
        %v1364 = vld [vmem:[%s343 + $0x1cd0] sm:$0xff]
        %v1365 = vld [vmem:[%s343 + $0x1cd8] sm:$0xff]
        %v1366 = vld [vmem:[%s343 + $0x1ce0] sm:$0xff]
        %v1367 = vld [vmem:[%s343 + $0x1ce8] sm:$0xff]
        %v1368 = vld [vmem:[%s343 + $0x1cf0] sm:$0xff]
        %v1369 = vld [vmem:[%s343 + $0x1cf8] sm:$0xff]
        %v1370 = vld [vmem:[%s343 + $0x1d00] sm:$0xff]
        %v1371 = vld [vmem:[%s343 + $0x1d08] sm:$0xff]
        %v1372 = vld [vmem:[%s343 + $0x1d10] sm:$0xff]
        %v1373 = vld [vmem:[%s343 + $0x1d18] sm:$0xff]
        %v1374 = vld [vmem:[%s343 + $0x1d20] sm:$0xff]
        %v1375 = vld [vmem:[%s343 + $0x1d28] sm:$0xff]
        %v1376 = vld [vmem:[%s343 + $0x1d30] sm:$0xff]
        %v1377 = vld [vmem:[%s343 + $0x1d38] sm:$0xff]
        %v1378 = vld [vmem:[%s343 + $0x1d40] sm:$0xff]
        %v1379 = vld [vmem:[%s343 + $0x1d48] sm:$0xff]
        %v1380 = vld [vmem:[%s343 + $0x1d50] sm:$0xff]
        %v1381 = vld [vmem:[%s343 + $0x1d58] sm:$0xff]
        %v1382 = vld [vmem:[%s343 + $0x1d60] sm:$0xff]
        %v1383 = vld [vmem:[%s343 + $0x1d68] sm:$0xff]
        %v1384 = vld [vmem:[%s343 + $0x1d70] sm:$0xff]
        %v1385 = vld [vmem:[%s343 + $0x1d78] sm:$0xff]
        %v1386 = vld [vmem:[%s343 + $0x1d80] sm:$0xff]
        %v1387 = vld [vmem:[%s343 + $0x1d88] sm:$0xff]
        %v1388 = vld [vmem:[%s343 + $0x1d90] sm:$0xff]
        %v1389 = vld [vmem:[%s343 + $0x1d98] sm:$0xff]
        %v1390 = vld [vmem:[%s343 + $0x1da0] sm:$0xff]
        %v1391 = vld [vmem:[%s343 + $0x1da8] sm:$0xff]
        %v1392 = vld [vmem:[%s343 + $0x1db0] sm:$0xff]
        %v1393 = vld [vmem:[%s343 + $0x1db8] sm:$0xff]
        %v1394 = vld [vmem:[%s343 + $0x1dc0] sm:$0xff]
        %v1395 = vld [vmem:[%s343 + $0x1dc8] sm:$0xff]
        %v1396 = vld [vmem:[%s343 + $0x1dd0] sm:$0xff]
        %v1397 = vld [vmem:[%s343 + $0x1dd8] sm:$0xff]
        %v1398 = vld [vmem:[%s343 + $0x1de0] sm:$0xff]
        %v1399 = vld [vmem:[%s343 + $0x1de8] sm:$0xff]
        %v1400 = vld [vmem:[%s343 + $0x1df0] sm:$0xff]
        %v1401 = vld [vmem:[%s343 + $0x1df8] sm:$0xff]
        %v1402 = vld [vmem:[%s343 + $0x1e00] sm:$0xff]
        %v1403 = vld [vmem:[%s343 + $0x1e08] sm:$0xff]
        %v1404 = vld [vmem:[%s343 + $0x1e10] sm:$0xff]
        %v1405 = vld [vmem:[%s343 + $0x1e18] sm:$0xff]
        %v1406 = vld [vmem:[%s343 + $0x1e20] sm:$0xff]
        %v1407 = vld [vmem:[%s343 + $0x1e28] sm:$0xff]
        %v1408 = vld [vmem:[%s343 + $0x1e30] sm:$0xff]
        %v1409 = vld [vmem:[%s343 + $0x1e38] sm:$0xff]
        %v1410 = vld [vmem:[%s343 + $0x1e40] sm:$0xff]
        %v1411 = vld [vmem:[%s343 + $0x1e48] sm:$0xff]
        %v1412 = vld [vmem:[%s343 + $0x1e50] sm:$0xff]
        %v1413 = vld [vmem:[%s343 + $0x1e58] sm:$0xff]
        %v1414 = vld [vmem:[%s343 + $0x1e60] sm:$0xff]
        %v1415 = vld [vmem:[%s343 + $0x1e68] sm:$0xff]
        %v1416 = vld [vmem:[%s343 + $0x1e70] sm:$0xff]
        %v1417 = vld [vmem:[%s343 + $0x1e78] sm:$0xff]
        %v1418 = vld [vmem:[%s343 + $0x1e80] sm:$0xff]
        %v1419 = vld [vmem:[%s343 + $0x1e88] sm:$0xff]
        %v1420 = vld [vmem:[%s343 + $0x1e90] sm:$0xff]
        %v1421 = vld [vmem:[%s343 + $0x1e98] sm:$0xff]
        %v1422 = vld [vmem:[%s343 + $0x1ea0] sm:$0xff]
        %v1423 = vld [vmem:[%s343 + $0x1ea8] sm:$0xff]
        %v1424 = vld [vmem:[%s343 + $0x1eb0] sm:$0xff]
        %v1425 = vld [vmem:[%s343 + $0x1eb8] sm:$0xff]
        %v1426 = vld [vmem:[%s343 + $0x1ec0] sm:$0xff]
        %v1427 = vld [vmem:[%s343 + $0x1ec8] sm:$0xff]
        %v1428 = vld [vmem:[%s343 + $0x1ed0] sm:$0xff]
        %v1429 = vld [vmem:[%s343 + $0x1ed8] sm:$0xff]
        %v1430 = vld [vmem:[%s343 + $0x1ee0] sm:$0xff]
        %v1431 = vld [vmem:[%s343 + $0x1ee8] sm:$0xff]
        %v1432 = vld [vmem:[%s343 + $0x1ef0] sm:$0xff]
        %v1433 = vld [vmem:[%s343 + $0x1ef8] sm:$0xff]
        %v1434 = vld [vmem:[%s343 + $0x1f00] sm:$0xff]
        %v1435 = vld [vmem:[%s343 + $0x1f08] sm:$0xff]
        %v1436 = vld [vmem:[%s343 + $0x1f10] sm:$0xff]
        %v1437 = vld [vmem:[%s343 + $0x1f18] sm:$0xff]
        %v1438 = vld [vmem:[%s343 + $0x1f20] sm:$0xff]
        %v1439 = vld [vmem:[%s343 + $0x1f28] sm:$0xff]
        %v1440 = vld [vmem:[%s343 + $0x1f30] sm:$0xff]
        %v1441 = vld [vmem:[%s343 + $0x1f38] sm:$0xff]
        %v1442 = vld [vmem:[%s343 + $0x1f40] sm:$0xff]
        %v1443 = vld [vmem:[%s343 + $0x1f48] sm:$0xff]
        %v1444 = vld [vmem:[%s343 + $0x1f50] sm:$0xff]
        %v1445 = vld [vmem:[%s343 + $0x1f58] sm:$0xff]
        %v1446 = vld [vmem:[%s343 + $0x1f60] sm:$0xff]
        %v1447 = vld [vmem:[%s343 + $0x1f68] sm:$0xff]
        %v1448 = vld [vmem:[%s343 + $0x1f70] sm:$0xff]
        %v1449 = vld [vmem:[%s343 + $0x1f78] sm:$0xff]
        %v1450 = vld [vmem:[%s343 + $0x1f80] sm:$0xff]
        %v1451 = vld [vmem:[%s343 + $0x1f88] sm:$0xff]
        %v1452 = vld [vmem:[%s343 + $0x1f90] sm:$0xff]
        %v1453 = vld [vmem:[%s343 + $0x1f98] sm:$0xff]
        %v1454 = vld [vmem:[%s343 + $0x1fa0] sm:$0xff]
        %v1455 = vld [vmem:[%s343 + $0x1fa8] sm:$0xff]
        %v1456 = vld [vmem:[%s343 + $0x1fb0] sm:$0xff]
        %v1457 = vld [vmem:[%s343 + $0x1fb8] sm:$0xff]
        %v1458 = vld [vmem:[%s343 + $0x1fc0] sm:$0xff]
        %v1459 = vld [vmem:[%s343 + $0x1fc8] sm:$0xff]
        %v1460 = vld [vmem:[%s343 + $0x1fd0] sm:$0xff]
        %v1461 = vld [vmem:[%s343 + $0x1fd8] sm:$0xff]
        %v1462 = vld [vmem:[%s343 + $0x1fe0] sm:$0xff]
        %v1463 = vld [vmem:[%s343 + $0x1fe8] sm:$0xff]
        %v1464 = vld [vmem:[%s343 + $0x1ff0] sm:$0xff]
        %v1465 = vld [vmem:[%s343 + $0x1ff8] sm:$0xff]
        %v1466 = vld [vmem:[%s343 + $0x2000] sm:$0xff]
        %v1467 = vld [vmem:[%s343 + $0x2008] sm:$0xff]
        %v1468 = vld [vmem:[%s343 + $0x2010] sm:$0xff]
        %v1469 = vld [vmem:[%s343 + $0x2018] sm:$0xff]
        %v1470 = vld [vmem:[%s343 + $0x2020] sm:$0xff]
        %v1471 = vld [vmem:[%s343 + $0x2028] sm:$0xff]
        %v1472 = vld [vmem:[%s343 + $0x2030] sm:$0xff]
        %v1473 = vld [vmem:[%s343 + $0x2038] sm:$0xff]
        %v1474 = vld [vmem:[%s343 + $0x2040] sm:$0xff]
        %v1475 = vld [vmem:[%s343 + $0x2048] sm:$0xff]
        %v1476 = vld [vmem:[%s343 + $0x2050] sm:$0xff]
        %v1477 = vld [vmem:[%s343 + $0x2058] sm:$0xff]
        %v1478 = vld [vmem:[%s343 + $0x2060] sm:$0xff]
        %v1479 = vld [vmem:[%s343 + $0x2068] sm:$0xff]
        %v1480 = vld [vmem:[%s343 + $0x2070] sm:$0xff]
        %v1481 = vld [vmem:[%s343 + $0x2078] sm:$0xff]
        %v1482 = vld [vmem:[%s343 + $0x2080] sm:$0xff]
        %v1483 = vld [vmem:[%s343 + $0x2088] sm:$0xff]
        %v1484 = vld [vmem:[%s343 + $0x2090] sm:$0xff]
        %v1485 = vld [vmem:[%s343 + $0x2098] sm:$0xff]
        %v1486 = vld [vmem:[%s343 + $0x20a0] sm:$0xff]
        %v1487 = vld [vmem:[%s343 + $0x20a8] sm:$0xff]
        %v1488 = vld [vmem:[%s343 + $0x20b0] sm:$0xff]
        %v1489 = vld [vmem:[%s343 + $0x20b8] sm:$0xff]
        %v1490 = vld [vmem:[%s343 + $0x20c0] sm:$0xff]
        %v1491 = vld [vmem:[%s343 + $0x20c8] sm:$0xff]
        %v1492 = vld [vmem:[%s343 + $0x20d0] sm:$0xff]
        %v1493 = vld [vmem:[%s343 + $0x20d8] sm:$0xff]
        %v1494 = vld [vmem:[%s343 + $0x20e0] sm:$0xff]
        %v1495 = vld [vmem:[%s343 + $0x20e8] sm:$0xff]
        %v1496 = vld [vmem:[%s343 + $0x20f0] sm:$0xff]
        %v1497 = vld [vmem:[%s343 + $0x20f8] sm:$0xff]
        %v1498 = vld [vmem:[%s343 + $0x2100] sm:$0xff]
        %v1499 = vld [vmem:[%s343 + $0x2108] sm:$0xff]
        %v1500 = vld [vmem:[%s343 + $0x2110] sm:$0xff]
        %v1501 = vld [vmem:[%s343 + $0x2118] sm:$0xff]
        %v1502 = vld [vmem:[%s343 + $0x2120] sm:$0xff]
        %v1503 = vld [vmem:[%s343 + $0x2128] sm:$0xff]
        %v1504 = vld [vmem:[%s343 + $0x2130] sm:$0xff]
        %v1505 = vld [vmem:[%s343 + $0x2138] sm:$0xff]
        %v1506 = vld [vmem:[%s343 + $0x2140] sm:$0xff]
        %v1507 = vld [vmem:[%s343 + $0x2148] sm:$0xff]
        %v1508 = vld [vmem:[%s343 + $0x2150] sm:$0xff]
        %v1509 = vld [vmem:[%s343 + $0x2158] sm:$0xff]
        %v1510 = vld [vmem:[%s343 + $0x2160] sm:$0xff]
        %v1511 = vld [vmem:[%s343 + $0x2168] sm:$0xff]
        %v1512 = vld [vmem:[%s343 + $0x2170] sm:$0xff]
        %v1513 = vld [vmem:[%s343 + $0x2178] sm:$0xff]
        %v1514 = vld [vmem:[%s343 + $0x2180] sm:$0xff]
        %v1515 = vld [vmem:[%s343 + $0x2188] sm:$0xff]
        %v1516 = vld [vmem:[%s343 + $0x2190] sm:$0xff]
        %v1517 = vld [vmem:[%s343 + $0x2198] sm:$0xff]
        %v1518 = vld [vmem:[%s343 + $0x21a0] sm:$0xff]
        %v1519 = vld [vmem:[%s343 + $0x21a8] sm:$0xff]
        %v1520 = vld [vmem:[%s343 + $0x21b0] sm:$0xff]
        %v1521 = vld [vmem:[%s343 + $0x21b8] sm:$0xff]
        %v1522 = vld [vmem:[%s343 + $0x21c0] sm:$0xff]
        %v1523 = vld [vmem:[%s343 + $0x21c8] sm:$0xff]
        %v1524 = vld [vmem:[%s343 + $0x21d0] sm:$0xff]
        %v1525 = vld [vmem:[%s343 + $0x21d8] sm:$0xff]
        %v1526 = vld [vmem:[%s343 + $0x21e0] sm:$0xff]
        %v1527 = vld [vmem:[%s343 + $0x21e8] sm:$0xff]
        %v1528 = vld [vmem:[%s343 + $0x21f0] sm:$0xff]
        %v1529 = vld [vmem:[%s343 + $0x21f8] sm:$0xff]
        %v1530 = vld [vmem:[%s343 + $0x2200] sm:$0xff]
        %v1531 = vld [vmem:[%s343 + $0x2208] sm:$0xff]
        %v1532 = vld [vmem:[%s343 + $0x2210] sm:$0xff]
        %v1533 = vld [vmem:[%s343 + $0x2218] sm:$0xff]
        %v1534 = vld [vmem:[%s343 + $0x2220] sm:$0xff]
        %v1535 = vld [vmem:[%s343 + $0x2228] sm:$0xff]
        %v1536 = vld [vmem:[%s343 + $0x2230] sm:$0xff]
        %v1537 = vld [vmem:[%s343 + $0x2238] sm:$0xff]
        %v1538 = vld [vmem:[%s343 + $0x2240] sm:$0xff]
        %v1539 = vld [vmem:[%s343 + $0x2248] sm:$0xff]
        %v1540 = vld [vmem:[%s343 + $0x2250] sm:$0xff]
        %v1541 = vld [vmem:[%s343 + $0x2258] sm:$0xff]
        %v1542 = vld [vmem:[%s343 + $0x2260] sm:$0xff]
        %v1543 = vld [vmem:[%s343 + $0x2268] sm:$0xff]
        %v1544 = vld [vmem:[%s343 + $0x2270] sm:$0xff]
        %v1545 = vld [vmem:[%s343 + $0x2278] sm:$0xff]
        %v1546 = vld [vmem:[%s343 + $0x2280] sm:$0xff]
        %v1547 = vld [vmem:[%s343 + $0x2288] sm:$0xff]
        %v1548 = vld [vmem:[%s343 + $0x2290] sm:$0xff]
        %v1549 = vld [vmem:[%s343 + $0x2298] sm:$0xff]
        %v1550 = vld [vmem:[%s343 + $0x22a0] sm:$0xff]
        %v1551 = vld [vmem:[%s343 + $0x22a8] sm:$0xff]
        %v1552 = vld [vmem:[%s343 + $0x22b0] sm:$0xff]
        %v1553 = vld [vmem:[%s343 + $0x22b8] sm:$0xff]
        %v1554 = vld [vmem:[%s343 + $0x22c0] sm:$0xff]
        %v1555 = vld [vmem:[%s343 + $0x22c8] sm:$0xff]
        %v1556 = vld [vmem:[%s343 + $0x22d0] sm:$0xff]
        %v1557 = vld [vmem:[%s343 + $0x22d8] sm:$0xff]
        %v1558 = vld [vmem:[%s343 + $0x22e0] sm:$0xff]
        %v1559 = vld [vmem:[%s343 + $0x22e8] sm:$0xff]
        %v1560 = vld [vmem:[%s343 + $0x22f0] sm:$0xff]
        %v1561 = vld [vmem:[%s343 + $0x22f8] sm:$0xff]
        %v1562 = vld [vmem:[%s343 + $0x2300] sm:$0xff]
        %v1563 = vld [vmem:[%s343 + $0x2308] sm:$0xff]
        %v1564 = vld [vmem:[%s343 + $0x2310] sm:$0xff]
        %v1565 = vld [vmem:[%s343 + $0x2318] sm:$0xff]
        %v1566 = vld [vmem:[%s343 + $0x2320] sm:$0xff]
        %v1567 = vld [vmem:[%s343 + $0x2328] sm:$0xff]
        %v1568 = vld [vmem:[%s343 + $0x2330] sm:$0xff]
        %v1569 = vld [vmem:[%s343 + $0x2338] sm:$0xff]
        %v1570 = vld [vmem:[%s343 + $0x2340] sm:$0xff]
        %v1571 = vld [vmem:[%s343 + $0x2348] sm:$0xff]
        %v1572 = vld [vmem:[%s343 + $0x2350] sm:$0xff]
        %v1573 = vld [vmem:[%s343 + $0x2358] sm:$0xff]
        %v1574 = vld [vmem:[%s343 + $0x2360] sm:$0xff]
        %v1575 = vld [vmem:[%s343 + $0x2368] sm:$0xff]
        %v1576 = vld [vmem:[%s343 + $0x2370] sm:$0xff]
        %v1577 = vld [vmem:[%s343 + $0x2378] sm:$0xff]
        %v1578 = vld [vmem:[%s343 + $0x2380] sm:$0xff]
        %v1579 = vld [vmem:[%s343 + $0x2388] sm:$0xff]
        %v1580 = vld [vmem:[%s343 + $0x2390] sm:$0xff]
        %v1581 = vld [vmem:[%s343 + $0x2398] sm:$0xff]
        %v1582 = vld [vmem:[%s343 + $0x23a0] sm:$0xff]
        %v1583 = vld [vmem:[%s343 + $0x23a8] sm:$0xff]
        %v1584 = vld [vmem:[%s343 + $0x23b0] sm:$0xff]
        %v1585 = vld [vmem:[%s343 + $0x23b8] sm:$0xff]
        %v1586 = vld [vmem:[%s343 + $0x23c0] sm:$0xff]
        %v1587 = vld [vmem:[%s343 + $0x23c8] sm:$0xff]
        %v1588 = vld [vmem:[%s343 + $0x23d0] sm:$0xff]
        %v1589 = vld [vmem:[%s343 + $0x23d8] sm:$0xff]
        %v1590 = vld [vmem:[%s343 + $0x23e0] sm:$0xff]
        %v1591 = vld [vmem:[%s343 + $0x23e8] sm:$0xff]
        %v1592 = vld [vmem:[%s343 + $0x23f0] sm:$0xff]
        %v1593 = vld [vmem:[%s343 + $0x23f8] sm:$0xff]
        %v1594 = vld [vmem:[%s343 + $0x2400] sm:$0xff]
        %v1595 = vld [vmem:[%s343 + $0x2408] sm:$0xff]
        %v1596 = vld [vmem:[%s343 + $0x2410] sm:$0xff]
        %v1597 = vld [vmem:[%s343 + $0x2418] sm:$0xff]
        %v1598 = vld [vmem:[%s343 + $0x2420] sm:$0xff]
        %v1599 = vld [vmem:[%s343 + $0x2428] sm:$0xff]
        %v1600 = vld [vmem:[%s343 + $0x2430] sm:$0xff]
        %v1601 = vld [vmem:[%s343 + $0x2438] sm:$0xff]
        %v1602 = vld [vmem:[%s343 + $0x2440] sm:$0xff]
        %v1603 = vld [vmem:[%s343 + $0x2448] sm:$0xff]
        %v1604 = vld [vmem:[%s343 + $0x2450] sm:$0xff]
        %v1605 = vld [vmem:[%s343 + $0x2458] sm:$0xff]
        %v1606 = vld [vmem:[%s343 + $0x2460] sm:$0xff]
        %v1607 = vld [vmem:[%s343 + $0x2468] sm:$0xff]
        %v1608 = vld [vmem:[%s343 + $0x2470] sm:$0xff]
        %v1609 = vld [vmem:[%s343 + $0x2478] sm:$0xff]
        %v1610 = vld [vmem:[%s343 + $0x2480] sm:$0xff]
        %v1611 = vld [vmem:[%s343 + $0x2488] sm:$0xff]
        %v1612 = vld [vmem:[%s343 + $0x2490] sm:$0xff]
        %v1613 = vld [vmem:[%s343 + $0x2498] sm:$0xff]
        %v1614 = vld [vmem:[%s343 + $0x24a0] sm:$0xff]
        %v1615 = vld [vmem:[%s343 + $0x24a8] sm:$0xff]
        %v1616 = vld [vmem:[%s343 + $0x24b0] sm:$0xff]
        %v1617 = vld [vmem:[%s343 + $0x24b8] sm:$0xff]
        %v1618 = vld [vmem:[%s343 + $0x24c0] sm:$0xff]
        %v1619 = vld [vmem:[%s343 + $0x24c8] sm:$0xff]
        %v1620 = vld [vmem:[%s343 + $0x24d0] sm:$0xff]
        %v1621 = vld [vmem:[%s343 + $0x24d8] sm:$0xff]
        %v1622 = vld [vmem:[%s343 + $0x24e0] sm:$0xff]
        %v1623 = vld [vmem:[%s343 + $0x24e8] sm:$0xff]
        %v1624 = vld [vmem:[%s343 + $0x24f0] sm:$0xff]
        %v1625 = vld [vmem:[%s343 + $0x24f8] sm:$0xff]
        %v1626 = vld [vmem:[%s343 + $0x2500] sm:$0xff]
        %v1627 = vld [vmem:[%s343 + $0x2508] sm:$0xff]
        %v1628 = vld [vmem:[%s343 + $0x2510] sm:$0xff]
        %v1629 = vld [vmem:[%s343 + $0x2518] sm:$0xff]
        %v1630 = vld [vmem:[%s343 + $0x2520] sm:$0xff]
        %v1631 = vld [vmem:[%s343 + $0x2528] sm:$0xff]
        %v1632 = vld [vmem:[%s343 + $0x2530] sm:$0xff]
        %v1633 = vld [vmem:[%s343 + $0x2538] sm:$0xff]
        %v1634 = vld [vmem:[%s343 + $0x2540] sm:$0xff]
        %v1635 = vld [vmem:[%s343 + $0x2548] sm:$0xff]
        %v1636 = vld [vmem:[%s343 + $0x2550] sm:$0xff]
        %v1637 = vld [vmem:[%s343 + $0x2558] sm:$0xff]
        %v1638 = vld [vmem:[%s343 + $0x2560] sm:$0xff]
        %v1639 = vld [vmem:[%s343 + $0x2568] sm:$0xff]
        %v1640 = vld [vmem:[%s343 + $0x2570] sm:$0xff]
        %v1641 = vld [vmem:[%s343 + $0x2578] sm:$0xff]
        %v1642 = vld [vmem:[%s343 + $0x2580] sm:$0xff]
        %v1643 = vld [vmem:[%s343 + $0x2588] sm:$0xff]
        %v1644 = vld [vmem:[%s343 + $0x2590] sm:$0xff]
        %v1645 = vld [vmem:[%s343 + $0x2598] sm:$0xff]
        %v1646 = vld [vmem:[%s343 + $0x25a0] sm:$0xff]
        %v1647 = vld [vmem:[%s343 + $0x25a8] sm:$0xff]
        %v1648 = vld [vmem:[%s343 + $0x25b0] sm:$0xff]
        %v1649 = vld [vmem:[%s343 + $0x25b8] sm:$0xff]
        %v1650 = vld [vmem:[%s343 + $0x25c0] sm:$0xff]
        %v1651 = vld [vmem:[%s343 + $0x25c8] sm:$0xff]
        %v1652 = vld [vmem:[%s343 + $0x25d0] sm:$0xff]
        %v1653 = vld [vmem:[%s343 + $0x25d8] sm:$0xff]
        %v1654 = vld [vmem:[%s343 + $0x25e0] sm:$0xff]
        %v1655 = vld [vmem:[%s343 + $0x25e8] sm:$0xff]
        %v1656 = vld [vmem:[%s343 + $0x25f0] sm:$0xff]
        %v1657 = vld [vmem:[%s343 + $0x25f8] sm:$0xff]
        %v1658 = vld [vmem:[%s343 + $0x2600] sm:$0xff]
        %v1659 = vld [vmem:[%s343 + $0x2608] sm:$0xff]
        %v1660 = vld [vmem:[%s343 + $0x2610] sm:$0xff]
        %v1661 = vld [vmem:[%s343 + $0x2618] sm:$0xff]
        %v1662 = vld [vmem:[%s343 + $0x2620] sm:$0xff]
        %v1663 = vld [vmem:[%s343 + $0x2628] sm:$0xff]
        %v1664 = vld [vmem:[%s343 + $0x2630] sm:$0xff]
        %v1665 = vld [vmem:[%s343 + $0x2638] sm:$0xff]
        %v1666 = vld [vmem:[%s343 + $0x2640] sm:$0xff]
        %v1667 = vld [vmem:[%s343 + $0x2648] sm:$0xff]
        %v1668 = vld [vmem:[%s343 + $0x2650] sm:$0xff]
        %v1669 = vld [vmem:[%s343 + $0x2658] sm:$0xff]
        %v1670 = vld [vmem:[%s343 + $0x2660] sm:$0xff]
        %v1671 = vld [vmem:[%s343 + $0x2668] sm:$0xff]
        %v1672 = vld [vmem:[%s343 + $0x2670] sm:$0xff]
        %v1673 = vld [vmem:[%s343 + $0x2678] sm:$0xff]
        %v1674 = vld [vmem:[%s343 + $0x2680] sm:$0xff]
        %v1675 = vld [vmem:[%s343 + $0x2688] sm:$0xff]
        %v1676 = vld [vmem:[%s343 + $0x2690] sm:$0xff]
        %v1677 = vld [vmem:[%s343 + $0x2698] sm:$0xff]
        %v1678 = vld [vmem:[%s343 + $0x26a0] sm:$0xff]
        %v1679 = vld [vmem:[%s343 + $0x26a8] sm:$0xff]
        %v1680 = vld [vmem:[%s343 + $0x26b0] sm:$0xff]
        %v1681 = vld [vmem:[%s343 + $0x26b8] sm:$0xff]
        %v1682 = vld [vmem:[%s343 + $0x26c0] sm:$0xff]
        %v1683 = vld [vmem:[%s343 + $0x26c8] sm:$0xff]
        %v1684 = vld [vmem:[%s343 + $0x26d0] sm:$0xff]
        %v1685 = vld [vmem:[%s343 + $0x26d8] sm:$0xff]
        %v1686 = vld [vmem:[%s343 + $0x26e0] sm:$0xff]
        %v1687 = vld [vmem:[%s343 + $0x26e8] sm:$0xff]
        %v1688 = vld [vmem:[%s343 + $0x26f0] sm:$0xff]
        %v1689 = vld [vmem:[%s343 + $0x26f8] sm:$0xff]
        %v1690 = vld [vmem:[%s343 + $0x2700] sm:$0xff]
        %v1691 = vld [vmem:[%s343 + $0x2708] sm:$0xff]
        %v1692 = vld [vmem:[%s343 + $0x2710] sm:$0xff]
        %v1693 = vld [vmem:[%s343 + $0x2718] sm:$0xff]
        %v1694 = vld [vmem:[%s343 + $0x2720] sm:$0xff]
        %v1695 = vld [vmem:[%s343 + $0x2728] sm:$0xff]
        %v1696 = vld [vmem:[%s343 + $0x2730] sm:$0xff]
        %v1697 = vld [vmem:[%s343 + $0x2738] sm:$0xff]
        %v1698 = vld [vmem:[%s343 + $0x2740] sm:$0xff]
        %v1699 = vld [vmem:[%s343 + $0x2748] sm:$0xff]
        %v1700 = vld [vmem:[%s343 + $0x2750] sm:$0xff]
        %v1701 = vld [vmem:[%s343 + $0x2758] sm:$0xff]
        %v1702 = vld [vmem:[%s343 + $0x2760] sm:$0xff]
        %v1703 = vld [vmem:[%s343 + $0x2768] sm:$0xff]
        %v1704 = vld [vmem:[%s343 + $0x2770] sm:$0xff]
        %v1705 = vld [vmem:[%s343 + $0x2778] sm:$0xff]
        %v1706 = vld [vmem:[%s343 + $0x2780] sm:$0xff]
        %v1707 = vld [vmem:[%s343 + $0x2788] sm:$0xff]
        %v1708 = vld [vmem:[%s343 + $0x2790] sm:$0xff]
        %v1709 = vld [vmem:[%s343 + $0x2798] sm:$0xff]
        %v1710 = vld [vmem:[%s343 + $0x27a0] sm:$0xff]
        %v1711 = vld [vmem:[%s343 + $0x27a8] sm:$0xff]
        %v1712 = vld [vmem:[%s343 + $0x27b0] sm:$0xff]
        %v1713 = vld [vmem:[%s343 + $0x27b8] sm:$0xff]
        %v1714 = vld [vmem:[%s343 + $0x27c0] sm:$0xff]
        %v1715 = vld [vmem:[%s343 + $0x27c8] sm:$0xff]
        %v1716 = vld [vmem:[%s343 + $0x27d0] sm:$0xff]
        %v1717 = vld [vmem:[%s343 + $0x27d8] sm:$0xff]
        %v1718 = vld [vmem:[%s343 + $0x27e0] sm:$0xff]
        %v1719 = vld [vmem:[%s343 + $0x27e8] sm:$0xff]
        %v1720 = vld [vmem:[%s343 + $0x27f0] sm:$0xff]
        %v1721 = vld [vmem:[%s343 + $0x27f8] sm:$0xff]
        %v1722 = vld [vmem:[%s343 + $0x2800] sm:$0xff]
        %v1723 = vld [vmem:[%s343 + $0x2808] sm:$0xff]
        %v1724 = vld [vmem:[%s343 + $0x2810] sm:$0xff]
        %v1725 = vld [vmem:[%s343 + $0x2818] sm:$0xff]
        %v1726 = vld [vmem:[%s343 + $0x2820] sm:$0xff]
        %v1727 = vld [vmem:[%s343 + $0x2828] sm:$0xff]
        %v1728 = vld [vmem:[%s343 + $0x2830] sm:$0xff]
        %v1729 = vld [vmem:[%s343 + $0x2838] sm:$0xff]
        %v1730 = vld [vmem:[%s343 + $0x2840] sm:$0xff]
        %v1731 = vld [vmem:[%s343 + $0x2848] sm:$0xff]
        %v1732 = vld [vmem:[%s343 + $0x2850] sm:$0xff]
        %v1733 = vld [vmem:[%s343 + $0x2858] sm:$0xff]
        %v1734 = vld [vmem:[%s343 + $0x2860] sm:$0xff]
        %v1735 = vld [vmem:[%s343 + $0x2868] sm:$0xff]
        %v1736 = vld [vmem:[%s343 + $0x2870] sm:$0xff]
        %v1737 = vld [vmem:[%s343 + $0x2878] sm:$0xff]
        %v1738 = vld [vmem:[%s343 + $0x2880] sm:$0xff]
        %v1739 = vld [vmem:[%s343 + $0x2888] sm:$0xff]
        %v1740 = vld [vmem:[%s343 + $0x2890] sm:$0xff]
        %v1741 = vld [vmem:[%s343 + $0x2898] sm:$0xff]
        %v1742 = vld [vmem:[%s343 + $0x28a0] sm:$0xff]
        %v1743 = vld [vmem:[%s343 + $0x28a8] sm:$0xff]
        %v1744 = vld [vmem:[%s343 + $0x28b0] sm:$0xff]
        %v1745 = vld [vmem:[%s343 + $0x28b8] sm:$0xff]
        %v1746 = vld [vmem:[%s343 + $0x28c0] sm:$0xff]
        %v1747 = vld [vmem:[%s343 + $0x28c8] sm:$0xff]
        %v1748 = vld [vmem:[%s343 + $0x28d0] sm:$0xff]
        %v1749 = vld [vmem:[%s343 + $0x28d8] sm:$0xff]
        %v1750 = vld [vmem:[%s343 + $0x28e0] sm:$0xff]
        %v1751 = vld [vmem:[%s343 + $0x28e8] sm:$0xff]
        %v1752 = vld [vmem:[%s343 + $0x28f0] sm:$0xff]
        %v1753 = vld [vmem:[%s343 + $0x28f8] sm:$0xff]
        %v1754 = vld [vmem:[%s343 + $0x2900] sm:$0xff]
        %v1755 = vld [vmem:[%s343 + $0x2908] sm:$0xff]
        %v1756 = vld [vmem:[%s343 + $0x2910] sm:$0xff]
        %v1757 = vld [vmem:[%s343 + $0x2918] sm:$0xff]
        %v1758 = vld [vmem:[%s343 + $0x2920] sm:$0xff]
        %v1759 = vld [vmem:[%s343 + $0x2928] sm:$0xff]
        %v1760 = vld [vmem:[%s343 + $0x2930] sm:$0xff]
        %v1761 = vld [vmem:[%s343 + $0x2938] sm:$0xff]
        %v1762 = vld [vmem:[%s343 + $0x2940] sm:$0xff]
        %v1763 = vld [vmem:[%s343 + $0x2948] sm:$0xff]
        %v1764 = vld [vmem:[%s343 + $0x2950] sm:$0xff]
        %v1765 = vld [vmem:[%s343 + $0x2958] sm:$0xff]
        %v1766 = vld [vmem:[%s343 + $0x2960] sm:$0xff]
        %v1767 = vld [vmem:[%s343 + $0x2968] sm:$0xff]
        %v1768 = vld [vmem:[%s343 + $0x2970] sm:$0xff]
        %v1769 = vld [vmem:[%s343 + $0x2978] sm:$0xff]
        %v1770 = vld [vmem:[%s343 + $0x2980] sm:$0xff]
        %v1771 = vld [vmem:[%s343 + $0x2988] sm:$0xff]
        %v1772 = vld [vmem:[%s343 + $0x2990] sm:$0xff]
        %v1773 = vld [vmem:[%s343 + $0x2998] sm:$0xff]
        %v1774 = vld [vmem:[%s343 + $0x29a0] sm:$0xff]
        %v1775 = vld [vmem:[%s343 + $0x29a8] sm:$0xff]
        %v1776 = vld [vmem:[%s343 + $0x29b0] sm:$0xff]
        %v1777 = vld [vmem:[%s343 + $0x29b8] sm:$0xff]
        %v1778 = vld [vmem:[%s343 + $0x29c0] sm:$0xff]
        %v1779 = vld [vmem:[%s343 + $0x29c8] sm:$0xff]
        %v1780 = vld [vmem:[%s343 + $0x29d0] sm:$0xff]
        %v1781 = vld [vmem:[%s343 + $0x29d8] sm:$0xff]
        %v1782 = vld [vmem:[%s343 + $0x29e0] sm:$0xff]
        %v1783 = vld [vmem:[%s343 + $0x29e8] sm:$0xff]
        %v1784 = vld [vmem:[%s343 + $0x29f0] sm:$0xff]
        %v1785 = vld [vmem:[%s343 + $0x29f8] sm:$0xff]
        %v1786 = vld [vmem:[%s343 + $0x2a00] sm:$0xff]
        %v1787 = vld [vmem:[%s343 + $0x2a08] sm:$0xff]
        %v1788 = vld [vmem:[%s343 + $0x2a10] sm:$0xff]
        %v1789 = vld [vmem:[%s343 + $0x2a18] sm:$0xff]
        %v1790 = vld [vmem:[%s343 + $0x2a20] sm:$0xff]
        %v1791 = vld [vmem:[%s343 + $0x2a28] sm:$0xff]
        %v1792 = vld [vmem:[%s343 + $0x2a30] sm:$0xff]
        %v1793 = vld [vmem:[%s343 + $0x2a38] sm:$0xff]
        %v1794 = vld [vmem:[%s343 + $0x2a40] sm:$0xff]
        %v1795 = vld [vmem:[%s343 + $0x2a48] sm:$0xff]
        %v1796 = vld [vmem:[%s343 + $0x2a50] sm:$0xff]
        %v1797 = vld [vmem:[%s343 + $0x2a58] sm:$0xff]
        %v1798 = vld [vmem:[%s343 + $0x2a60] sm:$0xff]
        %v1799 = vld [vmem:[%s343 + $0x2a68] sm:$0xff]
        %v1800 = vld [vmem:[%s343 + $0x2a70] sm:$0xff]
        %v1801 = vld [vmem:[%s343 + $0x2a78] sm:$0xff]
        %v1802 = vld [vmem:[%s343 + $0x2a80] sm:$0xff]
        %v1803 = vld [vmem:[%s343 + $0x2a88] sm:$0xff]
        %v1804 = vld [vmem:[%s343 + $0x2a90] sm:$0xff]
        %v1805 = vld [vmem:[%s343 + $0x2a98] sm:$0xff]
        %v1806 = vld [vmem:[%s343 + $0x2aa0] sm:$0xff]
        %v1807 = vld [vmem:[%s343 + $0x2aa8] sm:$0xff]
        %v1808 = vld [vmem:[%s343 + $0x2ab0] sm:$0xff]
        %v1809 = vld [vmem:[%s343 + $0x2ab8] sm:$0xff]
        %v1810 = vld [vmem:[%s343 + $0x2ac0] sm:$0xff]
        %v1811 = vld [vmem:[%s343 + $0x2ac8] sm:$0xff]
        %v1812 = vld [vmem:[%s343 + $0x2ad0] sm:$0xff]
        %v1813 = vld [vmem:[%s343 + $0x2ad8] sm:$0xff]
        %v1814 = vld [vmem:[%s343 + $0x2ae0] sm:$0xff]
        %v1815 = vld [vmem:[%s343 + $0x2ae8] sm:$0xff]
        %v1816 = vld [vmem:[%s343 + $0x2af0] sm:$0xff]
        %v1817 = vld [vmem:[%s343 + $0x2af8] sm:$0xff]
        %v1818 = vld [vmem:[%s343 + $0x2b00] sm:$0xff]
        %v1819 = vld [vmem:[%s343 + $0x2b08] sm:$0xff]
        %v1820 = vld [vmem:[%s343 + $0x2b10] sm:$0xff]
        %v1821 = vld [vmem:[%s343 + $0x2b18] sm:$0xff]
        %v1822 = vld [vmem:[%s343 + $0x2b20] sm:$0xff]
        %v1823 = vld [vmem:[%s343 + $0x2b28] sm:$0xff]
        %v1824 = vld [vmem:[%s343 + $0x2b30] sm:$0xff]
        %v1825 = vld [vmem:[%s343 + $0x2b38] sm:$0xff]
        %v1826 = vld [vmem:[%s343 + $0x2b40] sm:$0xff]
        %v1827 = vld [vmem:[%s343 + $0x2b48] sm:$0xff]
        %v1828 = vld [vmem:[%s343 + $0x2b50] sm:$0xff]
        %v1829 = vld [vmem:[%s343 + $0x2b58] sm:$0xff]
        %v1830 = vld [vmem:[%s343 + $0x2b60] sm:$0xff]
        %v1831 = vld [vmem:[%s343 + $0x2b68] sm:$0xff]
        %v1832 = vld [vmem:[%s343 + $0x2b70] sm:$0xff]
        %v1833 = vld [vmem:[%s343 + $0x2b78] sm:$0xff]
        %v1834 = vld [vmem:[%s343 + $0x2b80] sm:$0xff]
        %v1835 = vld [vmem:[%s343 + $0x2b88] sm:$0xff]
        %v1836 = vld [vmem:[%s343 + $0x2b90] sm:$0xff]
        %v1837 = vld [vmem:[%s343 + $0x2b98] sm:$0xff]
        %v1838 = vld [vmem:[%s343 + $0x2ba0] sm:$0xff]
        %v1839 = vld [vmem:[%s343 + $0x2ba8] sm:$0xff]
        %v1840 = vld [vmem:[%s343 + $0x2bb0] sm:$0xff]
        %v1841 = vld [vmem:[%s343 + $0x2bb8] sm:$0xff]
        %v1842 = vld [vmem:[%s343 + $0x2bc0] sm:$0xff]
        %v1843 = vld [vmem:[%s343 + $0x2bc8] sm:$0xff]
        %v1844 = vld [vmem:[%s343 + $0x2bd0] sm:$0xff]
        %v1845 = vld [vmem:[%s343 + $0x2bd8] sm:$0xff]
        %v1846 = vld [vmem:[%s343 + $0x2be0] sm:$0xff]
        %v1847 = vld [vmem:[%s343 + $0x2be8] sm:$0xff]
        %v1848 = vld [vmem:[%s343 + $0x2bf0] sm:$0xff]
        %v1849 = vld [vmem:[%s343 + $0x2bf8] sm:$0xff]
        %v1850 = vld [vmem:[%s343 + $0x2c00] sm:$0xff]
        %v1851 = vld [vmem:[%s343 + $0x2c08] sm:$0xff]
        %v1852 = vld [vmem:[%s343 + $0x2c10] sm:$0xff]
        %v1853 = vld [vmem:[%s343 + $0x2c18] sm:$0xff]
        %v1854 = vld [vmem:[%s343 + $0x2c20] sm:$0xff]
        %v1855 = vld [vmem:[%s343 + $0x2c28] sm:$0xff]
        %v1856 = vld [vmem:[%s343 + $0x2c30] sm:$0xff]
        %v1857 = vld [vmem:[%s343 + $0x2c38] sm:$0xff]
        %v1858 = vld [vmem:[%s343 + $0x2c40] sm:$0xff]
        %v1859 = vld [vmem:[%s343 + $0x2c48] sm:$0xff]
        %v1860 = vld [vmem:[%s343 + $0x2c50] sm:$0xff]
        %v1861 = vld [vmem:[%s343 + $0x2c58] sm:$0xff]
        %v1862 = vld [vmem:[%s343 + $0x2c60] sm:$0xff]
        %v1863 = vld [vmem:[%s343 + $0x2c68] sm:$0xff]
        %v1864 = vld [vmem:[%s343 + $0x2c70] sm:$0xff]
        %v1865 = vld [vmem:[%s343 + $0x2c78] sm:$0xff]
        %v1866 = vld [vmem:[%s343 + $0x2c80] sm:$0xff]
        %v1867 = vld [vmem:[%s343 + $0x2c88] sm:$0xff]
        %v1868 = vld [vmem:[%s343 + $0x2c90] sm:$0xff]
        %v1869 = vld [vmem:[%s343 + $0x2c98] sm:$0xff]
        %v1870 = vld [vmem:[%s343 + $0x2ca0] sm:$0xff]
        %v1871 = vld [vmem:[%s343 + $0x2ca8] sm:$0xff]
        %v1872 = vld [vmem:[%s343 + $0x2cb0] sm:$0xff]
        %v1873 = vld [vmem:[%s343 + $0x2cb8] sm:$0xff]
        %v1874 = vld [vmem:[%s343 + $0x2cc0] sm:$0xff]
        %v1875 = vld [vmem:[%s343 + $0x2cc8] sm:$0xff]
        %v1876 = vld [vmem:[%s343 + $0x2cd0] sm:$0xff]
        %v1877 = vld [vmem:[%s343 + $0x2cd8] sm:$0xff]
        %v1878 = vld [vmem:[%s343 + $0x2ce0] sm:$0xff]
        %v1879 = vld [vmem:[%s343 + $0x2ce8] sm:$0xff]
        %v1880 = vld [vmem:[%s343 + $0x2cf0] sm:$0xff]
        %v1881 = vld [vmem:[%s343 + $0x2cf8] sm:$0xff]
        %v1882 = vld [vmem:[%s343 + $0x2d00] sm:$0xff]
        %v1883 = vld [vmem:[%s343 + $0x2d08] sm:$0xff]
        %v1884 = vld [vmem:[%s343 + $0x2d10] sm:$0xff]
        %v1885 = vld [vmem:[%s343 + $0x2d18] sm:$0xff]
        %v1886 = vld [vmem:[%s343 + $0x2d20] sm:$0xff]
        %v1887 = vld [vmem:[%s343 + $0x2d28] sm:$0xff]
        %v1888 = vld [vmem:[%s343 + $0x2d30] sm:$0xff]
        %v1889 = vld [vmem:[%s343 + $0x2d38] sm:$0xff]
        %v1890 = vld [vmem:[%s343 + $0x2d40] sm:$0xff]
        %v1891 = vld [vmem:[%s343 + $0x2d48] sm:$0xff]
        %v1892 = vld [vmem:[%s343 + $0x2d50] sm:$0xff]
        %v1893 = vld [vmem:[%s343 + $0x2d58] sm:$0xff]
        %v1894 = vld [vmem:[%s343 + $0x2d60] sm:$0xff]
        %v1895 = vld [vmem:[%s343 + $0x2d68] sm:$0xff]
        %v1896 = vld [vmem:[%s343 + $0x2d70] sm:$0xff]
        %v1897 = vld [vmem:[%s343 + $0x2d78] sm:$0xff]
        %v1898 = vld [vmem:[%s343 + $0x2d80] sm:$0xff]
        %v1899 = vld [vmem:[%s343 + $0x2d88] sm:$0xff]
        %v1900 = vld [vmem:[%s343 + $0x2d90] sm:$0xff]
        %v1901 = vld [vmem:[%s343 + $0x2d98] sm:$0xff]
        %v1902 = vld [vmem:[%s343 + $0x2da0] sm:$0xff]
        %v1903 = vld [vmem:[%s343 + $0x2da8] sm:$0xff]
        %v1904 = vld [vmem:[%s343 + $0x2db0] sm:$0xff]
        %v1905 = vld [vmem:[%s343 + $0x2db8] sm:$0xff]
        %v1906 = vld [vmem:[%s343 + $0x2dc0] sm:$0xff]
        %v1907 = vld [vmem:[%s343 + $0x2dc8] sm:$0xff]
        %v1908 = vld [vmem:[%s343 + $0x2dd0] sm:$0xff]
        %v1909 = vld [vmem:[%s343 + $0x2dd8] sm:$0xff]
        %v1910 = vld [vmem:[%s343 + $0x2de0] sm:$0xff]
        %v1911 = vld [vmem:[%s343 + $0x2de8] sm:$0xff]
        %v1912 = vld [vmem:[%s343 + $0x2df0] sm:$0xff]
        %v1913 = vld [vmem:[%s343 + $0x2df8] sm:$0xff]
        %v1914 = vld [vmem:[%s343 + $0x2e00] sm:$0xff]
        %v1915 = vld [vmem:[%s343 + $0x2e08] sm:$0xff]
        %v1916 = vld [vmem:[%s343 + $0x2e10] sm:$0xff]
        %v1917 = vld [vmem:[%s343 + $0x2e18] sm:$0xff]
        %v1918 = vld [vmem:[%s343 + $0x2e20] sm:$0xff]
        %v1919 = vld [vmem:[%s343 + $0x2e28] sm:$0xff]
        %v1920 = vld [vmem:[%s343 + $0x2e30] sm:$0xff]
        %v1921 = vld [vmem:[%s343 + $0x2e38] sm:$0xff]
        %v1922 = vld [vmem:[%s343 + $0x2e40] sm:$0xff]
        %v1923 = vld [vmem:[%s343 + $0x2e48] sm:$0xff]
        %v1924 = vld [vmem:[%s343 + $0x2e50] sm:$0xff]
        %v1925 = vld [vmem:[%s343 + $0x2e58] sm:$0xff]
        %v1926 = vld [vmem:[%s343 + $0x2e60] sm:$0xff]
        %v1927 = vld [vmem:[%s343 + $0x2e68] sm:$0xff]
        %v1928 = vld [vmem:[%s343 + $0x2e70] sm:$0xff]
        %v1929 = vld [vmem:[%s343 + $0x2e78] sm:$0xff]
        %v1930 = vld [vmem:[%s343 + $0x2e80] sm:$0xff]
        %v1931 = vld [vmem:[%s343 + $0x2e88] sm:$0xff]
        %v1932 = vld [vmem:[%s343 + $0x2e90] sm:$0xff]
        %v1933 = vld [vmem:[%s343 + $0x2e98] sm:$0xff]
        %v1934 = vld [vmem:[%s343 + $0x2ea0] sm:$0xff]
        %v1935 = vld [vmem:[%s343 + $0x2ea8] sm:$0xff]
        %v1936 = vld [vmem:[%s343 + $0x2eb0] sm:$0xff]
        %v1937 = vld [vmem:[%s343 + $0x2eb8] sm:$0xff]
        %v1938 = vld [vmem:[%s343 + $0x2ec0] sm:$0xff]
        %v1939 = vld [vmem:[%s343 + $0x2ec8] sm:$0xff]
        %v1940 = vld [vmem:[%s343 + $0x2ed0] sm:$0xff]
        %v1941 = vld [vmem:[%s343 + $0x2ed8] sm:$0xff]
        %v1942 = vld [vmem:[%s343 + $0x2ee0] sm:$0xff]
        %v1943 = vld [vmem:[%s343 + $0x2ee8] sm:$0xff]
        %v1944 = vld [vmem:[%s343 + $0x2ef0] sm:$0xff]
        %v1945 = vld [vmem:[%s343 + $0x2ef8] sm:$0xff]
        %v1946 = vld [vmem:[%s343 + $0x2f00] sm:$0xff]
        %v1947 = vld [vmem:[%s343 + $0x2f08] sm:$0xff]
        %v1948 = vld [vmem:[%s343 + $0x2f10] sm:$0xff]
        %v1949 = vld [vmem:[%s343 + $0x2f18] sm:$0xff]
        %v1950 = vld [vmem:[%s343 + $0x2f20] sm:$0xff]
        %v1951 = vld [vmem:[%s343 + $0x2f28] sm:$0xff]
        %v1952 = vld [vmem:[%s343 + $0x2f30] sm:$0xff]
        %v1953 = vld [vmem:[%s343 + $0x2f38] sm:$0xff]
        %v1954 = vld [vmem:[%s343 + $0x2f40] sm:$0xff]
        %v1955 = vld [vmem:[%s343 + $0x2f48] sm:$0xff]
        %v1956 = vld [vmem:[%s343 + $0x2f50] sm:$0xff]
        %v1957 = vld [vmem:[%s343 + $0x2f58] sm:$0xff]
        %v1958 = vld [vmem:[%s343 + $0x2f60] sm:$0xff]
        %v1959 = vld [vmem:[%s343 + $0x2f68] sm:$0xff]
        %v1960 = vld [vmem:[%s343 + $0x2f70] sm:$0xff]
        %v1961 = vld [vmem:[%s343 + $0x2f78] sm:$0xff]
        %v1962 = vld [vmem:[%s343 + $0x2f80] sm:$0xff]
        %v1963 = vld [vmem:[%s343 + $0x2f88] sm:$0xff]
        %v1964 = vld [vmem:[%s343 + $0x2f90] sm:$0xff]
        %v1965 = vld [vmem:[%s343 + $0x2f98] sm:$0xff]
        %v1966 = vld [vmem:[%s343 + $0x2fa0] sm:$0xff]
        %v1967 = vld [vmem:[%s343 + $0x2fa8] sm:$0xff]
        %v1968 = vld [vmem:[%s343 + $0x2fb0] sm:$0xff]
        %v1969 = vld [vmem:[%s343 + $0x2fb8] sm:$0xff]
        %v1970 = vld [vmem:[%s343 + $0x2fc0] sm:$0xff]
        %v1971 = vld [vmem:[%s343 + $0x2fc8] sm:$0xff]
        %v1972 = vld [vmem:[%s343 + $0x2fd0] sm:$0xff]
        %v1973 = vld [vmem:[%s343 + $0x2fd8] sm:$0xff]
        %v1974 = vld [vmem:[%s343 + $0x2fe0] sm:$0xff]
        %v1975 = vld [vmem:[%s343 + $0x2fe8] sm:$0xff]
        %v1976 = vld [vmem:[%s343 + $0x2ff0] sm:$0xff]
        %v1977 = vld [vmem:[%s343 + $0x2ff8] sm:$0xff]
        %v1978 = vld [vmem:[%s343 + $0x3000] sm:$0xff]
        %v1979 = vld [vmem:[%s343 + $0x3008] sm:$0xff]
        %v1980 = vld [vmem:[%s343 + $0x3010] sm:$0xff]
        %v1981 = vld [vmem:[%s343 + $0x3018] sm:$0xff]
        %v1982 = vld [vmem:[%s343 + $0x3020] sm:$0xff]
        %v1983 = vld [vmem:[%s343 + $0x3028] sm:$0xff]
        %v1984 = vld [vmem:[%s343 + $0x3030] sm:$0xff]
        %v1985 = vld [vmem:[%s343 + $0x3038] sm:$0xff]
        %v1986 = vld [vmem:[%s343 + $0x3040] sm:$0xff]
        %v1987 = vld [vmem:[%s343 + $0x3048] sm:$0xff]
        %v1988 = vld [vmem:[%s343 + $0x3050] sm:$0xff]
        %v1989 = vld [vmem:[%s343 + $0x3058] sm:$0xff]
        %v1990 = vld [vmem:[%s343 + $0x3060] sm:$0xff]
        %v1991 = vld [vmem:[%s343 + $0x3068] sm:$0xff]
        %v1992 = vld [vmem:[%s343 + $0x3070] sm:$0xff]
        %v1993 = vld [vmem:[%s343 + $0x3078] sm:$0xff]
        %v1994 = vld [vmem:[%s343 + $0x3080] sm:$0xff]
        %v1995 = vld [vmem:[%s343 + $0x3088] sm:$0xff]
        %v1996 = vld [vmem:[%s343 + $0x3090] sm:$0xff]
        %v1997 = vld [vmem:[%s343 + $0x3098] sm:$0xff]
        %v1998 = vld [vmem:[%s343 + $0x30a0] sm:$0xff]
        %v1999 = vld [vmem:[%s343 + $0x30a8] sm:$0xff]
        %v2000 = vld [vmem:[%s343 + $0x30b0] sm:$0xff]
        %v2001 = vld [vmem:[%s343 + $0x30b8] sm:$0xff]
        %v2002 = vld [vmem:[%s343 + $0x30c0] sm:$0xff]
        %v2003 = vld [vmem:[%s343 + $0x30c8] sm:$0xff]
        %v2004 = vld [vmem:[%s343 + $0x30d0] sm:$0xff]
        %v2005 = vld [vmem:[%s343 + $0x30d8] sm:$0xff]
        %v2006 = vld [vmem:[%s343 + $0x30e0] sm:$0xff]
        %v2007 = vld [vmem:[%s343 + $0x30e8] sm:$0xff]
        %v2008 = vld [vmem:[%s343 + $0x30f0] sm:$0xff]
        %v2009 = vld [vmem:[%s343 + $0x30f8] sm:$0xff]
        %v2010 = vld [vmem:[%s343 + $0x3100] sm:$0xff]
        %v2011 = vld [vmem:[%s343 + $0x3108] sm:$0xff]
        %v2012 = vld [vmem:[%s343 + $0x3110] sm:$0xff]
        %v2013 = vld [vmem:[%s343 + $0x3118] sm:$0xff]
        %v2014 = vld [vmem:[%s343 + $0x3120] sm:$0xff]
        %v2015 = vld [vmem:[%s343 + $0x3128] sm:$0xff]
        %v2016 = vld [vmem:[%s343 + $0x3130] sm:$0xff]
        %v2017 = vld [vmem:[%s343 + $0x3138] sm:$0xff]
        %v2018 = vld [vmem:[%s343 + $0x3140] sm:$0xff]
        %v2019 = vld [vmem:[%s343 + $0x3148] sm:$0xff]
        %v2020 = vld [vmem:[%s343 + $0x3150] sm:$0xff]
        %v2021 = vld [vmem:[%s343 + $0x3158] sm:$0xff]
        %v2022 = vld [vmem:[%s343 + $0x3160] sm:$0xff]
        %v2023 = vld [vmem:[%s343 + $0x3168] sm:$0xff]
        %v2024 = vld [vmem:[%s343 + $0x3170] sm:$0xff]
        %v2025 = vld [vmem:[%s343 + $0x3178] sm:$0xff]
        %v2026 = vld [vmem:[%s343 + $0x3180] sm:$0xff]
        %v2027 = vld [vmem:[%s343 + $0x3188] sm:$0xff]
        %v2028 = vld [vmem:[%s343 + $0x3190] sm:$0xff]
        %v2029 = vld [vmem:[%s343 + $0x3198] sm:$0xff]
        %v2030 = vld [vmem:[%s343 + $0x31a0] sm:$0xff]
        %v2031 = vld [vmem:[%s343 + $0x31a8] sm:$0xff]
        %v2032 = vld [vmem:[%s343 + $0x31b0] sm:$0xff]
        %v2033 = vld [vmem:[%s343 + $0x31b8] sm:$0xff]
        %v2034 = vld [vmem:[%s343 + $0x31c0] sm:$0xff]
        %v2035 = vld [vmem:[%s343 + $0x31c8] sm:$0xff]
        %v2036 = vld [vmem:[%s343 + $0x31d0] sm:$0xff]
        %v2037 = vld [vmem:[%s343 + $0x31d8] sm:$0xff]
        %v2038 = vld [vmem:[%s343 + $0x31e0] sm:$0xff]
        %v2039 = vld [vmem:[%s343 + $0x31e8] sm:$0xff]
        %v2040 = vld [vmem:[%s343 + $0x31f0] sm:$0xff]
        %v2041 = vld [vmem:[%s343 + $0x31f8] sm:$0xff]
        %v2042 = vld [vmem:[%s343 + $0x3200] sm:$0xff]
        %v2043 = vld [vmem:[%s343 + $0x3208] sm:$0xff]
        %v2044 = vld [vmem:[%s343 + $0x3210] sm:$0xff]
        %v2045 = vld [vmem:[%s343 + $0x3218] sm:$0xff]
        %v2046 = vld [vmem:[%s343 + $0x3220] sm:$0xff]
        %v2047 = vld [vmem:[%s343 + $0x3228] sm:$0xff]
        %v2048 = vld [vmem:[%s343 + $0x3230] sm:$0xff]
        %v2049 = vld [vmem:[%s343 + $0x3238] sm:$0xff]
        %v2050 = vld [vmem:[%s343 + $0x3240] sm:$0xff]
        %v2051 = vld [vmem:[%s343 + $0x3248] sm:$0xff]
        %v2052 = vld [vmem:[%s343 + $0x3250] sm:$0xff]
        %v2053 = vld [vmem:[%s343 + $0x3258] sm:$0xff]
        %v2054 = vld [vmem:[%s343 + $0x3260] sm:$0xff]
        %v2055 = vld [vmem:[%s343 + $0x3268] sm:$0xff]
        %v2056 = vld [vmem:[%s343 + $0x3270] sm:$0xff]
        %v2057 = vld [vmem:[%s343 + $0x3278] sm:$0xff]
        %v2058 = vld [vmem:[%s343 + $0x3280] sm:$0xff]
        %v2059 = vld [vmem:[%s343 + $0x3288] sm:$0xff]
        %v2060 = vld [vmem:[%s343 + $0x3290] sm:$0xff]
        %v2061 = vld [vmem:[%s343 + $0x3298] sm:$0xff]
        %v2062 = vld [vmem:[%s343 + $0x32a0] sm:$0xff]
        %v2063 = vld [vmem:[%s343 + $0x32a8] sm:$0xff]
        %v2064 = vld [vmem:[%s343 + $0x32b0] sm:$0xff]
        %v2065 = vld [vmem:[%s343 + $0x32b8] sm:$0xff]
        %v2066 = vld [vmem:[%s343 + $0x32c0] sm:$0xff]
        %v2067 = vld [vmem:[%s343 + $0x32c8] sm:$0xff]
        %v2068 = vld [vmem:[%s343 + $0x32d0] sm:$0xff]
        %v2069 = vld [vmem:[%s343 + $0x32d8] sm:$0xff]
        %v2070 = vld [vmem:[%s343 + $0x32e0] sm:$0xff]
        %v2071 = vld [vmem:[%s343 + $0x32e8] sm:$0xff]
        %v2072 = vld [vmem:[%s343 + $0x32f0] sm:$0xff]
        %v2073 = vld [vmem:[%s343 + $0x32f8] sm:$0xff]
        %v2074 = vld [vmem:[%s343 + $0x3300] sm:$0xff]
        %v2075 = vld [vmem:[%s343 + $0x3308] sm:$0xff]
        %v2076 = vld [vmem:[%s343 + $0x3310] sm:$0xff]
        %v2077 = vld [vmem:[%s343 + $0x3318] sm:$0xff]
        %v2078 = vld [vmem:[%s343 + $0x3320] sm:$0xff]
        %v2079 = vld [vmem:[%s343 + $0x3328] sm:$0xff]
        %v2080 = vld [vmem:[%s343 + $0x3330] sm:$0xff]
        %v2081 = vld [vmem:[%s343 + $0x3338] sm:$0xff]
        %v2082 = vld [vmem:[%s343 + $0x3340] sm:$0xff]
        %v2083 = vld [vmem:[%s343 + $0x3348] sm:$0xff]
        %v2084 = vld [vmem:[%s343 + $0x3350] sm:$0xff]
        %v2085 = vld [vmem:[%s343 + $0x3358] sm:$0xff]
        %v2086 = vld [vmem:[%s343 + $0x3360] sm:$0xff]
        %v2087 = vld [vmem:[%s343 + $0x3368] sm:$0xff]
        %v2088 = vld [vmem:[%s343 + $0x3370] sm:$0xff]
        %v2089 = vld [vmem:[%s343 + $0x3378] sm:$0xff]
        %v2090 = vld [vmem:[%s343 + $0x3380] sm:$0xff]
        %v2091 = vld [vmem:[%s343 + $0x3388] sm:$0xff]
        %v2092 = vld [vmem:[%s343 + $0x3390] sm:$0xff]
        %v2093 = vld [vmem:[%s343 + $0x3398] sm:$0xff]
        %v2094 = vld [vmem:[%s343 + $0x33a0] sm:$0xff]
        %v2095 = vld [vmem:[%s343 + $0x33a8] sm:$0xff]
        %v2096 = vld [vmem:[%s343 + $0x33b0] sm:$0xff]
        %v2097 = vld [vmem:[%s343 + $0x33b8] sm:$0xff]
        %v2098 = vld [vmem:[%s343 + $0x33c0] sm:$0xff]
        %v2099 = vld [vmem:[%s343 + $0x33c8] sm:$0xff]
        %v2100 = vld [vmem:[%s343 + $0x33d0] sm:$0xff]
        %v2101 = vld [vmem:[%s343 + $0x33d8] sm:$0xff]
        %v2102 = vld [vmem:[%s343 + $0x33e0] sm:$0xff]
        %v2103 = vld [vmem:[%s343 + $0x33e8] sm:$0xff]
        %v2104 = vld [vmem:[%s343 + $0x33f0] sm:$0xff]
        %v2105 = vld [vmem:[%s343 + $0x33f8] sm:$0xff]
        %v2106 = vld [vmem:[%s343 + $0x3400] sm:$0xff]
        %v2107 = vld [vmem:[%s343 + $0x3408] sm:$0xff]
        %v2108 = vld [vmem:[%s343 + $0x3410] sm:$0xff]
        %v2109 = vld [vmem:[%s343 + $0x3418] sm:$0xff]
        %v2110 = vld [vmem:[%s343 + $0x3420] sm:$0xff]
        %v2111 = vld [vmem:[%s343 + $0x3428] sm:$0xff]
        %v2112 = vld [vmem:[%s343 + $0x3430] sm:$0xff]
        %v2113 = vld [vmem:[%s343 + $0x3438] sm:$0xff]
        %v2114 = vld [vmem:[%s343 + $0x3440] sm:$0xff]
        %v2115 = vld [vmem:[%s343 + $0x3448] sm:$0xff]
        %v2116 = vld [vmem:[%s343 + $0x3450] sm:$0xff]
        %v2117 = vld [vmem:[%s343 + $0x3458] sm:$0xff]
        %v2118 = vld [vmem:[%s343 + $0x3460] sm:$0xff]
        %v2119 = vld [vmem:[%s343 + $0x3468] sm:$0xff]
        %v2120 = vld [vmem:[%s343 + $0x3470] sm:$0xff]
        %v2121 = vld [vmem:[%s343 + $0x3478] sm:$0xff]
        %v2122 = vld [vmem:[%s343 + $0x3480] sm:$0xff]
        %v2123 = vld [vmem:[%s343 + $0x3488] sm:$0xff]
        %v2124 = vld [vmem:[%s343 + $0x3490] sm:$0xff]
        %v2125 = vld [vmem:[%s343 + $0x3498] sm:$0xff]
        %v2126 = vld [vmem:[%s343 + $0x34a0] sm:$0xff]
        %v2127 = vld [vmem:[%s343 + $0x34a8] sm:$0xff]
        %v2128 = vld [vmem:[%s343 + $0x34b0] sm:$0xff]
        %v2129 = vld [vmem:[%s343 + $0x34b8] sm:$0xff]
        %v2130 = vld [vmem:[%s343 + $0x34c0] sm:$0xff]
        %v2131 = vld [vmem:[%s343 + $0x34c8] sm:$0xff]
        %v2132 = vld [vmem:[%s343 + $0x34d0] sm:$0xff]
        %v2133 = vld [vmem:[%s343 + $0x34d8] sm:$0xff]
        %v2134 = vld [vmem:[%s343 + $0x34e0] sm:$0xff]
        %v2135 = vld [vmem:[%s343 + $0x34e8] sm:$0xff]
        %v2136 = vld [vmem:[%s343 + $0x34f0] sm:$0xff]
        %v2137 = vld [vmem:[%s343 + $0x34f8] sm:$0xff]
        %v2138 = vld [vmem:[%s343 + $0x3500] sm:$0xff]
        %v2139 = vld [vmem:[%s343 + $0x3508] sm:$0xff]
        %v2140 = vld [vmem:[%s343 + $0x3510] sm:$0xff]
        %v2141 = vld [vmem:[%s343 + $0x3518] sm:$0xff]
        %v2142 = vld [vmem:[%s343 + $0x3520] sm:$0xff]
        %v2143 = vld [vmem:[%s343 + $0x3528] sm:$0xff]
        %v2144 = vld [vmem:[%s343 + $0x3530] sm:$0xff]
        %v2145 = vld [vmem:[%s343 + $0x3538] sm:$0xff]
        %v2146 = vld [vmem:[%s343 + $0x3540] sm:$0xff]
        %v2147 = vld [vmem:[%s343 + $0x3548] sm:$0xff]
        %v2148 = vld [vmem:[%s343 + $0x3550] sm:$0xff]
        %v2149 = vld [vmem:[%s343 + $0x3558] sm:$0xff]
        %v2150 = vld [vmem:[%s343 + $0x3560] sm:$0xff]
        %v2151 = vld [vmem:[%s343 + $0x3568] sm:$0xff]
        %v2152 = vld [vmem:[%s343 + $0x3570] sm:$0xff]
        %v2153 = vld [vmem:[%s343 + $0x3578] sm:$0xff]
        %v2154 = vld [vmem:[%s343 + $0x3580] sm:$0xff]
        %v2155 = vld [vmem:[%s343 + $0x3588] sm:$0xff]
        %v2156 = vld [vmem:[%s343 + $0x3590] sm:$0xff]
        %v2157 = vld [vmem:[%s343 + $0x3598] sm:$0xff]
        %v2158 = vld [vmem:[%s343 + $0x35a0] sm:$0xff]
        %v2159 = vld [vmem:[%s343 + $0x35a8] sm:$0xff]
        %v2160 = vld [vmem:[%s343 + $0x35b0] sm:$0xff]
        %v2161 = vld [vmem:[%s343 + $0x35b8] sm:$0xff]
        %v2162 = vld [vmem:[%s343 + $0x35c0] sm:$0xff]
        %v2163 = vld [vmem:[%s343 + $0x35c8] sm:$0xff]
        %v2164 = vld [vmem:[%s343 + $0x35d0] sm:$0xff]
        %v2165 = vld [vmem:[%s343 + $0x35d8] sm:$0xff]
        %v2166 = vld [vmem:[%s343 + $0x35e0] sm:$0xff]
        %v2167 = vld [vmem:[%s343 + $0x35e8] sm:$0xff]
        %v2168 = vld [vmem:[%s343 + $0x35f0] sm:$0xff]
        %v2169 = vld [vmem:[%s343 + $0x35f8] sm:$0xff]
        %v2170 = vld [vmem:[%s343 + $0x3600] sm:$0xff]
        %v2171 = vld [vmem:[%s343 + $0x3608] sm:$0xff]
        %v2172 = vld [vmem:[%s343 + $0x3610] sm:$0xff]
        %v2173 = vld [vmem:[%s343 + $0x3618] sm:$0xff]
        %v2174 = vld [vmem:[%s343 + $0x3620] sm:$0xff]
        %v2175 = vld [vmem:[%s343 + $0x3628] sm:$0xff]
        %v2176 = vld [vmem:[%s343 + $0x3630] sm:$0xff]
        %v2177 = vld [vmem:[%s343 + $0x3638] sm:$0xff]
        %v2178 = vld [vmem:[%s343 + $0x3640] sm:$0xff]
        %v2179 = vld [vmem:[%s343 + $0x3648] sm:$0xff]
        %v2180 = vld [vmem:[%s343 + $0x3650] sm:$0xff]
        %v2181 = vld [vmem:[%s343 + $0x3658] sm:$0xff]
        %v2182 = vld [vmem:[%s343 + $0x3660] sm:$0xff]
        %v2183 = vld [vmem:[%s343 + $0x3668] sm:$0xff]
        %v2184 = vld [vmem:[%s343 + $0x3670] sm:$0xff]
        %v2185 = vld [vmem:[%s343 + $0x3678] sm:$0xff]
        %v2186 = vld [vmem:[%s343 + $0x3680] sm:$0xff]
        %v2187 = vld [vmem:[%s343 + $0x3688] sm:$0xff]
        %v2188 = vld [vmem:[%s343 + $0x3690] sm:$0xff]
        %v2189 = vld [vmem:[%s343 + $0x3698] sm:$0xff]
        %v2190 = vld [vmem:[%s343 + $0x36a0] sm:$0xff]
        %v2191 = vld [vmem:[%s343 + $0x36a8] sm:$0xff]
        %v2192 = vld [vmem:[%s343 + $0x36b0] sm:$0xff]
        %v2193 = vld [vmem:[%s343 + $0x36b8] sm:$0xff]
        %v2194 = vld [vmem:[%s343 + $0x36c0] sm:$0xff]
        %v2195 = vld [vmem:[%s343 + $0x36c8] sm:$0xff]
        %v2196 = vld [vmem:[%s343 + $0x36d0] sm:$0xff]
        %v2197 = vld [vmem:[%s343 + $0x36d8] sm:$0xff]
        %v2198 = vld [vmem:[%s343 + $0x36e0] sm:$0xff]
        %v2199 = vld [vmem:[%s343 + $0x36e8] sm:$0xff]
        %v2200 = vld [vmem:[%s343 + $0x36f0] sm:$0xff]
        %v2201 = vld [vmem:[%s343 + $0x36f8] sm:$0xff]
        %v2202 = vld [vmem:[%s343 + $0x3700] sm:$0xff]
        %v2203 = vld [vmem:[%s343 + $0x3708] sm:$0xff]
        %v2204 = vld [vmem:[%s343 + $0x3710] sm:$0xff]
        %v2205 = vld [vmem:[%s343 + $0x3718] sm:$0xff]
        %v2206 = vld [vmem:[%s343 + $0x3720] sm:$0xff]
        %v2207 = vld [vmem:[%s343 + $0x3728] sm:$0xff]
        %v2208 = vld [vmem:[%s343 + $0x3730] sm:$0xff]
        %v2209 = vld [vmem:[%s343 + $0x3738] sm:$0xff]
        %v2210 = vld [vmem:[%s343 + $0x3740] sm:$0xff]
        %v2211 = vld [vmem:[%s343 + $0x3748] sm:$0xff]
        %v2212 = vld [vmem:[%s343 + $0x3750] sm:$0xff]
        %v2213 = vld [vmem:[%s343 + $0x3758] sm:$0xff]
        %v2214 = vld [vmem:[%s343 + $0x3760] sm:$0xff]
        %v2215 = vld [vmem:[%s343 + $0x3768] sm:$0xff]
        %v2216 = vld [vmem:[%s343 + $0x3770] sm:$0xff]
        %v2217 = vld [vmem:[%s343 + $0x3778] sm:$0xff]
        %v2218 = vld [vmem:[%s343 + $0x3780] sm:$0xff]
        %v2219 = vld [vmem:[%s343 + $0x3788] sm:$0xff]
        %v2220 = vld [vmem:[%s343 + $0x3790] sm:$0xff]
        %v2221 = vld [vmem:[%s343 + $0x3798] sm:$0xff]
        %v2222 = vld [vmem:[%s343 + $0x37a0] sm:$0xff]
        %v2223 = vld [vmem:[%s343 + $0x37a8] sm:$0xff]
        %v2224 = vld [vmem:[%s343 + $0x37b0] sm:$0xff]
        %v2225 = vld [vmem:[%s343 + $0x37b8] sm:$0xff]
        %v2226 = vld [vmem:[%s343 + $0x37c0] sm:$0xff]
        %v2227 = vld [vmem:[%s343 + $0x37c8] sm:$0xff]
        %v2228 = vld [vmem:[%s343 + $0x37d0] sm:$0xff]
        %v2229 = vld [vmem:[%s343 + $0x37d8] sm:$0xff]
        %v2230 = vld [vmem:[%s343 + $0x37e0] sm:$0xff]
        %v2231 = vld [vmem:[%s343 + $0x37e8] sm:$0xff]
        %v2232 = vld [vmem:[%s343 + $0x37f0] sm:$0xff]
        %v2233 = vld [vmem:[%s343 + $0x37f8] sm:$0xff]
        %v2234 = vld [vmem:[%s343 + $0x3800] sm:$0xff]
        %v2235 = vld [vmem:[%s343 + $0x3808] sm:$0xff]
        %v2236 = vld [vmem:[%s343 + $0x3810] sm:$0xff]
        %v2237 = vld [vmem:[%s343 + $0x3818] sm:$0xff]
        %v2238 = vld [vmem:[%s343 + $0x3820] sm:$0xff]
        %v2239 = vld [vmem:[%s343 + $0x3828] sm:$0xff]
        %v2240 = vld [vmem:[%s343 + $0x3830] sm:$0xff]
        %v2241 = vld [vmem:[%s343 + $0x3838] sm:$0xff]
        %v2242 = vld [vmem:[%s343 + $0x3840] sm:$0xff]
        %v2243 = vld [vmem:[%s343 + $0x3848] sm:$0xff]
        %v2244 = vld [vmem:[%s343 + $0x3850] sm:$0xff]
        %v2245 = vld [vmem:[%s343 + $0x3858] sm:$0xff]
        %v2246 = vld [vmem:[%s343 + $0x3860] sm:$0xff]
        %v2247 = vld [vmem:[%s343 + $0x3868] sm:$0xff]
        %v2248 = vld [vmem:[%s343 + $0x3870] sm:$0xff]
        %v2249 = vld [vmem:[%s343 + $0x3878] sm:$0xff]
        %v2250 = vld [vmem:[%s343 + $0x3880] sm:$0xff]
        %v2251 = vld [vmem:[%s343 + $0x3888] sm:$0xff]
        %v2252 = vld [vmem:[%s343 + $0x3890] sm:$0xff]
        %v2253 = vld [vmem:[%s343 + $0x3898] sm:$0xff]
        %v2254 = vld [vmem:[%s343 + $0x38a0] sm:$0xff]
        %v2255 = vld [vmem:[%s343 + $0x38a8] sm:$0xff]
        %v2256 = vld [vmem:[%s343 + $0x38b0] sm:$0xff]
        %v2257 = vld [vmem:[%s343 + $0x38b8] sm:$0xff]
        %v2258 = vld [vmem:[%s343 + $0x38c0] sm:$0xff]
        %v2259 = vld [vmem:[%s343 + $0x38c8] sm:$0xff]
        %v2260 = vld [vmem:[%s343 + $0x38d0] sm:$0xff]
        %v2261 = vld [vmem:[%s343 + $0x38d8] sm:$0xff]
        %v2262 = vld [vmem:[%s343 + $0x38e0] sm:$0xff]
        %v2263 = vld [vmem:[%s343 + $0x38e8] sm:$0xff]
        %v2264 = vld [vmem:[%s343 + $0x38f0] sm:$0xff]
        %v2265 = vld [vmem:[%s343 + $0x38f8] sm:$0xff]
        %v2266 = vld [vmem:[%s343 + $0x3900] sm:$0xff]
        %v2267 = vld [vmem:[%s343 + $0x3908] sm:$0xff]
        %v2268 = vld [vmem:[%s343 + $0x3910] sm:$0xff]
        %v2269 = vld [vmem:[%s343 + $0x3918] sm:$0xff]
        %v2270 = vld [vmem:[%s343 + $0x3920] sm:$0xff]
        %v2271 = vld [vmem:[%s343 + $0x3928] sm:$0xff]
        %v2272 = vld [vmem:[%s343 + $0x3930] sm:$0xff]
        %v2273 = vld [vmem:[%s343 + $0x3938] sm:$0xff]
        %v2274 = vld [vmem:[%s343 + $0x3940] sm:$0xff]
        %v2275 = vld [vmem:[%s343 + $0x3948] sm:$0xff]
        %v2276 = vld [vmem:[%s343 + $0x3950] sm:$0xff]
        %v2277 = vld [vmem:[%s343 + $0x3958] sm:$0xff]
        %v2278 = vld [vmem:[%s343 + $0x3960] sm:$0xff]
        %v2279 = vld [vmem:[%s343 + $0x3968] sm:$0xff]
        %v2280 = vld [vmem:[%s343 + $0x3970] sm:$0xff]
        %v2281 = vld [vmem:[%s343 + $0x3978] sm:$0xff]
        %v2282 = vld [vmem:[%s343 + $0x3980] sm:$0xff]
        %v2283 = vld [vmem:[%s343 + $0x3988] sm:$0xff]
        %v2284 = vld [vmem:[%s343 + $0x3990] sm:$0xff]
        %v2285 = vld [vmem:[%s343 + $0x3998] sm:$0xff]
        %v2286 = vld [vmem:[%s343 + $0x39a0] sm:$0xff]
        %v2287 = vld [vmem:[%s343 + $0x39a8] sm:$0xff]
        %v2288 = vld [vmem:[%s343 + $0x39b0] sm:$0xff]
        %v2289 = vld [vmem:[%s343 + $0x39b8] sm:$0xff]
        %v2290 = vld [vmem:[%s343 + $0x39c0] sm:$0xff]
        %v2291 = vld [vmem:[%s343 + $0x39c8] sm:$0xff]
        %v2292 = vld [vmem:[%s343 + $0x39d0] sm:$0xff]
        %v2293 = vld [vmem:[%s343 + $0x39d8] sm:$0xff]
        %v2294 = vld [vmem:[%s343 + $0x39e0] sm:$0xff]
        %v2295 = vld [vmem:[%s343 + $0x39e8] sm:$0xff]
        %v2296 = vld [vmem:[%s343 + $0x39f0] sm:$0xff]
        %v2297 = vld [vmem:[%s343 + $0x39f8] sm:$0xff]
        %v2298 = vld [vmem:[%s343 + $0x3a00] sm:$0xff]
        %v2299 = vld [vmem:[%s343 + $0x3a08] sm:$0xff]
        %v2300 = vld [vmem:[%s343 + $0x3a10] sm:$0xff]
        %v2301 = vld [vmem:[%s343 + $0x3a18] sm:$0xff]
        %v2302 = vld [vmem:[%s343 + $0x3a20] sm:$0xff]
        %v2303 = vld [vmem:[%s343 + $0x3a28] sm:$0xff]
        %v2304 = vld [vmem:[%s343 + $0x3a30] sm:$0xff]
        %v2305 = vld [vmem:[%s343 + $0x3a38] sm:$0xff]
        %v2306 = vld [vmem:[%s343 + $0x3a40] sm:$0xff]
        %v2307 = vld [vmem:[%s343 + $0x3a48] sm:$0xff]
        %v2308 = vld [vmem:[%s343 + $0x3a50] sm:$0xff]
        %v2309 = vld [vmem:[%s343 + $0x3a58] sm:$0xff]
        %v2310 = vld [vmem:[%s343 + $0x3a60] sm:$0xff]
        %v2311 = vld [vmem:[%s343 + $0x3a68] sm:$0xff]
        %v2312 = vld [vmem:[%s343 + $0x3a70] sm:$0xff]
        %v2313 = vld [vmem:[%s343 + $0x3a78] sm:$0xff]
        %v2314 = vld [vmem:[%s343 + $0x3a80] sm:$0xff]
        %v2315 = vld [vmem:[%s343 + $0x3a88] sm:$0xff]
        %v2316 = vld [vmem:[%s343 + $0x3a90] sm:$0xff]
        %v2317 = vld [vmem:[%s343 + $0x3a98] sm:$0xff]
        %v2318 = vld [vmem:[%s343 + $0x3aa0] sm:$0xff]
        %v2319 = vld [vmem:[%s343 + $0x3aa8] sm:$0xff]
        %v2320 = vld [vmem:[%s343 + $0x3ab0] sm:$0xff]
        %v2321 = vld [vmem:[%s343 + $0x3ab8] sm:$0xff]
        %v2322 = vld [vmem:[%s343 + $0x3ac0] sm:$0xff]
        %v2323 = vld [vmem:[%s343 + $0x3ac8] sm:$0xff]
        %v2324 = vld [vmem:[%s343 + $0x3ad0] sm:$0xff]
        %v2325 = vld [vmem:[%s343 + $0x3ad8] sm:$0xff]
        %v2326 = vld [vmem:[%s343 + $0x3ae0] sm:$0xff]
        %v2327 = vld [vmem:[%s343 + $0x3ae8] sm:$0xff]
        %v2328 = vld [vmem:[%s343 + $0x3af0] sm:$0xff]
        %v2329 = vld [vmem:[%s343 + $0x3af8] sm:$0xff]
        %v2330 = vld [vmem:[%s343 + $0x3b00] sm:$0xff]
        %v2331 = vld [vmem:[%s343 + $0x3b08] sm:$0xff]
        %v2332 = vld [vmem:[%s343 + $0x3b10] sm:$0xff]
        %v2333 = vld [vmem:[%s343 + $0x3b18] sm:$0xff]
        %v2334 = vld [vmem:[%s343 + $0x3b20] sm:$0xff]
        %v2335 = vld [vmem:[%s343 + $0x3b28] sm:$0xff]
        %v2336 = vld [vmem:[%s343 + $0x3b30] sm:$0xff]
        %v2337 = vld [vmem:[%s343 + $0x3b38] sm:$0xff]
        %v2338 = vld [vmem:[%s343 + $0x3b40] sm:$0xff]
        %v2339 = vld [vmem:[%s343 + $0x3b48] sm:$0xff]
        %v2340 = vld [vmem:[%s343 + $0x3b50] sm:$0xff]
        %v2341 = vld [vmem:[%s343 + $0x3b58] sm:$0xff]
        %v2342 = vld [vmem:[%s343 + $0x3b60] sm:$0xff]
        %v2343 = vld [vmem:[%s343 + $0x3b68] sm:$0xff]
        %v2344 = vld [vmem:[%s343 + $0x3b70] sm:$0xff]
        %v2345 = vld [vmem:[%s343 + $0x3b78] sm:$0xff]
        %v2346 = vld [vmem:[%s343 + $0x3b80] sm:$0xff]
        %v2347 = vld [vmem:[%s343 + $0x3b88] sm:$0xff]
        %v2348 = vld [vmem:[%s343 + $0x3b90] sm:$0xff]
        %v2349 = vld [vmem:[%s343 + $0x3b98] sm:$0xff]
        %v2350 = vld [vmem:[%s343 + $0x3ba0] sm:$0xff]
        %v2351 = vld [vmem:[%s343 + $0x3ba8] sm:$0xff]
        %v2352 = vld [vmem:[%s343 + $0x3bb0] sm:$0xff]
        %v2353 = vld [vmem:[%s343 + $0x3bb8] sm:$0xff]
        %v2354 = vld [vmem:[%s343 + $0x3bc0] sm:$0xff]
        %v2355 = vld [vmem:[%s343 + $0x3bc8] sm:$0xff]
        %v2356 = vld [vmem:[%s343 + $0x3bd0] sm:$0xff]
        %v2357 = vld [vmem:[%s343 + $0x3bd8] sm:$0xff]
        %v2358 = vld [vmem:[%s343 + $0x3be0] sm:$0xff]
        %v2359 = vld [vmem:[%s343 + $0x3be8] sm:$0xff]
        %v2360 = vld [vmem:[%s343 + $0x3bf0] sm:$0xff]
        %v2361 = vld [vmem:[%s343 + $0x3bf8] sm:$0xff]
        %v2362 = vld [vmem:[%s343 + $0x3c00] sm:$0xff]
        %v2363 = vld [vmem:[%s343 + $0x3c08] sm:$0xff]
        %v2364 = vld [vmem:[%s343 + $0x3c10] sm:$0xff]
        %v2365 = vld [vmem:[%s343 + $0x3c18] sm:$0xff]
        %v2366 = vld [vmem:[%s343 + $0x3c20] sm:$0xff]
        %v2367 = vld [vmem:[%s343 + $0x3c28] sm:$0xff]
        %v2368 = vld [vmem:[%s343 + $0x3c30] sm:$0xff]
        %v2369 = vld [vmem:[%s343 + $0x3c38] sm:$0xff]
        %v2370 = vld [vmem:[%s343 + $0x3c40] sm:$0xff]
        %v2371 = vld [vmem:[%s343 + $0x3c48] sm:$0xff]
        %v2372 = vld [vmem:[%s343 + $0x3c50] sm:$0xff]
        %v2373 = vld [vmem:[%s343 + $0x3c58] sm:$0xff]
        %v2374 = vld [vmem:[%s343 + $0x3c60] sm:$0xff]
        %v2375 = vld [vmem:[%s343 + $0x3c68] sm:$0xff]
        %v2376 = vld [vmem:[%s343 + $0x3c70] sm:$0xff]
        %v2377 = vld [vmem:[%s343 + $0x3c78] sm:$0xff]
        %v2378 = vld [vmem:[%s343 + $0x3c80] sm:$0xff]
        %v2379 = vld [vmem:[%s343 + $0x3c88] sm:$0xff]
        %v2380 = vld [vmem:[%s343 + $0x3c90] sm:$0xff]
        %v2381 = vld [vmem:[%s343 + $0x3c98] sm:$0xff]
        %v2382 = vld [vmem:[%s343 + $0x3ca0] sm:$0xff]
        %v2383 = vld [vmem:[%s343 + $0x3ca8] sm:$0xff]
        %v2384 = vld [vmem:[%s343 + $0x3cb0] sm:$0xff]
        %v2385 = vld [vmem:[%s343 + $0x3cb8] sm:$0xff]
        %v2386 = vld [vmem:[%s343 + $0x3cc0] sm:$0xff]
        %v2387 = vld [vmem:[%s343 + $0x3cc8] sm:$0xff]
        %v2388 = vld [vmem:[%s343 + $0x3cd0] sm:$0xff]
        %v2389 = vld [vmem:[%s343 + $0x3cd8] sm:$0xff]
        %v2390 = vld [vmem:[%s343 + $0x3ce0] sm:$0xff]
        %v2391 = vld [vmem:[%s343 + $0x3ce8] sm:$0xff]
        %v2392 = vld [vmem:[%s343 + $0x3cf0] sm:$0xff]
        %v2393 = vld [vmem:[%s343 + $0x3cf8] sm:$0xff]
        %v2394 = vld [vmem:[%s343 + $0x3d00] sm:$0xff]
        %v2395 = vld [vmem:[%s343 + $0x3d08] sm:$0xff]
        %v2396 = vld [vmem:[%s343 + $0x3d10] sm:$0xff]
        %v2397 = vld [vmem:[%s343 + $0x3d18] sm:$0xff]
        %v2398 = vld [vmem:[%s343 + $0x3d20] sm:$0xff]
        %v2399 = vld [vmem:[%s343 + $0x3d28] sm:$0xff]
        %v2400 = vld [vmem:[%s343 + $0x3d30] sm:$0xff]
        %v2401 = vld [vmem:[%s343 + $0x3d38] sm:$0xff]
        %v2402 = vld [vmem:[%s343 + $0x3d40] sm:$0xff]
        %v2403 = vld [vmem:[%s343 + $0x3d48] sm:$0xff]
        %v2404 = vld [vmem:[%s343 + $0x3d50] sm:$0xff]
        %v2405 = vld [vmem:[%s343 + $0x3d58] sm:$0xff]
        %v2406 = vld [vmem:[%s343 + $0x3d60] sm:$0xff]
        %v2407 = vld [vmem:[%s343 + $0x3d68] sm:$0xff]
        %v2408 = vld [vmem:[%s343 + $0x3d70] sm:$0xff]
        %v2409 = vld [vmem:[%s343 + $0x3d78] sm:$0xff]
        %v2410 = vld [vmem:[%s343 + $0x3d80] sm:$0xff]
        %v2411 = vld [vmem:[%s343 + $0x3d88] sm:$0xff]
        %v2412 = vld [vmem:[%s343 + $0x3d90] sm:$0xff]
        %v2413 = vld [vmem:[%s343 + $0x3d98] sm:$0xff]
        %v2414 = vld [vmem:[%s343 + $0x3da0] sm:$0xff]
        %v2415 = vld [vmem:[%s343 + $0x3da8] sm:$0xff]
        %v2416 = vld [vmem:[%s343 + $0x3db0] sm:$0xff]
        %v2417 = vld [vmem:[%s343 + $0x3db8] sm:$0xff]
        %v2418 = vld [vmem:[%s343 + $0x3dc0] sm:$0xff]
        %v2419 = vld [vmem:[%s343 + $0x3dc8] sm:$0xff]
        %v2420 = vld [vmem:[%s343 + $0x3dd0] sm:$0xff]
        %v2421 = vld [vmem:[%s343 + $0x3dd8] sm:$0xff]
        %v2422 = vld [vmem:[%s343 + $0x3de0] sm:$0xff]
        %v2423 = vld [vmem:[%s343 + $0x3de8] sm:$0xff]
        %v2424 = vld [vmem:[%s343 + $0x3df0] sm:$0xff]
        %v2425 = vld [vmem:[%s343 + $0x3df8] sm:$0xff]
        %v2426 = vld [vmem:[%s343 + $0x3e00] sm:$0xff]
        %v2427 = vld [vmem:[%s343 + $0x3e08] sm:$0xff]
        %v2428 = vld [vmem:[%s343 + $0x3e10] sm:$0xff]
        %v2429 = vld [vmem:[%s343 + $0x3e18] sm:$0xff]
        %v2430 = vld [vmem:[%s343 + $0x3e20] sm:$0xff]
        %v2431 = vld [vmem:[%s343 + $0x3e28] sm:$0xff]
        %v2432 = vld [vmem:[%s343 + $0x3e30] sm:$0xff]
        %v2433 = vld [vmem:[%s343 + $0x3e38] sm:$0xff]
        %v2434 = vld [vmem:[%s343 + $0x3e40] sm:$0xff]
        %v2435 = vld [vmem:[%s343 + $0x3e48] sm:$0xff]
        %v2436 = vld [vmem:[%s343 + $0x3e50] sm:$0xff]
        %v2437 = vld [vmem:[%s343 + $0x3e58] sm:$0xff]
        %v2438 = vld [vmem:[%s343 + $0x3e60] sm:$0xff]
        %v2439 = vld [vmem:[%s343 + $0x3e68] sm:$0xff]
        %v2440 = vld [vmem:[%s343 + $0x3e70] sm:$0xff]
        %v2441 = vld [vmem:[%s343 + $0x3e78] sm:$0xff]
        %v2442 = vld [vmem:[%s343 + $0x3e80] sm:$0xff]
        %v2443 = vld [vmem:[%s343 + $0x3e88] sm:$0xff]
        %v2444 = vld [vmem:[%s343 + $0x3e90] sm:$0xff]
        %v2445 = vld [vmem:[%s343 + $0x3e98] sm:$0xff]
        %v2446 = vld [vmem:[%s343 + $0x3ea0] sm:$0xff]
        %v2447 = vld [vmem:[%s343 + $0x3ea8] sm:$0xff]
        %v2448 = vld [vmem:[%s343 + $0x3eb0] sm:$0xff]
        %v2449 = vld [vmem:[%s343 + $0x3eb8] sm:$0xff]
        %v2450 = vld [vmem:[%s343 + $0x3ec0] sm:$0xff]
        %v2451 = vld [vmem:[%s343 + $0x3ec8] sm:$0xff]
        %v2452 = vld [vmem:[%s343 + $0x3ed0] sm:$0xff]
        %v2453 = vld [vmem:[%s343 + $0x3ed8] sm:$0xff]
        %v2454 = vld [vmem:[%s343 + $0x3ee0] sm:$0xff]
        %v2455 = vld [vmem:[%s343 + $0x3ee8] sm:$0xff]
        %v2456 = vld [vmem:[%s343 + $0x3ef0] sm:$0xff]
        %v2457 = vld [vmem:[%s343 + $0x3ef8] sm:$0xff]
        %v2458 = vld [vmem:[%s343 + $0x3f00] sm:$0xff]
        %v2459 = vld [vmem:[%s343 + $0x3f08] sm:$0xff]
        %v2460 = vld [vmem:[%s343 + $0x3f10] sm:$0xff]
        %v2461 = vld [vmem:[%s343 + $0x3f18] sm:$0xff]
        %v2462 = vld [vmem:[%s343 + $0x3f20] sm:$0xff]
        %v2463 = vld [vmem:[%s343 + $0x3f28] sm:$0xff]
        %v2464 = vld [vmem:[%s343 + $0x3f30] sm:$0xff]
        %v2465 = vld [vmem:[%s343 + $0x3f38] sm:$0xff]
        %v2466 = vld [vmem:[%s343 + $0x3f40] sm:$0xff]
        %v2467 = vld [vmem:[%s343 + $0x3f48] sm:$0xff]
        %v2468 = vld [vmem:[%s343 + $0x3f50] sm:$0xff]
        %v2469 = vld [vmem:[%s343 + $0x3f58] sm:$0xff]
        %v2470 = vld [vmem:[%s343 + $0x3f60] sm:$0xff]
        %v2471 = vld [vmem:[%s343 + $0x3f68] sm:$0xff]
        %v2472 = vld [vmem:[%s343 + $0x3f70] sm:$0xff]
        %v2473 = vld [vmem:[%s343 + $0x3f78] sm:$0xff]
        %v2474 = vld [vmem:[%s343 + $0x3f80] sm:$0xff]
        %v2475 = vld [vmem:[%s343 + $0x3f88] sm:$0xff]
        %v2476 = vld [vmem:[%s343 + $0x3f90] sm:$0xff]
        %v2477 = vld [vmem:[%s343 + $0x3f98] sm:$0xff]
        %v2478 = vld [vmem:[%s343 + $0x3fa0] sm:$0xff]
        %v2479 = vld [vmem:[%s343 + $0x3fa8] sm:$0xff]
        %v2480 = vld [vmem:[%s343 + $0x3fb0] sm:$0xff]
        %v2481 = vld [vmem:[%s343 + $0x3fb8] sm:$0xff]
        %v2482 = vld [vmem:[%s343 + $0x3fc0] sm:$0xff]
        %v2483 = vld [vmem:[%s343 + $0x3fc8] sm:$0xff]
        %v2484 = vld [vmem:[%s343 + $0x3fd0] sm:$0xff]
        %v2485 = vld [vmem:[%s343 + $0x3fd8] sm:$0xff]
        %v2486 = vld [vmem:[%s343 + $0x3fe0] sm:$0xff]
        %v2487 = vld [vmem:[%s343 + $0x3fe8] sm:$0xff]
        %v2488 = vld [vmem:[%s343 + $0x3ff0] sm:$0xff]
        %v2489 = vld [vmem:[%s343 + $0x3ff8] sm:$0xff]
        %v2490 = vld [vmem:[%s343 + $0x4000] sm:$0xff]
        %v2491 = vld [vmem:[%s343 + $0x4008] sm:$0xff]
        %v2492 = vld [vmem:[%s343 + $0x4010] sm:$0xff]
        %v2493 = vld [vmem:[%s343 + $0x4018] sm:$0xff]
        %v2494 = vld [vmem:[%s343 + $0x4020] sm:$0xff]
        %v2495 = vld [vmem:[%s343 + $0x4028] sm:$0xff]
        %v2496 = vld [vmem:[%s343 + $0x4030] sm:$0xff]
        %v2497 = vld [vmem:[%s343 + $0x4038] sm:$0xff]
        %v2498 = vld [vmem:[%s343 + $0x4040] sm:$0xff]
        %v2499 = vld [vmem:[%s343 + $0x4048] sm:$0xff]
        %v2500 = vld [vmem:[%s343 + $0x4050] sm:$0xff]
        %v2501 = vld [vmem:[%s343 + $0x4058] sm:$0xff]
        %v2502 = vld [vmem:[%s343 + $0x4060] sm:$0xff]
        %v2503 = vld [vmem:[%s343 + $0x4068] sm:$0xff]
        %v2504 = vld [vmem:[%s343 + $0x4070] sm:$0xff]
        %v2505 = vld [vmem:[%s343 + $0x4078] sm:$0xff]
        %v2506 = vld [vmem:[%s343 + $0x4080] sm:$0xff]
        %v2507 = vld [vmem:[%s343 + $0x4088] sm:$0xff]
        %v2508 = vld [vmem:[%s343 + $0x4090] sm:$0xff]
        %v2509 = vld [vmem:[%s343 + $0x4098] sm:$0xff]
        %v2510 = vld [vmem:[%s343 + $0x40a0] sm:$0xff]
        %v2511 = vld [vmem:[%s343 + $0x40a8] sm:$0xff]
        %v2512 = vld [vmem:[%s343 + $0x40b0] sm:$0xff]
        %v2513 = vld [vmem:[%s343 + $0x40b8] sm:$0xff]
        %v2514 = vld [vmem:[%s343 + $0x40c0] sm:$0xff]
        %v2515 = vld [vmem:[%s343 + $0x40c8] sm:$0xff]
        %v2516 = vld [vmem:[%s343 + $0x40d0] sm:$0xff]
        %v2517 = vld [vmem:[%s343 + $0x40d8] sm:$0xff]
        %v2518 = vld [vmem:[%s343 + $0x40e0] sm:$0xff]
        %v2519 = vld [vmem:[%s343 + $0x40e8] sm:$0xff]
        %v2520 = vld [vmem:[%s343 + $0x40f0] sm:$0xff]
        %v2521 = vld [vmem:[%s343 + $0x40f8] sm:$0xff]
        %v2522 = vld [vmem:[%s343 + $0x4100] sm:$0xff]
        %v2523 = vld [vmem:[%s343 + $0x4108] sm:$0xff]
        %v2524 = vld [vmem:[%s343 + $0x4110] sm:$0xff]
        %v2525 = vld [vmem:[%s343 + $0x4118] sm:$0xff]
        %v2526 = vld [vmem:[%s343 + $0x4120] sm:$0xff]
        %v2527 = vld [vmem:[%s343 + $0x4128] sm:$0xff]
        %v2528 = vld [vmem:[%s343 + $0x4130] sm:$0xff]
        %v2529 = vld [vmem:[%s343 + $0x4138] sm:$0xff]
        %v2530 = vld [vmem:[%s343 + $0x4140] sm:$0xff]
        %v2531 = vld [vmem:[%s343 + $0x4148] sm:$0xff]
        %v2532 = vld [vmem:[%s343 + $0x4150] sm:$0xff]
        %v2533 = vld [vmem:[%s343 + $0x4158] sm:$0xff]
        %v2534 = vld [vmem:[%s343 + $0x4160] sm:$0xff]
        %v2535 = vld [vmem:[%s343 + $0x4168] sm:$0xff]
        %v2536 = vld [vmem:[%s343 + $0x4170] sm:$0xff]
        %v2537 = vld [vmem:[%s343 + $0x4178] sm:$0xff]
        %v2538 = vld [vmem:[%s343 + $0x4180] sm:$0xff]
        %v2539 = vld [vmem:[%s343 + $0x4188] sm:$0xff]
        %v2540 = vld [vmem:[%s343 + $0x4190] sm:$0xff]
        %v2541 = vld [vmem:[%s343 + $0x4198] sm:$0xff]
        %v2542 = vld [vmem:[%s343 + $0x41a0] sm:$0xff]
        %v2543 = vld [vmem:[%s343 + $0x41a8] sm:$0xff]
        %v2544 = vld [vmem:[%s343 + $0x41b0] sm:$0xff]
        %v2545 = vld [vmem:[%s343 + $0x41b8] sm:$0xff]
        %v2546 = vld [vmem:[%s343 + $0x41c0] sm:$0xff]
        %v2547 = vld [vmem:[%s343 + $0x41c8] sm:$0xff]
        %v2548 = vld [vmem:[%s343 + $0x41d0] sm:$0xff]
        %v2549 = vld [vmem:[%s343 + $0x41d8] sm:$0xff]
        %v2550 = vld [vmem:[%s343 + $0x41e0] sm:$0xff]
        %v2551 = vld [vmem:[%s343 + $0x41e8] sm:$0xff]
        %v2552 = vld [vmem:[%s343 + $0x41f0] sm:$0xff]
        %v2553 = vld [vmem:[%s343 + $0x41f8] sm:$0xff]
        %v2554 = vld [vmem:[%s343 + $0x4200] sm:$0xff]
        %v2555 = vld [vmem:[%s343 + $0x4208] sm:$0xff]
        %v2556 = vld [vmem:[%s343 + $0x4210] sm:$0xff]
        %v2557 = vld [vmem:[%s343 + $0x4218] sm:$0xff]
        %v2558 = vld [vmem:[%s343 + $0x4220] sm:$0xff]
        %v2559 = vld [vmem:[%s343 + $0x4228] sm:$0xff]
        %v2560 = vld [vmem:[%s343 + $0x4230] sm:$0xff]
        %v2561 = vld [vmem:[%s343 + $0x4238] sm:$0xff]
        %v2562 = vld [vmem:[%s343 + $0x4240] sm:$0xff]
        %v2563 = vld [vmem:[%s343 + $0x4248] sm:$0xff]
        %v2564 = vld [vmem:[%s343 + $0x4250] sm:$0xff]
        %v2565 = vld [vmem:[%s343 + $0x4258] sm:$0xff]
        %v2566 = vld [vmem:[%s343 + $0x4260] sm:$0xff]
        %v2567 = vld [vmem:[%s343 + $0x4268] sm:$0xff]
        %v2568 = vld [vmem:[%s343 + $0x4270] sm:$0xff]
        %v2569 = vld [vmem:[%s343 + $0x4278] sm:$0xff]
        %v2570 = vld [vmem:[%s343 + $0x4280] sm:$0xff]
        %v2571 = vld [vmem:[%s343 + $0x4288] sm:$0xff]
        %v2572 = vld [vmem:[%s343 + $0x4290] sm:$0xff]
        %v2573 = vld [vmem:[%s343 + $0x4298] sm:$0xff]
        %v2574 = vld [vmem:[%s343 + $0x42a0] sm:$0xff]
        %v2575 = vld [vmem:[%s343 + $0x42a8] sm:$0xff]
        %v2576 = vld [vmem:[%s343 + $0x42b0] sm:$0xff]
        %v2577 = vld [vmem:[%s343 + $0x42b8] sm:$0xff]
        %v2578 = vld [vmem:[%s343 + $0x42c0] sm:$0xff]
        %v2579 = vld [vmem:[%s343 + $0x42c8] sm:$0xff]
        %v2580 = vld [vmem:[%s343 + $0x42d0] sm:$0xff]
        %v2581 = vld [vmem:[%s343 + $0x42d8] sm:$0xff]
        %v2582 = vld [vmem:[%s343 + $0x42e0] sm:$0xff]
        %v2583 = vld [vmem:[%s343 + $0x42e8] sm:$0xff]
        %v2584 = vld [vmem:[%s343 + $0x42f0] sm:$0xff]
        %v2585 = vld [vmem:[%s343 + $0x42f8] sm:$0xff]
        %v2586 = vld [vmem:[%s343 + $0x4300] sm:$0xff]
        %v2587 = vld [vmem:[%s343 + $0x4308] sm:$0xff]
        %v2588 = vld [vmem:[%s343 + $0x4310] sm:$0xff]
        %v2589 = vld [vmem:[%s343 + $0x4318] sm:$0xff]
        %v2590 = vld [vmem:[%s343 + $0x4320] sm:$0xff]
        %v2591 = vld [vmem:[%s343 + $0x4328] sm:$0xff]
        %v2592 = vld [vmem:[%s343 + $0x4330] sm:$0xff]
        %v2593 = vld [vmem:[%s343 + $0x4338] sm:$0xff]
        %v2594 = vld [vmem:[%s343 + $0x4340] sm:$0xff]
        %v2595 = vld [vmem:[%s343 + $0x4348] sm:$0xff]
        %v2596 = vld [vmem:[%s343 + $0x4350] sm:$0xff]
        %v2597 = vld [vmem:[%s343 + $0x4358] sm:$0xff]
        %v2598 = vld [vmem:[%s343 + $0x4360] sm:$0xff]
        %v2599 = vld [vmem:[%s343 + $0x4368] sm:$0xff]
        %v2600 = vld [vmem:[%s343 + $0x4370] sm:$0xff]
        %v2601 = vld [vmem:[%s343 + $0x4378] sm:$0xff]
        %v2602 = vld [vmem:[%s343 + $0x4380] sm:$0xff]
        %v2603 = vld [vmem:[%s343 + $0x4388] sm:$0xff]
        %v2604 = vld [vmem:[%s343 + $0x4390] sm:$0xff]
        %v2605 = vld [vmem:[%s343 + $0x4398] sm:$0xff]
        %v2606 = vld [vmem:[%s343 + $0x43a0] sm:$0xff]
        %v2607 = vld [vmem:[%s343 + $0x43a8] sm:$0xff]
        %v2608 = vld [vmem:[%s343 + $0x43b0] sm:$0xff]
        %v2609 = vld [vmem:[%s343 + $0x43b8] sm:$0xff]
        %v2610 = vld [vmem:[%s343 + $0x43c0] sm:$0xff]
        %v2611 = vld [vmem:[%s343 + $0x43c8] sm:$0xff]
        %v2612 = vld [vmem:[%s343 + $0x43d0] sm:$0xff]
        %v2613 = vld [vmem:[%s343 + $0x43d8] sm:$0xff]
        %v2614 = vld [vmem:[%s343 + $0x43e0] sm:$0xff]
        %v2615 = vld [vmem:[%s343 + $0x43e8] sm:$0xff]
        %v2616 = vld [vmem:[%s343 + $0x43f0] sm:$0xff]
        %v2617 = vld [vmem:[%s343 + $0x43f8] sm:$0xff]
        %v2618 = vld [vmem:[%s343 + $0x4400] sm:$0xff]
        %v2619 = vld [vmem:[%s343 + $0x4408] sm:$0xff]
        %v2620 = vld [vmem:[%s343 + $0x4410] sm:$0xff]
        %v2621 = vld [vmem:[%s343 + $0x4418] sm:$0xff]
        %v2622 = vld [vmem:[%s343 + $0x4420] sm:$0xff]
        %v2623 = vld [vmem:[%s343 + $0x4428] sm:$0xff]
        %v2624 = vld [vmem:[%s343 + $0x4430] sm:$0xff]
        %v2625 = vld [vmem:[%s343 + $0x4438] sm:$0xff]
        %v2626 = vld [vmem:[%s343 + $0x4440] sm:$0xff]
        %v2627 = vld [vmem:[%s343 + $0x4448] sm:$0xff]
        %v2628 = vld [vmem:[%s343 + $0x4450] sm:$0xff]
        %v2629 = vld [vmem:[%s343 + $0x4458] sm:$0xff]
        %v2630 = vld [vmem:[%s343 + $0x4460] sm:$0xff]
        %v2631 = vld [vmem:[%s343 + $0x4468] sm:$0xff]
        %v2632 = vld [vmem:[%s343 + $0x4470] sm:$0xff]
        %v2633 = vld [vmem:[%s343 + $0x4478] sm:$0xff]
        %v2634 = vld [vmem:[%s343 + $0x4480] sm:$0xff]
        %v2635 = vld [vmem:[%s343 + $0x4488] sm:$0xff]
        %v2636 = vld [vmem:[%s343 + $0x4490] sm:$0xff]
        %v2637 = vld [vmem:[%s343 + $0x4498] sm:$0xff]
        %v2638 = vld [vmem:[%s343 + $0x44a0] sm:$0xff]
        %v2639 = vld [vmem:[%s343 + $0x44a8] sm:$0xff]
        %v2640 = vld [vmem:[%s343 + $0x44b0] sm:$0xff]
        %v2641 = vld [vmem:[%s343 + $0x44b8] sm:$0xff]
        %v2642 = vld [vmem:[%s343 + $0x44c0] sm:$0xff]
        %v2643 = vld [vmem:[%s343 + $0x44c8] sm:$0xff]
        %v2644 = vld [vmem:[%s343 + $0x44d0] sm:$0xff]
        %v2645 = vld [vmem:[%s343 + $0x44d8] sm:$0xff]
        %v2646 = vld [vmem:[%s343 + $0x44e0] sm:$0xff]
        %v2647 = vld [vmem:[%s343 + $0x44e8] sm:$0xff]
        %v2648 = vld [vmem:[%s343 + $0x44f0] sm:$0xff]
        %v2649 = vld [vmem:[%s343 + $0x44f8] sm:$0xff]
        %v2650 = vld [vmem:[%s343 + $0x4500] sm:$0xff]
        %v2651 = vld [vmem:[%s343 + $0x4508] sm:$0xff]
        %v2652 = vld [vmem:[%s343 + $0x4510] sm:$0xff]
        %v2653 = vld [vmem:[%s343 + $0x4518] sm:$0xff]
        %v2654 = vld [vmem:[%s343 + $0x4520] sm:$0xff]
        %v2655 = vld [vmem:[%s343 + $0x4528] sm:$0xff]
        %v2656 = vld [vmem:[%s343 + $0x4530] sm:$0xff]
        %v2657 = vld [vmem:[%s343 + $0x4538] sm:$0xff]
        %v2658 = vld [vmem:[%s343 + $0x4540] sm:$0xff]
        %v2659 = vld [vmem:[%s343 + $0x4548] sm:$0xff]
        %v2660 = vld [vmem:[%s343 + $0x4550] sm:$0xff]
        %v2661 = vld [vmem:[%s343 + $0x4558] sm:$0xff]
        %v2662 = vld [vmem:[%s343 + $0x4560] sm:$0xff]
        %v2663 = vld [vmem:[%s343 + $0x4568] sm:$0xff]
        %v2664 = vld [vmem:[%s343 + $0x4570] sm:$0xff]
        %v2665 = vld [vmem:[%s343 + $0x4578] sm:$0xff]
        %v2666 = vld [vmem:[%s343 + $0x4580] sm:$0xff]
        %v2667 = vld [vmem:[%s343 + $0x4588] sm:$0xff]
        %v2668 = vld [vmem:[%s343 + $0x4590] sm:$0xff]
        %v2669 = vld [vmem:[%s343 + $0x4598] sm:$0xff]
        %v2670 = vld [vmem:[%s343 + $0x45a0] sm:$0xff]
        %v2671 = vld [vmem:[%s343 + $0x45a8] sm:$0xff]
        %v2672 = vld [vmem:[%s343 + $0x45b0] sm:$0xff]
        %v2673 = vld [vmem:[%s343 + $0x45b8] sm:$0xff]
        %v2674 = vld [vmem:[%s343 + $0x45c0] sm:$0xff]
        %v2675 = vld [vmem:[%s343 + $0x45c8] sm:$0xff]
        %v2676 = vld [vmem:[%s343 + $0x45d0] sm:$0xff]
        %v2677 = vld [vmem:[%s343 + $0x45d8] sm:$0xff]
        %v2678 = vld [vmem:[%s343 + $0x45e0] sm:$0xff]
        %v2679 = vld [vmem:[%s343 + $0x45e8] sm:$0xff]
        %v2680 = vld [vmem:[%s343 + $0x45f0] sm:$0xff]
        %v2681 = vld [vmem:[%s343 + $0x45f8] sm:$0xff]
        %v2682 = vld [vmem:[%s343 + $0x4600] sm:$0xff]
        %v2683 = vld [vmem:[%s343 + $0x4608] sm:$0xff]
        %v2684 = vld [vmem:[%s343 + $0x4610] sm:$0xff]
        %v2685 = vld [vmem:[%s343 + $0x4618] sm:$0xff]
        %v2686 = vld [vmem:[%s343 + $0x4620] sm:$0xff]
        %v2687 = vld [vmem:[%s343 + $0x4628] sm:$0xff]
        %v2688 = vld [vmem:[%s343 + $0x4630] sm:$0xff]
        %v2689 = vld [vmem:[%s343 + $0x4638] sm:$0xff]
        %v2690 = vld [vmem:[%s343 + $0x4640] sm:$0xff]
        %v2691 = vld [vmem:[%s343 + $0x4648] sm:$0xff]
        %v2692 = vld [vmem:[%s343 + $0x4650] sm:$0xff]
        %v2693 = vld [vmem:[%s343 + $0x4658] sm:$0xff]
        %v2694 = vld [vmem:[%s343 + $0x4660] sm:$0xff]
        %v2695 = vld [vmem:[%s343 + $0x4668] sm:$0xff]
        %v2696 = vld [vmem:[%s343 + $0x4670] sm:$0xff]
        %v2697 = vld [vmem:[%s343 + $0x4678] sm:$0xff]
        %v2698 = vld [vmem:[%s343 + $0x4680] sm:$0xff]
        %v2699 = vld [vmem:[%s343 + $0x4688] sm:$0xff]
        %v2700 = vld [vmem:[%s343 + $0x4690] sm:$0xff]
        %v2701 = vld [vmem:[%s343 + $0x4698] sm:$0xff]
        %v2702 = vld [vmem:[%s343 + $0x46a0] sm:$0xff]
        %v2703 = vld [vmem:[%s343 + $0x46a8] sm:$0xff]
        %v2704 = vld [vmem:[%s343 + $0x46b0] sm:$0xff]
        %v2705 = vld [vmem:[%s343 + $0x46b8] sm:$0xff]
        %v2706 = vld [vmem:[%s343 + $0x46c0] sm:$0xff]
        %v2707 = vld [vmem:[%s343 + $0x46c8] sm:$0xff]
        %v2708 = vld [vmem:[%s343 + $0x46d0] sm:$0xff]
        %v2709 = vld [vmem:[%s343 + $0x46d8] sm:$0xff]
        %v2710 = vld [vmem:[%s343 + $0x46e0] sm:$0xff]
        %v2711 = vld [vmem:[%s343 + $0x46e8] sm:$0xff]
        %v2712 = vld [vmem:[%s343 + $0x46f0] sm:$0xff]
        %v2713 = vld [vmem:[%s343 + $0x46f8] sm:$0xff]
        %v2714 = vld [vmem:[%s343 + $0x4700] sm:$0xff]
        %v2715 = vld [vmem:[%s343 + $0x4708] sm:$0xff]
        %v2716 = vld [vmem:[%s343 + $0x4710] sm:$0xff]
        %v2717 = vld [vmem:[%s343 + $0x4718] sm:$0xff]
        %v2718 = vld [vmem:[%s343 + $0x4720] sm:$0xff]
        %v2719 = vld [vmem:[%s343 + $0x4728] sm:$0xff]
        %v2720 = vld [vmem:[%s343 + $0x4730] sm:$0xff]
        %v2721 = vld [vmem:[%s343 + $0x4738] sm:$0xff]
        %v2722 = vld [vmem:[%s343 + $0x4740] sm:$0xff]
        %v2723 = vld [vmem:[%s343 + $0x4748] sm:$0xff]
        %v2724 = vld [vmem:[%s343 + $0x4750] sm:$0xff]
        %v2725 = vld [vmem:[%s343 + $0x4758] sm:$0xff]
        %v2726 = vld [vmem:[%s343 + $0x4760] sm:$0xff]
        %v2727 = vld [vmem:[%s343 + $0x4768] sm:$0xff]
        %v2728 = vld [vmem:[%s343 + $0x4770] sm:$0xff]
        %v2729 = vld [vmem:[%s343 + $0x4778] sm:$0xff]
        %v2730 = vld [vmem:[%s343 + $0x4780] sm:$0xff]
        %v2731 = vld [vmem:[%s343 + $0x4788] sm:$0xff]
        %v2732 = vld [vmem:[%s343 + $0x4790] sm:$0xff]
        %v2733 = vld [vmem:[%s343 + $0x4798] sm:$0xff]
        %v2734 = vld [vmem:[%s343 + $0x47a0] sm:$0xff]
        %v2735 = vld [vmem:[%s343 + $0x47a8] sm:$0xff]
        %v2736 = vld [vmem:[%s343 + $0x47b0] sm:$0xff]
        %v2737 = vld [vmem:[%s343 + $0x47b8] sm:$0xff]
        %v2738 = vld [vmem:[%s343 + $0x47c0] sm:$0xff]
        %v2739 = vld [vmem:[%s343 + $0x47c8] sm:$0xff]
        %v2740 = vld [vmem:[%s343 + $0x47d0] sm:$0xff]
        %v2741 = vld [vmem:[%s343 + $0x47d8] sm:$0xff]
        %v2742 = vld [vmem:[%s343 + $0x47e0] sm:$0xff]
        %v2743 = vld [vmem:[%s343 + $0x47e8] sm:$0xff]
        %v2744 = vld [vmem:[%s343 + $0x47f0] sm:$0xff]
        %v2745 = vld [vmem:[%s343 + $0x47f8] sm:$0xff]
        %2746 = vmatprep.subr.mxu0 %v443
        %2747 = vmatpush1.msra.mxu0 %v442
        %2748 = vmatprep.subr.mxu0 %v449
        %2749 = vmatpush1.msra.mxu0 %v448
        %2750 = vmatprep.subr.mxu0 %v455
        %2751 = vmatpush1.msra.mxu0 %v454
        %2752 = vmatprep.subr.mxu0 %v461
        %2753 = vmatpush1.msra.mxu0 %v460
        %2754 = vmatprep.subr.mxu0 %v467
        %2755 = vmatpush1.msra.mxu0 %v466
        %2756 = vmatprep.subr.mxu0 %v473
        %2757 = vmatpush1.msra.mxu0 %v472
        %2758 = vmatprep.subr.mxu0 %v479
        %2759 = vmatpush1.msra.mxu0 %v478
        %2760 = vmatprep.subr.mxu0 %v485
        %2761 = vmatpush1.msra.mxu0 %v484
        %2762 = vmatprep.subr.mxu0 %v491
        %2763 = vmatpush1.msra.mxu0 %v490
        %2764 = vmatprep.subr.mxu0 %v497
        %2765 = vmatpush1.msra.mxu0 %v496
        %2766 = vmatprep.subr.mxu0 %v503
        %2767 = vmatpush1.msra.mxu0 %v502
        %2768 = vmatprep.subr.mxu0 %v509
        %2769 = vmatpush1.msra.mxu0 %v508
        %2770 = vmatprep.subr.mxu0 %v515
        %2771 = vmatpush1.msra.mxu0 %v514
        %2772 = vmatprep.subr.mxu0 %v521
        %2773 = vmatpush1.msra.mxu0 %v520
        %2774 = vmatprep.subr.mxu0 %v527
        %2775 = vmatpush1.msra.mxu0 %v526
        %2776 = vmatprep.subr.mxu0 %v533
        %2777 = vmatpush1.msra.mxu0 %v532
        %2778 = vmatprep.subr.mxu0 %v539
        %2779 = vmatpush1.msra.mxu0 %v538
        %2780 = vmatprep.subr.mxu0 %v545
        %2781 = vmatpush1.msra.mxu0 %v544
        %2782 = vmatprep.subr.mxu0 %v551
        %2783 = vmatpush1.msra.mxu0 %v550
        %2784 = vmatprep.subr.mxu0 %v557
        %2785 = vmatpush1.msra.mxu0 %v556
        %2786 = vmatprep.subr.mxu0 %v563
        %2787 = vmatpush1.msra.mxu0 %v562
        %2788 = vmatprep.subr.mxu0 %v569
        %2789 = vmatpush1.msra.mxu0 %v568
        %2790 = vmatprep.subr.mxu0 %v575
        %2791 = vmatpush1.msra.mxu0 %v574
        %2792 = vmatprep.subr.mxu0 %v581
        %2793 = vmatpush1.msra.mxu0 %v580
        %2794 = vmatprep.subr.mxu0 %v587
        %2795 = vmatpush1.msra.mxu0 %v586
        %2796 = vmatprep.subr.mxu0 %v593
        %2797 = vmatpush1.msra.mxu0 %v592
        %2798 = vmatprep.subr.mxu0 %v599
        %2799 = vmatpush1.msra.mxu0 %v598
        %2800 = vmatprep.subr.mxu0 %v605
        %2801 = vmatpush1.msra.mxu0 %v604
        %2802 = vmatprep.subr.mxu0 %v611
        %2803 = vmatpush1.msra.mxu0 %v610
        %2804 = vmatprep.subr.mxu0 %v617
        %2805 = vmatpush1.msra.mxu0 %v616
        %2806 = vmatprep.subr.mxu0 %v623
        %2807 = vmatpush1.msra.mxu0 %v622
        %2808 = vmatprep.subr.mxu0 %v629
        %2809 = vmatpush1.msra.mxu0 %v628
        %2810 = vmatprep.mubr.f32.mxu0 %v419
        %2811 = vmatmul.mubr.f32.gmra.mrb[0].mxu0 %v418
        %v2812 = vpop.f32.mrb[0].mxu0
        %v2813 = vadd.f32 0.0, %v2812
        %v2814 = vpop.f32.mrb[0].mxu0
        %v2815 = vadd.f32 0.0, %v2814
        %2816 = vdwg.mxu0
        %2817 = vmatprep.subr.mxu0 %v635
        %2818 = vmatpush1.msra.mxu0 %v634
        %2819 = vmatprep.subr.mxu0 %v641
        %2820 = vmatpush1.msra.mxu0 %v640
        %2821 = vmatprep.subr.mxu0 %v647
        %2822 = vmatpush1.msra.mxu0 %v646
        %2823 = vmatprep.subr.mxu0 %v653
        %2824 = vmatpush1.msra.mxu0 %v652
        %2825 = vmatprep.subr.mxu0 %v659
        %2826 = vmatpush1.msra.mxu0 %v658
        %2827 = vmatprep.subr.mxu0 %v665
        %2828 = vmatpush1.msra.mxu0 %v664
        %2829 = vmatprep.subr.mxu0 %v671
        %2830 = vmatpush1.msra.mxu0 %v670
        %2831 = vmatprep.subr.mxu0 %v677
        %2832 = vmatpush1.msra.mxu0 %v676
        %2833 = vmatprep.subr.mxu0 %v683
        %2834 = vmatpush1.msra.mxu0 %v682
        %2835 = vmatprep.subr.mxu0 %v689
        %2836 = vmatpush1.msra.mxu0 %v688
        %2837 = vmatprep.subr.mxu0 %v695
        %2838 = vmatpush1.msra.mxu0 %v694
        %2839 = vmatprep.subr.mxu0 %v701
        %2840 = vmatpush1.msra.mxu0 %v700
        %2841 = vmatprep.subr.mxu0 %v707
        %2842 = vmatpush1.msra.mxu0 %v706
        %2843 = vmatprep.subr.mxu0 %v713
        %2844 = vmatpush1.msra.mxu0 %v712
        %2845 = vmatprep.subr.mxu0 %v719
        %2846 = vmatpush1.msra.mxu0 %v718
        %2847 = vmatprep.subr.mxu0 %v725
        %2848 = vmatpush1.msra.mxu0 %v724
        %2849 = vmatprep.subr.mxu0 %v731
        %2850 = vmatpush1.msra.mxu0 %v730
        %2851 = vmatprep.subr.mxu0 %v737
        %2852 = vmatpush1.msra.mxu0 %v736
        %2853 = vmatprep.subr.mxu0 %v743
        %2854 = vmatpush1.msra.mxu0 %v742
        %2855 = vmatprep.subr.mxu0 %v749
        %2856 = vmatpush1.msra.mxu0 %v748
        %2857 = vmatprep.subr.mxu0 %v755
        %2858 = vmatpush1.msra.mxu0 %v754
        %2859 = vmatprep.subr.mxu0 %v761
        %2860 = vmatpush1.msra.mxu0 %v760
        %2861 = vmatprep.subr.mxu0 %v767
        %2862 = vmatpush1.msra.mxu0 %v766
        %2863 = vmatprep.subr.mxu0 %v773
        %2864 = vmatpush1.msra.mxu0 %v772
        %2865 = vmatprep.subr.mxu0 %v779
        %2866 = vmatpush1.msra.mxu0 %v778
        %2867 = vmatprep.subr.mxu0 %v785
        %2868 = vmatpush1.msra.mxu0 %v784
        %2869 = vmatprep.subr.mxu0 %v791
        %2870 = vmatpush1.msra.mxu0 %v790
        %2871 = vmatprep.subr.mxu0 %v797
        %2872 = vmatpush1.msra.mxu0 %v796
        %2873 = vmatprep.subr.mxu0 %v803
        %2874 = vmatpush1.msra.mxu0 %v802
        %2875 = vmatprep.subr.mxu0 %v809
        %2876 = vmatpush1.msra.mxu0 %v808
        %2877 = vmatprep.subr.mxu0 %v815
        %2878 = vmatpush1.msra.mxu0 %v814
        %2879 = vmatprep.subr.mxu0 %v821
        %2880 = vmatpush1.msra.mxu0 %v820
        %2881 = vmatprep.mubr.f32.mxu0 %v421
        %2882 = vmatmul.mubr.f32.gmra.mrb[0].mxu0 %v420
        %v2883 = vpop.f32.mrb[0].mxu0
        %v2884 = vadd.f32 %v2813, %v2883
        %v2885 = vpop.f32.mrb[0].mxu0
        %v2886 = vadd.f32 %v2815, %v2885
        %2887 = vdwg.mxu0
        %2888 = vmatprep.subr.mxu0 %v827
        %2889 = vmatpush1.msra.mxu0 %v826
        %2890 = vmatprep.subr.mxu0 %v833
        %2891 = vmatpush1.msra.mxu0 %v832
        %2892 = vmatprep.subr.mxu0 %v839
        %2893 = vmatpush1.msra.mxu0 %v838
        %2894 = vmatprep.subr.mxu0 %v845
        %2895 = vmatpush1.msra.mxu0 %v844
        %2896 = vmatprep.subr.mxu0 %v851
        %2897 = vmatpush1.msra.mxu0 %v850
        %2898 = vmatprep.subr.mxu0 %v857
        %2899 = vmatpush1.msra.mxu0 %v856
        %2900 = vmatprep.subr.mxu0 %v863
        %2901 = vmatpush1.msra.mxu0 %v862
        %2902 = vmatprep.subr.mxu0 %v869
        %2903 = vmatpush1.msra.mxu0 %v868
        %2904 = vmatprep.subr.mxu0 %v875
        %2905 = vmatpush1.msra.mxu0 %v874
        %2906 = vmatprep.subr.mxu0 %v881
        %2907 = vmatpush1.msra.mxu0 %v880
        %2908 = vmatprep.subr.mxu0 %v887
        %2909 = vmatpush1.msra.mxu0 %v886
        %2910 = vmatprep.subr.mxu0 %v893
        %2911 = vmatpush1.msra.mxu0 %v892
        %2912 = vmatprep.subr.mxu0 %v899
        %2913 = vmatpush1.msra.mxu0 %v898
        %2914 = vmatprep.subr.mxu0 %v905
        %2915 = vmatpush1.msra.mxu0 %v904
        %2916 = vmatprep.subr.mxu0 %v911
        %2917 = vmatpush1.msra.mxu0 %v910
        %2918 = vmatprep.subr.mxu0 %v917
        %2919 = vmatpush1.msra.mxu0 %v916
        %2920 = vmatprep.subr.mxu0 %v923
        %2921 = vmatpush1.msra.mxu0 %v922
        %2922 = vmatprep.subr.mxu0 %v929
        %2923 = vmatpush1.msra.mxu0 %v928
        %2924 = vmatprep.subr.mxu0 %v935
        %2925 = vmatpush1.msra.mxu0 %v934
        %2926 = vmatprep.subr.mxu0 %v941
        %2927 = vmatpush1.msra.mxu0 %v940
        %2928 = vmatprep.subr.mxu0 %v947
        %2929 = vmatpush1.msra.mxu0 %v946
        %2930 = vmatprep.subr.mxu0 %v953
        %2931 = vmatpush1.msra.mxu0 %v952
        %2932 = vmatprep.subr.mxu0 %v959
        %2933 = vmatpush1.msra.mxu0 %v958
        %2934 = vmatprep.subr.mxu0 %v965
        %2935 = vmatpush1.msra.mxu0 %v964
        %2936 = vmatprep.subr.mxu0 %v971
        %2937 = vmatpush1.msra.mxu0 %v970
        %2938 = vmatprep.subr.mxu0 %v977
        %2939 = vmatpush1.msra.mxu0 %v976
        %2940 = vmatprep.subr.mxu0 %v983
        %2941 = vmatpush1.msra.mxu0 %v982
        %2942 = vmatprep.subr.mxu0 %v989
        %2943 = vmatpush1.msra.mxu0 %v988
        %2944 = vmatprep.subr.mxu0 %v995
        %2945 = vmatpush1.msra.mxu0 %v994
        %2946 = vmatprep.subr.mxu0 %v1001
        %2947 = vmatpush1.msra.mxu0 %v1000
        %2948 = vmatprep.subr.mxu0 %v1007
        %2949 = vmatpush1.msra.mxu0 %v1006
        %2950 = vmatprep.subr.mxu0 %v1013
        %2951 = vmatpush1.msra.mxu0 %v1012
        %2952 = vmatprep.mubr.f32.mxu0 %v423
        %2953 = vmatmul.mubr.f32.gmra.mrb[0].mxu0 %v422
        %v2954 = vpop.f32.mrb[0].mxu0
        %v2955 = vadd.f32 %v2884, %v2954
        %v2956 = vpop.f32.mrb[0].mxu0
        %v2957 = vadd.f32 %v2886, %v2956
        %2958 = vdwg.mxu0
        %2959 = vmatprep.subr.mxu0 %v1019
        %2960 = vmatpush1.msra.mxu0 %v1018
        %2961 = vmatprep.subr.mxu0 %v1025
        %2962 = vmatpush1.msra.mxu0 %v1024
        %2963 = vmatprep.subr.mxu0 %v1031
        %2964 = vmatpush1.msra.mxu0 %v1030
        %2965 = vmatprep.subr.mxu0 %v1037
        %2966 = vmatpush1.msra.mxu0 %v1036
        %2967 = vmatprep.subr.mxu0 %v1043
        %2968 = vmatpush1.msra.mxu0 %v1042
        %2969 = vmatprep.subr.mxu0 %v1049
        %2970 = vmatpush1.msra.mxu0 %v1048
        %2971 = vmatprep.subr.mxu0 %v1055
        %2972 = vmatpush1.msra.mxu0 %v1054
        %2973 = vmatprep.subr.mxu0 %v1061
        %2974 = vmatpush1.msra.mxu0 %v1060
        %2975 = vmatprep.subr.mxu0 %v1067
        %2976 = vmatpush1.msra.mxu0 %v1066
        %2977 = vmatprep.subr.mxu0 %v1073
        %2978 = vmatpush1.msra.mxu0 %v1072
        %2979 = vmatprep.subr.mxu0 %v1079
        %2980 = vmatpush1.msra.mxu0 %v1078
        %2981 = vmatprep.subr.mxu0 %v1085
        %2982 = vmatpush1.msra.mxu0 %v1084
        %2983 = vmatprep.subr.mxu0 %v1091
        %2984 = vmatpush1.msra.mxu0 %v1090
        %2985 = vmatprep.subr.mxu0 %v1097
        %2986 = vmatpush1.msra.mxu0 %v1096
        %2987 = vmatprep.subr.mxu0 %v1103
        %2988 = vmatpush1.msra.mxu0 %v1102
        %2989 = vmatprep.subr.mxu0 %v1109
        %2990 = vmatpush1.msra.mxu0 %v1108
        %2991 = vmatprep.subr.mxu0 %v1115
        %2992 = vmatpush1.msra.mxu0 %v1114
        %2993 = vmatprep.subr.mxu0 %v1121
        %2994 = vmatpush1.msra.mxu0 %v1120
        %2995 = vmatprep.subr.mxu0 %v1127
        %2996 = vmatpush1.msra.mxu0 %v1126
        %2997 = vmatprep.subr.mxu0 %v1133
        %2998 = vmatpush1.msra.mxu0 %v1132
        %2999 = vmatprep.subr.mxu0 %v1139
        %3000 = vmatpush1.msra.mxu0 %v1138
        %3001 = vmatprep.subr.mxu0 %v1145
        %3002 = vmatpush1.msra.mxu0 %v1144
        %3003 = vmatprep.subr.mxu0 %v1151
        %3004 = vmatpush1.msra.mxu0 %v1150
        %3005 = vmatprep.subr.mxu0 %v1157
        %3006 = vmatpush1.msra.mxu0 %v1156
        %3007 = vmatprep.subr.mxu0 %v1163
        %3008 = vmatpush1.msra.mxu0 %v1162
        %3009 = vmatprep.subr.mxu0 %v1169
        %3010 = vmatpush1.msra.mxu0 %v1168
        %3011 = vmatprep.subr.mxu0 %v1175
        %3012 = vmatpush1.msra.mxu0 %v1174
        %3013 = vmatprep.subr.mxu0 %v1181
        %3014 = vmatpush1.msra.mxu0 %v1180
        %3015 = vmatprep.subr.mxu0 %v1187
        %3016 = vmatpush1.msra.mxu0 %v1186
        %3017 = vmatprep.subr.mxu0 %v1193
        %3018 = vmatpush1.msra.mxu0 %v1192
        %3019 = vmatprep.subr.mxu0 %v1199
        %3020 = vmatpush1.msra.mxu0 %v1198
        %3021 = vmatprep.subr.mxu0 %v1205
        %3022 = vmatpush1.msra.mxu0 %v1204
        %3023 = vmatprep.mubr.f32.mxu0 %v425
        %3024 = vmatmul.mubr.f32.gmra.mrb[0].mxu0 %v424
        %v3025 = vpop.f32.mrb[0].mxu0
        %v3026 = vadd.f32 %v2955, %v3025
        %v3027 = vpop.f32.mrb[0].mxu0
        %v3028 = vadd.f32 %v2957, %v3027
        %3029 = vdwg.mxu0
        %3030 = vmatprep.subr.mxu0 %v1211
        %3031 = vmatpush1.msra.mxu0 %v1210
        %3032 = vmatprep.subr.mxu0 %v1217
        %3033 = vmatpush1.msra.mxu0 %v1216
        %3034 = vmatprep.subr.mxu0 %v1223
        %3035 = vmatpush1.msra.mxu0 %v1222
        %3036 = vmatprep.subr.mxu0 %v1229
        %3037 = vmatpush1.msra.mxu0 %v1228
        %3038 = vmatprep.subr.mxu0 %v1235
        %3039 = vmatpush1.msra.mxu0 %v1234
        %3040 = vmatprep.subr.mxu0 %v1241
        %3041 = vmatpush1.msra.mxu0 %v1240
        %3042 = vmatprep.subr.mxu0 %v1247
        %3043 = vmatpush1.msra.mxu0 %v1246
        %3044 = vmatprep.subr.mxu0 %v1253
        %3045 = vmatpush1.msra.mxu0 %v1252
        %3046 = vmatprep.subr.mxu0 %v1259
        %3047 = vmatpush1.msra.mxu0 %v1258
        %3048 = vmatprep.subr.mxu0 %v1265
        %3049 = vmatpush1.msra.mxu0 %v1264
        %3050 = vmatprep.subr.mxu0 %v1271
        %3051 = vmatpush1.msra.mxu0 %v1270
        %3052 = vmatprep.subr.mxu0 %v1277
        %3053 = vmatpush1.msra.mxu0 %v1276
        %3054 = vmatprep.subr.mxu0 %v1283
        %3055 = vmatpush1.msra.mxu0 %v1282
        %3056 = vmatprep.subr.mxu0 %v1289
        %3057 = vmatpush1.msra.mxu0 %v1288
        %3058 = vmatprep.subr.mxu0 %v1295
        %3059 = vmatpush1.msra.mxu0 %v1294
        %3060 = vmatprep.subr.mxu0 %v1301
        %3061 = vmatpush1.msra.mxu0 %v1300
        %3062 = vmatprep.subr.mxu0 %v1307
        %3063 = vmatpush1.msra.mxu0 %v1306
        %3064 = vmatprep.subr.mxu0 %v1313
        %3065 = vmatpush1.msra.mxu0 %v1312
        %3066 = vmatprep.subr.mxu0 %v1319
        %3067 = vmatpush1.msra.mxu0 %v1318
        %3068 = vmatprep.subr.mxu0 %v1325
        %3069 = vmatpush1.msra.mxu0 %v1324
        %3070 = vmatprep.subr.mxu0 %v1331
        %3071 = vmatpush1.msra.mxu0 %v1330
        %3072 = vmatprep.subr.mxu0 %v1337
        %3073 = vmatpush1.msra.mxu0 %v1336
        %3074 = vmatprep.subr.mxu0 %v1343
        %3075 = vmatpush1.msra.mxu0 %v1342
        %3076 = vmatprep.subr.mxu0 %v1349
        %3077 = vmatpush1.msra.mxu0 %v1348
        %3078 = vmatprep.subr.mxu0 %v1355
        %3079 = vmatpush1.msra.mxu0 %v1354
        %3080 = vmatprep.subr.mxu0 %v1361
        %3081 = vmatpush1.msra.mxu0 %v1360
        %3082 = vmatprep.subr.mxu0 %v1367
        %3083 = vmatpush1.msra.mxu0 %v1366
        %3084 = vmatprep.subr.mxu0 %v1373
        %3085 = vmatpush1.msra.mxu0 %v1372
        %3086 = vmatprep.subr.mxu0 %v1379
        %3087 = vmatpush1.msra.mxu0 %v1378
        %3088 = vmatprep.subr.mxu0 %v1385
        %3089 = vmatpush1.msra.mxu0 %v1384
        %3090 = vmatprep.subr.mxu0 %v1391
        %3091 = vmatpush1.msra.mxu0 %v1390
        %3092 = vmatprep.subr.mxu0 %v1397
        %3093 = vmatpush1.msra.mxu0 %v1396
        %3094 = vmatprep.mubr.f32.mxu0 %v427
        %3095 = vmatmul.mubr.f32.gmra.mrb[0].mxu0 %v426
        %v3096 = vpop.f32.mrb[0].mxu0
        %v3097 = vadd.f32 %v3026, %v3096
        %v3098 = vpop.f32.mrb[0].mxu0
        %v3099 = vadd.f32 %v3028, %v3098
        %3100 = vdwg.mxu0
        %3101 = vmatprep.subr.mxu0 %v1403
        %3102 = vmatpush1.msra.mxu0 %v1402
        %3103 = vmatprep.subr.mxu0 %v1409
        %3104 = vmatpush1.msra.mxu0 %v1408
        %3105 = vmatprep.subr.mxu0 %v1415
        %3106 = vmatpush1.msra.mxu0 %v1414
        %3107 = vmatprep.subr.mxu0 %v1421
        %3108 = vmatpush1.msra.mxu0 %v1420
        %3109 = vmatprep.subr.mxu0 %v1427
        %3110 = vmatpush1.msra.mxu0 %v1426
        %3111 = vmatprep.subr.mxu0 %v1433
        %3112 = vmatpush1.msra.mxu0 %v1432
        %3113 = vmatprep.subr.mxu0 %v1439
        %3114 = vmatpush1.msra.mxu0 %v1438
        %3115 = vmatprep.subr.mxu0 %v1445
        %3116 = vmatpush1.msra.mxu0 %v1444
        %3117 = vmatprep.subr.mxu0 %v1451
        %3118 = vmatpush1.msra.mxu0 %v1450
        %3119 = vmatprep.subr.mxu0 %v1457
        %3120 = vmatpush1.msra.mxu0 %v1456
        %3121 = vmatprep.subr.mxu0 %v1463
        %3122 = vmatpush1.msra.mxu0 %v1462
        %3123 = vmatprep.subr.mxu0 %v1469
        %3124 = vmatpush1.msra.mxu0 %v1468
        %3125 = vmatprep.subr.mxu0 %v1475
        %3126 = vmatpush1.msra.mxu0 %v1474
        %3127 = vmatprep.subr.mxu0 %v1481
        %3128 = vmatpush1.msra.mxu0 %v1480
        %3129 = vmatprep.subr.mxu0 %v1487
        %3130 = vmatpush1.msra.mxu0 %v1486
        %3131 = vmatprep.subr.mxu0 %v1493
        %3132 = vmatpush1.msra.mxu0 %v1492
        %3133 = vmatprep.subr.mxu0 %v1499
        %3134 = vmatpush1.msra.mxu0 %v1498
        %3135 = vmatprep.subr.mxu0 %v1505
        %3136 = vmatpush1.msra.mxu0 %v1504
        %3137 = vmatprep.subr.mxu0 %v1511
        %3138 = vmatpush1.msra.mxu0 %v1510
        %3139 = vmatprep.subr.mxu0 %v1517
        %3140 = vmatpush1.msra.mxu0 %v1516
        %3141 = vmatprep.subr.mxu0 %v1523
        %3142 = vmatpush1.msra.mxu0 %v1522
        %3143 = vmatprep.subr.mxu0 %v1529
        %3144 = vmatpush1.msra.mxu0 %v1528
        %3145 = vmatprep.subr.mxu0 %v1535
        %3146 = vmatpush1.msra.mxu0 %v1534
        %3147 = vmatprep.subr.mxu0 %v1541
        %3148 = vmatpush1.msra.mxu0 %v1540
        %3149 = vmatprep.subr.mxu0 %v1547
        %3150 = vmatpush1.msra.mxu0 %v1546
        %3151 = vmatprep.subr.mxu0 %v1553
        %3152 = vmatpush1.msra.mxu0 %v1552
        %3153 = vmatprep.subr.mxu0 %v1559
        %3154 = vmatpush1.msra.mxu0 %v1558
        %3155 = vmatprep.subr.mxu0 %v1565
        %3156 = vmatpush1.msra.mxu0 %v1564
        %3157 = vmatprep.subr.mxu0 %v1571
        %3158 = vmatpush1.msra.mxu0 %v1570
        %3159 = vmatprep.subr.mxu0 %v1577
        %3160 = vmatpush1.msra.mxu0 %v1576
        %3161 = vmatprep.subr.mxu0 %v1583
        %3162 = vmatpush1.msra.mxu0 %v1582
        %3163 = vmatprep.subr.mxu0 %v1589
        %3164 = vmatpush1.msra.mxu0 %v1588
        %3165 = vmatprep.mubr.f32.mxu0 %v429
        %3166 = vmatmul.mubr.f32.gmra.mrb[0].mxu0 %v428
        %v3167 = vpop.f32.mrb[0].mxu0
        %v3168 = vadd.f32 %v3097, %v3167
        %v3169 = vpop.f32.mrb[0].mxu0
        %v3170 = vadd.f32 %v3099, %v3169
        %3171 = vdwg.mxu0
        %3172 = vmatprep.subr.mxu0 %v1595
        %3173 = vmatpush1.msra.mxu0 %v1594
        %3174 = vmatprep.subr.mxu0 %v1601
        %3175 = vmatpush1.msra.mxu0 %v1600
        %3176 = vmatprep.subr.mxu0 %v1607
        %3177 = vmatpush1.msra.mxu0 %v1606
        %3178 = vmatprep.subr.mxu0 %v1613
        %3179 = vmatpush1.msra.mxu0 %v1612
        %3180 = vmatprep.subr.mxu0 %v1619
        %3181 = vmatpush1.msra.mxu0 %v1618
        %3182 = vmatprep.subr.mxu0 %v1625
        %3183 = vmatpush1.msra.mxu0 %v1624
        %3184 = vmatprep.subr.mxu0 %v1631
        %3185 = vmatpush1.msra.mxu0 %v1630
        %3186 = vmatprep.subr.mxu0 %v1637
        %3187 = vmatpush1.msra.mxu0 %v1636
        %3188 = vmatprep.subr.mxu0 %v1643
        %3189 = vmatpush1.msra.mxu0 %v1642
        %3190 = vmatprep.subr.mxu0 %v1649
        %3191 = vmatpush1.msra.mxu0 %v1648
        %3192 = vmatprep.subr.mxu0 %v1655
        %3193 = vmatpush1.msra.mxu0 %v1654
        %3194 = vmatprep.subr.mxu0 %v1661
        %3195 = vmatpush1.msra.mxu0 %v1660
        %3196 = vmatprep.subr.mxu0 %v1667
        %3197 = vmatpush1.msra.mxu0 %v1666
        %3198 = vmatprep.subr.mxu0 %v1673
        %3199 = vmatpush1.msra.mxu0 %v1672
        %3200 = vmatprep.subr.mxu0 %v1679
        %3201 = vmatpush1.msra.mxu0 %v1678
        %3202 = vmatprep.subr.mxu0 %v1685
        %3203 = vmatpush1.msra.mxu0 %v1684
        %3204 = vmatprep.subr.mxu0 %v1691
        %3205 = vmatpush1.msra.mxu0 %v1690
        %3206 = vmatprep.subr.mxu0 %v1697
        %3207 = vmatpush1.msra.mxu0 %v1696
        %3208 = vmatprep.subr.mxu0 %v1703
        %3209 = vmatpush1.msra.mxu0 %v1702
        %3210 = vmatprep.subr.mxu0 %v1709
        %3211 = vmatpush1.msra.mxu0 %v1708
        %3212 = vmatprep.subr.mxu0 %v1715
        %3213 = vmatpush1.msra.mxu0 %v1714
        %3214 = vmatprep.subr.mxu0 %v1721
        %3215 = vmatpush1.msra.mxu0 %v1720
        %3216 = vmatprep.subr.mxu0 %v1727
        %3217 = vmatpush1.msra.mxu0 %v1726
        %3218 = vmatprep.subr.mxu0 %v1733
        %3219 = vmatpush1.msra.mxu0 %v1732
        %3220 = vmatprep.subr.mxu0 %v1739
        %3221 = vmatpush1.msra.mxu0 %v1738
        %3222 = vmatprep.subr.mxu0 %v1745
        %3223 = vmatpush1.msra.mxu0 %v1744
        %3224 = vmatprep.subr.mxu0 %v1751
        %3225 = vmatpush1.msra.mxu0 %v1750
        %3226 = vmatprep.subr.mxu0 %v1757
        %3227 = vmatpush1.msra.mxu0 %v1756
        %3228 = vmatprep.subr.mxu0 %v1763
        %3229 = vmatpush1.msra.mxu0 %v1762
        %3230 = vmatprep.subr.mxu0 %v1769
        %3231 = vmatpush1.msra.mxu0 %v1768
        %3232 = vmatprep.subr.mxu0 %v1775
        %3233 = vmatpush1.msra.mxu0 %v1774
        %3234 = vmatprep.subr.mxu0 %v1781
        %3235 = vmatpush1.msra.mxu0 %v1780
        %3236 = vmatprep.mubr.f32.mxu0 %v431
        %3237 = vmatmul.mubr.f32.gmra.mrb[0].mxu0 %v430
        %v3238 = vpop.f32.mrb[0].mxu0
        %v3239 = vadd.f32 %v3168, %v3238
        %v3240 = vpop.f32.mrb[0].mxu0
        %v3241 = vadd.f32 %v3170, %v3240
        %3242 = vdwg.mxu0
        %3243 = vmatprep.subr.mxu0 %v1787
        %3244 = vmatpush1.msra.mxu0 %v1786
        %3245 = vmatprep.subr.mxu0 %v1793
        %3246 = vmatpush1.msra.mxu0 %v1792
        %3247 = vmatprep.subr.mxu0 %v1799
        %3248 = vmatpush1.msra.mxu0 %v1798
        %3249 = vmatprep.subr.mxu0 %v1805
        %3250 = vmatpush1.msra.mxu0 %v1804
        %3251 = vmatprep.subr.mxu0 %v1811
        %3252 = vmatpush1.msra.mxu0 %v1810
        %3253 = vmatprep.subr.mxu0 %v1817
        %3254 = vmatpush1.msra.mxu0 %v1816
        %3255 = vmatprep.subr.mxu0 %v1823
        %3256 = vmatpush1.msra.mxu0 %v1822
        %3257 = vmatprep.subr.mxu0 %v1829
        %3258 = vmatpush1.msra.mxu0 %v1828
        %3259 = vmatprep.subr.mxu0 %v1835
        %3260 = vmatpush1.msra.mxu0 %v1834
        %3261 = vmatprep.subr.mxu0 %v1841
        %3262 = vmatpush1.msra.mxu0 %v1840
        %3263 = vmatprep.subr.mxu0 %v1847
        %3264 = vmatpush1.msra.mxu0 %v1846
        %3265 = vmatprep.subr.mxu0 %v1853
        %3266 = vmatpush1.msra.mxu0 %v1852
        %3267 = vmatprep.subr.mxu0 %v1859
        %3268 = vmatpush1.msra.mxu0 %v1858
        %3269 = vmatprep.subr.mxu0 %v1865
        %3270 = vmatpush1.msra.mxu0 %v1864
        %3271 = vmatprep.subr.mxu0 %v1871
        %3272 = vmatpush1.msra.mxu0 %v1870
        %3273 = vmatprep.subr.mxu0 %v1877
        %3274 = vmatpush1.msra.mxu0 %v1876
        %3275 = vmatprep.subr.mxu0 %v1883
        %3276 = vmatpush1.msra.mxu0 %v1882
        %3277 = vmatprep.subr.mxu0 %v1889
        %3278 = vmatpush1.msra.mxu0 %v1888
        %3279 = vmatprep.subr.mxu0 %v1895
        %3280 = vmatpush1.msra.mxu0 %v1894
        %3281 = vmatprep.subr.mxu0 %v1901
        %3282 = vmatpush1.msra.mxu0 %v1900
        %3283 = vmatprep.subr.mxu0 %v1907
        %3284 = vmatpush1.msra.mxu0 %v1906
        %3285 = vmatprep.subr.mxu0 %v1913
        %3286 = vmatpush1.msra.mxu0 %v1912
        %3287 = vmatprep.subr.mxu0 %v1919
        %3288 = vmatpush1.msra.mxu0 %v1918
        %3289 = vmatprep.subr.mxu0 %v1925
        %3290 = vmatpush1.msra.mxu0 %v1924
        %3291 = vmatprep.subr.mxu0 %v1931
        %3292 = vmatpush1.msra.mxu0 %v1930
        %3293 = vmatprep.subr.mxu0 %v1937
        %3294 = vmatpush1.msra.mxu0 %v1936
        %3295 = vmatprep.subr.mxu0 %v1943
        %3296 = vmatpush1.msra.mxu0 %v1942
        %3297 = vmatprep.subr.mxu0 %v1949
        %3298 = vmatpush1.msra.mxu0 %v1948
        %3299 = vmatprep.subr.mxu0 %v1955
        %3300 = vmatpush1.msra.mxu0 %v1954
        %3301 = vmatprep.subr.mxu0 %v1961
        %3302 = vmatpush1.msra.mxu0 %v1960
        %3303 = vmatprep.subr.mxu0 %v1967
        %3304 = vmatpush1.msra.mxu0 %v1966
        %3305 = vmatprep.subr.mxu0 %v1973
        %3306 = vmatpush1.msra.mxu0 %v1972
        %3307 = vmatprep.mubr.f32.mxu0 %v433
        %3308 = vmatmul.mubr.f32.gmra.mrb[0].mxu0 %v432
        %v3309 = vpop.f32.mrb[0].mxu0
        %v3310 = vadd.f32 %v3239, %v3309
        %v3311 = vpop.f32.mrb[0].mxu0
        %v3312 = vadd.f32 %v3241, %v3311
        %3313 = vdwg.mxu0
        %3314 = vmatprep.subr.mxu0 %v1979
        %3315 = vmatpush1.msra.mxu0 %v1978
        %3316 = vmatprep.subr.mxu0 %v1985
        %3317 = vmatpush1.msra.mxu0 %v1984
        %3318 = vmatprep.subr.mxu0 %v1991
        %3319 = vmatpush1.msra.mxu0 %v1990
        %3320 = vmatprep.subr.mxu0 %v1997
        %3321 = vmatpush1.msra.mxu0 %v1996
        %3322 = vmatprep.subr.mxu0 %v2003
        %3323 = vmatpush1.msra.mxu0 %v2002
        %3324 = vmatprep.subr.mxu0 %v2009
        %3325 = vmatpush1.msra.mxu0 %v2008
        %3326 = vmatprep.subr.mxu0 %v2015
        %3327 = vmatpush1.msra.mxu0 %v2014
        %3328 = vmatprep.subr.mxu0 %v2021
        %3329 = vmatpush1.msra.mxu0 %v2020
        %3330 = vmatprep.subr.mxu0 %v2027
        %3331 = vmatpush1.msra.mxu0 %v2026
        %3332 = vmatprep.subr.mxu0 %v2033
        %3333 = vmatpush1.msra.mxu0 %v2032
        %3334 = vmatprep.subr.mxu0 %v2039
        %3335 = vmatpush1.msra.mxu0 %v2038
        %3336 = vmatprep.subr.mxu0 %v2045
        %3337 = vmatpush1.msra.mxu0 %v2044
        %3338 = vmatprep.subr.mxu0 %v2051
        %3339 = vmatpush1.msra.mxu0 %v2050
        %3340 = vmatprep.subr.mxu0 %v2057
        %3341 = vmatpush1.msra.mxu0 %v2056
        %3342 = vmatprep.subr.mxu0 %v2063
        %3343 = vmatpush1.msra.mxu0 %v2062
        %3344 = vmatprep.subr.mxu0 %v2069
        %3345 = vmatpush1.msra.mxu0 %v2068
        %3346 = vmatprep.subr.mxu0 %v2075
        %3347 = vmatpush1.msra.mxu0 %v2074
        %3348 = vmatprep.subr.mxu0 %v2081
        %3349 = vmatpush1.msra.mxu0 %v2080
        %3350 = vmatprep.subr.mxu0 %v2087
        %3351 = vmatpush1.msra.mxu0 %v2086
        %3352 = vmatprep.subr.mxu0 %v2093
        %3353 = vmatpush1.msra.mxu0 %v2092
        %3354 = vmatprep.subr.mxu0 %v2099
        %3355 = vmatpush1.msra.mxu0 %v2098
        %3356 = vmatprep.subr.mxu0 %v2105
        %3357 = vmatpush1.msra.mxu0 %v2104
        %3358 = vmatprep.subr.mxu0 %v2111
        %3359 = vmatpush1.msra.mxu0 %v2110
        %3360 = vmatprep.subr.mxu0 %v2117
        %3361 = vmatpush1.msra.mxu0 %v2116
        %3362 = vmatprep.subr.mxu0 %v2123
        %3363 = vmatpush1.msra.mxu0 %v2122
        %3364 = vmatprep.subr.mxu0 %v2129
        %3365 = vmatpush1.msra.mxu0 %v2128
        %3366 = vmatprep.subr.mxu0 %v2135
        %3367 = vmatpush1.msra.mxu0 %v2134
        %3368 = vmatprep.subr.mxu0 %v2141
        %3369 = vmatpush1.msra.mxu0 %v2140
        %3370 = vmatprep.subr.mxu0 %v2147
        %3371 = vmatpush1.msra.mxu0 %v2146
        %3372 = vmatprep.subr.mxu0 %v2153
        %3373 = vmatpush1.msra.mxu0 %v2152
        %3374 = vmatprep.subr.mxu0 %v2159
        %3375 = vmatpush1.msra.mxu0 %v2158
        %3376 = vmatprep.subr.mxu0 %v2165
        %3377 = vmatpush1.msra.mxu0 %v2164
        %3378 = vmatprep.mubr.f32.mxu0 %v435
        %3379 = vmatmul.mubr.f32.gmra.mrb[0].mxu0 %v434
        %v3380 = vpop.f32.mrb[0].mxu0
        %v3381 = vadd.f32 %v3310, %v3380
        %v3382 = vpop.f32.mrb[0].mxu0
        %v3383 = vadd.f32 %v3312, %v3382
        %3384 = vdwg.mxu0
        %3385 = vmatprep.subr.mxu0 %v2171
        %3386 = vmatpush1.msra.mxu0 %v2170
        %3387 = vmatprep.subr.mxu0 %v2177
        %3388 = vmatpush1.msra.mxu0 %v2176
        %3389 = vmatprep.subr.mxu0 %v2183
        %3390 = vmatpush1.msra.mxu0 %v2182
        %3391 = vmatprep.subr.mxu0 %v2189
        %3392 = vmatpush1.msra.mxu0 %v2188
        %3393 = vmatprep.subr.mxu0 %v2195
        %3394 = vmatpush1.msra.mxu0 %v2194
        %3395 = vmatprep.subr.mxu0 %v2201
        %3396 = vmatpush1.msra.mxu0 %v2200
        %3397 = vmatprep.subr.mxu0 %v2207
        %3398 = vmatpush1.msra.mxu0 %v2206
        %3399 = vmatprep.subr.mxu0 %v2213
        %3400 = vmatpush1.msra.mxu0 %v2212
        %3401 = vmatprep.subr.mxu0 %v2219
        %3402 = vmatpush1.msra.mxu0 %v2218
        %3403 = vmatprep.subr.mxu0 %v2225
        %3404 = vmatpush1.msra.mxu0 %v2224
        %3405 = vmatprep.subr.mxu0 %v2231
        %3406 = vmatpush1.msra.mxu0 %v2230
        %3407 = vmatprep.subr.mxu0 %v2237
        %3408 = vmatpush1.msra.mxu0 %v2236
        %3409 = vmatprep.subr.mxu0 %v2243
        %3410 = vmatpush1.msra.mxu0 %v2242
        %3411 = vmatprep.subr.mxu0 %v2249
        %3412 = vmatpush1.msra.mxu0 %v2248
        %3413 = vmatprep.subr.mxu0 %v2255
        %3414 = vmatpush1.msra.mxu0 %v2254
        %3415 = vmatprep.subr.mxu0 %v2261
        %3416 = vmatpush1.msra.mxu0 %v2260
        %3417 = vmatprep.subr.mxu0 %v2267
        %3418 = vmatpush1.msra.mxu0 %v2266
        %3419 = vmatprep.subr.mxu0 %v2273
        %3420 = vmatpush1.msra.mxu0 %v2272
        %3421 = vmatprep.subr.mxu0 %v2279
        %3422 = vmatpush1.msra.mxu0 %v2278
        %3423 = vmatprep.subr.mxu0 %v2285
        %3424 = vmatpush1.msra.mxu0 %v2284
        %3425 = vmatprep.subr.mxu0 %v2291
        %3426 = vmatpush1.msra.mxu0 %v2290
        %3427 = vmatprep.subr.mxu0 %v2297
        %3428 = vmatpush1.msra.mxu0 %v2296
        %3429 = vmatprep.subr.mxu0 %v2303
        %3430 = vmatpush1.msra.mxu0 %v2302
        %3431 = vmatprep.subr.mxu0 %v2309
        %3432 = vmatpush1.msra.mxu0 %v2308
        %3433 = vmatprep.subr.mxu0 %v2315
        %3434 = vmatpush1.msra.mxu0 %v2314
        %3435 = vmatprep.subr.mxu0 %v2321
        %3436 = vmatpush1.msra.mxu0 %v2320
        %3437 = vmatprep.subr.mxu0 %v2327
        %3438 = vmatpush1.msra.mxu0 %v2326
        %3439 = vmatprep.subr.mxu0 %v2333
        %3440 = vmatpush1.msra.mxu0 %v2332
        %3441 = vmatprep.subr.mxu0 %v2339
        %3442 = vmatpush1.msra.mxu0 %v2338
        %3443 = vmatprep.subr.mxu0 %v2345
        %3444 = vmatpush1.msra.mxu0 %v2344
        %3445 = vmatprep.subr.mxu0 %v2351
        %3446 = vmatpush1.msra.mxu0 %v2350
        %3447 = vmatprep.subr.mxu0 %v2357
        %3448 = vmatpush1.msra.mxu0 %v2356
        %3449 = vmatprep.mubr.f32.mxu0 %v437
        %3450 = vmatmul.mubr.f32.gmra.mrb[0].mxu0 %v436
        %v3451 = vpop.f32.mrb[0].mxu0
        %v3452 = vadd.f32 %v3381, %v3451
        %v3453 = vpop.f32.mrb[0].mxu0
        %v3454 = vadd.f32 %v3383, %v3453
        %3455 = vdwg.mxu0
        %3456 = vmatprep.subr.mxu0 %v2363
        %3457 = vmatpush1.msra.mxu0 %v2362
        %3458 = vmatprep.subr.mxu0 %v2369
        %3459 = vmatpush1.msra.mxu0 %v2368
        %3460 = vmatprep.subr.mxu0 %v2375
        %3461 = vmatpush1.msra.mxu0 %v2374
        %3462 = vmatprep.subr.mxu0 %v2381
        %3463 = vmatpush1.msra.mxu0 %v2380
        %3464 = vmatprep.subr.mxu0 %v2387
        %3465 = vmatpush1.msra.mxu0 %v2386
        %3466 = vmatprep.subr.mxu0 %v2393
        %3467 = vmatpush1.msra.mxu0 %v2392
        %3468 = vmatprep.subr.mxu0 %v2399
        %3469 = vmatpush1.msra.mxu0 %v2398
        %3470 = vmatprep.subr.mxu0 %v2405
        %3471 = vmatpush1.msra.mxu0 %v2404
        %3472 = vmatprep.subr.mxu0 %v2411
        %3473 = vmatpush1.msra.mxu0 %v2410
        %3474 = vmatprep.subr.mxu0 %v2417
        %3475 = vmatpush1.msra.mxu0 %v2416
        %3476 = vmatprep.subr.mxu0 %v2423
        %3477 = vmatpush1.msra.mxu0 %v2422
        %3478 = vmatprep.subr.mxu0 %v2429
        %3479 = vmatpush1.msra.mxu0 %v2428
        %3480 = vmatprep.subr.mxu0 %v2435
        %3481 = vmatpush1.msra.mxu0 %v2434
        %3482 = vmatprep.subr.mxu0 %v2441
        %3483 = vmatpush1.msra.mxu0 %v2440
        %3484 = vmatprep.subr.mxu0 %v2447
        %3485 = vmatpush1.msra.mxu0 %v2446
        %3486 = vmatprep.subr.mxu0 %v2453
        %3487 = vmatpush1.msra.mxu0 %v2452
        %3488 = vmatprep.subr.mxu0 %v2459
        %3489 = vmatpush1.msra.mxu0 %v2458
        %3490 = vmatprep.subr.mxu0 %v2465
        %3491 = vmatpush1.msra.mxu0 %v2464
        %3492 = vmatprep.subr.mxu0 %v2471
        %3493 = vmatpush1.msra.mxu0 %v2470
        %3494 = vmatprep.subr.mxu0 %v2477
        %3495 = vmatpush1.msra.mxu0 %v2476
        %3496 = vmatprep.subr.mxu0 %v2483
        %3497 = vmatpush1.msra.mxu0 %v2482
        %3498 = vmatprep.subr.mxu0 %v2489
        %3499 = vmatpush1.msra.mxu0 %v2488
        %3500 = vmatprep.subr.mxu0 %v2495
        %3501 = vmatpush1.msra.mxu0 %v2494
        %3502 = vmatprep.subr.mxu0 %v2501
        %3503 = vmatpush1.msra.mxu0 %v2500
        %3504 = vmatprep.subr.mxu0 %v2507
        %3505 = vmatpush1.msra.mxu0 %v2506
        %3506 = vmatprep.subr.mxu0 %v2513
        %3507 = vmatpush1.msra.mxu0 %v2512
        %3508 = vmatprep.subr.mxu0 %v2519
        %3509 = vmatpush1.msra.mxu0 %v2518
        %3510 = vmatprep.subr.mxu0 %v2525
        %3511 = vmatpush1.msra.mxu0 %v2524
        %3512 = vmatprep.subr.mxu0 %v2531
        %3513 = vmatpush1.msra.mxu0 %v2530
        %3514 = vmatprep.subr.mxu0 %v2537
        %3515 = vmatpush1.msra.mxu0 %v2536
        %3516 = vmatprep.subr.mxu0 %v2543
        %3517 = vmatpush1.msra.mxu0 %v2542
        %3518 = vmatprep.subr.mxu0 %v2549
        %3519 = vmatpush1.msra.mxu0 %v2548
        %3520 = vmatprep.mubr.f32.mxu0 %v439
        %3521 = vmatmul.mubr.f32.gmra.mrb[0].mxu0 %v438
        %v3522 = vpop.f32.mrb[0].mxu0
        %v3523 = vadd.f32 %v3452, %v3522
        %v3524 = vpop.f32.mrb[0].mxu0
        %v3525 = vadd.f32 %v3454, %v3524
        %3526 = vdwg.mxu0
        %3527 = vmatprep.subr.mxu0 %v2555
        %3528 = vmatpush1.msra.mxu0 %v2554
        %3529 = vmatprep.subr.mxu0 %v2561
        %3530 = vmatpush1.msra.mxu0 %v2560
        %3531 = vmatprep.subr.mxu0 %v2567
        %3532 = vmatpush1.msra.mxu0 %v2566
        %3533 = vmatprep.subr.mxu0 %v2573
        %3534 = vmatpush1.msra.mxu0 %v2572
        %3535 = vmatprep.subr.mxu0 %v2579
        %3536 = vmatpush1.msra.mxu0 %v2578
        %3537 = vmatprep.subr.mxu0 %v2585
        %3538 = vmatpush1.msra.mxu0 %v2584
        %3539 = vmatprep.subr.mxu0 %v2591
        %3540 = vmatpush1.msra.mxu0 %v2590
        %3541 = vmatprep.subr.mxu0 %v2597
        %3542 = vmatpush1.msra.mxu0 %v2596
        %3543 = vmatprep.subr.mxu0 %v2603
        %3544 = vmatpush1.msra.mxu0 %v2602
        %3545 = vmatprep.subr.mxu0 %v2609
        %3546 = vmatpush1.msra.mxu0 %v2608
        %3547 = vmatprep.subr.mxu0 %v2615
        %3548 = vmatpush1.msra.mxu0 %v2614
        %3549 = vmatprep.subr.mxu0 %v2621
        %3550 = vmatpush1.msra.mxu0 %v2620
        %3551 = vmatprep.subr.mxu0 %v2627
        %3552 = vmatpush1.msra.mxu0 %v2626
        %3553 = vmatprep.subr.mxu0 %v2633
        %3554 = vmatpush1.msra.mxu0 %v2632
        %3555 = vmatprep.subr.mxu0 %v2639
        %3556 = vmatpush1.msra.mxu0 %v2638
        %3557 = vmatprep.subr.mxu0 %v2645
        %3558 = vmatpush1.msra.mxu0 %v2644
        %3559 = vmatprep.subr.mxu0 %v2651
        %3560 = vmatpush1.msra.mxu0 %v2650
        %3561 = vmatprep.subr.mxu0 %v2657
        %3562 = vmatpush1.msra.mxu0 %v2656
        %3563 = vmatprep.subr.mxu0 %v2663
        %3564 = vmatpush1.msra.mxu0 %v2662
        %3565 = vmatprep.subr.mxu0 %v2669
        %3566 = vmatpush1.msra.mxu0 %v2668
        %3567 = vmatprep.subr.mxu0 %v2675
        %3568 = vmatpush1.msra.mxu0 %v2674
        %3569 = vmatprep.subr.mxu0 %v2681
        %3570 = vmatpush1.msra.mxu0 %v2680
        %3571 = vmatprep.subr.mxu0 %v2687
        %3572 = vmatpush1.msra.mxu0 %v2686
        %3573 = vmatprep.subr.mxu0 %v2693
        %3574 = vmatpush1.msra.mxu0 %v2692
        %3575 = vmatprep.subr.mxu0 %v2699
        %3576 = vmatpush1.msra.mxu0 %v2698
        %3577 = vmatprep.subr.mxu0 %v2705
        %3578 = vmatpush1.msra.mxu0 %v2704
        %3579 = vmatprep.subr.mxu0 %v2711
        %3580 = vmatpush1.msra.mxu0 %v2710
        %3581 = vmatprep.subr.mxu0 %v2717
        %3582 = vmatpush1.msra.mxu0 %v2716
        %3583 = vmatprep.subr.mxu0 %v2723
        %3584 = vmatpush1.msra.mxu0 %v2722
        %3585 = vmatprep.subr.mxu0 %v2729
        %3586 = vmatpush1.msra.mxu0 %v2728
        %3587 = vmatprep.subr.mxu0 %v2735
        %3588 = vmatpush1.msra.mxu0 %v2734
        %3589 = vmatprep.subr.mxu0 %v2741
        %3590 = vmatpush1.msra.mxu0 %v2740
        %3591 = vmatprep.mubr.f32.mxu0 %v441
        %3592 = vmatmul.mubr.f32.gmra.mrb[0].mxu0 %v440
        %v3593 = vpop.f32.mrb[0].mxu0
        %v3594 = vadd.f32 %v3523, %v3593
        %v3595 = vpop.f32.mrb[0].mxu0
        %v3596 = vadd.f32 %v3525, %v3595
        %3597 = vdwg.mxu0
        %3598 = vmatprep.subr.mxu0 %v445
        %3599 = vmatpush1.msra.mxu0 %v444
        %3600 = vmatprep.subr.mxu0 %v451
        %3601 = vmatpush1.msra.mxu0 %v450
        %3602 = vmatprep.subr.mxu0 %v457
        %3603 = vmatpush1.msra.mxu0 %v456
        %3604 = vmatprep.subr.mxu0 %v463
        %3605 = vmatpush1.msra.mxu0 %v462
        %3606 = vmatprep.subr.mxu0 %v469
        %3607 = vmatpush1.msra.mxu0 %v468
        %3608 = vmatprep.subr.mxu0 %v475
        %3609 = vmatpush1.msra.mxu0 %v474
        %3610 = vmatprep.subr.mxu0 %v481
        %3611 = vmatpush1.msra.mxu0 %v480
        %3612 = vmatprep.subr.mxu0 %v487
        %3613 = vmatpush1.msra.mxu0 %v486
        %3614 = vmatprep.subr.mxu0 %v493
        %3615 = vmatpush1.msra.mxu0 %v492
        %3616 = vmatprep.subr.mxu0 %v499
        %3617 = vmatpush1.msra.mxu0 %v498
        %3618 = vmatprep.subr.mxu0 %v505
        %3619 = vmatpush1.msra.mxu0 %v504
        %3620 = vmatprep.subr.mxu0 %v511
        %3621 = vmatpush1.msra.mxu0 %v510
        %3622 = vmatprep.subr.mxu0 %v517
        %3623 = vmatpush1.msra.mxu0 %v516
        %3624 = vmatprep.subr.mxu0 %v523
        %3625 = vmatpush1.msra.mxu0 %v522
        %3626 = vmatprep.subr.mxu0 %v529
        %3627 = vmatpush1.msra.mxu0 %v528
        %3628 = vmatprep.subr.mxu0 %v535
        %3629 = vmatpush1.msra.mxu0 %v534
        %3630 = vmatprep.subr.mxu0 %v541
        %3631 = vmatpush1.msra.mxu0 %v540
        %3632 = vmatprep.subr.mxu0 %v547
        %3633 = vmatpush1.msra.mxu0 %v546
        %3634 = vmatprep.subr.mxu0 %v553
        %3635 = vmatpush1.msra.mxu0 %v552
        %3636 = vmatprep.subr.mxu0 %v559
        %3637 = vmatpush1.msra.mxu0 %v558
        %3638 = vmatprep.subr.mxu0 %v565
        %3639 = vmatpush1.msra.mxu0 %v564
        %3640 = vmatprep.subr.mxu0 %v571
        %3641 = vmatpush1.msra.mxu0 %v570
        %3642 = vmatprep.subr.mxu0 %v577
        %3643 = vmatpush1.msra.mxu0 %v576
        %3644 = vmatprep.subr.mxu0 %v583
        %3645 = vmatpush1.msra.mxu0 %v582
        %3646 = vmatprep.subr.mxu0 %v589
        %3647 = vmatpush1.msra.mxu0 %v588
        %3648 = vmatprep.subr.mxu0 %v595
        %3649 = vmatpush1.msra.mxu0 %v594
        %3650 = vmatprep.subr.mxu0 %v601
        %3651 = vmatpush1.msra.mxu0 %v600
        %3652 = vmatprep.subr.mxu0 %v607
        %3653 = vmatpush1.msra.mxu0 %v606
        %3654 = vmatprep.subr.mxu0 %v613
        %3655 = vmatpush1.msra.mxu0 %v612
        %3656 = vmatprep.subr.mxu0 %v619
        %3657 = vmatpush1.msra.mxu0 %v618
        %3658 = vmatprep.subr.mxu0 %v625
        %3659 = vmatpush1.msra.mxu0 %v624
        %3660 = vmatprep.subr.mxu0 %v631
        %3661 = vmatpush1.msra.mxu0 %v630
        %3662 = vmatprep.mubr.f32.mxu0 %v419
        %3663 = vmatmul.mubr.f32.gmra.mrb[0].mxu0 %v418
        %v3664 = vpop.f32.mrb[0].mxu0
        %v3665 = vadd.f32 0.0, %v3664
        %v3666 = vpop.f32.mrb[0].mxu0
        %v3667 = vadd.f32 0.0, %v3666
        %3668 = vdwg.mxu0
        %3669 = vmatprep.subr.mxu0 %v637
        %3670 = vmatpush1.msra.mxu0 %v636
        %3671 = vmatprep.subr.mxu0 %v643
        %3672 = vmatpush1.msra.mxu0 %v642
        %3673 = vmatprep.subr.mxu0 %v649
        %3674 = vmatpush1.msra.mxu0 %v648
        %3675 = vmatprep.subr.mxu0 %v655
        %3676 = vmatpush1.msra.mxu0 %v654
        %3677 = vmatprep.subr.mxu0 %v661
        %3678 = vmatpush1.msra.mxu0 %v660
        %3679 = vmatprep.subr.mxu0 %v667
        %3680 = vmatpush1.msra.mxu0 %v666
        %3681 = vmatprep.subr.mxu0 %v673
        %3682 = vmatpush1.msra.mxu0 %v672
        %3683 = vmatprep.subr.mxu0 %v679
        %3684 = vmatpush1.msra.mxu0 %v678
        %3685 = vmatprep.subr.mxu0 %v685
        %3686 = vmatpush1.msra.mxu0 %v684
        %3687 = vmatprep.subr.mxu0 %v691
        %3688 = vmatpush1.msra.mxu0 %v690
        %3689 = vmatprep.subr.mxu0 %v697
        %3690 = vmatpush1.msra.mxu0 %v696
        %3691 = vmatprep.subr.mxu0 %v703
        %3692 = vmatpush1.msra.mxu0 %v702
        %3693 = vmatprep.subr.mxu0 %v709
        %3694 = vmatpush1.msra.mxu0 %v708
        %3695 = vmatprep.subr.mxu0 %v715
        %3696 = vmatpush1.msra.mxu0 %v714
        %3697 = vmatprep.subr.mxu0 %v721
        %3698 = vmatpush1.msra.mxu0 %v720
        %3699 = vmatprep.subr.mxu0 %v727
        %3700 = vmatpush1.msra.mxu0 %v726
        %3701 = vmatprep.subr.mxu0 %v733
        %3702 = vmatpush1.msra.mxu0 %v732
        %3703 = vmatprep.subr.mxu0 %v739
        %3704 = vmatpush1.msra.mxu0 %v738
        %3705 = vmatprep.subr.mxu0 %v745
        %3706 = vmatpush1.msra.mxu0 %v744
        %3707 = vmatprep.subr.mxu0 %v751
        %3708 = vmatpush1.msra.mxu0 %v750
        %3709 = vmatprep.subr.mxu0 %v757
        %3710 = vmatpush1.msra.mxu0 %v756
        %3711 = vmatprep.subr.mxu0 %v763
        %3712 = vmatpush1.msra.mxu0 %v762
        %3713 = vmatprep.subr.mxu0 %v769
        %3714 = vmatpush1.msra.mxu0 %v768
        %3715 = vmatprep.subr.mxu0 %v775
        %3716 = vmatpush1.msra.mxu0 %v774
        %3717 = vmatprep.subr.mxu0 %v781
        %3718 = vmatpush1.msra.mxu0 %v780
        %3719 = vmatprep.subr.mxu0 %v787
        %3720 = vmatpush1.msra.mxu0 %v786
        %3721 = vmatprep.subr.mxu0 %v793
        %3722 = vmatpush1.msra.mxu0 %v792
        %3723 = vmatprep.subr.mxu0 %v799
        %3724 = vmatpush1.msra.mxu0 %v798
        %3725 = vmatprep.subr.mxu0 %v805
        %3726 = vmatpush1.msra.mxu0 %v804
        %3727 = vmatprep.subr.mxu0 %v811
        %3728 = vmatpush1.msra.mxu0 %v810
        %3729 = vmatprep.subr.mxu0 %v817
        %3730 = vmatpush1.msra.mxu0 %v816
        %3731 = vmatprep.subr.mxu0 %v823
        %3732 = vmatpush1.msra.mxu0 %v822
        %3733 = vmatprep.mubr.f32.mxu0 %v421
        %3734 = vmatmul.mubr.f32.gmra.mrb[0].mxu0 %v420
        %v3735 = vpop.f32.mrb[0].mxu0
        %v3736 = vadd.f32 %v3665, %v3735
        %v3737 = vpop.f32.mrb[0].mxu0
        %v3738 = vadd.f32 %v3667, %v3737
        %3739 = vdwg.mxu0
        %3740 = vmatprep.subr.mxu0 %v829
        %3741 = vmatpush1.msra.mxu0 %v828
        %3742 = vmatprep.subr.mxu0 %v835
        %3743 = vmatpush1.msra.mxu0 %v834
        %3744 = vmatprep.subr.mxu0 %v841
        %3745 = vmatpush1.msra.mxu0 %v840
        %3746 = vmatprep.subr.mxu0 %v847
        %3747 = vmatpush1.msra.mxu0 %v846
        %3748 = vmatprep.subr.mxu0 %v853
        %3749 = vmatpush1.msra.mxu0 %v852
        %3750 = vmatprep.subr.mxu0 %v859
        %3751 = vmatpush1.msra.mxu0 %v858
        %3752 = vmatprep.subr.mxu0 %v865
        %3753 = vmatpush1.msra.mxu0 %v864
        %3754 = vmatprep.subr.mxu0 %v871
        %3755 = vmatpush1.msra.mxu0 %v870
        %3756 = vmatprep.subr.mxu0 %v877
        %3757 = vmatpush1.msra.mxu0 %v876
        %3758 = vmatprep.subr.mxu0 %v883
        %3759 = vmatpush1.msra.mxu0 %v882
        %3760 = vmatprep.subr.mxu0 %v889
        %3761 = vmatpush1.msra.mxu0 %v888
        %3762 = vmatprep.subr.mxu0 %v895
        %3763 = vmatpush1.msra.mxu0 %v894
        %3764 = vmatprep.subr.mxu0 %v901
        %3765 = vmatpush1.msra.mxu0 %v900
        %3766 = vmatprep.subr.mxu0 %v907
        %3767 = vmatpush1.msra.mxu0 %v906
        %3768 = vmatprep.subr.mxu0 %v913
        %3769 = vmatpush1.msra.mxu0 %v912
        %3770 = vmatprep.subr.mxu0 %v919
        %3771 = vmatpush1.msra.mxu0 %v918
        %3772 = vmatprep.subr.mxu0 %v925
        %3773 = vmatpush1.msra.mxu0 %v924
        %3774 = vmatprep.subr.mxu0 %v931
        %3775 = vmatpush1.msra.mxu0 %v930
        %3776 = vmatprep.subr.mxu0 %v937
        %3777 = vmatpush1.msra.mxu0 %v936
        %3778 = vmatprep.subr.mxu0 %v943
        %3779 = vmatpush1.msra.mxu0 %v942
        %3780 = vmatprep.subr.mxu0 %v949
        %3781 = vmatpush1.msra.mxu0 %v948
        %3782 = vmatprep.subr.mxu0 %v955
        %3783 = vmatpush1.msra.mxu0 %v954
        %3784 = vmatprep.subr.mxu0 %v961
        %3785 = vmatpush1.msra.mxu0 %v960
        %3786 = vmatprep.subr.mxu0 %v967
        %3787 = vmatpush1.msra.mxu0 %v966
        %3788 = vmatprep.subr.mxu0 %v973
        %3789 = vmatpush1.msra.mxu0 %v972
        %3790 = vmatprep.subr.mxu0 %v979
        %3791 = vmatpush1.msra.mxu0 %v978
        %3792 = vmatprep.subr.mxu0 %v985
        %3793 = vmatpush1.msra.mxu0 %v984
        %3794 = vmatprep.subr.mxu0 %v991
        %3795 = vmatpush1.msra.mxu0 %v990
        %3796 = vmatprep.subr.mxu0 %v997
        %3797 = vmatpush1.msra.mxu0 %v996
        %3798 = vmatprep.subr.mxu0 %v1003
        %3799 = vmatpush1.msra.mxu0 %v1002
        %3800 = vmatprep.subr.mxu0 %v1009
        %3801 = vmatpush1.msra.mxu0 %v1008
        %3802 = vmatprep.subr.mxu0 %v1015
        %3803 = vmatpush1.msra.mxu0 %v1014
        %3804 = vmatprep.mubr.f32.mxu0 %v423
        %3805 = vmatmul.mubr.f32.gmra.mrb[0].mxu0 %v422
        %v3806 = vpop.f32.mrb[0].mxu0
        %v3807 = vadd.f32 %v3736, %v3806
        %v3808 = vpop.f32.mrb[0].mxu0
        %v3809 = vadd.f32 %v3738, %v3808
        %3810 = vdwg.mxu0
        %3811 = vmatprep.subr.mxu0 %v1021
        %3812 = vmatpush1.msra.mxu0 %v1020
        %3813 = vmatprep.subr.mxu0 %v1027
        %3814 = vmatpush1.msra.mxu0 %v1026
        %3815 = vmatprep.subr.mxu0 %v1033
        %3816 = vmatpush1.msra.mxu0 %v1032
        %3817 = vmatprep.subr.mxu0 %v1039
        %3818 = vmatpush1.msra.mxu0 %v1038
        %3819 = vmatprep.subr.mxu0 %v1045
        %3820 = vmatpush1.msra.mxu0 %v1044
        %3821 = vmatprep.subr.mxu0 %v1051
        %3822 = vmatpush1.msra.mxu0 %v1050
        %3823 = vmatprep.subr.mxu0 %v1057
        %3824 = vmatpush1.msra.mxu0 %v1056
        %3825 = vmatprep.subr.mxu0 %v1063
        %3826 = vmatpush1.msra.mxu0 %v1062
        %3827 = vmatprep.subr.mxu0 %v1069
        %3828 = vmatpush1.msra.mxu0 %v1068
        %3829 = vmatprep.subr.mxu0 %v1075
        %3830 = vmatpush1.msra.mxu0 %v1074
        %3831 = vmatprep.subr.mxu0 %v1081
        %3832 = vmatpush1.msra.mxu0 %v1080
        %3833 = vmatprep.subr.mxu0 %v1087
        %3834 = vmatpush1.msra.mxu0 %v1086
        %3835 = vmatprep.subr.mxu0 %v1093
        %3836 = vmatpush1.msra.mxu0 %v1092
        %3837 = vmatprep.subr.mxu0 %v1099
        %3838 = vmatpush1.msra.mxu0 %v1098
        %3839 = vmatprep.subr.mxu0 %v1105
        %3840 = vmatpush1.msra.mxu0 %v1104
        %3841 = vmatprep.subr.mxu0 %v1111
        %3842 = vmatpush1.msra.mxu0 %v1110
        %3843 = vmatprep.subr.mxu0 %v1117
        %3844 = vmatpush1.msra.mxu0 %v1116
        %3845 = vmatprep.subr.mxu0 %v1123
        %3846 = vmatpush1.msra.mxu0 %v1122
        %3847 = vmatprep.subr.mxu0 %v1129
        %3848 = vmatpush1.msra.mxu0 %v1128
        %3849 = vmatprep.subr.mxu0 %v1135
        %3850 = vmatpush1.msra.mxu0 %v1134
        %3851 = vmatprep.subr.mxu0 %v1141
        %3852 = vmatpush1.msra.mxu0 %v1140
        %3853 = vmatprep.subr.mxu0 %v1147
        %3854 = vmatpush1.msra.mxu0 %v1146
        %3855 = vmatprep.subr.mxu0 %v1153
        %3856 = vmatpush1.msra.mxu0 %v1152
        %3857 = vmatprep.subr.mxu0 %v1159
        %3858 = vmatpush1.msra.mxu0 %v1158
        %3859 = vmatprep.subr.mxu0 %v1165
        %3860 = vmatpush1.msra.mxu0 %v1164
        %3861 = vmatprep.subr.mxu0 %v1171
        %3862 = vmatpush1.msra.mxu0 %v1170
        %3863 = vmatprep.subr.mxu0 %v1177
        %3864 = vmatpush1.msra.mxu0 %v1176
        %3865 = vmatprep.subr.mxu0 %v1183
        %3866 = vmatpush1.msra.mxu0 %v1182
        %3867 = vmatprep.subr.mxu0 %v1189
        %3868 = vmatpush1.msra.mxu0 %v1188
        %3869 = vmatprep.subr.mxu0 %v1195
        %3870 = vmatpush1.msra.mxu0 %v1194
        %3871 = vmatprep.subr.mxu0 %v1201
        %3872 = vmatpush1.msra.mxu0 %v1200
        %3873 = vmatprep.subr.mxu0 %v1207
        %3874 = vmatpush1.msra.mxu0 %v1206
        %3875 = vmatprep.mubr.f32.mxu0 %v425
        %3876 = vmatmul.mubr.f32.gmra.mrb[0].mxu0 %v424
        %v3877 = vpop.f32.mrb[0].mxu0
        %v3878 = vadd.f32 %v3807, %v3877
        %v3879 = vpop.f32.mrb[0].mxu0
        %v3880 = vadd.f32 %v3809, %v3879
        %3881 = vdwg.mxu0
        %3882 = vmatprep.subr.mxu0 %v1213
        %3883 = vmatpush1.msra.mxu0 %v1212
        %3884 = vmatprep.subr.mxu0 %v1219
        %3885 = vmatpush1.msra.mxu0 %v1218
        %3886 = vmatprep.subr.mxu0 %v1225
        %3887 = vmatpush1.msra.mxu0 %v1224
        %3888 = vmatprep.subr.mxu0 %v1231
        %3889 = vmatpush1.msra.mxu0 %v1230
        %3890 = vmatprep.subr.mxu0 %v1237
        %3891 = vmatpush1.msra.mxu0 %v1236
        %3892 = vmatprep.subr.mxu0 %v1243
        %3893 = vmatpush1.msra.mxu0 %v1242
        %3894 = vmatprep.subr.mxu0 %v1249
        %3895 = vmatpush1.msra.mxu0 %v1248
        %3896 = vmatprep.subr.mxu0 %v1255
        %3897 = vmatpush1.msra.mxu0 %v1254
        %3898 = vmatprep.subr.mxu0 %v1261
        %3899 = vmatpush1.msra.mxu0 %v1260
        %3900 = vmatprep.subr.mxu0 %v1267
        %3901 = vmatpush1.msra.mxu0 %v1266
        %3902 = vmatprep.subr.mxu0 %v1273
        %3903 = vmatpush1.msra.mxu0 %v1272
        %3904 = vmatprep.subr.mxu0 %v1279
        %3905 = vmatpush1.msra.mxu0 %v1278
        %3906 = vmatprep.subr.mxu0 %v1285
        %3907 = vmatpush1.msra.mxu0 %v1284
        %3908 = vmatprep.subr.mxu0 %v1291
        %3909 = vmatpush1.msra.mxu0 %v1290
        %3910 = vmatprep.subr.mxu0 %v1297
        %3911 = vmatpush1.msra.mxu0 %v1296
        %3912 = vmatprep.subr.mxu0 %v1303
        %3913 = vmatpush1.msra.mxu0 %v1302
        %3914 = vmatprep.subr.mxu0 %v1309
        %3915 = vmatpush1.msra.mxu0 %v1308
        %3916 = vmatprep.subr.mxu0 %v1315
        %3917 = vmatpush1.msra.mxu0 %v1314
        %3918 = vmatprep.subr.mxu0 %v1321
        %3919 = vmatpush1.msra.mxu0 %v1320
        %3920 = vmatprep.subr.mxu0 %v1327
        %3921 = vmatpush1.msra.mxu0 %v1326
        %3922 = vmatprep.subr.mxu0 %v1333
        %3923 = vmatpush1.msra.mxu0 %v1332
        %3924 = vmatprep.subr.mxu0 %v1339
        %3925 = vmatpush1.msra.mxu0 %v1338
        %3926 = vmatprep.subr.mxu0 %v1345
        %3927 = vmatpush1.msra.mxu0 %v1344
        %3928 = vmatprep.subr.mxu0 %v1351
        %3929 = vmatpush1.msra.mxu0 %v1350
        %3930 = vmatprep.subr.mxu0 %v1357
        %3931 = vmatpush1.msra.mxu0 %v1356
        %3932 = vmatprep.subr.mxu0 %v1363
        %3933 = vmatpush1.msra.mxu0 %v1362
        %3934 = vmatprep.subr.mxu0 %v1369
        %3935 = vmatpush1.msra.mxu0 %v1368
        %3936 = vmatprep.subr.mxu0 %v1375
        %3937 = vmatpush1.msra.mxu0 %v1374
        %3938 = vmatprep.subr.mxu0 %v1381
        %3939 = vmatpush1.msra.mxu0 %v1380
        %3940 = vmatprep.subr.mxu0 %v1387
        %3941 = vmatpush1.msra.mxu0 %v1386
        %3942 = vmatprep.subr.mxu0 %v1393
        %3943 = vmatpush1.msra.mxu0 %v1392
        %3944 = vmatprep.subr.mxu0 %v1399
        %3945 = vmatpush1.msra.mxu0 %v1398
        %3946 = vmatprep.mubr.f32.mxu0 %v427
        %3947 = vmatmul.mubr.f32.gmra.mrb[0].mxu0 %v426
        %v3948 = vpop.f32.mrb[0].mxu0
        %v3949 = vadd.f32 %v3878, %v3948
        %v3950 = vpop.f32.mrb[0].mxu0
        %v3951 = vadd.f32 %v3880, %v3950
        %3952 = vdwg.mxu0
        %3953 = vmatprep.subr.mxu0 %v1405
        %3954 = vmatpush1.msra.mxu0 %v1404
        %3955 = vmatprep.subr.mxu0 %v1411
        %3956 = vmatpush1.msra.mxu0 %v1410
        %3957 = vmatprep.subr.mxu0 %v1417
        %3958 = vmatpush1.msra.mxu0 %v1416
        %3959 = vmatprep.subr.mxu0 %v1423
        %3960 = vmatpush1.msra.mxu0 %v1422
        %3961 = vmatprep.subr.mxu0 %v1429
        %3962 = vmatpush1.msra.mxu0 %v1428
        %3963 = vmatprep.subr.mxu0 %v1435
        %3964 = vmatpush1.msra.mxu0 %v1434
        %3965 = vmatprep.subr.mxu0 %v1441
        %3966 = vmatpush1.msra.mxu0 %v1440
        %3967 = vmatprep.subr.mxu0 %v1447
        %3968 = vmatpush1.msra.mxu0 %v1446
        %3969 = vmatprep.subr.mxu0 %v1453
        %3970 = vmatpush1.msra.mxu0 %v1452
        %3971 = vmatprep.subr.mxu0 %v1459
        %3972 = vmatpush1.msra.mxu0 %v1458
        %3973 = vmatprep.subr.mxu0 %v1465
        %3974 = vmatpush1.msra.mxu0 %v1464
        %3975 = vmatprep.subr.mxu0 %v1471
        %3976 = vmatpush1.msra.mxu0 %v1470
        %3977 = vmatprep.subr.mxu0 %v1477
        %3978 = vmatpush1.msra.mxu0 %v1476
        %3979 = vmatprep.subr.mxu0 %v1483
        %3980 = vmatpush1.msra.mxu0 %v1482
        %3981 = vmatprep.subr.mxu0 %v1489
        %3982 = vmatpush1.msra.mxu0 %v1488
        %3983 = vmatprep.subr.mxu0 %v1495
        %3984 = vmatpush1.msra.mxu0 %v1494
        %3985 = vmatprep.subr.mxu0 %v1501
        %3986 = vmatpush1.msra.mxu0 %v1500
        %3987 = vmatprep.subr.mxu0 %v1507
        %3988 = vmatpush1.msra.mxu0 %v1506
        %3989 = vmatprep.subr.mxu0 %v1513
        %3990 = vmatpush1.msra.mxu0 %v1512
        %3991 = vmatprep.subr.mxu0 %v1519
        %3992 = vmatpush1.msra.mxu0 %v1518
        %3993 = vmatprep.subr.mxu0 %v1525
        %3994 = vmatpush1.msra.mxu0 %v1524
        %3995 = vmatprep.subr.mxu0 %v1531
        %3996 = vmatpush1.msra.mxu0 %v1530
        %3997 = vmatprep.subr.mxu0 %v1537
        %3998 = vmatpush1.msra.mxu0 %v1536
        %3999 = vmatprep.subr.mxu0 %v1543
        %4000 = vmatpush1.msra.mxu0 %v1542
        %4001 = vmatprep.subr.mxu0 %v1549
        %4002 = vmatpush1.msra.mxu0 %v1548
        %4003 = vmatprep.subr.mxu0 %v1555
        %4004 = vmatpush1.msra.mxu0 %v1554
        %4005 = vmatprep.subr.mxu0 %v1561
        %4006 = vmatpush1.msra.mxu0 %v1560
        %4007 = vmatprep.subr.mxu0 %v1567
        %4008 = vmatpush1.msra.mxu0 %v1566
        %4009 = vmatprep.subr.mxu0 %v1573
        %4010 = vmatpush1.msra.mxu0 %v1572
        %4011 = vmatprep.subr.mxu0 %v1579
        %4012 = vmatpush1.msra.mxu0 %v1578
        %4013 = vmatprep.subr.mxu0 %v1585
        %4014 = vmatpush1.msra.mxu0 %v1584
        %4015 = vmatprep.subr.mxu0 %v1591
        %4016 = vmatpush1.msra.mxu0 %v1590
        %4017 = vmatprep.mubr.f32.mxu0 %v429
        %4018 = vmatmul.mubr.f32.gmra.mrb[0].mxu0 %v428
        %v4019 = vpop.f32.mrb[0].mxu0
        %v4020 = vadd.f32 %v3949, %v4019
        %v4021 = vpop.f32.mrb[0].mxu0
        %v4022 = vadd.f32 %v3951, %v4021
        %4023 = vdwg.mxu0
        %4024 = vmatprep.subr.mxu0 %v1597
        %4025 = vmatpush1.msra.mxu0 %v1596
        %4026 = vmatprep.subr.mxu0 %v1603
        %4027 = vmatpush1.msra.mxu0 %v1602
        %4028 = vmatprep.subr.mxu0 %v1609
        %4029 = vmatpush1.msra.mxu0 %v1608
        %4030 = vmatprep.subr.mxu0 %v1615
        %4031 = vmatpush1.msra.mxu0 %v1614
        %4032 = vmatprep.subr.mxu0 %v1621
        %4033 = vmatpush1.msra.mxu0 %v1620
        %4034 = vmatprep.subr.mxu0 %v1627
        %4035 = vmatpush1.msra.mxu0 %v1626
        %4036 = vmatprep.subr.mxu0 %v1633
        %4037 = vmatpush1.msra.mxu0 %v1632
        %4038 = vmatprep.subr.mxu0 %v1639
        %4039 = vmatpush1.msra.mxu0 %v1638
        %4040 = vmatprep.subr.mxu0 %v1645
        %4041 = vmatpush1.msra.mxu0 %v1644
        %4042 = vmatprep.subr.mxu0 %v1651
        %4043 = vmatpush1.msra.mxu0 %v1650
        %4044 = vmatprep.subr.mxu0 %v1657
        %4045 = vmatpush1.msra.mxu0 %v1656
        %4046 = vmatprep.subr.mxu0 %v1663
        %4047 = vmatpush1.msra.mxu0 %v1662
        %4048 = vmatprep.subr.mxu0 %v1669
        %4049 = vmatpush1.msra.mxu0 %v1668
        %4050 = vmatprep.subr.mxu0 %v1675
        %4051 = vmatpush1.msra.mxu0 %v1674
        %4052 = vmatprep.subr.mxu0 %v1681
        %4053 = vmatpush1.msra.mxu0 %v1680
        %4054 = vmatprep.subr.mxu0 %v1687
        %4055 = vmatpush1.msra.mxu0 %v1686
        %4056 = vmatprep.subr.mxu0 %v1693
        %4057 = vmatpush1.msra.mxu0 %v1692
        %4058 = vmatprep.subr.mxu0 %v1699
        %4059 = vmatpush1.msra.mxu0 %v1698
        %4060 = vmatprep.subr.mxu0 %v1705
        %4061 = vmatpush1.msra.mxu0 %v1704
        %4062 = vmatprep.subr.mxu0 %v1711
        %4063 = vmatpush1.msra.mxu0 %v1710
        %4064 = vmatprep.subr.mxu0 %v1717
        %4065 = vmatpush1.msra.mxu0 %v1716
        %4066 = vmatprep.subr.mxu0 %v1723
        %4067 = vmatpush1.msra.mxu0 %v1722
        %4068 = vmatprep.subr.mxu0 %v1729
        %4069 = vmatpush1.msra.mxu0 %v1728
        %4070 = vmatprep.subr.mxu0 %v1735
        %4071 = vmatpush1.msra.mxu0 %v1734
        %4072 = vmatprep.subr.mxu0 %v1741
        %4073 = vmatpush1.msra.mxu0 %v1740
        %4074 = vmatprep.subr.mxu0 %v1747
        %4075 = vmatpush1.msra.mxu0 %v1746
        %4076 = vmatprep.subr.mxu0 %v1753
        %4077 = vmatpush1.msra.mxu0 %v1752
        %4078 = vmatprep.subr.mxu0 %v1759
        %4079 = vmatpush1.msra.mxu0 %v1758
        %4080 = vmatprep.subr.mxu0 %v1765
        %4081 = vmatpush1.msra.mxu0 %v1764
        %4082 = vmatprep.subr.mxu0 %v1771
        %4083 = vmatpush1.msra.mxu0 %v1770
        %4084 = vmatprep.subr.mxu0 %v1777
        %4085 = vmatpush1.msra.mxu0 %v1776
        %4086 = vmatprep.subr.mxu0 %v1783
        %4087 = vmatpush1.msra.mxu0 %v1782
        %4088 = vmatprep.mubr.f32.mxu0 %v431
        %4089 = vmatmul.mubr.f32.gmra.mrb[0].mxu0 %v430
        %v4090 = vpop.f32.mrb[0].mxu0
        %v4091 = vadd.f32 %v4020, %v4090
        %v4092 = vpop.f32.mrb[0].mxu0
        %v4093 = vadd.f32 %v4022, %v4092
        %4094 = vdwg.mxu0
        %4095 = vmatprep.subr.mxu0 %v1789
        %4096 = vmatpush1.msra.mxu0 %v1788
        %4097 = vmatprep.subr.mxu0 %v1795
        %4098 = vmatpush1.msra.mxu0 %v1794
        %4099 = vmatprep.subr.mxu0 %v1801
        %4100 = vmatpush1.msra.mxu0 %v1800
        %4101 = vmatprep.subr.mxu0 %v1807
        %4102 = vmatpush1.msra.mxu0 %v1806
        %4103 = vmatprep.subr.mxu0 %v1813
        %4104 = vmatpush1.msra.mxu0 %v1812
        %4105 = vmatprep.subr.mxu0 %v1819
        %4106 = vmatpush1.msra.mxu0 %v1818
        %4107 = vmatprep.subr.mxu0 %v1825
        %4108 = vmatpush1.msra.mxu0 %v1824
        %4109 = vmatprep.subr.mxu0 %v1831
        %4110 = vmatpush1.msra.mxu0 %v1830
        %4111 = vmatprep.subr.mxu0 %v1837
        %4112 = vmatpush1.msra.mxu0 %v1836
        %4113 = vmatprep.subr.mxu0 %v1843
        %4114 = vmatpush1.msra.mxu0 %v1842
        %4115 = vmatprep.subr.mxu0 %v1849
        %4116 = vmatpush1.msra.mxu0 %v1848
        %4117 = vmatprep.subr.mxu0 %v1855
        %4118 = vmatpush1.msra.mxu0 %v1854
        %4119 = vmatprep.subr.mxu0 %v1861
        %4120 = vmatpush1.msra.mxu0 %v1860
        %4121 = vmatprep.subr.mxu0 %v1867
        %4122 = vmatpush1.msra.mxu0 %v1866
        %4123 = vmatprep.subr.mxu0 %v1873
        %4124 = vmatpush1.msra.mxu0 %v1872
        %4125 = vmatprep.subr.mxu0 %v1879
        %4126 = vmatpush1.msra.mxu0 %v1878
        %4127 = vmatprep.subr.mxu0 %v1885
        %4128 = vmatpush1.msra.mxu0 %v1884
        %4129 = vmatprep.subr.mxu0 %v1891
        %4130 = vmatpush1.msra.mxu0 %v1890
        %4131 = vmatprep.subr.mxu0 %v1897
        %4132 = vmatpush1.msra.mxu0 %v1896
        %4133 = vmatprep.subr.mxu0 %v1903
        %4134 = vmatpush1.msra.mxu0 %v1902
        %4135 = vmatprep.subr.mxu0 %v1909
        %4136 = vmatpush1.msra.mxu0 %v1908
        %4137 = vmatprep.subr.mxu0 %v1915
        %4138 = vmatpush1.msra.mxu0 %v1914
        %4139 = vmatprep.subr.mxu0 %v1921
        %4140 = vmatpush1.msra.mxu0 %v1920
        %4141 = vmatprep.subr.mxu0 %v1927
        %4142 = vmatpush1.msra.mxu0 %v1926
        %4143 = vmatprep.subr.mxu0 %v1933
        %4144 = vmatpush1.msra.mxu0 %v1932
        %4145 = vmatprep.subr.mxu0 %v1939
        %4146 = vmatpush1.msra.mxu0 %v1938
        %4147 = vmatprep.subr.mxu0 %v1945
        %4148 = vmatpush1.msra.mxu0 %v1944
        %4149 = vmatprep.subr.mxu0 %v1951
        %4150 = vmatpush1.msra.mxu0 %v1950
        %4151 = vmatprep.subr.mxu0 %v1957
        %4152 = vmatpush1.msra.mxu0 %v1956
        %4153 = vmatprep.subr.mxu0 %v1963
        %4154 = vmatpush1.msra.mxu0 %v1962
        %4155 = vmatprep.subr.mxu0 %v1969
        %4156 = vmatpush1.msra.mxu0 %v1968
        %4157 = vmatprep.subr.mxu0 %v1975
        %4158 = vmatpush1.msra.mxu0 %v1974
        %4159 = vmatprep.mubr.f32.mxu0 %v433
        %4160 = vmatmul.mubr.f32.gmra.mrb[0].mxu0 %v432
        %v4161 = vpop.f32.mrb[0].mxu0
        %v4162 = vadd.f32 %v4091, %v4161
        %v4163 = vpop.f32.mrb[0].mxu0
        %v4164 = vadd.f32 %v4093, %v4163
        %4165 = vdwg.mxu0
        %4166 = vmatprep.subr.mxu0 %v1981
        %4167 = vmatpush1.msra.mxu0 %v1980
        %4168 = vmatprep.subr.mxu0 %v1987
        %4169 = vmatpush1.msra.mxu0 %v1986
        %4170 = vmatprep.subr.mxu0 %v1993
        %4171 = vmatpush1.msra.mxu0 %v1992
        %4172 = vmatprep.subr.mxu0 %v1999
        %4173 = vmatpush1.msra.mxu0 %v1998
        %4174 = vmatprep.subr.mxu0 %v2005
        %4175 = vmatpush1.msra.mxu0 %v2004
        %4176 = vmatprep.subr.mxu0 %v2011
        %4177 = vmatpush1.msra.mxu0 %v2010
        %4178 = vmatprep.subr.mxu0 %v2017
        %4179 = vmatpush1.msra.mxu0 %v2016
        %4180 = vmatprep.subr.mxu0 %v2023
        %4181 = vmatpush1.msra.mxu0 %v2022
        %4182 = vmatprep.subr.mxu0 %v2029
        %4183 = vmatpush1.msra.mxu0 %v2028
        %4184 = vmatprep.subr.mxu0 %v2035
        %4185 = vmatpush1.msra.mxu0 %v2034
        %4186 = vmatprep.subr.mxu0 %v2041
        %4187 = vmatpush1.msra.mxu0 %v2040
        %4188 = vmatprep.subr.mxu0 %v2047
        %4189 = vmatpush1.msra.mxu0 %v2046
        %4190 = vmatprep.subr.mxu0 %v2053
        %4191 = vmatpush1.msra.mxu0 %v2052
        %4192 = vmatprep.subr.mxu0 %v2059
        %4193 = vmatpush1.msra.mxu0 %v2058
        %4194 = vmatprep.subr.mxu0 %v2065
        %4195 = vmatpush1.msra.mxu0 %v2064
        %4196 = vmatprep.subr.mxu0 %v2071
        %4197 = vmatpush1.msra.mxu0 %v2070
        %4198 = vmatprep.subr.mxu0 %v2077
        %4199 = vmatpush1.msra.mxu0 %v2076
        %4200 = vmatprep.subr.mxu0 %v2083
        %4201 = vmatpush1.msra.mxu0 %v2082
        %4202 = vmatprep.subr.mxu0 %v2089
        %4203 = vmatpush1.msra.mxu0 %v2088
        %4204 = vmatprep.subr.mxu0 %v2095
        %4205 = vmatpush1.msra.mxu0 %v2094
        %4206 = vmatprep.subr.mxu0 %v2101
        %4207 = vmatpush1.msra.mxu0 %v2100
        %4208 = vmatprep.subr.mxu0 %v2107
        %4209 = vmatpush1.msra.mxu0 %v2106
        %4210 = vmatprep.subr.mxu0 %v2113
        %4211 = vmatpush1.msra.mxu0 %v2112
        %4212 = vmatprep.subr.mxu0 %v2119
        %4213 = vmatpush1.msra.mxu0 %v2118
        %4214 = vmatprep.subr.mxu0 %v2125
        %4215 = vmatpush1.msra.mxu0 %v2124
        %4216 = vmatprep.subr.mxu0 %v2131
        %4217 = vmatpush1.msra.mxu0 %v2130
        %4218 = vmatprep.subr.mxu0 %v2137
        %4219 = vmatpush1.msra.mxu0 %v2136
        %4220 = vmatprep.subr.mxu0 %v2143
        %4221 = vmatpush1.msra.mxu0 %v2142
        %4222 = vmatprep.subr.mxu0 %v2149
        %4223 = vmatpush1.msra.mxu0 %v2148
        %4224 = vmatprep.subr.mxu0 %v2155
        %4225 = vmatpush1.msra.mxu0 %v2154
        %4226 = vmatprep.subr.mxu0 %v2161
        %4227 = vmatpush1.msra.mxu0 %v2160
        %4228 = vmatprep.subr.mxu0 %v2167
        %4229 = vmatpush1.msra.mxu0 %v2166
        %4230 = vmatprep.mubr.f32.mxu0 %v435
        %4231 = vmatmul.mubr.f32.gmra.mrb[0].mxu0 %v434
        %v4232 = vpop.f32.mrb[0].mxu0
        %v4233 = vadd.f32 %v4162, %v4232
        %v4234 = vpop.f32.mrb[0].mxu0
        %v4235 = vadd.f32 %v4164, %v4234
        %4236 = vdwg.mxu0
        %4237 = vmatprep.subr.mxu0 %v2173
        %4238 = vmatpush1.msra.mxu0 %v2172
        %4239 = vmatprep.subr.mxu0 %v2179
        %4240 = vmatpush1.msra.mxu0 %v2178
        %4241 = vmatprep.subr.mxu0 %v2185
        %4242 = vmatpush1.msra.mxu0 %v2184
        %4243 = vmatprep.subr.mxu0 %v2191
        %4244 = vmatpush1.msra.mxu0 %v2190
        %4245 = vmatprep.subr.mxu0 %v2197
        %4246 = vmatpush1.msra.mxu0 %v2196
        %4247 = vmatprep.subr.mxu0 %v2203
        %4248 = vmatpush1.msra.mxu0 %v2202
        %4249 = vmatprep.subr.mxu0 %v2209
        %4250 = vmatpush1.msra.mxu0 %v2208
        %4251 = vmatprep.subr.mxu0 %v2215
        %4252 = vmatpush1.msra.mxu0 %v2214
        %4253 = vmatprep.subr.mxu0 %v2221
        %4254 = vmatpush1.msra.mxu0 %v2220
        %4255 = vmatprep.subr.mxu0 %v2227
        %4256 = vmatpush1.msra.mxu0 %v2226
        %4257 = vmatprep.subr.mxu0 %v2233
        %4258 = vmatpush1.msra.mxu0 %v2232
        %4259 = vmatprep.subr.mxu0 %v2239
        %4260 = vmatpush1.msra.mxu0 %v2238
        %4261 = vmatprep.subr.mxu0 %v2245
        %4262 = vmatpush1.msra.mxu0 %v2244
        %4263 = vmatprep.subr.mxu0 %v2251
        %4264 = vmatpush1.msra.mxu0 %v2250
        %4265 = vmatprep.subr.mxu0 %v2257
        %4266 = vmatpush1.msra.mxu0 %v2256
        %4267 = vmatprep.subr.mxu0 %v2263
        %4268 = vmatpush1.msra.mxu0 %v2262
        %4269 = vmatprep.subr.mxu0 %v2269
        %4270 = vmatpush1.msra.mxu0 %v2268
        %4271 = vmatprep.subr.mxu0 %v2275
        %4272 = vmatpush1.msra.mxu0 %v2274
        %4273 = vmatprep.subr.mxu0 %v2281
        %4274 = vmatpush1.msra.mxu0 %v2280
        %4275 = vmatprep.subr.mxu0 %v2287
        %4276 = vmatpush1.msra.mxu0 %v2286
        %4277 = vmatprep.subr.mxu0 %v2293
        %4278 = vmatpush1.msra.mxu0 %v2292
        %4279 = vmatprep.subr.mxu0 %v2299
        %4280 = vmatpush1.msra.mxu0 %v2298
        %4281 = vmatprep.subr.mxu0 %v2305
        %4282 = vmatpush1.msra.mxu0 %v2304
        %4283 = vmatprep.subr.mxu0 %v2311
        %4284 = vmatpush1.msra.mxu0 %v2310
        %4285 = vmatprep.subr.mxu0 %v2317
        %4286 = vmatpush1.msra.mxu0 %v2316
        %4287 = vmatprep.subr.mxu0 %v2323
        %4288 = vmatpush1.msra.mxu0 %v2322
        %4289 = vmatprep.subr.mxu0 %v2329
        %4290 = vmatpush1.msra.mxu0 %v2328
        %4291 = vmatprep.subr.mxu0 %v2335
        %4292 = vmatpush1.msra.mxu0 %v2334
        %4293 = vmatprep.subr.mxu0 %v2341
        %4294 = vmatpush1.msra.mxu0 %v2340
        %4295 = vmatprep.subr.mxu0 %v2347
        %4296 = vmatpush1.msra.mxu0 %v2346
        %4297 = vmatprep.subr.mxu0 %v2353
        %4298 = vmatpush1.msra.mxu0 %v2352
        %4299 = vmatprep.subr.mxu0 %v2359
        %4300 = vmatpush1.msra.mxu0 %v2358
        %4301 = vmatprep.mubr.f32.mxu0 %v437
        %4302 = vmatmul.mubr.f32.gmra.mrb[0].mxu0 %v436
        %v4303 = vpop.f32.mrb[0].mxu0
        %v4304 = vadd.f32 %v4233, %v4303
        %v4305 = vpop.f32.mrb[0].mxu0
        %v4306 = vadd.f32 %v4235, %v4305
        %4307 = vdwg.mxu0
        %4308 = vmatprep.subr.mxu0 %v2365
        %4309 = vmatpush1.msra.mxu0 %v2364
        %4310 = vmatprep.subr.mxu0 %v2371
        %4311 = vmatpush1.msra.mxu0 %v2370
        %4312 = vmatprep.subr.mxu0 %v2377
        %4313 = vmatpush1.msra.mxu0 %v2376
        %4314 = vmatprep.subr.mxu0 %v2383
        %4315 = vmatpush1.msra.mxu0 %v2382
        %4316 = vmatprep.subr.mxu0 %v2389
        %4317 = vmatpush1.msra.mxu0 %v2388
        %4318 = vmatprep.subr.mxu0 %v2395
        %4319 = vmatpush1.msra.mxu0 %v2394
        %4320 = vmatprep.subr.mxu0 %v2401
        %4321 = vmatpush1.msra.mxu0 %v2400
        %4322 = vmatprep.subr.mxu0 %v2407
        %4323 = vmatpush1.msra.mxu0 %v2406
        %4324 = vmatprep.subr.mxu0 %v2413
        %4325 = vmatpush1.msra.mxu0 %v2412
        %4326 = vmatprep.subr.mxu0 %v2419
        %4327 = vmatpush1.msra.mxu0 %v2418
        %4328 = vmatprep.subr.mxu0 %v2425
        %4329 = vmatpush1.msra.mxu0 %v2424
        %4330 = vmatprep.subr.mxu0 %v2431
        %4331 = vmatpush1.msra.mxu0 %v2430
        %4332 = vmatprep.subr.mxu0 %v2437
        %4333 = vmatpush1.msra.mxu0 %v2436
        %4334 = vmatprep.subr.mxu0 %v2443
        %4335 = vmatpush1.msra.mxu0 %v2442
        %4336 = vmatprep.subr.mxu0 %v2449
        %4337 = vmatpush1.msra.mxu0 %v2448
        %4338 = vmatprep.subr.mxu0 %v2455
        %4339 = vmatpush1.msra.mxu0 %v2454
        %4340 = vmatprep.subr.mxu0 %v2461
        %4341 = vmatpush1.msra.mxu0 %v2460
        %4342 = vmatprep.subr.mxu0 %v2467
        %4343 = vmatpush1.msra.mxu0 %v2466
        %4344 = vmatprep.subr.mxu0 %v2473
        %4345 = vmatpush1.msra.mxu0 %v2472
        %4346 = vmatprep.subr.mxu0 %v2479
        %4347 = vmatpush1.msra.mxu0 %v2478
        %4348 = vmatprep.subr.mxu0 %v2485
        %4349 = vmatpush1.msra.mxu0 %v2484
        %4350 = vmatprep.subr.mxu0 %v2491
        %4351 = vmatpush1.msra.mxu0 %v2490
        %4352 = vmatprep.subr.mxu0 %v2497
        %4353 = vmatpush1.msra.mxu0 %v2496
        %4354 = vmatprep.subr.mxu0 %v2503
        %4355 = vmatpush1.msra.mxu0 %v2502
        %4356 = vmatprep.subr.mxu0 %v2509
        %4357 = vmatpush1.msra.mxu0 %v2508
        %4358 = vmatprep.subr.mxu0 %v2515
        %4359 = vmatpush1.msra.mxu0 %v2514
        %4360 = vmatprep.subr.mxu0 %v2521
        %4361 = vmatpush1.msra.mxu0 %v2520
        %4362 = vmatprep.subr.mxu0 %v2527
        %4363 = vmatpush1.msra.mxu0 %v2526
        %4364 = vmatprep.subr.mxu0 %v2533
        %4365 = vmatpush1.msra.mxu0 %v2532
        %4366 = vmatprep.subr.mxu0 %v2539
        %4367 = vmatpush1.msra.mxu0 %v2538
        %4368 = vmatprep.subr.mxu0 %v2545
        %4369 = vmatpush1.msra.mxu0 %v2544
        %4370 = vmatprep.subr.mxu0 %v2551
        %4371 = vmatpush1.msra.mxu0 %v2550
        %4372 = vmatprep.mubr.f32.mxu0 %v439
        %4373 = vmatmul.mubr.f32.gmra.mrb[0].mxu0 %v438
        %v4374 = vpop.f32.mrb[0].mxu0
        %v4375 = vadd.f32 %v4304, %v4374
        %v4376 = vpop.f32.mrb[0].mxu0
        %v4377 = vadd.f32 %v4306, %v4376
        %4378 = vdwg.mxu0
        %4379 = vmatprep.subr.mxu0 %v2557
        %4380 = vmatpush1.msra.mxu0 %v2556
        %4381 = vmatprep.subr.mxu0 %v2563
        %4382 = vmatpush1.msra.mxu0 %v2562
        %4383 = vmatprep.subr.mxu0 %v2569
        %4384 = vmatpush1.msra.mxu0 %v2568
        %4385 = vmatprep.subr.mxu0 %v2575
        %4386 = vmatpush1.msra.mxu0 %v2574
        %4387 = vmatprep.subr.mxu0 %v2581
        %4388 = vmatpush1.msra.mxu0 %v2580
        %4389 = vmatprep.subr.mxu0 %v2587
        %4390 = vmatpush1.msra.mxu0 %v2586
        %4391 = vmatprep.subr.mxu0 %v2593
        %4392 = vmatpush1.msra.mxu0 %v2592
        %4393 = vmatprep.subr.mxu0 %v2599
        %4394 = vmatpush1.msra.mxu0 %v2598
        %4395 = vmatprep.subr.mxu0 %v2605
        %4396 = vmatpush1.msra.mxu0 %v2604
        %4397 = vmatprep.subr.mxu0 %v2611
        %4398 = vmatpush1.msra.mxu0 %v2610
        %4399 = vmatprep.subr.mxu0 %v2617
        %4400 = vmatpush1.msra.mxu0 %v2616
        %4401 = vmatprep.subr.mxu0 %v2623
        %4402 = vmatpush1.msra.mxu0 %v2622
        %4403 = vmatprep.subr.mxu0 %v2629
        %4404 = vmatpush1.msra.mxu0 %v2628
        %4405 = vmatprep.subr.mxu0 %v2635
        %4406 = vmatpush1.msra.mxu0 %v2634
        %4407 = vmatprep.subr.mxu0 %v2641
        %4408 = vmatpush1.msra.mxu0 %v2640
        %4409 = vmatprep.subr.mxu0 %v2647
        %4410 = vmatpush1.msra.mxu0 %v2646
        %4411 = vmatprep.subr.mxu0 %v2653
        %4412 = vmatpush1.msra.mxu0 %v2652
        %4413 = vmatprep.subr.mxu0 %v2659
        %4414 = vmatpush1.msra.mxu0 %v2658
        %4415 = vmatprep.subr.mxu0 %v2665
        %4416 = vmatpush1.msra.mxu0 %v2664
        %4417 = vmatprep.subr.mxu0 %v2671
        %4418 = vmatpush1.msra.mxu0 %v2670
        %4419 = vmatprep.subr.mxu0 %v2677
        %4420 = vmatpush1.msra.mxu0 %v2676
        %4421 = vmatprep.subr.mxu0 %v2683
        %4422 = vmatpush1.msra.mxu0 %v2682
        %4423 = vmatprep.subr.mxu0 %v2689
        %4424 = vmatpush1.msra.mxu0 %v2688
        %4425 = vmatprep.subr.mxu0 %v2695
        %4426 = vmatpush1.msra.mxu0 %v2694
        %4427 = vmatprep.subr.mxu0 %v2701
        %4428 = vmatpush1.msra.mxu0 %v2700
        %4429 = vmatprep.subr.mxu0 %v2707
        %4430 = vmatpush1.msra.mxu0 %v2706
        %4431 = vmatprep.subr.mxu0 %v2713
        %4432 = vmatpush1.msra.mxu0 %v2712
        %4433 = vmatprep.subr.mxu0 %v2719
        %4434 = vmatpush1.msra.mxu0 %v2718
        %4435 = vmatprep.subr.mxu0 %v2725
        %4436 = vmatpush1.msra.mxu0 %v2724
        %4437 = vmatprep.subr.mxu0 %v2731
        %4438 = vmatpush1.msra.mxu0 %v2730
        %4439 = vmatprep.subr.mxu0 %v2737
        %4440 = vmatpush1.msra.mxu0 %v2736
        %4441 = vmatprep.subr.mxu0 %v2743
        %4442 = vmatpush1.msra.mxu0 %v2742
        %4443 = vmatprep.mubr.f32.mxu0 %v441
        %4444 = vmatmul.mubr.f32.gmra.mrb[0].mxu0 %v440
        %v4445 = vpop.f32.mrb[0].mxu0
        %v4446 = vadd.f32 %v4375, %v4445
        %v4447 = vpop.f32.mrb[0].mxu0
        %v4448 = vadd.f32 %v4377, %v4447
        %4449 = vdwg.mxu0
        %4450 = vmatprep.subr.mxu0 %v447
        %4451 = vmatpush1.msra.mxu0 %v446
        %4452 = vmatprep.subr.mxu0 %v453
        %4453 = vmatpush1.msra.mxu0 %v452
        %4454 = vmatprep.subr.mxu0 %v459
        %4455 = vmatpush1.msra.mxu0 %v458
        %4456 = vmatprep.subr.mxu0 %v465
        %4457 = vmatpush1.msra.mxu0 %v464
        %4458 = vmatprep.subr.mxu0 %v471
        %4459 = vmatpush1.msra.mxu0 %v470
        %4460 = vmatprep.subr.mxu0 %v477
        %4461 = vmatpush1.msra.mxu0 %v476
        %4462 = vmatprep.subr.mxu0 %v483
        %4463 = vmatpush1.msra.mxu0 %v482
        %4464 = vmatprep.subr.mxu0 %v489
        %4465 = vmatpush1.msra.mxu0 %v488
        %4466 = vmatprep.subr.mxu0 %v495
        %4467 = vmatpush1.msra.mxu0 %v494
        %4468 = vmatprep.subr.mxu0 %v501
        %4469 = vmatpush1.msra.mxu0 %v500
        %4470 = vmatprep.subr.mxu0 %v507
        %4471 = vmatpush1.msra.mxu0 %v506
        %4472 = vmatprep.subr.mxu0 %v513
        %4473 = vmatpush1.msra.mxu0 %v512
        %4474 = vmatprep.subr.mxu0 %v519
        %4475 = vmatpush1.msra.mxu0 %v518
        %4476 = vmatprep.subr.mxu0 %v525
        %4477 = vmatpush1.msra.mxu0 %v524
        %4478 = vmatprep.subr.mxu0 %v531
        %4479 = vmatpush1.msra.mxu0 %v530
        %4480 = vmatprep.subr.mxu0 %v537
        %4481 = vmatpush1.msra.mxu0 %v536
        %4482 = vmatprep.subr.mxu0 %v543
        %4483 = vmatpush1.msra.mxu0 %v542
        %4484 = vmatprep.subr.mxu0 %v549
        %4485 = vmatpush1.msra.mxu0 %v548
        %4486 = vmatprep.subr.mxu0 %v555
        %4487 = vmatpush1.msra.mxu0 %v554
        %4488 = vmatprep.subr.mxu0 %v561
        %4489 = vmatpush1.msra.mxu0 %v560
        %4490 = vmatprep.subr.mxu0 %v567
        %4491 = vmatpush1.msra.mxu0 %v566
        %4492 = vmatprep.subr.mxu0 %v573
        %4493 = vmatpush1.msra.mxu0 %v572
        %4494 = vmatprep.subr.mxu0 %v579
        %4495 = vmatpush1.msra.mxu0 %v578
        %4496 = vmatprep.subr.mxu0 %v585
        %4497 = vmatpush1.msra.mxu0 %v584
        %4498 = vmatprep.subr.mxu0 %v591
        %4499 = vmatpush1.msra.mxu0 %v590
        %4500 = vmatprep.subr.mxu0 %v597
        %4501 = vmatpush1.msra.mxu0 %v596
        %4502 = vmatprep.subr.mxu0 %v603
        %4503 = vmatpush1.msra.mxu0 %v602
        %4504 = vmatprep.subr.mxu0 %v609
        %4505 = vmatpush1.msra.mxu0 %v608
        %4506 = vmatprep.subr.mxu0 %v615
        %4507 = vmatpush1.msra.mxu0 %v614
        %4508 = vmatprep.subr.mxu0 %v621
        %4509 = vmatpush1.msra.mxu0 %v620
        %4510 = vmatprep.subr.mxu0 %v627
        %4511 = vmatpush1.msra.mxu0 %v626
        %4512 = vmatprep.subr.mxu0 %v633
        %4513 = vmatpush1.msra.mxu0 %v632
        %4514 = vmatprep.mubr.f32.mxu0 %v419
        %4515 = vmatmul.mubr.f32.gmra.mrb[0].mxu0 %v418
        %v4516 = vpop.f32.mrb[0].mxu0
        %v4517 = vadd.f32 0.0, %v4516
        %v4518 = vpop.f32.mrb[0].mxu0
        %v4519 = vadd.f32 0.0, %v4518
        %4520 = vdwg.mxu0
        %4521 = vmatprep.subr.mxu0 %v639
        %4522 = vmatpush1.msra.mxu0 %v638
        %4523 = vmatprep.subr.mxu0 %v645
        %4524 = vmatpush1.msra.mxu0 %v644
        %4525 = vmatprep.subr.mxu0 %v651
        %4526 = vmatpush1.msra.mxu0 %v650
        %4527 = vmatprep.subr.mxu0 %v657
        %4528 = vmatpush1.msra.mxu0 %v656
        %4529 = vmatprep.subr.mxu0 %v663
        %4530 = vmatpush1.msra.mxu0 %v662
        %4531 = vmatprep.subr.mxu0 %v669
        %4532 = vmatpush1.msra.mxu0 %v668
        %4533 = vmatprep.subr.mxu0 %v675
        %4534 = vmatpush1.msra.mxu0 %v674
        %4535 = vmatprep.subr.mxu0 %v681
        %4536 = vmatpush1.msra.mxu0 %v680
        %4537 = vmatprep.subr.mxu0 %v687
        %4538 = vmatpush1.msra.mxu0 %v686
        %4539 = vmatprep.subr.mxu0 %v693
        %4540 = vmatpush1.msra.mxu0 %v692
        %4541 = vmatprep.subr.mxu0 %v699
        %4542 = vmatpush1.msra.mxu0 %v698
        %4543 = vmatprep.subr.mxu0 %v705
        %4544 = vmatpush1.msra.mxu0 %v704
        %4545 = vmatprep.subr.mxu0 %v711
        %4546 = vmatpush1.msra.mxu0 %v710
        %4547 = vmatprep.subr.mxu0 %v717
        %4548 = vmatpush1.msra.mxu0 %v716
        %4549 = vmatprep.subr.mxu0 %v723
        %4550 = vmatpush1.msra.mxu0 %v722
        %4551 = vmatprep.subr.mxu0 %v729
        %4552 = vmatpush1.msra.mxu0 %v728
        %4553 = vmatprep.subr.mxu0 %v735
        %4554 = vmatpush1.msra.mxu0 %v734
        %4555 = vmatprep.subr.mxu0 %v741
        %4556 = vmatpush1.msra.mxu0 %v740
        %4557 = vmatprep.subr.mxu0 %v747
        %4558 = vmatpush1.msra.mxu0 %v746
        %4559 = vmatprep.subr.mxu0 %v753
        %4560 = vmatpush1.msra.mxu0 %v752
        %4561 = vmatprep.subr.mxu0 %v759
        %4562 = vmatpush1.msra.mxu0 %v758
        %4563 = vmatprep.subr.mxu0 %v765
        %4564 = vmatpush1.msra.mxu0 %v764
        %4565 = vmatprep.subr.mxu0 %v771
        %4566 = vmatpush1.msra.mxu0 %v770
        %4567 = vmatprep.subr.mxu0 %v777
        %4568 = vmatpush1.msra.mxu0 %v776
        %4569 = vmatprep.subr.mxu0 %v783
        %4570 = vmatpush1.msra.mxu0 %v782
        %4571 = vmatprep.subr.mxu0 %v789
        %4572 = vmatpush1.msra.mxu0 %v788
        %4573 = vmatprep.subr.mxu0 %v795
        %4574 = vmatpush1.msra.mxu0 %v794
        %4575 = vmatprep.subr.mxu0 %v801
        %4576 = vmatpush1.msra.mxu0 %v800
        %4577 = vmatprep.subr.mxu0 %v807
        %4578 = vmatpush1.msra.mxu0 %v806
        %4579 = vmatprep.subr.mxu0 %v813
        %4580 = vmatpush1.msra.mxu0 %v812
        %4581 = vmatprep.subr.mxu0 %v819
        %4582 = vmatpush1.msra.mxu0 %v818
        %4583 = vmatprep.subr.mxu0 %v825
        %4584 = vmatpush1.msra.mxu0 %v824
        %4585 = vmatprep.mubr.f32.mxu0 %v421
        %4586 = vmatmul.mubr.f32.gmra.mrb[0].mxu0 %v420
        %v4587 = vpop.f32.mrb[0].mxu0
        %v4588 = vadd.f32 %v4517, %v4587
        %v4589 = vpop.f32.mrb[0].mxu0
        %v4590 = vadd.f32 %v4519, %v4589
        %4591 = vdwg.mxu0
        %4592 = vmatprep.subr.mxu0 %v831
        %4593 = vmatpush1.msra.mxu0 %v830
        %4594 = vmatprep.subr.mxu0 %v837
        %4595 = vmatpush1.msra.mxu0 %v836
        %4596 = vmatprep.subr.mxu0 %v843
        %4597 = vmatpush1.msra.mxu0 %v842
        %4598 = vmatprep.subr.mxu0 %v849
        %4599 = vmatpush1.msra.mxu0 %v848
        %4600 = vmatprep.subr.mxu0 %v855
        %4601 = vmatpush1.msra.mxu0 %v854
        %4602 = vmatprep.subr.mxu0 %v861
        %4603 = vmatpush1.msra.mxu0 %v860
        %4604 = vmatprep.subr.mxu0 %v867
        %4605 = vmatpush1.msra.mxu0 %v866
        %4606 = vmatprep.subr.mxu0 %v873
        %4607 = vmatpush1.msra.mxu0 %v872
        %4608 = vmatprep.subr.mxu0 %v879
        %4609 = vmatpush1.msra.mxu0 %v878
        %4610 = vmatprep.subr.mxu0 %v885
        %4611 = vmatpush1.msra.mxu0 %v884
        %4612 = vmatprep.subr.mxu0 %v891
        %4613 = vmatpush1.msra.mxu0 %v890
        %4614 = vmatprep.subr.mxu0 %v897
        %4615 = vmatpush1.msra.mxu0 %v896
        %4616 = vmatprep.subr.mxu0 %v903
        %4617 = vmatpush1.msra.mxu0 %v902
        %4618 = vmatprep.subr.mxu0 %v909
        %4619 = vmatpush1.msra.mxu0 %v908
        %4620 = vmatprep.subr.mxu0 %v915
        %4621 = vmatpush1.msra.mxu0 %v914
        %4622 = vmatprep.subr.mxu0 %v921
        %4623 = vmatpush1.msra.mxu0 %v920
        %4624 = vmatprep.subr.mxu0 %v927
        %4625 = vmatpush1.msra.mxu0 %v926
        %4626 = vmatprep.subr.mxu0 %v933
        %4627 = vmatpush1.msra.mxu0 %v932
        %4628 = vmatprep.subr.mxu0 %v939
        %4629 = vmatpush1.msra.mxu0 %v938
        %4630 = vmatprep.subr.mxu0 %v945
        %4631 = vmatpush1.msra.mxu0 %v944
        %4632 = vmatprep.subr.mxu0 %v951
        %4633 = vmatpush1.msra.mxu0 %v950
        %4634 = vmatprep.subr.mxu0 %v957
        %4635 = vmatpush1.msra.mxu0 %v956
        %4636 = vmatprep.subr.mxu0 %v963
        %4637 = vmatpush1.msra.mxu0 %v962
        %4638 = vmatprep.subr.mxu0 %v969
        %4639 = vmatpush1.msra.mxu0 %v968
        %4640 = vmatprep.subr.mxu0 %v975
        %4641 = vmatpush1.msra.mxu0 %v974
        %4642 = vmatprep.subr.mxu0 %v981
        %4643 = vmatpush1.msra.mxu0 %v980
        %4644 = vmatprep.subr.mxu0 %v987
        %4645 = vmatpush1.msra.mxu0 %v986
        %4646 = vmatprep.subr.mxu0 %v993
        %4647 = vmatpush1.msra.mxu0 %v992
        %4648 = vmatprep.subr.mxu0 %v999
        %4649 = vmatpush1.msra.mxu0 %v998
        %4650 = vmatprep.subr.mxu0 %v1005
        %4651 = vmatpush1.msra.mxu0 %v1004
        %4652 = vmatprep.subr.mxu0 %v1011
        %4653 = vmatpush1.msra.mxu0 %v1010
        %4654 = vmatprep.subr.mxu0 %v1017
        %4655 = vmatpush1.msra.mxu0 %v1016
        %4656 = vmatprep.mubr.f32.mxu0 %v423
        %4657 = vmatmul.mubr.f32.gmra.mrb[0].mxu0 %v422
        %v4658 = vpop.f32.mrb[0].mxu0
        %v4659 = vadd.f32 %v4588, %v4658
        %v4660 = vpop.f32.mrb[0].mxu0
        %v4661 = vadd.f32 %v4590, %v4660
        %4662 = vdwg.mxu0
        %4663 = vmatprep.subr.mxu0 %v1023
        %4664 = vmatpush1.msra.mxu0 %v1022
        %4665 = vmatprep.subr.mxu0 %v1029
        %4666 = vmatpush1.msra.mxu0 %v1028
        %4667 = vmatprep.subr.mxu0 %v1035
        %4668 = vmatpush1.msra.mxu0 %v1034
        %4669 = vmatprep.subr.mxu0 %v1041
        %4670 = vmatpush1.msra.mxu0 %v1040
        %4671 = vmatprep.subr.mxu0 %v1047
        %4672 = vmatpush1.msra.mxu0 %v1046
        %4673 = vmatprep.subr.mxu0 %v1053
        %4674 = vmatpush1.msra.mxu0 %v1052
        %4675 = vmatprep.subr.mxu0 %v1059
        %4676 = vmatpush1.msra.mxu0 %v1058
        %4677 = vmatprep.subr.mxu0 %v1065
        %4678 = vmatpush1.msra.mxu0 %v1064
        %4679 = vmatprep.subr.mxu0 %v1071
        %4680 = vmatpush1.msra.mxu0 %v1070
        %4681 = vmatprep.subr.mxu0 %v1077
        %4682 = vmatpush1.msra.mxu0 %v1076
        %4683 = vmatprep.subr.mxu0 %v1083
        %4684 = vmatpush1.msra.mxu0 %v1082
        %4685 = vmatprep.subr.mxu0 %v1089
        %4686 = vmatpush1.msra.mxu0 %v1088
        %4687 = vmatprep.subr.mxu0 %v1095
        %4688 = vmatpush1.msra.mxu0 %v1094
        %4689 = vmatprep.subr.mxu0 %v1101
        %4690 = vmatpush1.msra.mxu0 %v1100
        %4691 = vmatprep.subr.mxu0 %v1107
        %4692 = vmatpush1.msra.mxu0 %v1106
        %4693 = vmatprep.subr.mxu0 %v1113
        %4694 = vmatpush1.msra.mxu0 %v1112
        %4695 = vmatprep.subr.mxu0 %v1119
        %4696 = vmatpush1.msra.mxu0 %v1118
        %4697 = vmatprep.subr.mxu0 %v1125
        %4698 = vmatpush1.msra.mxu0 %v1124
        %4699 = vmatprep.subr.mxu0 %v1131
        %4700 = vmatpush1.msra.mxu0 %v1130
        %4701 = vmatprep.subr.mxu0 %v1137
        %4702 = vmatpush1.msra.mxu0 %v1136
        %4703 = vmatprep.subr.mxu0 %v1143
        %4704 = vmatpush1.msra.mxu0 %v1142
        %4705 = vmatprep.subr.mxu0 %v1149
        %4706 = vmatpush1.msra.mxu0 %v1148
        %4707 = vmatprep.subr.mxu0 %v1155
        %4708 = vmatpush1.msra.mxu0 %v1154
        %4709 = vmatprep.subr.mxu0 %v1161
        %4710 = vmatpush1.msra.mxu0 %v1160
        %4711 = vmatprep.subr.mxu0 %v1167
        %4712 = vmatpush1.msra.mxu0 %v1166
        %4713 = vmatprep.subr.mxu0 %v1173
        %4714 = vmatpush1.msra.mxu0 %v1172
        %4715 = vmatprep.subr.mxu0 %v1179
        %4716 = vmatpush1.msra.mxu0 %v1178
        %4717 = vmatprep.subr.mxu0 %v1185
        %4718 = vmatpush1.msra.mxu0 %v1184
        %4719 = vmatprep.subr.mxu0 %v1191
        %4720 = vmatpush1.msra.mxu0 %v1190
        %4721 = vmatprep.subr.mxu0 %v1197
        %4722 = vmatpush1.msra.mxu0 %v1196
        %4723 = vmatprep.subr.mxu0 %v1203
        %4724 = vmatpush1.msra.mxu0 %v1202
        %4725 = vmatprep.subr.mxu0 %v1209
        %4726 = vmatpush1.msra.mxu0 %v1208
        %4727 = vmatprep.mubr.f32.mxu0 %v425
        %4728 = vmatmul.mubr.f32.gmra.mrb[0].mxu0 %v424
        %v4729 = vpop.f32.mrb[0].mxu0
        %v4730 = vadd.f32 %v4659, %v4729
        %v4731 = vpop.f32.mrb[0].mxu0
        %v4732 = vadd.f32 %v4661, %v4731
        %4733 = vdwg.mxu0
        %4734 = vmatprep.subr.mxu0 %v1215
        %4735 = vmatpush1.msra.mxu0 %v1214
        %4736 = vmatprep.subr.mxu0 %v1221
        %4737 = vmatpush1.msra.mxu0 %v1220
        %4738 = vmatprep.subr.mxu0 %v1227
        %4739 = vmatpush1.msra.mxu0 %v1226
        %4740 = vmatprep.subr.mxu0 %v1233
        %4741 = vmatpush1.msra.mxu0 %v1232
        %4742 = vmatprep.subr.mxu0 %v1239
        %4743 = vmatpush1.msra.mxu0 %v1238
        %4744 = vmatprep.subr.mxu0 %v1245
        %4745 = vmatpush1.msra.mxu0 %v1244
        %4746 = vmatprep.subr.mxu0 %v1251
        %4747 = vmatpush1.msra.mxu0 %v1250
        %4748 = vmatprep.subr.mxu0 %v1257
        %4749 = vmatpush1.msra.mxu0 %v1256
        %4750 = vmatprep.subr.mxu0 %v1263
        %4751 = vmatpush1.msra.mxu0 %v1262
        %4752 = vmatprep.subr.mxu0 %v1269
        %4753 = vmatpush1.msra.mxu0 %v1268
        %4754 = vmatprep.subr.mxu0 %v1275
        %4755 = vmatpush1.msra.mxu0 %v1274
        %4756 = vmatprep.subr.mxu0 %v1281
        %4757 = vmatpush1.msra.mxu0 %v1280
        %4758 = vmatprep.subr.mxu0 %v1287
        %4759 = vmatpush1.msra.mxu0 %v1286
        %4760 = vmatprep.subr.mxu0 %v1293
        %4761 = vmatpush1.msra.mxu0 %v1292
        %4762 = vmatprep.subr.mxu0 %v1299
        %4763 = vmatpush1.msra.mxu0 %v1298
        %4764 = vmatprep.subr.mxu0 %v1305
        %4765 = vmatpush1.msra.mxu0 %v1304
        %4766 = vmatprep.subr.mxu0 %v1311
        %4767 = vmatpush1.msra.mxu0 %v1310
        %4768 = vmatprep.subr.mxu0 %v1317
        %4769 = vmatpush1.msra.mxu0 %v1316
        %4770 = vmatprep.subr.mxu0 %v1323
        %4771 = vmatpush1.msra.mxu0 %v1322
        %4772 = vmatprep.subr.mxu0 %v1329
        %4773 = vmatpush1.msra.mxu0 %v1328
        %4774 = vmatprep.subr.mxu0 %v1335
        %4775 = vmatpush1.msra.mxu0 %v1334
        %4776 = vmatprep.subr.mxu0 %v1341
        %4777 = vmatpush1.msra.mxu0 %v1340
        %4778 = vmatprep.subr.mxu0 %v1347
        %4779 = vmatpush1.msra.mxu0 %v1346
        %4780 = vmatprep.subr.mxu0 %v1353
        %4781 = vmatpush1.msra.mxu0 %v1352
        %4782 = vmatprep.subr.mxu0 %v1359
        %4783 = vmatpush1.msra.mxu0 %v1358
        %4784 = vmatprep.subr.mxu0 %v1365
        %4785 = vmatpush1.msra.mxu0 %v1364
        %4786 = vmatprep.subr.mxu0 %v1371
        %4787 = vmatpush1.msra.mxu0 %v1370
        %4788 = vmatprep.subr.mxu0 %v1377
        %4789 = vmatpush1.msra.mxu0 %v1376
        %4790 = vmatprep.subr.mxu0 %v1383
        %4791 = vmatpush1.msra.mxu0 %v1382
        %4792 = vmatprep.subr.mxu0 %v1389
        %4793 = vmatpush1.msra.mxu0 %v1388
        %4794 = vmatprep.subr.mxu0 %v1395
        %4795 = vmatpush1.msra.mxu0 %v1394
        %4796 = vmatprep.subr.mxu0 %v1401
        %4797 = vmatpush1.msra.mxu0 %v1400
        %4798 = vmatprep.mubr.f32.mxu0 %v427
        %4799 = vmatmul.mubr.f32.gmra.mrb[0].mxu0 %v426
        %v4800 = vpop.f32.mrb[0].mxu0
        %v4801 = vadd.f32 %v4730, %v4800
        %v4802 = vpop.f32.mrb[0].mxu0
        %v4803 = vadd.f32 %v4732, %v4802
        %4804 = vdwg.mxu0
        %4805 = vmatprep.subr.mxu0 %v1407
        %4806 = vmatpush1.msra.mxu0 %v1406
        %4807 = vmatprep.subr.mxu0 %v1413
        %4808 = vmatpush1.msra.mxu0 %v1412
        %4809 = vmatprep.subr.mxu0 %v1419
        %4810 = vmatpush1.msra.mxu0 %v1418
        %4811 = vmatprep.subr.mxu0 %v1425
        %4812 = vmatpush1.msra.mxu0 %v1424
        %4813 = vmatprep.subr.mxu0 %v1431
        %4814 = vmatpush1.msra.mxu0 %v1430
        %4815 = vmatprep.subr.mxu0 %v1437
        %4816 = vmatpush1.msra.mxu0 %v1436
        %4817 = vmatprep.subr.mxu0 %v1443
        %4818 = vmatpush1.msra.mxu0 %v1442
        %4819 = vmatprep.subr.mxu0 %v1449
        %4820 = vmatpush1.msra.mxu0 %v1448
        %4821 = vmatprep.subr.mxu0 %v1455
        %4822 = vmatpush1.msra.mxu0 %v1454
        %4823 = vmatprep.subr.mxu0 %v1461
        %4824 = vmatpush1.msra.mxu0 %v1460
        %4825 = vmatprep.subr.mxu0 %v1467
        %4826 = vmatpush1.msra.mxu0 %v1466
        %4827 = vmatprep.subr.mxu0 %v1473
        %4828 = vmatpush1.msra.mxu0 %v1472
        %4829 = vmatprep.subr.mxu0 %v1479
        %4830 = vmatpush1.msra.mxu0 %v1478
        %4831 = vmatprep.subr.mxu0 %v1485
        %4832 = vmatpush1.msra.mxu0 %v1484
        %4833 = vmatprep.subr.mxu0 %v1491
        %4834 = vmatpush1.msra.mxu0 %v1490
        %4835 = vmatprep.subr.mxu0 %v1497
        %4836 = vmatpush1.msra.mxu0 %v1496
        %4837 = vmatprep.subr.mxu0 %v1503
        %4838 = vmatpush1.msra.mxu0 %v1502
        %4839 = vmatprep.subr.mxu0 %v1509
        %4840 = vmatpush1.msra.mxu0 %v1508
        %4841 = vmatprep.subr.mxu0 %v1515
        %4842 = vmatpush1.msra.mxu0 %v1514
        %4843 = vmatprep.subr.mxu0 %v1521
        %4844 = vmatpush1.msra.mxu0 %v1520
        %4845 = vmatprep.subr.mxu0 %v1527
        %4846 = vmatpush1.msra.mxu0 %v1526
        %4847 = vmatprep.subr.mxu0 %v1533
        %4848 = vmatpush1.msra.mxu0 %v1532
        %4849 = vmatprep.subr.mxu0 %v1539
        %4850 = vmatpush1.msra.mxu0 %v1538
        %4851 = vmatprep.subr.mxu0 %v1545
        %4852 = vmatpush1.msra.mxu0 %v1544
        %4853 = vmatprep.subr.mxu0 %v1551
        %4854 = vmatpush1.msra.mxu0 %v1550
        %4855 = vmatprep.subr.mxu0 %v1557
        %4856 = vmatpush1.msra.mxu0 %v1556
        %4857 = vmatprep.subr.mxu0 %v1563
        %4858 = vmatpush1.msra.mxu0 %v1562
        %4859 = vmatprep.subr.mxu0 %v1569
        %4860 = vmatpush1.msra.mxu0 %v1568
        %4861 = vmatprep.subr.mxu0 %v1575
        %4862 = vmatpush1.msra.mxu0 %v1574
        %4863 = vmatprep.subr.mxu0 %v1581
        %4864 = vmatpush1.msra.mxu0 %v1580
        %4865 = vmatprep.subr.mxu0 %v1587
        %4866 = vmatpush1.msra.mxu0 %v1586
        %4867 = vmatprep.subr.mxu0 %v1593
        %4868 = vmatpush1.msra.mxu0 %v1592
        %4869 = vmatprep.mubr.f32.mxu0 %v429
        %4870 = vmatmul.mubr.f32.gmra.mrb[0].mxu0 %v428
        %v4871 = vpop.f32.mrb[0].mxu0
        %v4872 = vadd.f32 %v4801, %v4871
        %v4873 = vpop.f32.mrb[0].mxu0
        %v4874 = vadd.f32 %v4803, %v4873
        %4875 = vdwg.mxu0
        %4876 = vmatprep.subr.mxu0 %v1599
        %4877 = vmatpush1.msra.mxu0 %v1598
        %4878 = vmatprep.subr.mxu0 %v1605
        %4879 = vmatpush1.msra.mxu0 %v1604
        %4880 = vmatprep.subr.mxu0 %v1611
        %4881 = vmatpush1.msra.mxu0 %v1610
        %4882 = vmatprep.subr.mxu0 %v1617
        %4883 = vmatpush1.msra.mxu0 %v1616
        %4884 = vmatprep.subr.mxu0 %v1623
        %4885 = vmatpush1.msra.mxu0 %v1622
        %4886 = vmatprep.subr.mxu0 %v1629
        %4887 = vmatpush1.msra.mxu0 %v1628
        %4888 = vmatprep.subr.mxu0 %v1635
        %4889 = vmatpush1.msra.mxu0 %v1634
        %4890 = vmatprep.subr.mxu0 %v1641
        %4891 = vmatpush1.msra.mxu0 %v1640
        %4892 = vmatprep.subr.mxu0 %v1647
        %4893 = vmatpush1.msra.mxu0 %v1646
        %4894 = vmatprep.subr.mxu0 %v1653
        %4895 = vmatpush1.msra.mxu0 %v1652
        %4896 = vmatprep.subr.mxu0 %v1659
        %4897 = vmatpush1.msra.mxu0 %v1658
        %4898 = vmatprep.subr.mxu0 %v1665
        %4899 = vmatpush1.msra.mxu0 %v1664
        %4900 = vmatprep.subr.mxu0 %v1671
        %4901 = vmatpush1.msra.mxu0 %v1670
        %4902 = vmatprep.subr.mxu0 %v1677
        %4903 = vmatpush1.msra.mxu0 %v1676
        %4904 = vmatprep.subr.mxu0 %v1683
        %4905 = vmatpush1.msra.mxu0 %v1682
        %4906 = vmatprep.subr.mxu0 %v1689
        %4907 = vmatpush1.msra.mxu0 %v1688
        %4908 = vmatprep.subr.mxu0 %v1695
        %4909 = vmatpush1.msra.mxu0 %v1694
        %4910 = vmatprep.subr.mxu0 %v1701
        %4911 = vmatpush1.msra.mxu0 %v1700
        %4912 = vmatprep.subr.mxu0 %v1707
        %4913 = vmatpush1.msra.mxu0 %v1706
        %4914 = vmatprep.subr.mxu0 %v1713
        %4915 = vmatpush1.msra.mxu0 %v1712
        %4916 = vmatprep.subr.mxu0 %v1719
        %4917 = vmatpush1.msra.mxu0 %v1718
        %4918 = vmatprep.subr.mxu0 %v1725
        %4919 = vmatpush1.msra.mxu0 %v1724
        %4920 = vmatprep.subr.mxu0 %v1731
        %4921 = vmatpush1.msra.mxu0 %v1730
        %4922 = vmatprep.subr.mxu0 %v1737
        %4923 = vmatpush1.msra.mxu0 %v1736
        %4924 = vmatprep.subr.mxu0 %v1743
        %4925 = vmatpush1.msra.mxu0 %v1742
        %4926 = vmatprep.subr.mxu0 %v1749
        %4927 = vmatpush1.msra.mxu0 %v1748
        %4928 = vmatprep.subr.mxu0 %v1755
        %4929 = vmatpush1.msra.mxu0 %v1754
        %4930 = vmatprep.subr.mxu0 %v1761
        %4931 = vmatpush1.msra.mxu0 %v1760
        %4932 = vmatprep.subr.mxu0 %v1767
        %4933 = vmatpush1.msra.mxu0 %v1766
        %4934 = vmatprep.subr.mxu0 %v1773
        %4935 = vmatpush1.msra.mxu0 %v1772
        %4936 = vmatprep.subr.mxu0 %v1779
        %4937 = vmatpush1.msra.mxu0 %v1778
        %4938 = vmatprep.subr.mxu0 %v1785
        %4939 = vmatpush1.msra.mxu0 %v1784
        %4940 = vmatprep.mubr.f32.mxu0 %v431
        %4941 = vmatmul.mubr.f32.gmra.mrb[0].mxu0 %v430
        %v4942 = vpop.f32.mrb[0].mxu0
        %v4943 = vadd.f32 %v4872, %v4942
        %v4944 = vpop.f32.mrb[0].mxu0
        %v4945 = vadd.f32 %v4874, %v4944
        %4946 = vdwg.mxu0
        %4947 = vmatprep.subr.mxu0 %v1791
        %4948 = vmatpush1.msra.mxu0 %v1790
        %4949 = vmatprep.subr.mxu0 %v1797
        %4950 = vmatpush1.msra.mxu0 %v1796
        %4951 = vmatprep.subr.mxu0 %v1803
        %4952 = vmatpush1.msra.mxu0 %v1802
        %4953 = vmatprep.subr.mxu0 %v1809
        %4954 = vmatpush1.msra.mxu0 %v1808
        %4955 = vmatprep.subr.mxu0 %v1815
        %4956 = vmatpush1.msra.mxu0 %v1814
        %4957 = vmatprep.subr.mxu0 %v1821
        %4958 = vmatpush1.msra.mxu0 %v1820
        %4959 = vmatprep.subr.mxu0 %v1827
        %4960 = vmatpush1.msra.mxu0 %v1826
        %4961 = vmatprep.subr.mxu0 %v1833
        %4962 = vmatpush1.msra.mxu0 %v1832
        %4963 = vmatprep.subr.mxu0 %v1839
        %4964 = vmatpush1.msra.mxu0 %v1838
        %4965 = vmatprep.subr.mxu0 %v1845
        %4966 = vmatpush1.msra.mxu0 %v1844
        %4967 = vmatprep.subr.mxu0 %v1851
        %4968 = vmatpush1.msra.mxu0 %v1850
        %4969 = vmatprep.subr.mxu0 %v1857
        %4970 = vmatpush1.msra.mxu0 %v1856
        %4971 = vmatprep.subr.mxu0 %v1863
        %4972 = vmatpush1.msra.mxu0 %v1862
        %4973 = vmatprep.subr.mxu0 %v1869
        %4974 = vmatpush1.msra.mxu0 %v1868
        %4975 = vmatprep.subr.mxu0 %v1875
        %4976 = vmatpush1.msra.mxu0 %v1874
        %4977 = vmatprep.subr.mxu0 %v1881
        %4978 = vmatpush1.msra.mxu0 %v1880
        %4979 = vmatprep.subr.mxu0 %v1887
        %4980 = vmatpush1.msra.mxu0 %v1886
        %4981 = vmatprep.subr.mxu0 %v1893
        %4982 = vmatpush1.msra.mxu0 %v1892
        %4983 = vmatprep.subr.mxu0 %v1899
        %4984 = vmatpush1.msra.mxu0 %v1898
        %4985 = vmatprep.subr.mxu0 %v1905
        %4986 = vmatpush1.msra.mxu0 %v1904
        %4987 = vmatprep.subr.mxu0 %v1911
        %4988 = vmatpush1.msra.mxu0 %v1910
        %4989 = vmatprep.subr.mxu0 %v1917
        %4990 = vmatpush1.msra.mxu0 %v1916
        %4991 = vmatprep.subr.mxu0 %v1923
        %4992 = vmatpush1.msra.mxu0 %v1922
        %4993 = vmatprep.subr.mxu0 %v1929
        %4994 = vmatpush1.msra.mxu0 %v1928
        %4995 = vmatprep.subr.mxu0 %v1935
        %4996 = vmatpush1.msra.mxu0 %v1934
        %4997 = vmatprep.subr.mxu0 %v1941
        %4998 = vmatpush1.msra.mxu0 %v1940
        %4999 = vmatprep.subr.mxu0 %v1947
        %5000 = vmatpush1.msra.mxu0 %v1946
        %5001 = vmatprep.subr.mxu0 %v1953
        %5002 = vmatpush1.msra.mxu0 %v1952
        %5003 = vmatprep.subr.mxu0 %v1959
        %5004 = vmatpush1.msra.mxu0 %v1958
        %5005 = vmatprep.subr.mxu0 %v1965
        %5006 = vmatpush1.msra.mxu0 %v1964
        %5007 = vmatprep.subr.mxu0 %v1971
        %5008 = vmatpush1.msra.mxu0 %v1970
        %5009 = vmatprep.subr.mxu0 %v1977
        %5010 = vmatpush1.msra.mxu0 %v1976
        %5011 = vmatprep.mubr.f32.mxu0 %v433
        %5012 = vmatmul.mubr.f32.gmra.mrb[0].mxu0 %v432
        %v5013 = vpop.f32.mrb[0].mxu0
        %v5014 = vadd.f32 %v4943, %v5013
        %v5015 = vpop.f32.mrb[0].mxu0
        %v5016 = vadd.f32 %v4945, %v5015
        %5017 = vdwg.mxu0
        %5018 = vmatprep.subr.mxu0 %v1983
        %5019 = vmatpush1.msra.mxu0 %v1982
        %5020 = vmatprep.subr.mxu0 %v1989
        %5021 = vmatpush1.msra.mxu0 %v1988
        %5022 = vmatprep.subr.mxu0 %v1995
        %5023 = vmatpush1.msra.mxu0 %v1994
        %5024 = vmatprep.subr.mxu0 %v2001
        %5025 = vmatpush1.msra.mxu0 %v2000
        %5026 = vmatprep.subr.mxu0 %v2007
        %5027 = vmatpush1.msra.mxu0 %v2006
        %5028 = vmatprep.subr.mxu0 %v2013
        %5029 = vmatpush1.msra.mxu0 %v2012
        %5030 = vmatprep.subr.mxu0 %v2019
        %5031 = vmatpush1.msra.mxu0 %v2018
        %5032 = vmatprep.subr.mxu0 %v2025
        %5033 = vmatpush1.msra.mxu0 %v2024
        %5034 = vmatprep.subr.mxu0 %v2031
        %5035 = vmatpush1.msra.mxu0 %v2030
        %5036 = vmatprep.subr.mxu0 %v2037
        %5037 = vmatpush1.msra.mxu0 %v2036
        %5038 = vmatprep.subr.mxu0 %v2043
        %5039 = vmatpush1.msra.mxu0 %v2042
        %5040 = vmatprep.subr.mxu0 %v2049
        %5041 = vmatpush1.msra.mxu0 %v2048
        %5042 = vmatprep.subr.mxu0 %v2055
        %5043 = vmatpush1.msra.mxu0 %v2054
        %5044 = vmatprep.subr.mxu0 %v2061
        %5045 = vmatpush1.msra.mxu0 %v2060
        %5046 = vmatprep.subr.mxu0 %v2067
        %5047 = vmatpush1.msra.mxu0 %v2066
        %5048 = vmatprep.subr.mxu0 %v2073
        %5049 = vmatpush1.msra.mxu0 %v2072
        %5050 = vmatprep.subr.mxu0 %v2079
        %5051 = vmatpush1.msra.mxu0 %v2078
        %5052 = vmatprep.subr.mxu0 %v2085
        %5053 = vmatpush1.msra.mxu0 %v2084
        %5054 = vmatprep.subr.mxu0 %v2091
        %5055 = vmatpush1.msra.mxu0 %v2090
        %5056 = vmatprep.subr.mxu0 %v2097
        %5057 = vmatpush1.msra.mxu0 %v2096
        %5058 = vmatprep.subr.mxu0 %v2103
        %5059 = vmatpush1.msra.mxu0 %v2102
        %5060 = vmatprep.subr.mxu0 %v2109
        %5061 = vmatpush1.msra.mxu0 %v2108
        %5062 = vmatprep.subr.mxu0 %v2115
        %5063 = vmatpush1.msra.mxu0 %v2114
        %5064 = vmatprep.subr.mxu0 %v2121
        %5065 = vmatpush1.msra.mxu0 %v2120
        %5066 = vmatprep.subr.mxu0 %v2127
        %5067 = vmatpush1.msra.mxu0 %v2126
        %5068 = vmatprep.subr.mxu0 %v2133
        %5069 = vmatpush1.msra.mxu0 %v2132
        %5070 = vmatprep.subr.mxu0 %v2139
        %5071 = vmatpush1.msra.mxu0 %v2138
        %5072 = vmatprep.subr.mxu0 %v2145
        %5073 = vmatpush1.msra.mxu0 %v2144
        %5074 = vmatprep.subr.mxu0 %v2151
        %5075 = vmatpush1.msra.mxu0 %v2150
        %5076 = vmatprep.subr.mxu0 %v2157
        %5077 = vmatpush1.msra.mxu0 %v2156
        %5078 = vmatprep.subr.mxu0 %v2163
        %5079 = vmatpush1.msra.mxu0 %v2162
        %5080 = vmatprep.subr.mxu0 %v2169
        %5081 = vmatpush1.msra.mxu0 %v2168
        %5082 = vmatprep.mubr.f32.mxu0 %v435
        %5083 = vmatmul.mubr.f32.gmra.mrb[0].mxu0 %v434
        %v5084 = vpop.f32.mrb[0].mxu0
        %v5085 = vadd.f32 %v5014, %v5084
        %v5086 = vpop.f32.mrb[0].mxu0
        %v5087 = vadd.f32 %v5016, %v5086
        %5088 = vdwg.mxu0
        %5089 = vmatprep.subr.mxu0 %v2175
        %5090 = vmatpush1.msra.mxu0 %v2174
        %5091 = vmatprep.subr.mxu0 %v2181
        %5092 = vmatpush1.msra.mxu0 %v2180
        %5093 = vmatprep.subr.mxu0 %v2187
        %5094 = vmatpush1.msra.mxu0 %v2186
        %5095 = vmatprep.subr.mxu0 %v2193
        %5096 = vmatpush1.msra.mxu0 %v2192
        %5097 = vmatprep.subr.mxu0 %v2199
        %5098 = vmatpush1.msra.mxu0 %v2198
        %5099 = vmatprep.subr.mxu0 %v2205
        %5100 = vmatpush1.msra.mxu0 %v2204
        %5101 = vmatprep.subr.mxu0 %v2211
        %5102 = vmatpush1.msra.mxu0 %v2210
        %5103 = vmatprep.subr.mxu0 %v2217
        %5104 = vmatpush1.msra.mxu0 %v2216
        %5105 = vmatprep.subr.mxu0 %v2223
        %5106 = vmatpush1.msra.mxu0 %v2222
        %5107 = vmatprep.subr.mxu0 %v2229
        %5108 = vmatpush1.msra.mxu0 %v2228
        %5109 = vmatprep.subr.mxu0 %v2235
        %5110 = vmatpush1.msra.mxu0 %v2234
        %5111 = vmatprep.subr.mxu0 %v2241
        %5112 = vmatpush1.msra.mxu0 %v2240
        %5113 = vmatprep.subr.mxu0 %v2247
        %5114 = vmatpush1.msra.mxu0 %v2246
        %5115 = vmatprep.subr.mxu0 %v2253
        %5116 = vmatpush1.msra.mxu0 %v2252
        %5117 = vmatprep.subr.mxu0 %v2259
        %5118 = vmatpush1.msra.mxu0 %v2258
        %5119 = vmatprep.subr.mxu0 %v2265
        %5120 = vmatpush1.msra.mxu0 %v2264
        %5121 = vmatprep.subr.mxu0 %v2271
        %5122 = vmatpush1.msra.mxu0 %v2270
        %5123 = vmatprep.subr.mxu0 %v2277
        %5124 = vmatpush1.msra.mxu0 %v2276
        %5125 = vmatprep.subr.mxu0 %v2283
        %5126 = vmatpush1.msra.mxu0 %v2282
        %5127 = vmatprep.subr.mxu0 %v2289
        %5128 = vmatpush1.msra.mxu0 %v2288
        %5129 = vmatprep.subr.mxu0 %v2295
        %5130 = vmatpush1.msra.mxu0 %v2294
        %5131 = vmatprep.subr.mxu0 %v2301
        %5132 = vmatpush1.msra.mxu0 %v2300
        %5133 = vmatprep.subr.mxu0 %v2307
        %5134 = vmatpush1.msra.mxu0 %v2306
        %5135 = vmatprep.subr.mxu0 %v2313
        %5136 = vmatpush1.msra.mxu0 %v2312
        %5137 = vmatprep.subr.mxu0 %v2319
        %5138 = vmatpush1.msra.mxu0 %v2318
        %5139 = vmatprep.subr.mxu0 %v2325
        %5140 = vmatpush1.msra.mxu0 %v2324
        %5141 = vmatprep.subr.mxu0 %v2331
        %5142 = vmatpush1.msra.mxu0 %v2330
        %5143 = vmatprep.subr.mxu0 %v2337
        %5144 = vmatpush1.msra.mxu0 %v2336
        %5145 = vmatprep.subr.mxu0 %v2343
        %5146 = vmatpush1.msra.mxu0 %v2342
        %5147 = vmatprep.subr.mxu0 %v2349
        %5148 = vmatpush1.msra.mxu0 %v2348
        %5149 = vmatprep.subr.mxu0 %v2355
        %5150 = vmatpush1.msra.mxu0 %v2354
        %5151 = vmatprep.subr.mxu0 %v2361
        %5152 = vmatpush1.msra.mxu0 %v2360
        %5153 = vmatprep.mubr.f32.mxu0 %v437
        %5154 = vmatmul.mubr.f32.gmra.mrb[0].mxu0 %v436
        %v5155 = vpop.f32.mrb[0].mxu0
        %v5156 = vadd.f32 %v5085, %v5155
        %v5157 = vpop.f32.mrb[0].mxu0
        %v5158 = vadd.f32 %v5087, %v5157
        %5159 = vdwg.mxu0
        %5160 = vmatprep.subr.mxu0 %v2367
        %5161 = vmatpush1.msra.mxu0 %v2366
        %5162 = vmatprep.subr.mxu0 %v2373
        %5163 = vmatpush1.msra.mxu0 %v2372
        %5164 = vmatprep.subr.mxu0 %v2379
        %5165 = vmatpush1.msra.mxu0 %v2378
        %5166 = vmatprep.subr.mxu0 %v2385
        %5167 = vmatpush1.msra.mxu0 %v2384
        %5168 = vmatprep.subr.mxu0 %v2391
        %5169 = vmatpush1.msra.mxu0 %v2390
        %5170 = vmatprep.subr.mxu0 %v2397
        %5171 = vmatpush1.msra.mxu0 %v2396
        %5172 = vmatprep.subr.mxu0 %v2403
        %5173 = vmatpush1.msra.mxu0 %v2402
        %5174 = vmatprep.subr.mxu0 %v2409
        %5175 = vmatpush1.msra.mxu0 %v2408
        %5176 = vmatprep.subr.mxu0 %v2415
        %5177 = vmatpush1.msra.mxu0 %v2414
        %5178 = vmatprep.subr.mxu0 %v2421
        %5179 = vmatpush1.msra.mxu0 %v2420
        %5180 = vmatprep.subr.mxu0 %v2427
        %5181 = vmatpush1.msra.mxu0 %v2426
        %5182 = vmatprep.subr.mxu0 %v2433
        %5183 = vmatpush1.msra.mxu0 %v2432
        %5184 = vmatprep.subr.mxu0 %v2439
        %5185 = vmatpush1.msra.mxu0 %v2438
        %5186 = vmatprep.subr.mxu0 %v2445
        %5187 = vmatpush1.msra.mxu0 %v2444
        %5188 = vmatprep.subr.mxu0 %v2451
        %5189 = vmatpush1.msra.mxu0 %v2450
        %5190 = vmatprep.subr.mxu0 %v2457
        %5191 = vmatpush1.msra.mxu0 %v2456
        %5192 = vmatprep.subr.mxu0 %v2463
        %5193 = vmatpush1.msra.mxu0 %v2462
        %5194 = vmatprep.subr.mxu0 %v2469
        %5195 = vmatpush1.msra.mxu0 %v2468
        %5196 = vmatprep.subr.mxu0 %v2475
        %5197 = vmatpush1.msra.mxu0 %v2474
        %5198 = vmatprep.subr.mxu0 %v2481
        %5199 = vmatpush1.msra.mxu0 %v2480
        %5200 = vmatprep.subr.mxu0 %v2487
        %5201 = vmatpush1.msra.mxu0 %v2486
        %5202 = vmatprep.subr.mxu0 %v2493
        %5203 = vmatpush1.msra.mxu0 %v2492
        %5204 = vmatprep.subr.mxu0 %v2499
        %5205 = vmatpush1.msra.mxu0 %v2498
        %5206 = vmatprep.subr.mxu0 %v2505
        %5207 = vmatpush1.msra.mxu0 %v2504
        %5208 = vmatprep.subr.mxu0 %v2511
        %5209 = vmatpush1.msra.mxu0 %v2510
        %5210 = vmatprep.subr.mxu0 %v2517
        %5211 = vmatpush1.msra.mxu0 %v2516
        %5212 = vmatprep.subr.mxu0 %v2523
        %5213 = vmatpush1.msra.mxu0 %v2522
        %5214 = vmatprep.subr.mxu0 %v2529
        %5215 = vmatpush1.msra.mxu0 %v2528
        %5216 = vmatprep.subr.mxu0 %v2535
        %5217 = vmatpush1.msra.mxu0 %v2534
        %5218 = vmatprep.subr.mxu0 %v2541
        %5219 = vmatpush1.msra.mxu0 %v2540
        %5220 = vmatprep.subr.mxu0 %v2547
        %5221 = vmatpush1.msra.mxu0 %v2546
        %5222 = vmatprep.subr.mxu0 %v2553
        %5223 = vmatpush1.msra.mxu0 %v2552
        %5224 = vmatprep.mubr.f32.mxu0 %v439
        %5225 = vmatmul.mubr.f32.gmra.mrb[0].mxu0 %v438
        %v5226 = vpop.f32.mrb[0].mxu0
        %v5227 = vadd.f32 %v5156, %v5226
        %v5228 = vpop.f32.mrb[0].mxu0
        %v5229 = vadd.f32 %v5158, %v5228
        %5230 = vdwg.mxu0
        %5231 = vmatprep.subr.mxu0 %v2559
        %5232 = vmatpush1.msra.mxu0 %v2558
        %5233 = vmatprep.subr.mxu0 %v2565
        %5234 = vmatpush1.msra.mxu0 %v2564
        %5235 = vmatprep.subr.mxu0 %v2571
        %5236 = vmatpush1.msra.mxu0 %v2570
        %5237 = vmatprep.subr.mxu0 %v2577
        %5238 = vmatpush1.msra.mxu0 %v2576
        %5239 = vmatprep.subr.mxu0 %v2583
        %5240 = vmatpush1.msra.mxu0 %v2582
        %5241 = vmatprep.subr.mxu0 %v2589
        %5242 = vmatpush1.msra.mxu0 %v2588
        %5243 = vmatprep.subr.mxu0 %v2595
        %5244 = vmatpush1.msra.mxu0 %v2594
        %5245 = vmatprep.subr.mxu0 %v2601
        %5246 = vmatpush1.msra.mxu0 %v2600
        %5247 = vmatprep.subr.mxu0 %v2607
        %5248 = vmatpush1.msra.mxu0 %v2606
        %5249 = vmatprep.subr.mxu0 %v2613
        %5250 = vmatpush1.msra.mxu0 %v2612
        %5251 = vmatprep.subr.mxu0 %v2619
        %5252 = vmatpush1.msra.mxu0 %v2618
        %5253 = vmatprep.subr.mxu0 %v2625
        %5254 = vmatpush1.msra.mxu0 %v2624
        %5255 = vmatprep.subr.mxu0 %v2631
        %5256 = vmatpush1.msra.mxu0 %v2630
        %5257 = vmatprep.subr.mxu0 %v2637
        %5258 = vmatpush1.msra.mxu0 %v2636
        %5259 = vmatprep.subr.mxu0 %v2643
        %5260 = vmatpush1.msra.mxu0 %v2642
        %5261 = vmatprep.subr.mxu0 %v2649
        %5262 = vmatpush1.msra.mxu0 %v2648
        %5263 = vmatprep.subr.mxu0 %v2655
        %5264 = vmatpush1.msra.mxu0 %v2654
        %5265 = vmatprep.subr.mxu0 %v2661
        %5266 = vmatpush1.msra.mxu0 %v2660
        %5267 = vmatprep.subr.mxu0 %v2667
        %5268 = vmatpush1.msra.mxu0 %v2666
        %5269 = vmatprep.subr.mxu0 %v2673
        %5270 = vmatpush1.msra.mxu0 %v2672
        %5271 = vmatprep.subr.mxu0 %v2679
        %5272 = vmatpush1.msra.mxu0 %v2678
        %5273 = vmatprep.subr.mxu0 %v2685
        %5274 = vmatpush1.msra.mxu0 %v2684
        %5275 = vmatprep.subr.mxu0 %v2691
        %5276 = vmatpush1.msra.mxu0 %v2690
        %5277 = vmatprep.subr.mxu0 %v2697
        %5278 = vmatpush1.msra.mxu0 %v2696
        %5279 = vmatprep.subr.mxu0 %v2703
        %5280 = vmatpush1.msra.mxu0 %v2702
        %5281 = vmatprep.subr.mxu0 %v2709
        %5282 = vmatpush1.msra.mxu0 %v2708
        %5283 = vmatprep.subr.mxu0 %v2715
        %5284 = vmatpush1.msra.mxu0 %v2714
        %5285 = vmatprep.subr.mxu0 %v2721
        %5286 = vmatpush1.msra.mxu0 %v2720
        %5287 = vmatprep.subr.mxu0 %v2727
        %5288 = vmatpush1.msra.mxu0 %v2726
        %5289 = vmatprep.subr.mxu0 %v2733
        %5290 = vmatpush1.msra.mxu0 %v2732
        %5291 = vmatprep.subr.mxu0 %v2739
        %5292 = vmatpush1.msra.mxu0 %v2738
        %5293 = vmatprep.subr.mxu0 %v2745
        %5294 = vmatpush1.msra.mxu0 %v2744
        %5295 = vmatprep.mubr.f32.mxu0 %v441
        %5296 = vmatmul.mubr.f32.gmra.mrb[0].mxu0 %v440
        %v5297 = vpop.f32.mrb[0].mxu0
        %v5298 = vadd.f32 %v5227, %v5297
        %v5299 = vpop.f32.mrb[0].mxu0
        %v5300 = vadd.f32 %v5229, %v5299
        %5301 = vdwg.mxu0
        %v5302 = vadd.f32 %v412, %v3594
        %v5303 = vadd.f32 %v413, %v3596
        %v5304 = vadd.f32 %v414, %v4446
        %v5305 = vadd.f32 %v415, %v4448
        %v5306 = vadd.f32 %v416, %v5298
        %v5307 = vadd.f32 %v417, %v5300
        %5308 = vst [vmem:[#allocation2] sm:$0xff] %v5302
        %5309 = vst [vmem:[#allocation2 + $0x8] sm:$0xff] %v5303
        %5310 = vst [vmem:[#allocation2 + $0x10] sm:$0xff] %v5304
        %5311 = vst [vmem:[#allocation2 + $0x18] sm:$0xff] %v5305
        %5312 = vst [vmem:[#allocation2 + $0x20] sm:$0xff] %v5306
        %vm5313 = vcmask 490496
        %5314 = vst.msk [vmem:[#allocation2 + $0x28] sm:$0xff] %vm5313, %v5307
        %p5315 = scmp.eq.s32.totalorder %s28, 9
        // Predicated region
        $region65: #{net_forward.1} parent=55 // pred_check
          %p5316 = pneg %p5315
        $region66: #{net_forward.1} parent=55 // pred_check_branch
          %5318 = sbr.rel (%p5316) target = $region68
        $region67: #{net_forward.1} parent=55 // pred_region
          %v5319 = vld [vmem:[#allocation2] sm:$0xff]
          %v5320 = vld [vmem:[#allocation2 + $0x8] sm:$0xff]
          %v5321 = vld [vmem:[#allocation2 + $0x10] sm:$0xff]
          %v5322 = vld [vmem:[#allocation2 + $0x18] sm:$0xff]
          %v5323 = vld [vmem:[#allocation2 + $0x20] sm:$0xff]
          %v5324 = vld [vmem:[#allocation2 + $0x28] sm:$0xff]
          %v5325 = vld [vmem:[%s2] sm:$0x3f]
          %v5327 = vlaneseq
          %v5328 = vshrl.u32 %v5327, 7
          %v5329 = vsub.s32 0, %v5328
          %v5330 = vrot.slane %v5325, %v5329
          %v5331 = vlaneseq
          %v5332 = vshrl.u32 %v5331, 7
          %v5333 = vsub.s32 1, %v5332
          %v5334 = vrot.slane %v5325, %v5333
          %v5335 = vlaneseq
          %v5336 = vshrl.u32 %v5335, 7
          %v5337 = vsub.s32 2, %v5336
          %v5338 = vrot.slane %v5325, %v5337
          %v5339 = vlaneseq
          %v5340 = vshrl.u32 %v5339, 7
          %v5341 = vsub.s32 3, %v5340
          %v5342 = vrot.slane %v5325, %v5341
          %v5343 = vlaneseq
          %v5344 = vshrl.u32 %v5343, 7
          %v5345 = vsub.s32 4, %v5344
          %v5346 = vrot.slane %v5325, %v5345
          %v5347 = vlaneseq
          %v5348 = vshrl.u32 %v5347, 7
          %v5349 = vsub.s32 5, %v5348
          %v5350 = vrot.slane %v5325, %v5349
          %v5357 = vadd.f32 %v5319, %v5330
          %v5358 = vadd.f32 %v5320, %v5334
          %v5359 = vadd.f32 %v5321, %v5338
          %v5360 = vadd.f32 %v5322, %v5342
          %v5361 = vadd.f32 %v5323, %v5346
          %v5362 = vadd.f32 %v5324, %v5350
          %v5363 = vmax.f32 %v5357, 0.0
          %v5364 = vmax.f32 %v5358, 0.0
          %v5365 = vmax.f32 %v5359, 0.0
          %v5366 = vmax.f32 %v5360, 0.0
          %v5367 = vmax.f32 %v5361, 0.0
          %v5368 = vmax.f32 %v5362, 0.0
          %v5369 = vld [vmem:[%s3] sm:$0xff]
          %v5370 = vld [vmem:[%s3 + $0x8] sm:$0xff]
          %v5371 = vld [vmem:[%s3 + $0x10] sm:$0xff]
          %v5372 = vld [vmem:[%s3 + $0x18] sm:$0xff]
          %v5373 = vld [vmem:[%s3 + $0x20] sm:$0xff]
          %v5374 = vld [vmem:[%s3 + $0x28] sm:$0xff]
          %v5375 = vld [vmem:[%s3 + $0x30] sm:$0xff]
          %v5376 = vld [vmem:[%s3 + $0x38] sm:$0xff]
          %v5377 = vld [vmem:[%s3 + $0x40] sm:$0xff]
          %v5378 = vld [vmem:[%s3 + $0x48] sm:$0xff]
          %v5379 = vld [vmem:[%s3 + $0x50] sm:$0xff]
          %v5380 = vld [vmem:[%s3 + $0x58] sm:$0xff]
          %v5381 = vld [vmem:[%s3 + $0x60] sm:$0xff]
          %v5382 = vld [vmem:[%s3 + $0x68] sm:$0xff]
          %v5383 = vld [vmem:[%s3 + $0x70] sm:$0xff]
          %v5384 = vld [vmem:[%s3 + $0x78] sm:$0xff]
          %v5385 = vld [vmem:[%s3 + $0x80] sm:$0xff]
          %v5386 = vld [vmem:[%s3 + $0x88] sm:$0xff]
          %v5387 = vld [vmem:[%s3 + $0x90] sm:$0xff]
          %v5388 = vld [vmem:[%s3 + $0x98] sm:$0xff]
          %v5389 = vld [vmem:[%s3 + $0xa0] sm:$0xff]
          %v5390 = vld [vmem:[%s3 + $0xa8] sm:$0xff]
          %v5391 = vld [vmem:[%s3 + $0xb0] sm:$0xff]
          %v5392 = vld [vmem:[%s3 + $0xb8] sm:$0xff]
          %v5393 = vld [vmem:[%s3 + $0xc0] sm:$0xff]
          %v5394 = vld [vmem:[%s3 + $0xc8] sm:$0xff]
          %v5395 = vld [vmem:[%s3 + $0xd0] sm:$0xff]
          %v5396 = vld [vmem:[%s3 + $0xd8] sm:$0xff]
          %v5397 = vld [vmem:[%s3 + $0xe0] sm:$0xff]
          %v5398 = vld [vmem:[%s3 + $0xe8] sm:$0xff]
          %v5399 = vld [vmem:[%s3 + $0xf0] sm:$0xff]
          %v5400 = vld [vmem:[%s3 + $0xf8] sm:$0xff]
          %v5401 = vld [vmem:[%s3 + $0x100] sm:$0xff]
          %v5402 = vld [vmem:[%s3 + $0x108] sm:$0xff]
          %v5403 = vld [vmem:[%s3 + $0x110] sm:$0xff]
          %v5404 = vld [vmem:[%s3 + $0x118] sm:$0xff]
          %v5405 = vld [vmem:[%s3 + $0x120] sm:$0xff]
          %v5406 = vld [vmem:[%s3 + $0x128] sm:$0xff]
          %v5407 = vld [vmem:[%s3 + $0x130] sm:$0xff]
          %v5408 = vld [vmem:[%s3 + $0x138] sm:$0xff]
          %v5409 = vld [vmem:[%s3 + $0x140] sm:$0xff]
          %v5410 = vld [vmem:[%s3 + $0x148] sm:$0xff]
          %v5411 = vld [vmem:[%s3 + $0x150] sm:$0xff]
          %v5412 = vld [vmem:[%s3 + $0x158] sm:$0xff]
          %v5413 = vld [vmem:[%s3 + $0x160] sm:$0xff]
          %v5414 = vld [vmem:[%s3 + $0x168] sm:$0xff]
          %v5415 = vld [vmem:[%s3 + $0x170] sm:$0xff]
          %v5416 = vld [vmem:[%s3 + $0x178] sm:$0xff]
          %v5417 = vld [vmem:[%s3 + $0x180] sm:$0xff]
          %v5418 = vld [vmem:[%s3 + $0x188] sm:$0xff]
          %v5419 = vld [vmem:[%s3 + $0x190] sm:$0xff]
          %v5420 = vld [vmem:[%s3 + $0x198] sm:$0xff]
          %v5421 = vld [vmem:[%s3 + $0x1a0] sm:$0xff]
          %v5422 = vld [vmem:[%s3 + $0x1a8] sm:$0xff]
          %v5423 = vld [vmem:[%s3 + $0x1b0] sm:$0xff]
          %v5424 = vld [vmem:[%s3 + $0x1b8] sm:$0xff]
          %v5425 = vld [vmem:[%s3 + $0x1c0] sm:$0xff]
          %v5426 = vld [vmem:[%s3 + $0x1c8] sm:$0xff]
          %v5427 = vld [vmem:[%s3 + $0x1d0] sm:$0xff]
          %v5428 = vld [vmem:[%s3 + $0x1d8] sm:$0xff]
          %v5429 = vld [vmem:[%s3 + $0x1e0] sm:$0xff]
          %v5430 = vld [vmem:[%s3 + $0x1e8] sm:$0xff]
          %v5431 = vld [vmem:[%s3 + $0x1f0] sm:$0xff]
          %v5432 = vld [vmem:[%s3 + $0x1f8] sm:$0xff]
          %v5433 = vld [vmem:[%s3 + $0x200] sm:$0xff]
          %v5434 = vld [vmem:[%s3 + $0x208] sm:$0xff]
          %v5435 = vld [vmem:[%s3 + $0x210] sm:$0xff]
          %v5436 = vld [vmem:[%s3 + $0x218] sm:$0xff]
          %v5437 = vld [vmem:[%s3 + $0x220] sm:$0xff]
          %v5438 = vld [vmem:[%s3 + $0x228] sm:$0xff]
          %v5439 = vld [vmem:[%s3 + $0x230] sm:$0xff]
          %v5440 = vld [vmem:[%s3 + $0x238] sm:$0xff]
          %v5441 = vld [vmem:[%s3 + $0x240] sm:$0xff]
          %v5442 = vld [vmem:[%s3 + $0x248] sm:$0xff]
          %v5443 = vld [vmem:[%s3 + $0x250] sm:$0xff]
          %v5444 = vld [vmem:[%s3 + $0x258] sm:$0xff]
          %v5445 = vld [vmem:[%s3 + $0x260] sm:$0xff]
          %v5446 = vld [vmem:[%s3 + $0x268] sm:$0xff]
          %v5447 = vld [vmem:[%s3 + $0x270] sm:$0xff]
          %v5448 = vld [vmem:[%s3 + $0x278] sm:$0xff]
          %v5449 = vld [vmem:[%s3 + $0x280] sm:$0xff]
          %v5450 = vld [vmem:[%s3 + $0x288] sm:$0xff]
          %v5451 = vld [vmem:[%s3 + $0x290] sm:$0xff]
          %v5452 = vld [vmem:[%s3 + $0x298] sm:$0xff]
          %v5453 = vld [vmem:[%s3 + $0x2a0] sm:$0xff]
          %v5454 = vld [vmem:[%s3 + $0x2a8] sm:$0xff]
          %v5455 = vld [vmem:[%s3 + $0x2b0] sm:$0xff]
          %v5456 = vld [vmem:[%s3 + $0x2b8] sm:$0xff]
          %v5457 = vld [vmem:[%s3 + $0x2c0] sm:$0xff]
          %v5458 = vld [vmem:[%s3 + $0x2c8] sm:$0xff]
          %v5459 = vld [vmem:[%s3 + $0x2d0] sm:$0xff]
          %v5460 = vld [vmem:[%s3 + $0x2d8] sm:$0xff]
          %v5461 = vld [vmem:[%s3 + $0x2e0] sm:$0xff]
          %v5462 = vld [vmem:[%s3 + $0x2e8] sm:$0xff]
          %v5463 = vld [vmem:[%s3 + $0x2f0] sm:$0xff]
          %v5464 = vld [vmem:[%s3 + $0x2f8] sm:$0xff]
          %v5465 = vld [vmem:[%s3 + $0x300] sm:$0xff]
          %v5466 = vld [vmem:[%s3 + $0x308] sm:$0xff]
          %v5467 = vld [vmem:[%s3 + $0x310] sm:$0xff]
          %v5468 = vld [vmem:[%s3 + $0x318] sm:$0xff]
          %v5469 = vld [vmem:[%s3 + $0x320] sm:$0xff]
          %v5470 = vld [vmem:[%s3 + $0x328] sm:$0xff]
          %v5471 = vld [vmem:[%s3 + $0x330] sm:$0xff]
          %v5472 = vld [vmem:[%s3 + $0x338] sm:$0xff]
          %v5473 = vld [vmem:[%s3 + $0x340] sm:$0xff]
          %v5474 = vld [vmem:[%s3 + $0x348] sm:$0xff]
          %v5475 = vld [vmem:[%s3 + $0x350] sm:$0xff]
          %v5476 = vld [vmem:[%s3 + $0x358] sm:$0xff]
          %v5477 = vld [vmem:[%s3 + $0x360] sm:$0xff]
          %v5478 = vld [vmem:[%s3 + $0x368] sm:$0xff]
          %v5479 = vld [vmem:[%s3 + $0x370] sm:$0xff]
          %v5480 = vld [vmem:[%s3 + $0x378] sm:$0xff]
          %v5481 = vld [vmem:[%s3 + $0x380] sm:$0xff]
          %v5482 = vld [vmem:[%s3 + $0x388] sm:$0xff]
          %v5483 = vld [vmem:[%s3 + $0x390] sm:$0xff]
          %v5484 = vld [vmem:[%s3 + $0x398] sm:$0xff]
          %v5485 = vld [vmem:[%s3 + $0x3a0] sm:$0xff]
          %v5486 = vld [vmem:[%s3 + $0x3a8] sm:$0xff]
          %v5487 = vld [vmem:[%s3 + $0x3b0] sm:$0xff]
          %v5488 = vld [vmem:[%s3 + $0x3b8] sm:$0xff]
          %v5489 = vld [vmem:[%s3 + $0x3c0] sm:$0xff]
          %v5490 = vld [vmem:[%s3 + $0x3c8] sm:$0xff]
          %v5491 = vld [vmem:[%s3 + $0x3d0] sm:$0xff]
          %v5492 = vld [vmem:[%s3 + $0x3d8] sm:$0xff]
          %v5493 = vld [vmem:[%s3 + $0x3e0] sm:$0xff]
          %v5494 = vld [vmem:[%s3 + $0x3e8] sm:$0xff]
          %v5495 = vld [vmem:[%s3 + $0x3f0] sm:$0xff]
          %v5496 = vld [vmem:[%s3 + $0x3f8] sm:$0xff]
          %v5497 = vld [vmem:[%s3 + $0x400] sm:$0xff]
          %v5498 = vld [vmem:[%s3 + $0x408] sm:$0xff]
          %v5499 = vld [vmem:[%s3 + $0x410] sm:$0xff]
          %v5500 = vld [vmem:[%s3 + $0x418] sm:$0xff]
          %v5501 = vld [vmem:[%s3 + $0x420] sm:$0xff]
          %v5502 = vld [vmem:[%s3 + $0x428] sm:$0xff]
          %v5503 = vld [vmem:[%s3 + $0x430] sm:$0xff]
          %v5504 = vld [vmem:[%s3 + $0x438] sm:$0xff]
          %v5505 = vld [vmem:[%s3 + $0x440] sm:$0xff]
          %v5506 = vld [vmem:[%s3 + $0x448] sm:$0xff]
          %v5507 = vld [vmem:[%s3 + $0x450] sm:$0xff]
          %v5508 = vld [vmem:[%s3 + $0x458] sm:$0xff]
          %v5509 = vld [vmem:[%s3 + $0x460] sm:$0xff]
          %v5510 = vld [vmem:[%s3 + $0x468] sm:$0xff]
          %v5511 = vld [vmem:[%s3 + $0x470] sm:$0xff]
          %v5512 = vld [vmem:[%s3 + $0x478] sm:$0xff]
          %v5513 = vld [vmem:[%s3 + $0x480] sm:$0xff]
          %v5514 = vld [vmem:[%s3 + $0x488] sm:$0xff]
          %v5515 = vld [vmem:[%s3 + $0x490] sm:$0xff]
          %v5516 = vld [vmem:[%s3 + $0x498] sm:$0xff]
          %v5517 = vld [vmem:[%s3 + $0x4a0] sm:$0xff]
          %v5518 = vld [vmem:[%s3 + $0x4a8] sm:$0xff]
          %v5519 = vld [vmem:[%s3 + $0x4b0] sm:$0xff]
          %v5520 = vld [vmem:[%s3 + $0x4b8] sm:$0xff]
          %v5521 = vld [vmem:[%s3 + $0x4c0] sm:$0xff]
          %v5522 = vld [vmem:[%s3 + $0x4c8] sm:$0xff]
          %v5523 = vld [vmem:[%s3 + $0x4d0] sm:$0xff]
          %v5524 = vld [vmem:[%s3 + $0x4d8] sm:$0xff]
          %v5525 = vld [vmem:[%s3 + $0x4e0] sm:$0xff]
          %v5526 = vld [vmem:[%s3 + $0x4e8] sm:$0xff]
          %v5527 = vld [vmem:[%s3 + $0x4f0] sm:$0xff]
          %v5528 = vld [vmem:[%s3 + $0x4f8] sm:$0xff]
          %v5529 = vld [vmem:[%s3 + $0x500] sm:$0xff]
          %v5530 = vld [vmem:[%s3 + $0x508] sm:$0xff]
          %v5531 = vld [vmem:[%s3 + $0x510] sm:$0xff]
          %v5532 = vld [vmem:[%s3 + $0x518] sm:$0xff]
          %v5533 = vld [vmem:[%s3 + $0x520] sm:$0xff]
          %v5534 = vld [vmem:[%s3 + $0x528] sm:$0xff]
          %v5535 = vld [vmem:[%s3 + $0x530] sm:$0xff]
          %v5536 = vld [vmem:[%s3 + $0x538] sm:$0xff]
          %v5537 = vld [vmem:[%s3 + $0x540] sm:$0xff]
          %v5538 = vld [vmem:[%s3 + $0x548] sm:$0xff]
          %v5539 = vld [vmem:[%s3 + $0x550] sm:$0xff]
          %v5540 = vld [vmem:[%s3 + $0x558] sm:$0xff]
          %v5541 = vld [vmem:[%s3 + $0x560] sm:$0xff]
          %v5542 = vld [vmem:[%s3 + $0x568] sm:$0xff]
          %v5543 = vld [vmem:[%s3 + $0x570] sm:$0xff]
          %v5544 = vld [vmem:[%s3 + $0x578] sm:$0xff]
          %v5545 = vld [vmem:[%s3 + $0x580] sm:$0xff]
          %v5546 = vld [vmem:[%s3 + $0x588] sm:$0xff]
          %v5547 = vld [vmem:[%s3 + $0x590] sm:$0xff]
          %v5548 = vld [vmem:[%s3 + $0x598] sm:$0xff]
          %v5549 = vld [vmem:[%s3 + $0x5a0] sm:$0xff]
          %v5550 = vld [vmem:[%s3 + $0x5a8] sm:$0xff]
          %v5551 = vld [vmem:[%s3 + $0x5b0] sm:$0xff]
          %v5552 = vld [vmem:[%s3 + $0x5b8] sm:$0xff]
          %v5553 = vld [vmem:[%s3 + $0x5c0] sm:$0xff]
          %v5554 = vld [vmem:[%s3 + $0x5c8] sm:$0xff]
          %v5555 = vld [vmem:[%s3 + $0x5d0] sm:$0xff]
          %v5556 = vld [vmem:[%s3 + $0x5d8] sm:$0xff]
          %v5557 = vld [vmem:[%s3 + $0x5e0] sm:$0xff]
          %v5558 = vld [vmem:[%s3 + $0x5e8] sm:$0xff]
          %v5559 = vld [vmem:[%s3 + $0x5f0] sm:$0xff]
          %v5560 = vld [vmem:[%s3 + $0x5f8] sm:$0xff]
          %v5561 = vld [vmem:[%s3 + $0x600] sm:$0xff]
          %v5562 = vld [vmem:[%s3 + $0x608] sm:$0xff]
          %v5563 = vld [vmem:[%s3 + $0x610] sm:$0xff]
          %v5564 = vld [vmem:[%s3 + $0x618] sm:$0xff]
          %v5565 = vld [vmem:[%s3 + $0x620] sm:$0xff]
          %v5566 = vld [vmem:[%s3 + $0x628] sm:$0xff]
          %v5567 = vld [vmem:[%s3 + $0x630] sm:$0xff]
          %v5568 = vld [vmem:[%s3 + $0x638] sm:$0xff]
          %v5569 = vld [vmem:[%s3 + $0x640] sm:$0xff]
          %v5570 = vld [vmem:[%s3 + $0x648] sm:$0xff]
          %v5571 = vld [vmem:[%s3 + $0x650] sm:$0xff]
          %v5572 = vld [vmem:[%s3 + $0x658] sm:$0xff]
          %v5573 = vld [vmem:[%s3 + $0x660] sm:$0xff]
          %v5574 = vld [vmem:[%s3 + $0x668] sm:$0xff]
          %v5575 = vld [vmem:[%s3 + $0x670] sm:$0xff]
          %v5576 = vld [vmem:[%s3 + $0x678] sm:$0xff]
          %v5577 = vld [vmem:[%s3 + $0x680] sm:$0xff]
          %v5578 = vld [vmem:[%s3 + $0x688] sm:$0xff]
          %v5579 = vld [vmem:[%s3 + $0x690] sm:$0xff]
          %v5580 = vld [vmem:[%s3 + $0x698] sm:$0xff]
          %v5581 = vld [vmem:[%s3 + $0x6a0] sm:$0xff]
          %v5582 = vld [vmem:[%s3 + $0x6a8] sm:$0xff]
          %v5583 = vld [vmem:[%s3 + $0x6b0] sm:$0xff]
          %v5584 = vld [vmem:[%s3 + $0x6b8] sm:$0xff]
          %v5585 = vld [vmem:[%s3 + $0x6c0] sm:$0xff]
          %v5586 = vld [vmem:[%s3 + $0x6c8] sm:$0xff]
          %v5587 = vld [vmem:[%s3 + $0x6d0] sm:$0xff]
          %v5588 = vld [vmem:[%s3 + $0x6d8] sm:$0xff]
          %v5589 = vld [vmem:[%s3 + $0x6e0] sm:$0xff]
          %v5590 = vld [vmem:[%s3 + $0x6e8] sm:$0xff]
          %v5591 = vld [vmem:[%s3 + $0x6f0] sm:$0xff]
          %v5592 = vld [vmem:[%s3 + $0x6f8] sm:$0xff]
          %v5593 = vld [vmem:[%s3 + $0x700] sm:$0xff]
          %v5594 = vld [vmem:[%s3 + $0x708] sm:$0xff]
          %v5595 = vld [vmem:[%s3 + $0x710] sm:$0xff]
          %v5596 = vld [vmem:[%s3 + $0x718] sm:$0xff]
          %v5597 = vld [vmem:[%s3 + $0x720] sm:$0xff]
          %v5598 = vld [vmem:[%s3 + $0x728] sm:$0xff]
          %v5599 = vld [vmem:[%s3 + $0x730] sm:$0xff]
          %v5600 = vld [vmem:[%s3 + $0x738] sm:$0xff]
          %v5601 = vld [vmem:[%s3 + $0x740] sm:$0xff]
          %v5602 = vld [vmem:[%s3 + $0x748] sm:$0xff]
          %v5603 = vld [vmem:[%s3 + $0x750] sm:$0xff]
          %v5604 = vld [vmem:[%s3 + $0x758] sm:$0xff]
          %v5605 = vld [vmem:[%s3 + $0x760] sm:$0xff]
          %v5606 = vld [vmem:[%s3 + $0x768] sm:$0xff]
          %v5607 = vld [vmem:[%s3 + $0x770] sm:$0xff]
          %v5608 = vld [vmem:[%s3 + $0x778] sm:$0xff]
          %v5609 = vld [vmem:[%s3 + $0x780] sm:$0xff]
          %v5610 = vld [vmem:[%s3 + $0x788] sm:$0xff]
          %v5611 = vld [vmem:[%s3 + $0x790] sm:$0xff]
          %v5612 = vld [vmem:[%s3 + $0x798] sm:$0xff]
          %v5613 = vld [vmem:[%s3 + $0x7a0] sm:$0xff]
          %v5614 = vld [vmem:[%s3 + $0x7a8] sm:$0xff]
          %v5615 = vld [vmem:[%s3 + $0x7b0] sm:$0xff]
          %v5616 = vld [vmem:[%s3 + $0x7b8] sm:$0xff]
          %v5617 = vld [vmem:[%s3 + $0x7c0] sm:$0xff]
          %v5618 = vld [vmem:[%s3 + $0x7c8] sm:$0xff]
          %v5619 = vld [vmem:[%s3 + $0x7d0] sm:$0xff]
          %v5620 = vld [vmem:[%s3 + $0x7d8] sm:$0xff]
          %v5621 = vld [vmem:[%s3 + $0x7e0] sm:$0xff]
          %v5622 = vld [vmem:[%s3 + $0x7e8] sm:$0xff]
          %v5623 = vld [vmem:[%s3 + $0x7f0] sm:$0xff]
          %v5624 = vld [vmem:[%s3 + $0x7f8] sm:$0xff]
          %v5625 = vld [vmem:[%s3 + $0x800] sm:$0xff]
          %v5626 = vld [vmem:[%s3 + $0x808] sm:$0xff]
          %v5627 = vld [vmem:[%s3 + $0x810] sm:$0xff]
          %v5628 = vld [vmem:[%s3 + $0x818] sm:$0xff]
          %v5629 = vld [vmem:[%s3 + $0x820] sm:$0xff]
          %v5630 = vld [vmem:[%s3 + $0x828] sm:$0xff]
          %v5631 = vld [vmem:[%s3 + $0x830] sm:$0xff]
          %v5632 = vld [vmem:[%s3 + $0x838] sm:$0xff]
          %v5633 = vld [vmem:[%s3 + $0x840] sm:$0xff]
          %v5634 = vld [vmem:[%s3 + $0x848] sm:$0xff]
          %v5635 = vld [vmem:[%s3 + $0x850] sm:$0xff]
          %v5636 = vld [vmem:[%s3 + $0x858] sm:$0xff]
          %v5637 = vld [vmem:[%s3 + $0x860] sm:$0xff]
          %v5638 = vld [vmem:[%s3 + $0x868] sm:$0xff]
          %v5639 = vld [vmem:[%s3 + $0x870] sm:$0xff]
          %v5640 = vld [vmem:[%s3 + $0x878] sm:$0xff]
          %v5641 = vld [vmem:[%s3 + $0x880] sm:$0xff]
          %v5642 = vld [vmem:[%s3 + $0x888] sm:$0xff]
          %v5643 = vld [vmem:[%s3 + $0x890] sm:$0xff]
          %v5644 = vld [vmem:[%s3 + $0x898] sm:$0xff]
          %v5645 = vld [vmem:[%s3 + $0x8a0] sm:$0xff]
          %v5646 = vld [vmem:[%s3 + $0x8a8] sm:$0xff]
          %v5647 = vld [vmem:[%s3 + $0x8b0] sm:$0xff]
          %v5648 = vld [vmem:[%s3 + $0x8b8] sm:$0xff]
          %v5649 = vld [vmem:[%s3 + $0x8c0] sm:$0xff]
          %v5650 = vld [vmem:[%s3 + $0x8c8] sm:$0xff]
          %v5651 = vld [vmem:[%s3 + $0x8d0] sm:$0xff]
          %v5652 = vld [vmem:[%s3 + $0x8d8] sm:$0xff]
          %v5653 = vld [vmem:[%s3 + $0x8e0] sm:$0xff]
          %v5654 = vld [vmem:[%s3 + $0x8e8] sm:$0xff]
          %v5655 = vld [vmem:[%s3 + $0x8f0] sm:$0xff]
          %v5656 = vld [vmem:[%s3 + $0x8f8] sm:$0xff]
          %v5657 = vld [vmem:[%s3 + $0x900] sm:$0xff]
          %v5658 = vld [vmem:[%s3 + $0x908] sm:$0xff]
          %v5659 = vld [vmem:[%s3 + $0x910] sm:$0xff]
          %v5660 = vld [vmem:[%s3 + $0x918] sm:$0xff]
          %v5661 = vld [vmem:[%s3 + $0x920] sm:$0xff]
          %v5662 = vld [vmem:[%s3 + $0x928] sm:$0xff]
          %v5663 = vld [vmem:[%s3 + $0x930] sm:$0xff]
          %v5664 = vld [vmem:[%s3 + $0x938] sm:$0xff]
          %v5665 = vld [vmem:[%s3 + $0x940] sm:$0xff]
          %v5666 = vld [vmem:[%s3 + $0x948] sm:$0xff]
          %v5667 = vld [vmem:[%s3 + $0x950] sm:$0xff]
          %v5668 = vld [vmem:[%s3 + $0x958] sm:$0xff]
          %v5669 = vld [vmem:[%s3 + $0x960] sm:$0xff]
          %v5670 = vld [vmem:[%s3 + $0x968] sm:$0xff]
          %v5671 = vld [vmem:[%s3 + $0x970] sm:$0xff]
          %v5672 = vld [vmem:[%s3 + $0x978] sm:$0xff]
          %v5673 = vld [vmem:[%s3 + $0x980] sm:$0xff]
          %v5674 = vld [vmem:[%s3 + $0x988] sm:$0xff]
          %v5675 = vld [vmem:[%s3 + $0x990] sm:$0xff]
          %v5676 = vld [vmem:[%s3 + $0x998] sm:$0xff]
          %v5677 = vld [vmem:[%s3 + $0x9a0] sm:$0xff]
          %v5678 = vld [vmem:[%s3 + $0x9a8] sm:$0xff]
          %v5679 = vld [vmem:[%s3 + $0x9b0] sm:$0xff]
          %v5680 = vld [vmem:[%s3 + $0x9b8] sm:$0xff]
          %v5681 = vld [vmem:[%s3 + $0x9c0] sm:$0xff]
          %v5682 = vld [vmem:[%s3 + $0x9c8] sm:$0xff]
          %v5683 = vld [vmem:[%s3 + $0x9d0] sm:$0xff]
          %v5684 = vld [vmem:[%s3 + $0x9d8] sm:$0xff]
          %v5685 = vld [vmem:[%s3 + $0x9e0] sm:$0xff]
          %v5686 = vld [vmem:[%s3 + $0x9e8] sm:$0xff]
          %v5687 = vld [vmem:[%s3 + $0x9f0] sm:$0xff]
          %v5688 = vld [vmem:[%s3 + $0x9f8] sm:$0xff]
          %v5689 = vld [vmem:[%s3 + $0xa00] sm:$0xff]
          %v5690 = vld [vmem:[%s3 + $0xa08] sm:$0xff]
          %v5691 = vld [vmem:[%s3 + $0xa10] sm:$0xff]
          %v5692 = vld [vmem:[%s3 + $0xa18] sm:$0xff]
          %v5693 = vld [vmem:[%s3 + $0xa20] sm:$0xff]
          %v5694 = vld [vmem:[%s3 + $0xa28] sm:$0xff]
          %v5695 = vld [vmem:[%s3 + $0xa30] sm:$0xff]
          %v5696 = vld [vmem:[%s3 + $0xa38] sm:$0xff]
          %v5697 = vld [vmem:[%s3 + $0xa40] sm:$0xff]
          %v5698 = vld [vmem:[%s3 + $0xa48] sm:$0xff]
          %v5699 = vld [vmem:[%s3 + $0xa50] sm:$0xff]
          %v5700 = vld [vmem:[%s3 + $0xa58] sm:$0xff]
          %v5701 = vld [vmem:[%s3 + $0xa60] sm:$0xff]
          %v5702 = vld [vmem:[%s3 + $0xa68] sm:$0xff]
          %v5703 = vld [vmem:[%s3 + $0xa70] sm:$0xff]
          %v5704 = vld [vmem:[%s3 + $0xa78] sm:$0xff]
          %v5705 = vld [vmem:[%s3 + $0xa80] sm:$0xff]
          %v5706 = vld [vmem:[%s3 + $0xa88] sm:$0xff]
          %v5707 = vld [vmem:[%s3 + $0xa90] sm:$0xff]
          %v5708 = vld [vmem:[%s3 + $0xa98] sm:$0xff]
          %v5709 = vld [vmem:[%s3 + $0xaa0] sm:$0xff]
          %v5710 = vld [vmem:[%s3 + $0xaa8] sm:$0xff]
          %v5711 = vld [vmem:[%s3 + $0xab0] sm:$0xff]
          %v5712 = vld [vmem:[%s3 + $0xab8] sm:$0xff]
          %v5713 = vld [vmem:[%s3 + $0xac0] sm:$0xff]
          %v5714 = vld [vmem:[%s3 + $0xac8] sm:$0xff]
          %v5715 = vld [vmem:[%s3 + $0xad0] sm:$0xff]
          %v5716 = vld [vmem:[%s3 + $0xad8] sm:$0xff]
          %v5717 = vld [vmem:[%s3 + $0xae0] sm:$0xf]
          %v5718 = vld [vmem:[%s3 + $0xae8] sm:$0xf]
          %v5719 = vld [vmem:[%s3 + $0xaf0] sm:$0xf]
          %v5720 = vld [vmem:[%s3 + $0xaf8] sm:$0xf]
          %v5721 = vld [vmem:[%s4] sm:$0xf]
          %v5723 = vlaneseq
          %v5724 = vshrl.u32 %v5723, 7
          %v5725 = vsub.s32 0, %v5724
          %v5726 = vrot.slane %v5721, %v5725
          %v5727 = vlaneseq
          %v5728 = vshrl.u32 %v5727, 7
          %v5729 = vsub.s32 1, %v5728
          %v5730 = vrot.slane %v5721, %v5729
          %v5731 = vlaneseq
          %v5732 = vshrl.u32 %v5731, 7
          %v5733 = vsub.s32 2, %v5732
          %v5734 = vrot.slane %v5721, %v5733
          %v5735 = vlaneseq
          %v5736 = vshrl.u32 %v5735, 7
          %v5737 = vsub.s32 3, %v5736
          %v5738 = vrot.slane %v5721, %v5737
          %v5744 = vsel %vm5313, %v5368, 0
          %vm5746 = vcmask 1043456
          %v5748 = vsel %vm5746, %v5717, 0
          %v5751 = vsel %vm5746, %v5718, 0
          %v5754 = vsel %vm5746, %v5719, 0
          %v5757 = vsel %vm5746, %v5720, 0
          %5759 = vmatprep.subr.mxu0 %v5370
          %5760 = vmatpush1.msra.mxu0 %v5369
          %5761 = vmatprep.subr.mxu0 %v5374
          %5762 = vmatpush1.msra.mxu0 %v5373
          %5763 = vmatprep.subr.mxu0 %v5378
          %5764 = vmatpush1.msra.mxu0 %v5377
          %5765 = vmatprep.subr.mxu0 %v5382
          %5766 = vmatpush1.msra.mxu0 %v5381
          %5767 = vmatprep.subr.mxu0 %v5386
          %5768 = vmatpush1.msra.mxu0 %v5385
          %5769 = vmatprep.subr.mxu0 %v5390
          %5770 = vmatpush1.msra.mxu0 %v5389
          %5771 = vmatprep.subr.mxu0 %v5394
          %5772 = vmatpush1.msra.mxu0 %v5393
          %5773 = vmatprep.subr.mxu0 %v5398
          %5774 = vmatpush1.msra.mxu0 %v5397
          %5775 = vmatprep.subr.mxu0 %v5402
          %5776 = vmatpush1.msra.mxu0 %v5401
          %5777 = vmatprep.subr.mxu0 %v5406
          %5778 = vmatpush1.msra.mxu0 %v5405
          %5779 = vmatprep.subr.mxu0 %v5410
          %5780 = vmatpush1.msra.mxu0 %v5409
          %5781 = vmatprep.subr.mxu0 %v5414
          %5782 = vmatpush1.msra.mxu0 %v5413
          %5783 = vmatprep.subr.mxu0 %v5418
          %5784 = vmatpush1.msra.mxu0 %v5417
          %5785 = vmatprep.subr.mxu0 %v5422
          %5786 = vmatpush1.msra.mxu0 %v5421
          %5787 = vmatprep.subr.mxu0 %v5426
          %5788 = vmatpush1.msra.mxu0 %v5425
          %5789 = vmatprep.subr.mxu0 %v5430
          %5790 = vmatpush1.msra.mxu0 %v5429
          %5791 = vmatprep.subr.mxu0 %v5434
          %5792 = vmatpush1.msra.mxu0 %v5433
          %5793 = vmatprep.subr.mxu0 %v5438
          %5794 = vmatpush1.msra.mxu0 %v5437
          %5795 = vmatprep.subr.mxu0 %v5442
          %5796 = vmatpush1.msra.mxu0 %v5441
          %5797 = vmatprep.subr.mxu0 %v5446
          %5798 = vmatpush1.msra.mxu0 %v5445
          %5799 = vmatprep.subr.mxu0 %v5450
          %5800 = vmatpush1.msra.mxu0 %v5449
          %5801 = vmatprep.subr.mxu0 %v5454
          %5802 = vmatpush1.msra.mxu0 %v5453
          %5803 = vmatprep.subr.mxu0 %v5458
          %5804 = vmatpush1.msra.mxu0 %v5457
          %5805 = vmatprep.subr.mxu0 %v5462
          %5806 = vmatpush1.msra.mxu0 %v5461
          %5807 = vmatprep.subr.mxu0 %v5466
          %5808 = vmatpush1.msra.mxu0 %v5465
          %5809 = vmatprep.subr.mxu0 %v5470
          %5810 = vmatpush1.msra.mxu0 %v5469
          %5811 = vmatprep.subr.mxu0 %v5474
          %5812 = vmatpush1.msra.mxu0 %v5473
          %5813 = vmatprep.subr.mxu0 %v5478
          %5814 = vmatpush1.msra.mxu0 %v5477
          %5815 = vmatprep.subr.mxu0 %v5482
          %5816 = vmatpush1.msra.mxu0 %v5481
          %5817 = vmatprep.subr.mxu0 %v5486
          %5818 = vmatpush1.msra.mxu0 %v5485
          %5819 = vmatprep.subr.mxu0 %v5490
          %5820 = vmatpush1.msra.mxu0 %v5489
          %5821 = vmatprep.subr.mxu0 %v5494
          %5822 = vmatpush1.msra.mxu0 %v5493
          %5823 = vmatprep.mubr.f32.mxu0 %v5364
          %5824 = vmatmul.mubr.f32.gmra.mrb[0].mxu0 %v5363
          %v5825 = vpop.f32.mrb[0].mxu0
          %v5826 = vadd.f32 %v5726, %v5825
          %v5827 = vpop.f32.mrb[0].mxu0
          %v5828 = vadd.f32 %v5730, %v5827
          %5829 = vdwg.mxu0
          %5830 = vmatprep.subr.mxu0 %v5498
          %5831 = vmatpush1.msra.mxu0 %v5497
          %5832 = vmatprep.subr.mxu0 %v5502
          %5833 = vmatpush1.msra.mxu0 %v5501
          %5834 = vmatprep.subr.mxu0 %v5506
          %5835 = vmatpush1.msra.mxu0 %v5505
          %5836 = vmatprep.subr.mxu0 %v5510
          %5837 = vmatpush1.msra.mxu0 %v5509
          %5838 = vmatprep.subr.mxu0 %v5514
          %5839 = vmatpush1.msra.mxu0 %v5513
          %5840 = vmatprep.subr.mxu0 %v5518
          %5841 = vmatpush1.msra.mxu0 %v5517
          %5842 = vmatprep.subr.mxu0 %v5522
          %5843 = vmatpush1.msra.mxu0 %v5521
          %5844 = vmatprep.subr.mxu0 %v5526
          %5845 = vmatpush1.msra.mxu0 %v5525
          %5846 = vmatprep.subr.mxu0 %v5530
          %5847 = vmatpush1.msra.mxu0 %v5529
          %5848 = vmatprep.subr.mxu0 %v5534
          %5849 = vmatpush1.msra.mxu0 %v5533
          %5850 = vmatprep.subr.mxu0 %v5538
          %5851 = vmatpush1.msra.mxu0 %v5537
          %5852 = vmatprep.subr.mxu0 %v5542
          %5853 = vmatpush1.msra.mxu0 %v5541
          %5854 = vmatprep.subr.mxu0 %v5546
          %5855 = vmatpush1.msra.mxu0 %v5545
          %5856 = vmatprep.subr.mxu0 %v5550
          %5857 = vmatpush1.msra.mxu0 %v5549
          %5858 = vmatprep.subr.mxu0 %v5554
          %5859 = vmatpush1.msra.mxu0 %v5553
          %5860 = vmatprep.subr.mxu0 %v5558
          %5861 = vmatpush1.msra.mxu0 %v5557
          %5862 = vmatprep.subr.mxu0 %v5562
          %5863 = vmatpush1.msra.mxu0 %v5561
          %5864 = vmatprep.subr.mxu0 %v5566
          %5865 = vmatpush1.msra.mxu0 %v5565
          %5866 = vmatprep.subr.mxu0 %v5570
          %5867 = vmatpush1.msra.mxu0 %v5569
          %5868 = vmatprep.subr.mxu0 %v5574
          %5869 = vmatpush1.msra.mxu0 %v5573
          %5870 = vmatprep.subr.mxu0 %v5578
          %5871 = vmatpush1.msra.mxu0 %v5577
          %5872 = vmatprep.subr.mxu0 %v5582
          %5873 = vmatpush1.msra.mxu0 %v5581
          %5874 = vmatprep.subr.mxu0 %v5586
          %5875 = vmatpush1.msra.mxu0 %v5585
          %5876 = vmatprep.subr.mxu0 %v5590
          %5877 = vmatpush1.msra.mxu0 %v5589
          %5878 = vmatprep.subr.mxu0 %v5594
          %5879 = vmatpush1.msra.mxu0 %v5593
          %5880 = vmatprep.subr.mxu0 %v5598
          %5881 = vmatpush1.msra.mxu0 %v5597
          %5882 = vmatprep.subr.mxu0 %v5602
          %5883 = vmatpush1.msra.mxu0 %v5601
          %5884 = vmatprep.subr.mxu0 %v5606
          %5885 = vmatpush1.msra.mxu0 %v5605
          %5886 = vmatprep.subr.mxu0 %v5610
          %5887 = vmatpush1.msra.mxu0 %v5609
          %5888 = vmatprep.subr.mxu0 %v5614
          %5889 = vmatpush1.msra.mxu0 %v5613
          %5890 = vmatprep.subr.mxu0 %v5618
          %5891 = vmatpush1.msra.mxu0 %v5617
          %5892 = vmatprep.subr.mxu0 %v5622
          %5893 = vmatpush1.msra.mxu0 %v5621
          %5894 = vmatprep.mubr.f32.mxu0 %v5366
          %5895 = vmatmul.mubr.f32.gmra.mrb[0].mxu0 %v5365
          %v5896 = vpop.f32.mrb[0].mxu0
          %v5897 = vadd.f32 %v5826, %v5896
          %v5898 = vpop.f32.mrb[0].mxu0
          %v5899 = vadd.f32 %v5828, %v5898
          %5900 = vdwg.mxu0
          %5901 = vmatprep.subr.mxu0 %v5626
          %5902 = vmatpush1.msra.mxu0 %v5625
          %5903 = vmatprep.subr.mxu0 %v5630
          %5904 = vmatpush1.msra.mxu0 %v5629
          %5905 = vmatprep.subr.mxu0 %v5634
          %5906 = vmatpush1.msra.mxu0 %v5633
          %5907 = vmatprep.subr.mxu0 %v5638
          %5908 = vmatpush1.msra.mxu0 %v5637
          %5909 = vmatprep.subr.mxu0 %v5642
          %5910 = vmatpush1.msra.mxu0 %v5641
          %5911 = vmatprep.subr.mxu0 %v5646
          %5912 = vmatpush1.msra.mxu0 %v5645
          %5913 = vmatprep.subr.mxu0 %v5650
          %5914 = vmatpush1.msra.mxu0 %v5649
          %5915 = vmatprep.subr.mxu0 %v5654
          %5916 = vmatpush1.msra.mxu0 %v5653
          %5917 = vmatprep.subr.mxu0 %v5658
          %5918 = vmatpush1.msra.mxu0 %v5657
          %5919 = vmatprep.subr.mxu0 %v5662
          %5920 = vmatpush1.msra.mxu0 %v5661
          %5921 = vmatprep.subr.mxu0 %v5666
          %5922 = vmatpush1.msra.mxu0 %v5665
          %5923 = vmatprep.subr.mxu0 %v5670
          %5924 = vmatpush1.msra.mxu0 %v5669
          %5925 = vmatprep.subr.mxu0 %v5674
          %5926 = vmatpush1.msra.mxu0 %v5673
          %5927 = vmatprep.subr.mxu0 %v5678
          %5928 = vmatpush1.msra.mxu0 %v5677
          %5929 = vmatprep.subr.mxu0 %v5682
          %5930 = vmatpush1.msra.mxu0 %v5681
          %5931 = vmatprep.subr.mxu0 %v5686
          %5932 = vmatpush1.msra.mxu0 %v5685
          %5933 = vmatprep.subr.mxu0 %v5690
          %5934 = vmatpush1.msra.mxu0 %v5689
          %5935 = vmatprep.subr.mxu0 %v5694
          %5936 = vmatpush1.msra.mxu0 %v5693
          %5937 = vmatprep.subr.mxu0 %v5698
          %5938 = vmatpush1.msra.mxu0 %v5697
          %5939 = vmatprep.subr.mxu0 %v5702
          %5940 = vmatpush1.msra.mxu0 %v5701
          %5941 = vmatprep.subr.mxu0 %v5706
          %5942 = vmatpush1.msra.mxu0 %v5705
          %5943 = vmatprep.subr.mxu0 %v5710
          %5944 = vmatpush1.msra.mxu0 %v5709
          %5945 = vmatprep.subr.mxu0 %v5714
          %5946 = vmatpush1.msra.mxu0 %v5713
          %5947 = vmatprep.subr.mxu0 %v5751
          %5948 = vmatpush1.msra.mxu0 %v5748
          %5949 = vmatprep.subr.mxu0 0.0
          %5950 = vmatpush1.msra.mxu0 0.0
          %5951 = vmatprep.subr.mxu0 0.0
          %5952 = vmatpush1.msra.mxu0 0.0
          %5953 = vmatprep.subr.mxu0 0.0
          %5954 = vmatpush1.msra.mxu0 0.0
          %5955 = vmatprep.subr.mxu0 0.0
          %5956 = vmatpush1.msra.mxu0 0.0
          %5957 = vmatprep.subr.mxu0 0.0
          %5958 = vmatpush1.msra.mxu0 0.0
          %5959 = vmatprep.subr.mxu0 0.0
          %5960 = vmatpush1.msra.mxu0 0.0
          %5961 = vmatprep.subr.mxu0 0.0
          %5962 = vmatpush1.msra.mxu0 0.0
          %5963 = vmatprep.subr.mxu0 0.0
          %5964 = vmatpush1.msra.mxu0 0.0
          %5965 = vmatprep.mubr.f32.mxu0 %v5744
          %5966 = vmatmul.mubr.f32.gmra.mrb[0].mxu0 %v5367
          %v5967 = vpop.f32.mrb[0].mxu0
          %v5968 = vadd.f32 %v5897, %v5967
          %v5969 = vpop.f32.mrb[0].mxu0
          %v5970 = vadd.f32 %v5899, %v5969
          %5971 = vdwg.mxu0
          %5972 = vmatprep.subr.mxu0 %v5372
          %5973 = vmatpush1.msra.mxu0 %v5371
          %5974 = vmatprep.subr.mxu0 %v5376
          %5975 = vmatpush1.msra.mxu0 %v5375
          %5976 = vmatprep.subr.mxu0 %v5380
          %5977 = vmatpush1.msra.mxu0 %v5379
          %5978 = vmatprep.subr.mxu0 %v5384
          %5979 = vmatpush1.msra.mxu0 %v5383
          %5980 = vmatprep.subr.mxu0 %v5388
          %5981 = vmatpush1.msra.mxu0 %v5387
          %5982 = vmatprep.subr.mxu0 %v5392
          %5983 = vmatpush1.msra.mxu0 %v5391
          %5984 = vmatprep.subr.mxu0 %v5396
          %5985 = vmatpush1.msra.mxu0 %v5395
          %5986 = vmatprep.subr.mxu0 %v5400
          %5987 = vmatpush1.msra.mxu0 %v5399
          %5988 = vmatprep.subr.mxu0 %v5404
          %5989 = vmatpush1.msra.mxu0 %v5403
          %5990 = vmatprep.subr.mxu0 %v5408
          %5991 = vmatpush1.msra.mxu0 %v5407
          %5992 = vmatprep.subr.mxu0 %v5412
          %5993 = vmatpush1.msra.mxu0 %v5411
          %5994 = vmatprep.subr.mxu0 %v5416
          %5995 = vmatpush1.msra.mxu0 %v5415
          %5996 = vmatprep.subr.mxu0 %v5420
          %5997 = vmatpush1.msra.mxu0 %v5419
          %5998 = vmatprep.subr.mxu0 %v5424
          %5999 = vmatpush1.msra.mxu0 %v5423
          %6000 = vmatprep.subr.mxu0 %v5428
          %6001 = vmatpush1.msra.mxu0 %v5427
          %6002 = vmatprep.subr.mxu0 %v5432
          %6003 = vmatpush1.msra.mxu0 %v5431
          %6004 = vmatprep.subr.mxu0 %v5436
          %6005 = vmatpush1.msra.mxu0 %v5435
          %6006 = vmatprep.subr.mxu0 %v5440
          %6007 = vmatpush1.msra.mxu0 %v5439
          %6008 = vmatprep.subr.mxu0 %v5444
          %6009 = vmatpush1.msra.mxu0 %v5443
          %6010 = vmatprep.subr.mxu0 %v5448
          %6011 = vmatpush1.msra.mxu0 %v5447
          %6012 = vmatprep.subr.mxu0 %v5452
          %6013 = vmatpush1.msra.mxu0 %v5451
          %6014 = vmatprep.subr.mxu0 %v5456
          %6015 = vmatpush1.msra.mxu0 %v5455
          %6016 = vmatprep.subr.mxu0 %v5460
          %6017 = vmatpush1.msra.mxu0 %v5459
          %6018 = vmatprep.subr.mxu0 %v5464
          %6019 = vmatpush1.msra.mxu0 %v5463
          %6020 = vmatprep.subr.mxu0 %v5468
          %6021 = vmatpush1.msra.mxu0 %v5467
          %6022 = vmatprep.subr.mxu0 %v5472
          %6023 = vmatpush1.msra.mxu0 %v5471
          %6024 = vmatprep.subr.mxu0 %v5476
          %6025 = vmatpush1.msra.mxu0 %v5475
          %6026 = vmatprep.subr.mxu0 %v5480
          %6027 = vmatpush1.msra.mxu0 %v5479
          %6028 = vmatprep.subr.mxu0 %v5484
          %6029 = vmatpush1.msra.mxu0 %v5483
          %6030 = vmatprep.subr.mxu0 %v5488
          %6031 = vmatpush1.msra.mxu0 %v5487
          %6032 = vmatprep.subr.mxu0 %v5492
          %6033 = vmatpush1.msra.mxu0 %v5491
          %6034 = vmatprep.subr.mxu0 %v5496
          %6035 = vmatpush1.msra.mxu0 %v5495
          %6036 = vmatprep.mubr.f32.mxu0 %v5364
          %6037 = vmatmul.mubr.f32.gmra.mrb[0].mxu0 %v5363
          %v6038 = vpop.f32.mrb[0].mxu0
          %v6039 = vadd.f32 %v5734, %v6038
          %v6040 = vpop.f32.mrb[0].mxu0
          %v6041 = vadd.f32 %v5738, %v6040
          %6042 = vdwg.mxu0
          %6043 = vmatprep.subr.mxu0 %v5500
          %6044 = vmatpush1.msra.mxu0 %v5499
          %6045 = vmatprep.subr.mxu0 %v5504
          %6046 = vmatpush1.msra.mxu0 %v5503
          %6047 = vmatprep.subr.mxu0 %v5508
          %6048 = vmatpush1.msra.mxu0 %v5507
          %6049 = vmatprep.subr.mxu0 %v5512
          %6050 = vmatpush1.msra.mxu0 %v5511
          %6051 = vmatprep.subr.mxu0 %v5516
          %6052 = vmatpush1.msra.mxu0 %v5515
          %6053 = vmatprep.subr.mxu0 %v5520
          %6054 = vmatpush1.msra.mxu0 %v5519
          %6055 = vmatprep.subr.mxu0 %v5524
          %6056 = vmatpush1.msra.mxu0 %v5523
          %6057 = vmatprep.subr.mxu0 %v5528
          %6058 = vmatpush1.msra.mxu0 %v5527
          %6059 = vmatprep.subr.mxu0 %v5532
          %6060 = vmatpush1.msra.mxu0 %v5531
          %6061 = vmatprep.subr.mxu0 %v5536
          %6062 = vmatpush1.msra.mxu0 %v5535
          %6063 = vmatprep.subr.mxu0 %v5540
          %6064 = vmatpush1.msra.mxu0 %v5539
          %6065 = vmatprep.subr.mxu0 %v5544
          %6066 = vmatpush1.msra.mxu0 %v5543
          %6067 = vmatprep.subr.mxu0 %v5548
          %6068 = vmatpush1.msra.mxu0 %v5547
          %6069 = vmatprep.subr.mxu0 %v5552
          %6070 = vmatpush1.msra.mxu0 %v5551
          %6071 = vmatprep.subr.mxu0 %v5556
          %6072 = vmatpush1.msra.mxu0 %v5555
          %6073 = vmatprep.subr.mxu0 %v5560
          %6074 = vmatpush1.msra.mxu0 %v5559
          %6075 = vmatprep.subr.mxu0 %v5564
          %6076 = vmatpush1.msra.mxu0 %v5563
          %6077 = vmatprep.subr.mxu0 %v5568
          %6078 = vmatpush1.msra.mxu0 %v5567
          %6079 = vmatprep.subr.mxu0 %v5572
          %6080 = vmatpush1.msra.mxu0 %v5571
          %6081 = vmatprep.subr.mxu0 %v5576
          %6082 = vmatpush1.msra.mxu0 %v5575
          %6083 = vmatprep.subr.mxu0 %v5580
          %6084 = vmatpush1.msra.mxu0 %v5579
          %6085 = vmatprep.subr.mxu0 %v5584
          %6086 = vmatpush1.msra.mxu0 %v5583
          %6087 = vmatprep.subr.mxu0 %v5588
          %6088 = vmatpush1.msra.mxu0 %v5587
          %6089 = vmatprep.subr.mxu0 %v5592
          %6090 = vmatpush1.msra.mxu0 %v5591
          %6091 = vmatprep.subr.mxu0 %v5596
          %6092 = vmatpush1.msra.mxu0 %v5595
          %6093 = vmatprep.subr.mxu0 %v5600
          %6094 = vmatpush1.msra.mxu0 %v5599
          %6095 = vmatprep.subr.mxu0 %v5604
          %6096 = vmatpush1.msra.mxu0 %v5603
          %6097 = vmatprep.subr.mxu0 %v5608
          %6098 = vmatpush1.msra.mxu0 %v5607
          %6099 = vmatprep.subr.mxu0 %v5612
          %6100 = vmatpush1.msra.mxu0 %v5611
          %6101 = vmatprep.subr.mxu0 %v5616
          %6102 = vmatpush1.msra.mxu0 %v5615
          %6103 = vmatprep.subr.mxu0 %v5620
          %6104 = vmatpush1.msra.mxu0 %v5619
          %6105 = vmatprep.subr.mxu0 %v5624
          %6106 = vmatpush1.msra.mxu0 %v5623
          %6107 = vmatprep.mubr.f32.mxu0 %v5366
          %6108 = vmatmul.mubr.f32.gmra.mrb[0].mxu0 %v5365
          %v6109 = vpop.f32.mrb[0].mxu0
          %v6110 = vadd.f32 %v6039, %v6109
          %v6111 = vpop.f32.mrb[0].mxu0
          %v6112 = vadd.f32 %v6041, %v6111
          %6113 = vdwg.mxu0
          %6114 = vmatprep.subr.mxu0 %v5628
          %6115 = vmatpush1.msra.mxu0 %v5627
          %6116 = vmatprep.subr.mxu0 %v5632
          %6117 = vmatpush1.msra.mxu0 %v5631
          %6118 = vmatprep.subr.mxu0 %v5636
          %6119 = vmatpush1.msra.mxu0 %v5635
          %6120 = vmatprep.subr.mxu0 %v5640
          %6121 = vmatpush1.msra.mxu0 %v5639
          %6122 = vmatprep.subr.mxu0 %v5644
          %6123 = vmatpush1.msra.mxu0 %v5643
          %6124 = vmatprep.subr.mxu0 %v5648
          %6125 = vmatpush1.msra.mxu0 %v5647
          %6126 = vmatprep.subr.mxu0 %v5652
          %6127 = vmatpush1.msra.mxu0 %v5651
          %6128 = vmatprep.subr.mxu0 %v5656
          %6129 = vmatpush1.msra.mxu0 %v5655
          %6130 = vmatprep.subr.mxu0 %v5660
          %6131 = vmatpush1.msra.mxu0 %v5659
          %6132 = vmatprep.subr.mxu0 %v5664
          %6133 = vmatpush1.msra.mxu0 %v5663
          %6134 = vmatprep.subr.mxu0 %v5668
          %6135 = vmatpush1.msra.mxu0 %v5667
          %6136 = vmatprep.subr.mxu0 %v5672
          %6137 = vmatpush1.msra.mxu0 %v5671
          %6138 = vmatprep.subr.mxu0 %v5676
          %6139 = vmatpush1.msra.mxu0 %v5675
          %6140 = vmatprep.subr.mxu0 %v5680
          %6141 = vmatpush1.msra.mxu0 %v5679
          %6142 = vmatprep.subr.mxu0 %v5684
          %6143 = vmatpush1.msra.mxu0 %v5683
          %6144 = vmatprep.subr.mxu0 %v5688
          %6145 = vmatpush1.msra.mxu0 %v5687
          %6146 = vmatprep.subr.mxu0 %v5692
          %6147 = vmatpush1.msra.mxu0 %v5691
          %6148 = vmatprep.subr.mxu0 %v5696
          %6149 = vmatpush1.msra.mxu0 %v5695
          %6150 = vmatprep.subr.mxu0 %v5700
          %6151 = vmatpush1.msra.mxu0 %v5699
          %6152 = vmatprep.subr.mxu0 %v5704
          %6153 = vmatpush1.msra.mxu0 %v5703
          %6154 = vmatprep.subr.mxu0 %v5708
          %6155 = vmatpush1.msra.mxu0 %v5707
          %6156 = vmatprep.subr.mxu0 %v5712
          %6157 = vmatpush1.msra.mxu0 %v5711
          %6158 = vmatprep.subr.mxu0 %v5716
          %6159 = vmatpush1.msra.mxu0 %v5715
          %6160 = vmatprep.subr.mxu0 %v5757
          %6161 = vmatpush1.msra.mxu0 %v5754
          %6162 = vmatprep.subr.mxu0 0.0
          %6163 = vmatpush1.msra.mxu0 0.0
          %6164 = vmatprep.subr.mxu0 0.0
          %6165 = vmatpush1.msra.mxu0 0.0
          %6166 = vmatprep.subr.mxu0 0.0
          %6167 = vmatpush1.msra.mxu0 0.0
          %6168 = vmatprep.subr.mxu0 0.0
          %6169 = vmatpush1.msra.mxu0 0.0
          %6170 = vmatprep.subr.mxu0 0.0
          %6171 = vmatpush1.msra.mxu0 0.0
          %6172 = vmatprep.subr.mxu0 0.0
          %6173 = vmatpush1.msra.mxu0 0.0
          %6174 = vmatprep.subr.mxu0 0.0
          %6175 = vmatpush1.msra.mxu0 0.0
          %6176 = vmatprep.subr.mxu0 0.0
          %6177 = vmatpush1.msra.mxu0 0.0
          %6178 = vmatprep.mubr.f32.mxu0 %v5744
          %6179 = vmatmul.mubr.f32.gmra.mrb[0].mxu0 %v5367
          %v6180 = vpop.f32.mrb[0].mxu0
          %v6181 = vadd.f32 %v6110, %v6180
          %v6182 = vpop.f32.mrb[0].mxu0
          %v6183 = vadd.f32 %v6112, %v6182
          %6184 = vdwg.mxu0
          %v6185 = vmax.f32 %v5968, 0.0
          %v6186 = vmax.f32 %v5970, 0.0
          %v6187 = vmax.f32 %v6181, 0.0
          %v6188 = vmax.f32 %v6183, 0.0
          %v6189 = vld [vmem:[%s5] sm:$0xff]
          %v6190 = vld [vmem:[%s5 + $0x8] sm:$0xff]
          %v6191 = vld [vmem:[%s5 + $0x10] sm:$0xff]
          %v6192 = vld [vmem:[%s5 + $0x18] sm:$0xff]
          %v6193 = vld [vmem:[%s5 + $0x20] sm:$0xff]
          %v6194 = vld [vmem:[%s5 + $0x28] sm:$0xff]
          %v6195 = vld [vmem:[%s5 + $0x30] sm:$0xff]
          %v6196 = vld [vmem:[%s5 + $0x38] sm:$0xff]
          %v6197 = vld [vmem:[%s5 + $0x40] sm:$0xff]
          %v6198 = vld [vmem:[%s5 + $0x48] sm:$0xff]
          %v6199 = vld [vmem:[%s5 + $0x50] sm:$0xff]
          %v6200 = vld [vmem:[%s5 + $0x58] sm:$0xff]
          %v6201 = vld [vmem:[%s5 + $0x60] sm:$0xff]
          %v6202 = vld [vmem:[%s5 + $0x68] sm:$0xff]
          %v6203 = vld [vmem:[%s5 + $0x70] sm:$0xff]
          %v6204 = vld [vmem:[%s5 + $0x78] sm:$0xff]
          %v6205 = vld [vmem:[%s5 + $0x80] sm:$0xff]
          %v6206 = vld [vmem:[%s5 + $0x88] sm:$0xff]
          %v6207 = vld [vmem:[%s5 + $0x90] sm:$0xff]
          %v6208 = vld [vmem:[%s5 + $0x98] sm:$0xff]
          %v6209 = vld [vmem:[%s5 + $0xa0] sm:$0xff]
          %v6210 = vld [vmem:[%s5 + $0xa8] sm:$0xff]
          %v6211 = vld [vmem:[%s5 + $0xb0] sm:$0xff]
          %v6212 = vld [vmem:[%s5 + $0xb8] sm:$0xff]
          %v6213 = vld [vmem:[%s5 + $0xc0] sm:$0xff]
          %v6214 = vld [vmem:[%s5 + $0xc8] sm:$0xff]
          %v6215 = vld [vmem:[%s5 + $0xd0] sm:$0xff]
          %v6216 = vld [vmem:[%s5 + $0xd8] sm:$0xff]
          %v6217 = vld [vmem:[%s5 + $0xe0] sm:$0xff]
          %v6218 = vld [vmem:[%s5 + $0xe8] sm:$0xff]
          %v6219 = vld [vmem:[%s5 + $0xf0] sm:$0xff]
          %v6220 = vld [vmem:[%s5 + $0xf8] sm:$0xff]
          %v6221 = vld [vmem:[%s5 + $0x100] sm:$0xff]
          %v6222 = vld [vmem:[%s5 + $0x108] sm:$0xff]
          %v6223 = vld [vmem:[%s5 + $0x110] sm:$0xff]
          %v6224 = vld [vmem:[%s5 + $0x118] sm:$0xff]
          %v6225 = vld [vmem:[%s5 + $0x120] sm:$0xff]
          %v6226 = vld [vmem:[%s5 + $0x128] sm:$0xff]
          %v6227 = vld [vmem:[%s5 + $0x130] sm:$0xff]
          %v6228 = vld [vmem:[%s5 + $0x138] sm:$0xff]
          %v6229 = vld [vmem:[%s5 + $0x140] sm:$0xff]
          %v6230 = vld [vmem:[%s5 + $0x148] sm:$0xff]
          %v6231 = vld [vmem:[%s5 + $0x150] sm:$0xff]
          %v6232 = vld [vmem:[%s5 + $0x158] sm:$0xff]
          %v6233 = vld [vmem:[%s5 + $0x160] sm:$0xff]
          %v6234 = vld [vmem:[%s5 + $0x168] sm:$0xff]
          %v6235 = vld [vmem:[%s5 + $0x170] sm:$0xff]
          %v6236 = vld [vmem:[%s5 + $0x178] sm:$0xff]
          %v6237 = vld [vmem:[%s5 + $0x180] sm:$0xff]
          %v6238 = vld [vmem:[%s5 + $0x188] sm:$0xff]
          %v6239 = vld [vmem:[%s5 + $0x190] sm:$0xff]
          %v6240 = vld [vmem:[%s5 + $0x198] sm:$0xff]
          %v6241 = vld [vmem:[%s5 + $0x1a0] sm:$0xff]
          %v6242 = vld [vmem:[%s5 + $0x1a8] sm:$0xff]
          %v6243 = vld [vmem:[%s5 + $0x1b0] sm:$0xff]
          %v6244 = vld [vmem:[%s5 + $0x1b8] sm:$0xff]
          %v6245 = vld [vmem:[%s5 + $0x1c0] sm:$0xff]
          %v6246 = vld [vmem:[%s5 + $0x1c8] sm:$0xff]
          %v6247 = vld [vmem:[%s5 + $0x1d0] sm:$0xff]
          %v6248 = vld [vmem:[%s5 + $0x1d8] sm:$0xff]
          %v6249 = vld [vmem:[%s5 + $0x1e0] sm:$0xff]
          %v6250 = vld [vmem:[%s5 + $0x1e8] sm:$0xff]
          %v6251 = vld [vmem:[%s5 + $0x1f0] sm:$0xf]
          %v6252 = vld [vmem:[%s6] sm:$0x1]
          %v6254 = vlaneseq
          %v6255 = vshrl.u32 %v6254, 7
          %v6256 = vsub.s32 0, %v6255
          %v6257 = vrot.slane %v6252, %v6256
          %vm6259 = vcmask 949248
          %v6261 = vsel %vm6259, %v6188, 0
          %v6264 = vsel %vm5746, %v6251, 0
          %6266 = vmatprep.subr.mxu0 0.0
          %6267 = vmatpush1.msra.mxu0 %v6189
          %6268 = vmatprep.subr.mxu0 0.0
          %6269 = vmatpush1.msra.mxu0 %v6190
          %6270 = vmatprep.subr.mxu0 0.0
          %6271 = vmatpush1.msra.mxu0 %v6191
          %6272 = vmatprep.subr.mxu0 0.0
          %6273 = vmatpush1.msra.mxu0 %v6192
          %6274 = vmatprep.subr.mxu0 0.0
          %6275 = vmatpush1.msra.mxu0 %v6193
          %6276 = vmatprep.subr.mxu0 0.0
          %6277 = vmatpush1.msra.mxu0 %v6194
          %6278 = vmatprep.subr.mxu0 0.0
          %6279 = vmatpush1.msra.mxu0 %v6195
          %6280 = vmatprep.subr.mxu0 0.0
          %6281 = vmatpush1.msra.mxu0 %v6196
          %6282 = vmatprep.subr.mxu0 0.0
          %6283 = vmatpush1.msra.mxu0 %v6197
          %6284 = vmatprep.subr.mxu0 0.0
          %6285 = vmatpush1.msra.mxu0 %v6198
          %6286 = vmatprep.subr.mxu0 0.0
          %6287 = vmatpush1.msra.mxu0 %v6199
          %6288 = vmatprep.subr.mxu0 0.0
          %6289 = vmatpush1.msra.mxu0 %v6200
          %6290 = vmatprep.subr.mxu0 0.0
          %6291 = vmatpush1.msra.mxu0 %v6201
          %6292 = vmatprep.subr.mxu0 0.0
          %6293 = vmatpush1.msra.mxu0 %v6202
          %6294 = vmatprep.subr.mxu0 0.0
          %6295 = vmatpush1.msra.mxu0 %v6203
          %6296 = vmatprep.subr.mxu0 0.0
          %6297 = vmatpush1.msra.mxu0 %v6204
          %6298 = vmatprep.subr.mxu0 0.0
          %6299 = vmatpush1.msra.mxu0 %v6205
          %6300 = vmatprep.subr.mxu0 0.0
          %6301 = vmatpush1.msra.mxu0 %v6206
          %6302 = vmatprep.subr.mxu0 0.0
          %6303 = vmatpush1.msra.mxu0 %v6207
          %6304 = vmatprep.subr.mxu0 0.0
          %6305 = vmatpush1.msra.mxu0 %v6208
          %6306 = vmatprep.subr.mxu0 0.0
          %6307 = vmatpush1.msra.mxu0 %v6209
          %6308 = vmatprep.subr.mxu0 0.0
          %6309 = vmatpush1.msra.mxu0 %v6210
          %6310 = vmatprep.subr.mxu0 0.0
          %6311 = vmatpush1.msra.mxu0 %v6211
          %6312 = vmatprep.subr.mxu0 0.0
          %6313 = vmatpush1.msra.mxu0 %v6212
          %6314 = vmatprep.subr.mxu0 0.0
          %6315 = vmatpush1.msra.mxu0 %v6213
          %6316 = vmatprep.subr.mxu0 0.0
          %6317 = vmatpush1.msra.mxu0 %v6214
          %6318 = vmatprep.subr.mxu0 0.0
          %6319 = vmatpush1.msra.mxu0 %v6215
          %6320 = vmatprep.subr.mxu0 0.0
          %6321 = vmatpush1.msra.mxu0 %v6216
          %6322 = vmatprep.subr.mxu0 0.0
          %6323 = vmatpush1.msra.mxu0 %v6217
          %6324 = vmatprep.subr.mxu0 0.0
          %6325 = vmatpush1.msra.mxu0 %v6218
          %6326 = vmatprep.subr.mxu0 0.0
          %6327 = vmatpush1.msra.mxu0 %v6219
          %6328 = vmatprep.subr.mxu0 0.0
          %6329 = vmatpush1.msra.mxu0 %v6220
          %6330 = vmatprep.mubr.f32.mxu0 %v6186
          %6331 = vmatmul.mubr.f32.gmra.mrb[0].mxu0 %v6185
          %v6332 = vpop.f32.mrb[0].mxu0
          %v6333 = vadd.f32 %v6257, %v6332
          %v6334 = vpop.f32.mrb[0].mxu0
          %6335 = vdwg.mxu0
          %6336 = vmatprep.subr.mxu0 0.0
          %6337 = vmatpush1.msra.mxu0 %v6221
          %6338 = vmatprep.subr.mxu0 0.0
          %6339 = vmatpush1.msra.mxu0 %v6222
          %6340 = vmatprep.subr.mxu0 0.0
          %6341 = vmatpush1.msra.mxu0 %v6223
          %6342 = vmatprep.subr.mxu0 0.0
          %6343 = vmatpush1.msra.mxu0 %v6224
          %6344 = vmatprep.subr.mxu0 0.0
          %6345 = vmatpush1.msra.mxu0 %v6225
          %6346 = vmatprep.subr.mxu0 0.0
          %6347 = vmatpush1.msra.mxu0 %v6226
          %6348 = vmatprep.subr.mxu0 0.0
          %6349 = vmatpush1.msra.mxu0 %v6227
          %6350 = vmatprep.subr.mxu0 0.0
          %6351 = vmatpush1.msra.mxu0 %v6228
          %6352 = vmatprep.subr.mxu0 0.0
          %6353 = vmatpush1.msra.mxu0 %v6229
          %6354 = vmatprep.subr.mxu0 0.0
          %6355 = vmatpush1.msra.mxu0 %v6230
          %6356 = vmatprep.subr.mxu0 0.0
          %6357 = vmatpush1.msra.mxu0 %v6231
          %6358 = vmatprep.subr.mxu0 0.0
          %6359 = vmatpush1.msra.mxu0 %v6232
          %6360 = vmatprep.subr.mxu0 0.0
          %6361 = vmatpush1.msra.mxu0 %v6233
          %6362 = vmatprep.subr.mxu0 0.0
          %6363 = vmatpush1.msra.mxu0 %v6234
          %6364 = vmatprep.subr.mxu0 0.0
          %6365 = vmatpush1.msra.mxu0 %v6235
          %6366 = vmatprep.subr.mxu0 0.0
          %6367 = vmatpush1.msra.mxu0 %v6236
          %6368 = vmatprep.subr.mxu0 0.0
          %6369 = vmatpush1.msra.mxu0 %v6237
          %6370 = vmatprep.subr.mxu0 0.0
          %6371 = vmatpush1.msra.mxu0 %v6238
          %6372 = vmatprep.subr.mxu0 0.0
          %6373 = vmatpush1.msra.mxu0 %v6239
          %6374 = vmatprep.subr.mxu0 0.0
          %6375 = vmatpush1.msra.mxu0 %v6240
          %6376 = vmatprep.subr.mxu0 0.0
          %6377 = vmatpush1.msra.mxu0 %v6241
          %6378 = vmatprep.subr.mxu0 0.0
          %6379 = vmatpush1.msra.mxu0 %v6242
          %6380 = vmatprep.subr.mxu0 0.0
          %6381 = vmatpush1.msra.mxu0 %v6243
          %6382 = vmatprep.subr.mxu0 0.0
          %6383 = vmatpush1.msra.mxu0 %v6244
          %6384 = vmatprep.subr.mxu0 0.0
          %6385 = vmatpush1.msra.mxu0 %v6245
          %6386 = vmatprep.subr.mxu0 0.0
          %6387 = vmatpush1.msra.mxu0 %v6246
          %6388 = vmatprep.subr.mxu0 0.0
          %6389 = vmatpush1.msra.mxu0 %v6247
          %6390 = vmatprep.subr.mxu0 0.0
          %6391 = vmatpush1.msra.mxu0 %v6248
          %6392 = vmatprep.subr.mxu0 0.0
          %6393 = vmatpush1.msra.mxu0 %v6249
          %6394 = vmatprep.subr.mxu0 0.0
          %6395 = vmatpush1.msra.mxu0 %v6250
          %6396 = vmatprep.subr.mxu0 0.0
          %6397 = vmatpush1.msra.mxu0 %v6264
          %6398 = vmatprep.subr.mxu0 0.0
          %6399 = vmatpush1.msra.mxu0 0.0
          %6400 = vmatprep.mubr.f32.mxu0 %v6261
          %6401 = vmatmul.mubr.f32.gmra.mrb[0].mxu0 %v6187
          %v6402 = vpop.f32.mrb[0].mxu0
          %v6403 = vadd.f32 %v6333, %v6402
          %v6404 = vpop.f32.mrb[0].mxu0
          %6405 = vdwg.mxu0
          %v6406 = vmax.f32 %v6403, 0.0
          %v6407 = vld [vmem:[%s7] sm:$0xff]
          %v6408 = vld [vmem:[%s7 + $0x8] sm:$0xff]
          %v6409 = vld [vmem:[%s7 + $0x10] sm:$0xff]
          %v6410 = vld [vmem:[%s7 + $0x18] sm:$0xff]
          %v6411 = vld [vmem:[%s7 + $0x20] sm:$0xff]
          %v6412 = vld [vmem:[%s7 + $0x28] sm:$0xff]
          %v6413 = vld [vmem:[%s7 + $0x30] sm:$0xff]
          %v6414 = vld [vmem:[%s7 + $0x38] sm:$0xff]
          %v6415 = vld [vmem:[%s7 + $0x40] sm:$0xff]
          %v6416 = vld [vmem:[%s7 + $0x48] sm:$0xff]
          %v6417 = vld [vmem:[%s7 + $0x50] sm:$0xff]
          %v6418 = vld [vmem:[%s7 + $0x58] sm:$0xff]
          %v6419 = vld [vmem:[%s7 + $0x60] sm:$0xf]
          %v6420 = vld [vmem:[%s8] sm:$0x1]
          %v6422 = vlaneseq
          %v6423 = vshrl.u32 %v6422, 7
          %v6424 = vsub.s32 0, %v6423
          %v6425 = vrot.slane %v6420, %v6424
          %vm6427 = vcmask 818176
          %v6429 = vsel %vm6427, %v6406, 0
          %v6432 = vsel %vm5746, %v6419, 0
          %6434 = vmatprep.subr.mxu0 0.0
          %6435 = vmatpush1.msra.mxu0 %v6407
          %6436 = vmatprep.subr.mxu0 0.0
          %6437 = vmatpush1.msra.mxu0 %v6408
          %6438 = vmatprep.subr.mxu0 0.0
          %6439 = vmatpush1.msra.mxu0 %v6409
          %6440 = vmatprep.subr.mxu0 0.0
          %6441 = vmatpush1.msra.mxu0 %v6410
          %6442 = vmatprep.subr.mxu0 0.0
          %6443 = vmatpush1.msra.mxu0 %v6411
          %6444 = vmatprep.subr.mxu0 0.0
          %6445 = vmatpush1.msra.mxu0 %v6412
          %6446 = vmatprep.subr.mxu0 0.0
          %6447 = vmatpush1.msra.mxu0 %v6413
          %6448 = vmatprep.subr.mxu0 0.0
          %6449 = vmatpush1.msra.mxu0 %v6414
          %6450 = vmatprep.subr.mxu0 0.0
          %6451 = vmatpush1.msra.mxu0 %v6415
          %6452 = vmatprep.subr.mxu0 0.0
          %6453 = vmatpush1.msra.mxu0 %v6416
          %6454 = vmatprep.subr.mxu0 0.0
          %6455 = vmatpush1.msra.mxu0 %v6417
          %6456 = vmatprep.subr.mxu0 0.0
          %6457 = vmatpush1.msra.mxu0 %v6418
          %6458 = vmatprep.subr.mxu0 0.0
          %6459 = vmatpush1.msra.mxu0 %v6432
          %6460 = vmatprep.subr.mxu0 0.0
          %6461 = vmatpush1.msra.mxu0 0.0
          %6462 = vmatprep.subr.mxu0 0.0
          %6463 = vmatpush1.msra.mxu0 0.0
          %6464 = vmatprep.subr.mxu0 0.0
          %6465 = vmatpush1.msra.mxu0 0.0
          %6466 = vmatprep.subr.mxu0 0.0
          %6467 = vmatpush1.msra.mxu0 0.0
          %6468 = vmatprep.subr.mxu0 0.0
          %6469 = vmatpush1.msra.mxu0 0.0
          %6470 = vmatprep.subr.mxu0 0.0
          %6471 = vmatpush1.msra.mxu0 0.0
          %6472 = vmatprep.subr.mxu0 0.0
          %6473 = vmatpush1.msra.mxu0 0.0
          %6474 = vmatprep.subr.mxu0 0.0
          %6475 = vmatpush1.msra.mxu0 0.0
          %6476 = vmatprep.subr.mxu0 0.0
          %6477 = vmatpush1.msra.mxu0 0.0
          %6478 = vmatprep.subr.mxu0 0.0
          %6479 = vmatpush1.msra.mxu0 0.0
          %6480 = vmatprep.subr.mxu0 0.0
          %6481 = vmatpush1.msra.mxu0 0.0
          %6482 = vmatprep.subr.mxu0 0.0
          %6483 = vmatpush1.msra.mxu0 0.0
          %6484 = vmatprep.subr.mxu0 0.0
          %6485 = vmatpush1.msra.mxu0 0.0
          %6486 = vmatprep.subr.mxu0 0.0
          %6487 = vmatpush1.msra.mxu0 0.0
          %6488 = vmatprep.subr.mxu0 0.0
          %6489 = vmatpush1.msra.mxu0 0.0
          %6490 = vmatprep.subr.mxu0 0.0
          %6491 = vmatpush1.msra.mxu0 0.0
          %6492 = vmatprep.subr.mxu0 0.0
          %6493 = vmatpush1.msra.mxu0 0.0
          %6494 = vmatprep.subr.mxu0 0.0
          %6495 = vmatpush1.msra.mxu0 0.0
          %6496 = vmatprep.subr.mxu0 0.0
          %6497 = vmatpush1.msra.mxu0 0.0
          %6498 = vmatprep.mubr.f32.mxu0 0.0
          %6499 = vmatmul.mubr.f32.gmra.mrb[0].mxu0 %v6429
          %v6500 = vpop.f32.mrb[0].mxu0
          %v6501 = vadd.f32 %v6425, %v6500
          %v6502 = vpop.f32.mrb[0].mxu0
          %6503 = vdwg.mxu0
          %v6504 = vxor.u32 %v6501, 2147483648
          %v6505 = vmul.f32 %v6504, 1.442695
          %v6506 = vpow.pop %v6505
          %v6507 = vadd.f32 %v6506, 1.0
          %v6508 = vrcp.pop %v6507
          %v6509 = vmul.f32 1.0, %v6508
          %vm6510 = vcmask 48128
          %6511 = vst.msk [vmem:[%s400] sm:$0xff] %vm6510, %v6509
        $region68: #{net_forward.1} parent=55 // pred_fallthru
          _
        %p6512 = scmp.lt.s32.totalorder %s27, 0
        %s6513 = scalar_select %p6512, %s27, 0
        %s6514 = smul.addr %s6513, 8
        %s6515 = scalar_lea.vmem %s9, %s6514
        // Predicated region
        $region69: #{net_forward.1} parent=55 // pred_check
          %p6516 = pneg %p254
        $region70: #{net_forward.1} parent=55 // pred_check_branch
          %6518 = sbr.rel (%p6516) target = $region72
        $region71: #{net_forward.1} parent=55 // pred_region
          _
        $region72: #{net_forward.1} parent=55 // pred_fallthru
          _
        // Predicated region
        $region73: #{net_forward.1} parent=55 // pred_check
          %p6519 = pneg %p254
        $region74: #{net_forward.1} parent=55 // pred_check_branch
          %6521 = sbr.rel (%p6519) target = $region76
        $region75: #{net_forward.1} parent=55 // pred_region
          %p6522 = scmp.lt.s32.totalorder %s27, 0
          %s6523 = scalar_select %p6522, %s27, 0
          %s6524 = smul.addr %s6523, 8
          %s6525 = scalar_lea.vmem %s9, %s6524
        $region76: #{net_forward.1} parent=55 // pred_fallthru
          _
      $region56: #{net_forward.1} parent=5 // pred_fallthru
        _
      %p6526 = scmp.le.s32.totalorder 2, %s18
      // Predicated region
      $region77: #{net_forward.1} parent=5 // pred_check
        %p6527 = pneg %p6526
      $region78: #{net_forward.1} parent=5 // pred_check_branch
        %6529 = sbr.rel (%p6527) target = $region80
      $region79: #{net_forward.1} parent=5 // pred_region
        %s6530 = ssub.s32 %s18, 2
      $region80: #{net_forward.1} parent=5 // pred_fallthru
        _
    $region6: #{net_forward.1} parent=1 // loop_footer
      %s22 = sadd.s32 1, %s18
    $region7: #{net_forward.1} parent=1 // loop_footer_branch
      %17 = sbr.rel target = $region3
    $region8: #{net_forward.1} parent=1 // loop_exit
      _
    %6531 = vsyncpa [#allocation4], 1
    %s6532 = scalar_lea.sflag [#allocation4], 1
    %6533 = vsyncpa %s6532, 1

</llo_original>
